<compile_context>
chip_gen: v6e
topology: v6e:2x2x1
jax: 0.10.0
libtpu: 0.0.40
codegen_flags: <defaults>
</compile_context>

<pallas_src>
import functools
import numpy as np
import jax
import jax.numpy as jnp
from jax import lax
from jax.experimental import pallas as pl
from jax.experimental.pallas import tpu as pltpu


def _round_up(x, m):
    return ((x + m - 1) // m) * m


# ----------------------------------------------------------------------------
# Bilinear interpolation weights (align_corners=True), built statically on host.
# ----------------------------------------------------------------------------
def _bilinear_matrix(n_in, n_out):
    A = np.zeros((n_out, n_in), dtype=np.float32)
    if n_out == 1 or n_in == 1:
        A[:, 0] = 1.0
        return A
    scale = (n_in - 1) / (n_out - 1)
    for I in range(n_out):
        s = I * scale
        i0 = min(int(np.floor(s)), n_in - 1)
        i1 = min(i0 + 1, n_in - 1)
        w1 = s - i0
        A[I, i0] += 1.0 - w1
        A[I, i1] += w1
    return A


# ----------------------------------------------------------------------------
# In-kernel helpers.
# ----------------------------------------------------------------------------
def _zero_halo_ring(buf_ref, H, W, C):
    """Clear only the 1-px halo ring of an (H+2, W+2, C) bf16 buffer.

    The interior is fully rewritten every grid step, so no full-buffer zero fill
    is needed (removes O(area) store traffic per step)."""
    zrow = jnp.zeros((1, W + 2, C), jnp.bfloat16)
    zcol = jnp.zeros((H + 2, 1, C), jnp.bfloat16)
    buf_ref[0:1, :, :] = zrow
    buf_ref[H + 1:H + 2, :, :] = zrow
    buf_ref[:, 0:1, :] = zcol
    buf_ref[:, W + 1:W + 2, :] = zcol


def _conv3x3_bn_relu(src_ref, Cin, H, W, w_ref, s_ref, b_ref, col_ref):
    """3x3 'SAME' conv (bias=False) over the halo-padded src_ref + folded BN + ReLU.

    src_ref: (H+2, W+2, Cin) bf16, halo already zero.
    w_ref:   (K, Cout_p) bf16, rows laid out (tap, Cin) with optional zero K-pad.
    col_ref: bf16 im2col scratch (H*W, K) or None for the direct 9-tap path.
    Returns (H*W, Cout_p) f32.
    """
    if col_ref is not None:
        # im2col path (tiny Cin): one big lane-dense matmul, K padded to 128-mult.
        k_real = 9 * Cin
        k_pad = col_ref.shape[1]
        for dy in range(3):
            for dx in range(3):
                t = dy * 3 + dx
                col_ref[:, t * Cin:(t + 1) * Cin] = (
                    src_ref[dy:dy + H, dx:dx + W, :].reshape(H * W, Cin))
        if k_pad > k_real:
            # K-pad columns feed zero weight rows but must not hold stale NaNs.
            col_ref[:, k_real:] = jnp.zeros((H * W, k_pad - k_real), jnp.bfloat16)
        y = jnp.dot(col_ref[...], w_ref[...], preferred_element_type=jnp.float32)
    else:
        # Direct 9-shifted-tap accumulation (Cin >= 128): no im2col buffer at all.
        y = None
        for dy in range(3):
            for dx in range(3):
                t = dy * 3 + dx
                patch = src_ref[dy:dy + H, dx:dx + W, :].reshape(H * W, Cin)
                part = jnp.dot(patch, w_ref[t * Cin:(t + 1) * Cin, :],
                               preferred_element_type=jnp.float32)
                y = part if y is None else y + part
    # Folded BatchNorm (eval-mode affine) + ReLU, f32 epilogue (v5e-safe).
    return jnp.maximum(y * s_ref[...] + b_ref[...], 0.0)


# ----------------------------------------------------------------------------
# Single fused kernel: upsample(x1) -> diff-pad -> concat(x2, .) -> DoubleConv.
# One grid step per batch element; everything stays in VMEM between stages.
# ----------------------------------------------------------------------------
def _up_fused_kernel(x1_ref, x2_ref, ah_ref, aw_ref,
                     w1_ref, s1_ref, b1_ref, w2_ref, s2_ref, b2_ref,
                     o_ref,
                     xpad_ref, midpad_ref, *col_refs,
                     H1, W1, C1, H2, W2, C2, Cmid_p, Cout_p,
                     py0, px0, diffY, diffX, use_col1, use_col2):
    Ho, Wo = 2 * H1, 2 * W1
    Ctot = C2 + C1
    cols = list(col_refs)
    col1_ref = cols.pop(0) if use_col1 else None
    col2_ref = cols.pop(0) if use_col2 else None

    # ---- 0) clear only the batch-invariant halo rings (no full zero fills) --
    _zero_halo_ring(xpad_ref, H2, W2, Ctot)
    _zero_halo_ring(midpad_ref, H2, W2, Cmid_p)

    # ---- 1) separable bilinear 2x upsample of x1 (align_corners=True) -------
    # rows: (Ho, H1) @ (H1, W1*C1), bf16 operands, f32 accumulation
    x1f = x1_ref[0].reshape(H1, W1 * C1)
    r = jnp.dot(ah_ref[...], x1f, preferred_element_type=jnp.float32)
    r3 = r.reshape(Ho, W1, C1).astype(jnp.bfloat16)
    # cols: Ho-batched (Wo, W1) @ (W1, C1)  (see TODO at top of file)
    aw_b = jnp.broadcast_to(aw_ref[...], (Ho, Wo, W1))
    up = lax.dot_general(aw_b, r3,
                         dimension_numbers=(((2,), (1,)), ((0,), (0,))),
                         preferred_element_type=jnp.float32)     # (Ho, Wo, C1) f32

    # ---- 2) halo-padded concat buffer [x2 | pad(up(x1))] in bf16 VMEM --------
    if diffY > 0 or diffX > 0:
        # diff-pad region of the x1 channels is not covered by `up`: clear it.
        xpad_ref[1:1 + H2, 1:1 + W2, C2:Ctot] = (
            jnp.zeros((H2, W2, C1), jnp.bfloat16))
    xpad_ref[1:1 + H2, 1:1 + W2, 0:C2] = x2_ref[0]
    xpad_ref[1 + py0:1 + py0 + Ho, 1 + px0:1 + px0 + Wo, C2:Ctot] = (
        up.astype(jnp.bfloat16))

    # ---- 3) conv1 (3x3, pad=1, bias=False) + folded BN + ReLU ----------------
    y = _conv3x3_bn_relu(xpad_ref, Ctot, H2, W2, w1_ref, s1_ref, b1_ref, col1_ref)

    # ---- 4) conv2 (3x3, pad=1, bias=False) + folded BN + ReLU ----------------
    midpad_ref[1:1 + H2, 1:1 + W2, :] = (
        y.reshape(H2, W2, Cmid_p).astype(jnp.bfloat16))
    z = _conv3x3_bn_relu(midpad_ref, Cmid_p, H2, W2, w2_ref, s2_ref, b2_ref,
                         col2_ref)

    # Lane-dense store: Cout is padded to a multiple of 128 (sliced in wrapper).
    o_ref[0] = z.reshape(H2, W2, Cout_p).astype(o_ref.dtype)


# ----------------------------------------------------------------------------
# Up.forward, NHWC-native entry point (preferred: no layout transposes).
# ----------------------------------------------------------------------------
def up_forward_nhwc(x1, x2, params):
    N, H1, W1, C1 = x1.shape
    _, H2, W2, C2 = x2.shape
    Ho, Wo = 2 * H1, 2 * W1
    diffY, diffX = H2 - Ho, W2 - Wo
    py0, px0 = diffY // 2, diffX // 2
    Ctot = C2 + C1
    Cmid = params["w1"].shape[-1]
    Cout = params["w2"].shape[-1]
    assert params["w1"].shape[2] == Ctot, "concat channels must match conv1 in-ch"

    # Pad matmul-N dims / BN vectors / output channels to multiples of 128
    # (lane-dense stores and MXU output lanes); slice the real channels after.
    Cmid_p = _round_up(Cmid, 128)
    Cout_p = _round_up(Cout, 128)

    use_col1 = Ctot < 128        # im2col only for tiny Cin
    use_col2 = Cmid_p < 128      # mid channels are 128-padded -> direct path

    # bf16 activations at the kernel boundary (halves HBM<->VMEM traffic);
    # accumulation and the BN/ReLU epilogue stay f32 inside the kernel.
    x1 = x1.astype(jnp.bfloat16)
    x2 = x2.astype(jnp.bfloat16)

    ah = jnp.asarray(_bilinear_matrix(H1, Ho), dtype=jnp.bfloat16)   # (Ho, H1)
    aw = jnp.asarray(_bilinear_matrix(W1, Wo), dtype=jnp.bfloat16)   # (Wo, W1)

    # conv1 weight: rows = (tap, Ctot), zero K-pad to 128-mult for the im2col path.
    k1_real = 9 * Ctot
    k1 = _round_up(k1_real, 128) if use_col1 else k1_real
    w1f = jnp.zeros((k1, Cmid_p), jnp.bfloat16)
    w1f = w1f.at[:k1_real, :Cmid].set(
        params["w1"].reshape(k1_real, Cmid).astype(jnp.bfloat16))

    # conv2 weight: rows = (tap, Cmid_p) with zero rows for the padded mid chans.
    w2p = jnp.zeros((3, 3, Cmid_p, Cout_p), jnp.float32)
    w2p = w2p.at[:, :, :Cmid, :Cout].set(params["w2"])
    k2_real = 9 * Cmid_p
    k2 = _round_up(k2_real, 128) if use_col2 else k2_real
    w2f = jnp.zeros((k2, Cout_p), jnp.bfloat16)
    w2f = w2f.at[:k2_real, :].set(w2p.reshape(k2_real, Cout_p).astype(jnp.bfloat16))

    def _pad_vec(v, n):
        out = jnp.zeros((1, n), jnp.float32)
        return out.at[0, :v.shape[0]].set(v.astype(jnp.float32))

    s1 = _pad_vec(params["s1"], Cmid_p)
    b1 = _pad_vec(params["b1"], Cmid_p)
    s2 = _pad_vec(params["s2"], Cout_p)
    b2 = _pad_vec(params["b2"], Cout_p)

    kernel = functools.partial(
        _up_fused_kernel,
        H1=H1, W1=W1, C1=C1, H2=H2, W2=W2, C2=C2,
        Cmid_p=Cmid_p, Cout_p=Cout_p,
        py0=py0, px0=px0, diffY=diffY, diffX=diffX,
        use_col1=use_col1, use_col2=use_col2)

    scratch = [
        pltpu.VMEM((H2 + 2, W2 + 2, Ctot), jnp.bfloat16),     # padded concat buf
        pltpu.VMEM((H2 + 2, W2 + 2, Cmid_p), jnp.bfloat16),   # padded mid act
    ]
    if use_col1:
        scratch.append(pltpu.VMEM((H2 * W2, k1), jnp.bfloat16))
    if use_col2:
        scratch.append(pltpu.VMEM((H2 * W2, k2), jnp.bfloat16))

    out = pl.pallas_call(
        kernel,
        out_shape=jax.ShapeDtypeStruct((N, H2, W2, Cout_p), jnp.float32),
        grid=(N,),
        in_specs=[
            pl.BlockSpec((1, H1, W1, C1), lambda n: (n, 0, 0, 0)),
            pl.BlockSpec((1, H2, W2, C2), lambda n: (n, 0, 0, 0)),
            pl.BlockSpec((Ho, H1), lambda n: (0, 0)),
            pl.BlockSpec((Wo, W1), lambda n: (0, 0)),
            pl.BlockSpec((k1, Cmid_p), lambda n: (0, 0)),
            pl.BlockSpec((1, Cmid_p), lambda n: (0, 0)),
            pl.BlockSpec((1, Cmid_p), lambda n: (0, 0)),
            pl.BlockSpec((k2, Cout_p), lambda n: (0, 0)),
            pl.BlockSpec((1, Cout_p), lambda n: (0, 0)),
            pl.BlockSpec((1, Cout_p), lambda n: (0, 0)),
        ],
        out_specs=pl.BlockSpec((1, H2, W2, Cout_p), lambda n: (n, 0, 0, 0)),
        scratch_shapes=scratch,
        compiler_params=pltpu.CompilerParams(
            dimension_semantics=("parallel",),
            vmem_limit_bytes=48 * 1024 * 1024),
    )(x1, x2, ah, aw, w1f, s1, b1, w2f, s2, b2)

    return out[..., :Cout]


# ----------------------------------------------------------------------------
# PyTorch-layout (NCHW) boundary wrapper.
# ----------------------------------------------------------------------------
def up_forward(x1_nchw, x2_nchw, params):
    # TODO(synk): keep the surrounding network NHWC end-to-end and call
    #             up_forward_nhwc directly to avoid these extra HBM transposes.
    x1 = jnp.transpose(x1_nchw, (0, 2, 3, 1))
    x2 = jnp.transpose(x2_nchw, (0, 2, 3, 1))
    out = up_forward_nhwc(x1, x2, params)
    return jnp.transpose(out, (0, 3, 1, 2)).astype(x2_nchw.dtype)


# ----------------------------------------------------------------------------
# Deterministic parameter construction (Conv weights + folded eval-mode BN).
# DoubleConv(in_channels, out_channels // 2): mid = out = out_channels // 2.
# ----------------------------------------------------------------------------
def init_params(key, in_channels, out_channels):
    mid = out_channels // 2
    out = out_channels // 2
    k1, k2 = jax.random.split(key)
    w1 = 0.1 * jax.random.normal(k1, (3, 3, in_channels, mid), jnp.float32)
    w2 = 0.1 * jax.random.normal(k2, (3, 3, mid, out), jnp.float32)

    def bn_fold(c, off):
        gamma = 1.0 + 0.01 * jnp.arange(c, dtype=jnp.float32)
        beta = 0.02 * jnp.arange(c, dtype=jnp.float32) - 0.01 * off
        mean = 0.005 * jnp.arange(c, dtype=jnp.float32)
        var = 1.0 + 0.03 * jnp.arange(c, dtype=jnp.float32)
        eps = 1e-5
        scale = gamma / jnp.sqrt(var + eps)
        bias = beta - mean * scale
        return scale, bias

    s1, b1 = bn_fold(mid, 1)
    s2, b2 = bn_fold(out, 2)
    return dict(w1=w1, s1=s1, b1=b1, w2=w2, s2=s2, b2=b2)


# ----------------------------------------------------------------------------
# Pure-JAX f32 reference (for correctness check).
# ----------------------------------------------------------------------------
def reference(x1_nchw, x2_nchw, params):
    x1 = jnp.transpose(x1_nchw, (0, 2, 3, 1))
    x2 = jnp.transpose(x2_nchw, (0, 2, 3, 1))
    N, H, W, C = x1.shape
    Ah = jnp.asarray(_bilinear_matrix(H, 2 * H))
    Aw = jnp.asarray(_bilinear_matrix(W, 2 * W))
    x1 = jnp.einsum('Ii,niwc->nIwc', Ah, x1)
    x1 = jnp.einsum('Jj,nIjc->nIJc', Aw, x1)
    diffY = x2.shape[1] - x1.shape[1]
    diffX = x2.shape[2] - x1.shape[2]
    x1 = jnp.pad(x1, ((0, 0),
                      (diffY // 2, diffY - diffY // 2),
                      (diffX // 2, diffX - diffX // 2),
                      (0, 0)))
    x = jnp.concatenate([x2, x1], axis=-1)

    def cbr(x, w, s, b):
        y = lax.conv_general_dilated(x, w, (1, 1), 'SAME',
                                     dimension_numbers=('NHWC', 'HWIO', 'NHWC'))
        return jnp.maximum(y * s + b, 0.0)

    y = cbr(x, params["w1"], params["s1"], params["b1"])
    y = cbr(y, params["w2"], params["s2"], params["b2"])
    return jnp.transpose(y, (0, 3, 1, 2))


if __name__ == "__main__":
    key = jax.random.PRNGKey(0)
    kx1, kx2, kp = jax.random.split(key, 3)

    # Up(in_channels=8, out_channels=8, bilinear=True)
    N, in_ch, out_ch = 2, 8, 8
    H1 = W1 = 8
    # x1: low-res feature map (half the channels), x2: skip connection
    x1 = jax.random.normal(kx1, (N, in_ch // 2, H1, W1), jnp.float32)
    x2 = jax.random.normal(kx2, (N, in_ch // 2, 2 * H1, 2 * W1), jnp.float32)

    params = init_params(kp, in_ch, out_ch)

    out = jax.block_until_ready(up_forward(x1, x2, params))
    assert out.shape == (N, out_ch // 2, 2 * H1, 2 * W1), out.shape

    ref = jax.block_until_ready(reference(x1, x2, params))
    # bf16 activations / weights on the MXU inside the kernel vs f32 reference.
    np.testing.assert_allclose(np.asarray(out), np.asarray(ref),
                               rtol=5e-2, atol=7e-2)
    print("KERNEL_OK")
</pallas_src>

<mosaic_0001>
module attributes {stable_mosaic.version = 11 : i64} {
  func.func @_up_fused_kernel(%arg0: i32, %arg1: memref<1x8x8x4xbf16, #tpu.memory_space<vmem>>, %arg2: memref<1x16x16x4xbf16, #tpu.memory_space<vmem>>, %arg3: memref<16x8xbf16, #tpu.memory_space<vmem>>, %arg4: memref<16x8xbf16, #tpu.memory_space<vmem>>, %arg5: memref<128x128xbf16, #tpu.memory_space<vmem>>, %arg6: memref<1x128xf32, #tpu.memory_space<vmem>>, %arg7: memref<1x128xf32, #tpu.memory_space<vmem>>, %arg8: memref<1152x128xbf16, #tpu.memory_space<vmem>>, %arg9: memref<1x128xf32, #tpu.memory_space<vmem>>, %arg10: memref<1x128xf32, #tpu.memory_space<vmem>>, %arg11: memref<1x16x16x128xf32, #tpu.memory_space<vmem>>, %arg12: memref<18x18x8xbf16, #tpu.memory_space<vmem>>, %arg13: memref<18x18x128xbf16, #tpu.memory_space<vmem>>, %arg14: memref<256x128xbf16, #tpu.memory_space<vmem>>) attributes {dimension_semantics = [#tpu.dimension_semantics<parallel>], iteration_bounds = array<i64: 2>, scalar_prefetch = 0 : i64, scratch_operands = 3 : i64, tpu.core_type = #tpu.core_type<tc>, window_params = [{transform_indices = @transform_0, window_bounds = array<i64: 1, 8, 8, 4>}, {transform_indices = @transform_1, window_bounds = array<i64: 1, 16, 16, 4>}, {pipeline_mode = #tpu.pipeline_mode<synchronous>, transform_indices = @transform_2, window_bounds = array<i64: 16, 8>}, {pipeline_mode = #tpu.pipeline_mode<synchronous>, transform_indices = @transform_3, window_bounds = array<i64: 16, 8>}, {pipeline_mode = #tpu.pipeline_mode<synchronous>, transform_indices = @transform_4, window_bounds = array<i64: 128, 128>}, {pipeline_mode = #tpu.pipeline_mode<synchronous>, transform_indices = @transform_5, window_bounds = array<i64: 1, 128>}, {pipeline_mode = #tpu.pipeline_mode<synchronous>, transform_indices = @transform_6, window_bounds = array<i64: 1, 128>}, {pipeline_mode = #tpu.pipeline_mode<synchronous>, transform_indices = @transform_7, window_bounds = array<i64: 1152, 128>}, {pipeline_mode = #tpu.pipeline_mode<synchronous>, transform_indices = @transform_8, window_bounds = array<i64: 1, 128>}, {pipeline_mode = #tpu.pipeline_mode<synchronous>, transform_indices = @transform_9, window_bounds = array<i64: 1, 128>}, {transform_indices = @transform_10, window_bounds = array<i64: 1, 16, 16, 128>}]} {
    %cst = arith.constant 0.000000e+00 : bf16
    %0 = vector.broadcast %cst : bf16 to vector<1x18x8xbf16>
    %cst_0 = arith.constant 0.000000e+00 : bf16
    %1 = vector.broadcast %cst_0 : bf16 to vector<18x1x8xbf16>
    %c0 = arith.constant 0 : index
    %c0_1 = arith.constant 0 : index
    %c0_2 = arith.constant 0 : index
    %2 = vector.load %arg12[%c0, %c0_1, %c0_2] : memref<18x18x8xbf16, #tpu.memory_space<vmem>>, vector<1x18x8xbf16>
    tpu.vector_store %arg12[%c0, %c0_1, %c0_2], %0 {strides = array<i32>} : memref<18x18x8xbf16, #tpu.memory_space<vmem>>, vector<1x18x8xbf16>,
    %c17 = arith.constant 17 : index
    %c0_3 = arith.constant 0 : index
    %c0_4 = arith.constant 0 : index
    %3 = vector.load %arg12[%c17, %c0_3, %c0_4] : memref<18x18x8xbf16, #tpu.memory_space<vmem>>, vector<1x18x8xbf16>
    tpu.vector_store %arg12[%c17, %c0_3, %c0_4], %0 {strides = array<i32>} : memref<18x18x8xbf16, #tpu.memory_space<vmem>>, vector<1x18x8xbf16>,
    %c0_5 = arith.constant 0 : index
    %c0_6 = arith.constant 0 : index
    %c0_7 = arith.constant 0 : index
    %4 = vector.load %arg12[%c0_5, %c0_6, %c0_7] : memref<18x18x8xbf16, #tpu.memory_space<vmem>>, vector<18x1x8xbf16>
    tpu.vector_store %arg12[%c0_5, %c0_6, %c0_7], %1 {strides = array<i32>} : memref<18x18x8xbf16, #tpu.memory_space<vmem>>, vector<18x1x8xbf16>,
    %c0_8 = arith.constant 0 : index
    %c17_9 = arith.constant 17 : index
    %c0_10 = arith.constant 0 : index
    %5 = vector.load %arg12[%c0_8, %c17_9, %c0_10] : memref<18x18x8xbf16, #tpu.memory_space<vmem>>, vector<18x1x8xbf16>
    tpu.vector_store %arg12[%c0_8, %c17_9, %c0_10], %1 {strides = array<i32>} : memref<18x18x8xbf16, #tpu.memory_space<vmem>>, vector<18x1x8xbf16>,
    %cst_11 = arith.constant 0.000000e+00 : bf16
    %6 = vector.broadcast %cst_11 : bf16 to vector<1x18x128xbf16>
    %cst_12 = arith.constant 0.000000e+00 : bf16
    %7 = vector.broadcast %cst_12 : bf16 to vector<18x1x128xbf16>
    %c0_13 = arith.constant 0 : index
    %c0_14 = arith.constant 0 : index
    %c0_15 = arith.constant 0 : index
    %8 = vector.load %arg13[%c0_13, %c0_14, %c0_15] : memref<18x18x128xbf16, #tpu.memory_space<vmem>>, vector<1x18x128xbf16>
    tpu.vector_store %arg13[%c0_13, %c0_14, %c0_15], %6 {strides = array<i32>} : memref<18x18x128xbf16, #tpu.memory_space<vmem>>, vector<1x18x128xbf16>,
    %c17_16 = arith.constant 17 : index
    %c0_17 = arith.constant 0 : index
    %c0_18 = arith.constant 0 : index
    %9 = vector.load %arg13[%c17_16, %c0_17, %c0_18] : memref<18x18x128xbf16, #tpu.memory_space<vmem>>, vector<1x18x128xbf16>
    tpu.vector_store %arg13[%c17_16, %c0_17, %c0_18], %6 {strides = array<i32>} : memref<18x18x128xbf16, #tpu.memory_space<vmem>>, vector<1x18x128xbf16>,
    %c0_19 = arith.constant 0 : index
    %c0_20 = arith.constant 0 : index
    %c0_21 = arith.constant 0 : index
    %10 = vector.load %arg13[%c0_19, %c0_20, %c0_21] : memref<18x18x128xbf16, #tpu.memory_space<vmem>>, vector<18x1x128xbf16>
    tpu.vector_store %arg13[%c0_19, %c0_20, %c0_21], %7 {strides = array<i32>} : memref<18x18x128xbf16, #tpu.memory_space<vmem>>, vector<18x1x128xbf16>,
    %c0_22 = arith.constant 0 : index
    %c17_23 = arith.constant 17 : index
    %c0_24 = arith.constant 0 : index
    %11 = vector.load %arg13[%c0_22, %c17_23, %c0_24] : memref<18x18x128xbf16, #tpu.memory_space<vmem>>, vector<18x1x128xbf16>
    tpu.vector_store %arg13[%c0_22, %c17_23, %c0_24], %7 {strides = array<i32>} : memref<18x18x128xbf16, #tpu.memory_space<vmem>>, vector<18x1x128xbf16>,
    %c0_25 = arith.constant 0 : index
    %c0_26 = arith.constant 0 : index
    %c0_27 = arith.constant 0 : index
    %c0_28 = arith.constant 0 : index
    %12 = vector.load %arg1[%c0_25, %c0_26, %c0_27, %c0_28] : memref<1x8x8x4xbf16, #tpu.memory_space<vmem>>, vector<1x8x8x4xbf16>
    %13 = vector.shape_cast %12 : vector<1x8x8x4xbf16> to vector<8x8x4xbf16>
    %14 = vector.shape_cast %13 : vector<8x8x4xbf16> to vector<8x32xbf16>
    %c0_29 = arith.constant 0 : index
    %c0_30 = arith.constant 0 : index
    %15 = vector.load %arg3[%c0_29, %c0_30] : memref<16x8xbf16, #tpu.memory_space<vmem>>, vector<16x8xbf16>
    %cst_31 = arith.constant dense<0.000000e+00> : vector<16x32xf32>
    %16 = tpu.matmul %15, %14, %cst_31 {dimension_numbers = #tpu.dot_dimension_numbers<[1], [0], [0], [1], [0, 0, 1, 1], [], []>} : vector<16x8xbf16>, vector<8x32xbf16>, vector<16x32xf32> -> vector<16x32xf32>
    %17 = vector.shape_cast %16 : vector<16x32xf32> to vector<16x8x4xf32>
    %18 = arith.truncf %17 : vector<16x8x4xf32> to vector<16x8x4xbf16>
    %c0_32 = arith.constant 0 : index
    %c0_33 = arith.constant 0 : index
    %19 = vector.load %arg4[%c0_32, %c0_33] : memref<16x8xbf16, #tpu.memory_space<vmem>>, vector<16x8xbf16>
    %20 = vector.shape_cast %19 : vector<16x8xbf16> to vector<1x16x8xbf16>
    %21 = vector.broadcast %20 : vector<1x16x8xbf16> to vector<16x16x8xbf16>
    %cst_34 = arith.constant dense<0.000000e+00> : vector<16x16x4xf32>
    %22 = tpu.matmul %21, %18, %cst_34 {dimension_numbers = #tpu.dot_dimension_numbers<[2], [1], [1], [2], [0, 0, 0, 1, 1, 2], [0], [0]>} : vector<16x16x8xbf16>, vector<16x8x4xbf16>, vector<16x16x4xf32> -> vector<16x16x4xf32>
    %c0_35 = arith.constant 0 : index
    %c0_36 = arith.constant 0 : index
    %c0_37 = arith.constant 0 : index
    %c0_38 = arith.constant 0 : index
    %23 = vector.load %arg2[%c0_35, %c0_36, %c0_37, %c0_38] : memref<1x16x16x4xbf16, #tpu.memory_space<vmem>>, vector<1x16x16x4xbf16>
    %24 = vector.shape_cast %23 : vector<1x16x16x4xbf16> to vector<16x16x4xbf16>
    %c1 = arith.constant 1 : index
    %c1_39 = arith.constant 1 : index
    %c0_40 = arith.constant 0 : index
    %25 = vector.load %arg12[%c1, %c1_39, %c0_40] : memref<18x18x8xbf16, #tpu.memory_space<vmem>>, vector<16x16x4xbf16>
    tpu.vector_store %arg12[%c1, %c1_39, %c0_40], %24 {strides = array<i32>} : memref<18x18x8xbf16, #tpu.memory_space<vmem>>, vector<16x16x4xbf16>,
    %26 = arith.truncf %22 : vector<16x16x4xf32> to vector<16x16x4xbf16>
    %c1_41 = arith.constant 1 : index
    %c1_42 = arith.constant 1 : index
    %c4 = arith.constant 4 : index
    %27 = vector.load %arg12[%c1_41, %c1_42, %c4] : memref<18x18x8xbf16, #tpu.memory_space<vmem>>, vector<16x16x4xbf16>
    tpu.vector_store %arg12[%c1_41, %c1_42, %c4], %26 {strides = array<i32>} : memref<18x18x8xbf16, #tpu.memory_space<vmem>>, vector<16x16x4xbf16>,
    %c0_43 = arith.constant 0 : index
    %c0_44 = arith.constant 0 : index
    %c0_45 = arith.constant 0 : index
    %28 = vector.load %arg12[%c0_43, %c0_44, %c0_45] : memref<18x18x8xbf16, #tpu.memory_space<vmem>>, vector<16x16x8xbf16>
    %29 = vector.shape_cast %28 : vector<16x16x8xbf16> to vector<256x8xbf16>
    %c0_46 = arith.constant 0 : index
    %c0_47 = arith.constant 0 : index
    %30 = vector.load %arg14[%c0_46, %c0_47] : memref<256x128xbf16, #tpu.memory_space<vmem>>, vector<256x8xbf16>
    tpu.vector_store %arg14[%c0_46, %c0_47], %29 {strides = array<i32>} : memref<256x128xbf16, #tpu.memory_space<vmem>>, vector<256x8xbf16>,
    %c0_48 = arith.constant 0 : index
    %c1_49 = arith.constant 1 : index
    %c0_50 = arith.constant 0 : index
    %31 = vector.load %arg12[%c0_48, %c1_49, %c0_50] : memref<18x18x8xbf16, #tpu.memory_space<vmem>>, vector<16x16x8xbf16>
    %32 = vector.shape_cast %31 : vector<16x16x8xbf16> to vector<256x8xbf16>
    %c0_51 = arith.constant 0 : index
    %c8 = arith.constant 8 : index
    %33 = vector.load %arg14[%c0_51, %c8] : memref<256x128xbf16, #tpu.memory_space<vmem>>, vector<256x8xbf16>
    tpu.vector_store %arg14[%c0_51, %c8], %32 {strides = array<i32>} : memref<256x128xbf16, #tpu.memory_space<vmem>>, vector<256x8xbf16>,
    %c0_52 = arith.constant 0 : index
    %c2 = arith.constant 2 : index
    %c0_53 = arith.constant 0 : index
    %34 = vector.load %arg12[%c0_52, %c2, %c0_53] : memref<18x18x8xbf16, #tpu.memory_space<vmem>>, vector<16x16x8xbf16>
    %35 = vector.shape_cast %34 : vector<16x16x8xbf16> to vector<256x8xbf16>
    %c0_54 = arith.constant 0 : index
    %c16 = arith.constant 16 : index
    %36 = vector.load %arg14[%c0_54, %c16] : memref<256x128xbf16, #tpu.memory_space<vmem>>, vector<256x8xbf16>
    tpu.vector_store %arg14[%c0_54, %c16], %35 {strides = array<i32>} : memref<256x128xbf16, #tpu.memory_space<vmem>>, vector<256x8xbf16>,
    %c1_55 = arith.constant 1 : index
    %c0_56 = arith.constant 0 : index
    %c0_57 = arith.constant 0 : index
    %37 = vector.load %arg12[%c1_55, %c0_56, %c0_57] : memref<18x18x8xbf16, #tpu.memory_space<vmem>>, vector<16x16x8xbf16>
    %38 = vector.shape_cast %37 : vector<16x16x8xbf16> to vector<256x8xbf16>
    %c0_58 = arith.constant 0 : index
    %c24 = arith.constant 24 : index
    %39 = vector.load %arg14[%c0_58, %c24] : memref<256x128xbf16, #tpu.memory_space<vmem>>, vector<256x8xbf16>
    tpu.vector_store %arg14[%c0_58, %c24], %38 {strides = array<i32>} : memref<256x128xbf16, #tpu.memory_space<vmem>>, vector<256x8xbf16>,
    %c1_59 = arith.constant 1 : index
    %c1_60 = arith.constant 1 : index
    %c0_61 = arith.constant 0 : index
    %40 = vector.load %arg12[%c1_59, %c1_60, %c0_61] : memref<18x18x8xbf16, #tpu.memory_space<vmem>>, vector<16x16x8xbf16>
    %41 = vector.shape_cast %40 : vector<16x16x8xbf16> to vector<256x8xbf16>
    %c0_62 = arith.constant 0 : index
    %c32 = arith.constant 32 : index
    %42 = vector.load %arg14[%c0_62, %c32] : memref<256x128xbf16, #tpu.memory_space<vmem>>, vector<256x8xbf16>
    tpu.vector_store %arg14[%c0_62, %c32], %41 {strides = array<i32>} : memref<256x128xbf16, #tpu.memory_space<vmem>>, vector<256x8xbf16>,
    %c1_63 = arith.constant 1 : index
    %c2_64 = arith.constant 2 : index
    %c0_65 = arith.constant 0 : index
    %43 = vector.load %arg12[%c1_63, %c2_64, %c0_65] : memref<18x18x8xbf16, #tpu.memory_space<vmem>>, vector<16x16x8xbf16>
    %44 = vector.shape_cast %43 : vector<16x16x8xbf16> to vector<256x8xbf16>
    %c0_66 = arith.constant 0 : index
    %c40 = arith.constant 40 : index
    %45 = vector.load %arg14[%c0_66, %c40] : memref<256x128xbf16, #tpu.memory_space<vmem>>, vector<256x8xbf16>
    tpu.vector_store %arg14[%c0_66, %c40], %44 {strides = array<i32>} : memref<256x128xbf16, #tpu.memory_space<vmem>>, vector<256x8xbf16>,
    %c2_67 = arith.constant 2 : index
    %c0_68 = arith.constant 0 : index
    %c0_69 = arith.constant 0 : index
    %46 = vector.load %arg12[%c2_67, %c0_68, %c0_69] : memref<18x18x8xbf16, #tpu.memory_space<vmem>>, vector<16x16x8xbf16>
    %47 = vector.shape_cast %46 : vector<16x16x8xbf16> to vector<256x8xbf16>
    %c0_70 = arith.constant 0 : index
    %c48 = arith.constant 48 : index
    %48 = vector.load %arg14[%c0_70, %c48] : memref<256x128xbf16, #tpu.memory_space<vmem>>, vector<256x8xbf16>
    tpu.vector_store %arg14[%c0_70, %c48], %47 {strides = array<i32>} : memref<256x128xbf16, #tpu.memory_space<vmem>>, vector<256x8xbf16>,
    %c2_71 = arith.constant 2 : index
    %c1_72 = arith.constant 1 : index
    %c0_73 = arith.constant 0 : index
    %49 = vector.load %arg12[%c2_71, %c1_72, %c0_73] : memref<18x18x8xbf16, #tpu.memory_space<vmem>>, vector<16x16x8xbf16>
    %50 = vector.shape_cast %49 : vector<16x16x8xbf16> to vector<256x8xbf16>
    %c0_74 = arith.constant 0 : index
    %c56 = arith.constant 56 : index
    %51 = vector.load %arg14[%c0_74, %c56] : memref<256x128xbf16, #tpu.memory_space<vmem>>, vector<256x8xbf16>
    tpu.vector_store %arg14[%c0_74, %c56], %50 {strides = array<i32>} : memref<256x128xbf16, #tpu.memory_space<vmem>>, vector<256x8xbf16>,
    %c2_75 = arith.constant 2 : index
    %c2_76 = arith.constant 2 : index
    %c0_77 = arith.constant 0 : index
    %52 = vector.load %arg12[%c2_75, %c2_76, %c0_77] : memref<18x18x8xbf16, #tpu.memory_space<vmem>>, vector<16x16x8xbf16>
    %53 = vector.shape_cast %52 : vector<16x16x8xbf16> to vector<256x8xbf16>
    %c0_78 = arith.constant 0 : index
    %c64 = arith.constant 64 : index
    %54 = vector.load %arg14[%c0_78, %c64] : memref<256x128xbf16, #tpu.memory_space<vmem>>, vector<256x8xbf16>
    tpu.vector_store %arg14[%c0_78, %c64], %53 {strides = array<i32>} : memref<256x128xbf16, #tpu.memory_space<vmem>>, vector<256x8xbf16>,
    %cst_79 = arith.constant 0.000000e+00 : bf16
    %55 = vector.broadcast %cst_79 : bf16 to vector<256x56xbf16>
    %c0_80 = arith.constant 0 : index
    %c72 = arith.constant 72 : index
    %56 = vector.load %arg14[%c0_80, %c72] : memref<256x128xbf16, #tpu.memory_space<vmem>>, vector<256x56xbf16>
    tpu.vector_store %arg14[%c0_80, %c72], %55 {strides = array<i32>} : memref<256x128xbf16, #tpu.memory_space<vmem>>, vector<256x56xbf16>,
    %c0_81 = arith.constant 0 : index
    %c0_82 = arith.constant 0 : index
    %57 = vector.load %arg14[%c0_81, %c0_82] : memref<256x128xbf16, #tpu.memory_space<vmem>>, vector<256x128xbf16>
    %c0_83 = arith.constant 0 : index
    %c0_84 = arith.constant 0 : index
    %58 = vector.load %arg5[%c0_83, %c0_84] : memref<128x128xbf16, #tpu.memory_space<vmem>>, vector<128x128xbf16>
    %cst_85 = arith.constant dense<0.000000e+00> : vector<256x128xf32>
    %59 = tpu.matmul %57, %58, %cst_85 {dimension_numbers = #tpu.dot_dimension_numbers<[1], [0], [0], [1], [0, 0, 1, 1], [], []>} : vector<256x128xbf16>, vector<128x128xbf16>, vector<256x128xf32> -> vector<256x128xf32>
    %c0_86 = arith.constant 0 : index
    %c0_87 = arith.constant 0 : index
    %60 = vector.load %arg6[%c0_86, %c0_87] : memref<1x128xf32, #tpu.memory_space<vmem>>, vector<1x128xf32>
    %61 = vector.broadcast %60 : vector<1x128xf32> to vector<256x128xf32>
    %62 = arith.mulf %59, %61 : vector<256x128xf32>
    %c0_88 = arith.constant 0 : index
    %c0_89 = arith.constant 0 : index
    %63 = vector.load %arg7[%c0_88, %c0_89] : memref<1x128xf32, #tpu.memory_space<vmem>>, vector<1x128xf32>
    %64 = vector.broadcast %63 : vector<1x128xf32> to vector<256x128xf32>
    %65 = arith.addf %62, %64 : vector<256x128xf32>
    %cst_90 = arith.constant 0.000000e+00 : f32
    %66 = vector.broadcast %cst_90 : f32 to vector<256x128xf32>
    %67 = arith.maximumf %65, %66 : vector<256x128xf32>
    %68 = vector.shape_cast %67 : vector<256x128xf32> to vector<16x16x128xf32>
    %69 = arith.truncf %68 : vector<16x16x128xf32> to vector<16x16x128xbf16>
    %c1_91 = arith.constant 1 : index
    %c1_92 = arith.constant 1 : index
    %c0_93 = arith.constant 0 : index
    %70 = vector.load %arg13[%c1_91, %c1_92, %c0_93] : memref<18x18x128xbf16, #tpu.memory_space<vmem>>, vector<16x16x128xbf16>
    tpu.vector_store %arg13[%c1_91, %c1_92, %c0_93], %69 {strides = array<i32>} : memref<18x18x128xbf16, #tpu.memory_space<vmem>>, vector<16x16x128xbf16>,
    %c0_94 = arith.constant 0 : index
    %c0_95 = arith.constant 0 : index
    %c0_96 = arith.constant 0 : index
    %71 = vector.load %arg13[%c0_94, %c0_95, %c0_96] : memref<18x18x128xbf16, #tpu.memory_space<vmem>>, vector<16x16x128xbf16>
    %72 = vector.shape_cast %71 : vector<16x16x128xbf16> to vector<256x128xbf16>
    %c0_97 = arith.constant 0 : index
    %c0_98 = arith.constant 0 : index
    %73 = vector.load %arg8[%c0_97, %c0_98] : memref<1152x128xbf16, #tpu.memory_space<vmem>>, vector<128x128xbf16>
    %cst_99 = arith.constant dense<0.000000e+00> : vector<256x128xf32>
    %74 = tpu.matmul %72, %73, %cst_99 {dimension_numbers = #tpu.dot_dimension_numbers<[1], [0], [0], [1], [0, 0, 1, 1], [], []>} : vector<256x128xbf16>, vector<128x128xbf16>, vector<256x128xf32> -> vector<256x128xf32>
    %c0_100 = arith.constant 0 : index
    %c1_101 = arith.constant 1 : index
    %c0_102 = arith.constant 0 : index
    %75 = vector.load %arg13[%c0_100, %c1_101, %c0_102] : memref<18x18x128xbf16, #tpu.memory_space<vmem>>, vector<16x16x128xbf16>
    %76 = vector.shape_cast %75 : vector<16x16x128xbf16> to vector<256x128xbf16>
    %c128 = arith.constant 128 : index
    %c0_103 = arith.constant 0 : index
    %77 = vector.load %arg8[%c128, %c0_103] : memref<1152x128xbf16, #tpu.memory_space<vmem>>, vector<128x128xbf16>
    %cst_104 = arith.constant dense<0.000000e+00> : vector<256x128xf32>
    %78 = tpu.matmul %76, %77, %cst_104 {dimension_numbers = #tpu.dot_dimension_numbers<[1], [0], [0], [1], [0, 0, 1, 1], [], []>} : vector<256x128xbf16>, vector<128x128xbf16>, vector<256x128xf32> -> vector<256x128xf32>
    %79 = arith.addf %74, %78 : vector<256x128xf32>
    %c0_105 = arith.constant 0 : index
    %c2_106 = arith.constant 2 : index
    %c0_107 = arith.constant 0 : index
    %80 = vector.load %arg13[%c0_105, %c2_106, %c0_107] : memref<18x18x128xbf16, #tpu.memory_space<vmem>>, vector<16x16x128xbf16>
    %81 = vector.shape_cast %80 : vector<16x16x128xbf16> to vector<256x128xbf16>
    %c256 = arith.constant 256 : index
    %c0_108 = arith.constant 0 : index
    %82 = vector.load %arg8[%c256, %c0_108] : memref<1152x128xbf16, #tpu.memory_space<vmem>>, vector<128x128xbf16>
    %cst_109 = arith.constant dense<0.000000e+00> : vector<256x128xf32>
    %83 = tpu.matmul %81, %82, %cst_109 {dimension_numbers = #tpu.dot_dimension_numbers<[1], [0], [0], [1], [0, 0, 1, 1], [], []>} : vector<256x128xbf16>, vector<128x128xbf16>, vector<256x128xf32> -> vector<256x128xf32>
    %84 = arith.addf %79, %83 : vector<256x128xf32>
    %c1_110 = arith.constant 1 : index
    %c0_111 = arith.constant 0 : index
    %c0_112 = arith.constant 0 : index
    %85 = vector.load %arg13[%c1_110, %c0_111, %c0_112] : memref<18x18x128xbf16, #tpu.memory_space<vmem>>, vector<16x16x128xbf16>
    %86 = vector.shape_cast %85 : vector<16x16x128xbf16> to vector<256x128xbf16>
    %c384 = arith.constant 384 : index
    %c0_113 = arith.constant 0 : index
    %87 = vector.load %arg8[%c384, %c0_113] : memref<1152x128xbf16, #tpu.memory_space<vmem>>, vector<128x128xbf16>
    %cst_114 = arith.constant dense<0.000000e+00> : vector<256x128xf32>
    %88 = tpu.matmul %86, %87, %cst_114 {dimension_numbers = #tpu.dot_dimension_numbers<[1], [0], [0], [1], [0, 0, 1, 1], [], []>} : vector<256x128xbf16>, vector<128x128xbf16>, vector<256x128xf32> -> vector<256x128xf32>
    %89 = arith.addf %84, %88 : vector<256x128xf32>
    %c1_115 = arith.constant 1 : index
    %c1_116 = arith.constant 1 : index
    %c0_117 = arith.constant 0 : index
    %90 = vector.load %arg13[%c1_115, %c1_116, %c0_117] : memref<18x18x128xbf16, #tpu.memory_space<vmem>>, vector<16x16x128xbf16>
    %91 = vector.shape_cast %90 : vector<16x16x128xbf16> to vector<256x128xbf16>
    %c512 = arith.constant 512 : index
    %c0_118 = arith.constant 0 : index
    %92 = vector.load %arg8[%c512, %c0_118] : memref<1152x128xbf16, #tpu.memory_space<vmem>>, vector<128x128xbf16>
    %cst_119 = arith.constant dense<0.000000e+00> : vector<256x128xf32>
    %93 = tpu.matmul %91, %92, %cst_119 {dimension_numbers = #tpu.dot_dimension_numbers<[1], [0], [0], [1], [0, 0, 1, 1], [], []>} : vector<256x128xbf16>, vector<128x128xbf16>, vector<256x128xf32> -> vector<256x128xf32>
    %94 = arith.addf %89, %93 : vector<256x128xf32>
    %c1_120 = arith.constant 1 : index
    %c2_121 = arith.constant 2 : index
    %c0_122 = arith.constant 0 : index
    %95 = vector.load %arg13[%c1_120, %c2_121, %c0_122] : memref<18x18x128xbf16, #tpu.memory_space<vmem>>, vector<16x16x128xbf16>
    %96 = vector.shape_cast %95 : vector<16x16x128xbf16> to vector<256x128xbf16>
    %c640 = arith.constant 640 : index
    %c0_123 = arith.constant 0 : index
    %97 = vector.load %arg8[%c640, %c0_123] : memref<1152x128xbf16, #tpu.memory_space<vmem>>, vector<128x128xbf16>
    %cst_124 = arith.constant dense<0.000000e+00> : vector<256x128xf32>
    %98 = tpu.matmul %96, %97, %cst_124 {dimension_numbers = #tpu.dot_dimension_numbers<[1], [0], [0], [1], [0, 0, 1, 1], [], []>} : vector<256x128xbf16>, vector<128x128xbf16>, vector<256x128xf32> -> vector<256x128xf32>
    %99 = arith.addf %94, %98 : vector<256x128xf32>
    %c2_125 = arith.constant 2 : index
    %c0_126 = arith.constant 0 : index
    %c0_127 = arith.constant 0 : index
    %100 = vector.load %arg13[%c2_125, %c0_126, %c0_127] : memref<18x18x128xbf16, #tpu.memory_space<vmem>>, vector<16x16x128xbf16>
    %101 = vector.shape_cast %100 : vector<16x16x128xbf16> to vector<256x128xbf16>
    %c768 = arith.constant 768 : index
    %c0_128 = arith.constant 0 : index
    %102 = vector.load %arg8[%c768, %c0_128] : memref<1152x128xbf16, #tpu.memory_space<vmem>>, vector<128x128xbf16>
    %cst_129 = arith.constant dense<0.000000e+00> : vector<256x128xf32>
    %103 = tpu.matmul %101, %102, %cst_129 {dimension_numbers = #tpu.dot_dimension_numbers<[1], [0], [0], [1], [0, 0, 1, 1], [], []>} : vector<256x128xbf16>, vector<128x128xbf16>, vector<256x128xf32> -> vector<256x128xf32>
    %104 = arith.addf %99, %103 : vector<256x128xf32>
    %c2_130 = arith.constant 2 : index
    %c1_131 = arith.constant 1 : index
    %c0_132 = arith.constant 0 : index
    %105 = vector.load %arg13[%c2_130, %c1_131, %c0_132] : memref<18x18x128xbf16, #tpu.memory_space<vmem>>, vector<16x16x128xbf16>
    %106 = vector.shape_cast %105 : vector<16x16x128xbf16> to vector<256x128xbf16>
    %c896 = arith.constant 896 : index
    %c0_133 = arith.constant 0 : index
    %107 = vector.load %arg8[%c896, %c0_133] : memref<1152x128xbf16, #tpu.memory_space<vmem>>, vector<128x128xbf16>
    %cst_134 = arith.constant dense<0.000000e+00> : vector<256x128xf32>
    %108 = tpu.matmul %106, %107, %cst_134 {dimension_numbers = #tpu.dot_dimension_numbers<[1], [0], [0], [1], [0, 0, 1, 1], [], []>} : vector<256x128xbf16>, vector<128x128xbf16>, vector<256x128xf32> -> vector<256x128xf32>
    %109 = arith.addf %104, %108 : vector<256x128xf32>
    %c2_135 = arith.constant 2 : index
    %c2_136 = arith.constant 2 : index
    %c0_137 = arith.constant 0 : index
    %110 = vector.load %arg13[%c2_135, %c2_136, %c0_137] : memref<18x18x128xbf16, #tpu.memory_space<vmem>>, vector<16x16x128xbf16>
    %111 = vector.shape_cast %110 : vector<16x16x128xbf16> to vector<256x128xbf16>
    %c1024 = arith.constant 1024 : index
    %c0_138 = arith.constant 0 : index
    %112 = vector.load %arg8[%c1024, %c0_138] : memref<1152x128xbf16, #tpu.memory_space<vmem>>, vector<128x128xbf16>
    %cst_139 = arith.constant dense<0.000000e+00> : vector<256x128xf32>
    %113 = tpu.matmul %111, %112, %cst_139 {dimension_numbers = #tpu.dot_dimension_numbers<[1], [0], [0], [1], [0, 0, 1, 1], [], []>} : vector<256x128xbf16>, vector<128x128xbf16>, vector<256x128xf32> -> vector<256x128xf32>
    %114 = arith.addf %109, %113 : vector<256x128xf32>
    %c0_140 = arith.constant 0 : index
    %c0_141 = arith.constant 0 : index
    %115 = vector.load %arg9[%c0_140, %c0_141] : memref<1x128xf32, #tpu.memory_space<vmem>>, vector<1x128xf32>
    %116 = vector.broadcast %115 : vector<1x128xf32> to vector<256x128xf32>
    %117 = arith.mulf %114, %116 : vector<256x128xf32>
    %c0_142 = arith.constant 0 : index
    %c0_143 = arith.constant 0 : index
    %118 = vector.load %arg10[%c0_142, %c0_143] : memref<1x128xf32, #tpu.memory_space<vmem>>, vector<1x128xf32>
    %119 = vector.broadcast %118 : vector<1x128xf32> to vector<256x128xf32>
    %120 = arith.addf %117, %119 : vector<256x128xf32>
    %cst_144 = arith.constant 0.000000e+00 : f32
    %121 = vector.broadcast %cst_144 : f32 to vector<256x128xf32>
    %122 = arith.maximumf %120, %121 : vector<256x128xf32>
    %123 = vector.shape_cast %122 : vector<256x128xf32> to vector<16x16x128xf32>
    %c0_145 = arith.constant 0 : index
    %c0_146 = arith.constant 0 : index
    %c0_147 = arith.constant 0 : index
    %c0_148 = arith.constant 0 : index
    %124 = vector.load %arg11[%c0_145, %c0_146, %c0_147, %c0_148] : memref<1x16x16x128xf32, #tpu.memory_space<vmem>>, vector<1x16x16x128xf32>
    %125 = vector.shape_cast %124 : vector<1x16x16x128xf32> to vector<16x16x128xf32>
    %126 = vector.shape_cast %123 : vector<16x16x128xf32> to vector<1x16x16x128xf32>
    tpu.vector_store %arg11[%c0_145, %c0_146, %c0_147, %c0_148], %126 {strides = array<i32>} : memref<1x16x16x128xf32, #tpu.memory_space<vmem>>, vector<1x16x16x128xf32>,
    return
  }
  func.func @transform_0(%arg0: i32) -> (i32, i32, i32, i32) {
    %c0_i32 = arith.constant 0 : i32
    %c0_i32_0 = arith.constant 0 : i32
    %c0_i32_1 = arith.constant 0 : i32
    %c0_i32_2 = arith.constant 0 : i32
    return %arg0, %c0_i32, %c0_i32_0, %c0_i32_1 : i32, i32, i32, i32
  }
  func.func @transform_1(%arg0: i32) -> (i32, i32, i32, i32) {
    %c0_i32 = arith.constant 0 : i32
    %c0_i32_0 = arith.constant 0 : i32
    %c0_i32_1 = arith.constant 0 : i32
    %c0_i32_2 = arith.constant 0 : i32
    return %arg0, %c0_i32, %c0_i32_0, %c0_i32_1 : i32, i32, i32, i32
  }
  func.func @transform_2(%arg0: i32) -> (i32, i32) {
    %c0_i32 = arith.constant 0 : i32
    %c0_i32_0 = arith.constant 0 : i32
    %c0_i32_1 = arith.constant 0 : i32
    return %c0_i32, %c0_i32_0 : i32, i32
  }
  func.func @transform_3(%arg0: i32) -> (i32, i32) {
    %c0_i32 = arith.constant 0 : i32
    %c0_i32_0 = arith.constant 0 : i32
    %c0_i32_1 = arith.constant 0 : i32
    return %c0_i32, %c0_i32_0 : i32, i32
  }
  func.func @transform_4(%arg0: i32) -> (i32, i32) {
    %c0_i32 = arith.constant 0 : i32
    %c0_i32_0 = arith.constant 0 : i32
    %c0_i32_1 = arith.constant 0 : i32
    return %c0_i32, %c0_i32_0 : i32, i32
  }
  func.func @transform_5(%arg0: i32) -> (i32, i32) {
    %c0_i32 = arith.constant 0 : i32
    %c0_i32_0 = arith.constant 0 : i32
    %c0_i32_1 = arith.constant 0 : i32
    return %c0_i32, %c0_i32_0 : i32, i32
  }
  func.func @transform_6(%arg0: i32) -> (i32, i32) {
    %c0_i32 = arith.constant 0 : i32
    %c0_i32_0 = arith.constant 0 : i32
    %c0_i32_1 = arith.constant 0 : i32
    return %c0_i32, %c0_i32_0 : i32, i32
  }
  func.func @transform_7(%arg0: i32) -> (i32, i32) {
    %c0_i32 = arith.constant 0 : i32
    %c0_i32_0 = arith.constant 0 : i32
    %c0_i32_1 = arith.constant 0 : i32
    return %c0_i32, %c0_i32_0 : i32, i32
  }
  func.func @transform_8(%arg0: i32) -> (i32, i32) {
    %c0_i32 = arith.constant 0 : i32
    %c0_i32_0 = arith.constant 0 : i32
    %c0_i32_1 = arith.constant 0 : i32
    return %c0_i32, %c0_i32_0 : i32, i32
  }
  func.func @transform_9(%arg0: i32) -> (i32, i32) {
    %c0_i32 = arith.constant 0 : i32
    %c0_i32_0 = arith.constant 0 : i32
    %c0_i32_1 = arith.constant 0 : i32
    return %c0_i32, %c0_i32_0 : i32, i32
  }
  func.func @transform_10(%arg0: i32) -> (i32, i32, i32, i32) {
    %c0_i32 = arith.constant 0 : i32
    %c0_i32_0 = arith.constant 0 : i32
    %c0_i32_1 = arith.constant 0 : i32
    %c0_i32_2 = arith.constant 0 : i32
    return %arg0, %c0_i32, %c0_i32_0, %c0_i32_1 : i32, i32, i32, i32
  }
}

</mosaic_0001>

<llo_original>
// kernel: tpu_custom_call.1
$region0: #{tpu_custom_call.1}
  #allocation0 [shape = 'u32[]', space=smem, size = 0x4, offset = 0x4, fixed_abs, tag = 'smem constant byte address 0x4 - core index']
  #allocation1 [shape = 'u32[144,128]{1,0:T(1,128)}', space=vmem, size = 0x12000, scoped, tag = 'internal scratch']
  #allocation2 [shape = 'bf16[18,18,8]{2,1,0:T(8,128)(2,1)}', space=vmem, size = 0x1b000, scoped, tag = 'scratch operand']
  #allocation3 [shape = 'bf16[18,18,128]{2,1,0:T(8,128)(2,1)}', space=vmem, size = 0x1b000, scoped, tag = 'scratch operand']
  #allocation4 [shape = 'bf16[256,128]{1,0:T(8,128)(2,1)}', space=vmem, size = 0x10000, scoped, tag = 'scratch operand']
  %s0 = inlined_call_operand.vmem [shape: bf16[2,8,8,4], index: 0, kind: input, shape index: {}]
  %s1 = inlined_call_operand.vmem [shape: bf16[2,16,16,4], index: 1, kind: input, shape index: {}]
  %s2 = inlined_call_operand.vmem [shape: bf16[16,8], index: 2, kind: input, shape index: {}]
  %s3 = inlined_call_operand.vmem [shape: bf16[16,8], index: 3, kind: input, shape index: {}]
  %s4 = inlined_call_operand.vmem [shape: bf16[128,128], index: 4, kind: input, shape index: {}]
  %s5 = inlined_call_operand.vmem [shape: f32[1,128], index: 5, kind: input, shape index: {}]
  %s6 = inlined_call_operand.vmem [shape: f32[1,128], index: 6, kind: input, shape index: {}]
  %s7 = inlined_call_operand.hbm [shape: bf16[1152,128], index: 7, kind: input, shape index: {}]
  %s8 = inlined_call_operand.vmem [shape: f32[1,128], index: 8, kind: input, shape index: {}]
  %s9 = inlined_call_operand.vmem [shape: f32[1,128], index: 9, kind: input, shape index: {}]
  %s10 = inlined_call_operand.hbm [shape: f32[2,16,16,128], index: 10, kind: output, shape index: {}]
  %s11 = sld [smem:[#allocation0]]
  $region77: #{tpu_custom_call.1} parent=0
    _
  %s13 = ssub.s32 1, %s11
  %s14 = scalar_select 0, %s13, %s11
  $region1: #{tpu_custom_call.1} parent=0
    #allocation5 [shape = 'u8[294912]{0}', space=vmem, size = 0x48000, scoped, tag = 'input window, operand 7, single buffered']
    #allocation6 [shape = 's32[2]{0}', space=sflag, size = 0x8, scoped, tag = 'scoped memory for tpu_custom_call.1']
    #allocation7 [shape = 's32[2]{0}', space=sflag, size = 0x8, scoped, tag = 'scoped memory for tpu_custom_call.1']
    #allocation8 [shape = 'u8[262144]{0}', space=vmem, size = 0x40000, scoped, tag = 'output window, operand 0']
    %15 = vsyncpa [#allocation6], 0
    %16 = vsyncpa [#allocation7], 0
    %s17 = scalar_lea.sflag [#allocation7], 1
    %18 = vsyncpa %s17, 0
    loop: start=0, step=1, limit=4
    $region2: #{tpu_custom_call.1} parent=1 // loop_pre_header
      _
    $region3: #{tpu_custom_call.1} parent=1 // loop_header
      %s20 = sphi 0, %s24
      %p21 = scmp.ge.s32.totalorder %s20, 4
      %s30 = sphi 0, %s32
      %s33 = sphi 0, %s30
      %s34 = sphi 0, %s33
      %s50 = sphi 0, %s34
      %s56 = sphi 0, %s58
      %s59 = sphi 0, %s56
      %s60 = sphi 0, %s59
      %s76 = sphi 0, %s60
      %s80 = sphi 0, %s80
      %s82 = sphi 0, %s80
      %s83 = sphi 0, %s82
      %s97 = sphi 0, %s83
      %s101 = sphi 0, %s101
      %s103 = sphi 0, %s101
      %s104 = sphi 0, %s103
      %s118 = sphi 0, %s104
      %s122 = sphi 0, %s122
      %s124 = sphi 0, %s122
      %s125 = sphi 0, %s124
      %s139 = sphi 0, %s125
      %s143 = sphi 0, %s143
      %s145 = sphi 0, %s143
      %s146 = sphi 0, %s145
      %s160 = sphi 0, %s146
      %s164 = sphi 0, %s164
      %s166 = sphi 0, %s164
      %s167 = sphi 0, %s166
      %s181 = sphi 0, %s167
      %s185 = sphi 0, %s185
      %s187 = sphi 0, %s185
      %s188 = sphi 0, %s187
      %s202 = sphi 0, %s188
      %s206 = sphi 0, %s206
      %s208 = sphi 0, %s206
      %s209 = sphi 0, %s208
      %s223 = sphi 0, %s209
      %s227 = sphi 0, %s227
      %s229 = sphi 0, %s227
      %s230 = sphi 0, %s229
      %s244 = sphi 0, %s230
      %s250 = sphi 0, %s252
      %s253 = sphi 0, %s250
      %s254 = sphi 0, %s253
      %s270 = sphi 0, %s254
    $region4: #{tpu_custom_call.1} parent=1 // loop_header_branch
      %23 = sbr.rel (%p21) target = $region8
    $region5: #{tpu_custom_call.1} parent=1 // loop_body
      %s25 = ssub.s32 %s20, 1
      %s26 = ssub.s32 %s20, 2
      %s27 = sadd.s32 %s20, 1
      %s28 = ssub.s32 %s20, %s27
      %p29 = scmp.eq.s32.totalorder %s28, 0
      %s31 = sadd.s32 %s30, 1
      %s32 = scalar_select %p29, %s30, %s31
      %p35 = pneg %p29
      %p36 = scmp.eq.s32.totalorder %s20, 1
      %p37 = por %p35, %p36
      %p38 = scmp.ne.s32.totalorder %s30, %s33
      %p39 = scmp.eq.s32.totalorder %s20, 0
      %p40 = por %p38, %p39
      %p41 = scmp.ne.s32.totalorder %s30, %s33
      %p42 = scmp.eq.s32.totalorder %s25, 1
      %p43 = por %p41, %p42
      %p44 = scmp.ne.s32.totalorder %s33, %s34
      %p45 = scmp.eq.s32.totalorder %s25, 0
      %p46 = por %p44, %p45
      %p47 = scmp.ne.s32.totalorder %s33, %s34
      %p48 = scmp.eq.s32.totalorder %s26, 1
      %p49 = por %p47, %p48
      %p51 = scmp.ne.s32.totalorder %s34, %s50
      %p52 = scmp.eq.s32.totalorder %s26, 0
      %p53 = por %p51, %p52
      %s54 = ssub.s32 %s20, %s27
      %p55 = scmp.eq.s32.totalorder %s54, 0
      %s57 = sadd.s32 %s56, 1
      %s58 = scalar_select %p55, %s56, %s57
      %p61 = pneg %p55
      %p62 = scmp.eq.s32.totalorder %s20, 1
      %p63 = por %p61, %p62
      %p64 = scmp.ne.s32.totalorder %s56, %s59
      %p65 = scmp.eq.s32.totalorder %s20, 0
      %p66 = por %p64, %p65
      %p67 = scmp.ne.s32.totalorder %s56, %s59
      %p68 = scmp.eq.s32.totalorder %s25, 1
      %p69 = por %p67, %p68
      %p70 = scmp.ne.s32.totalorder %s59, %s60
      %p71 = scmp.eq.s32.totalorder %s25, 0
      %p72 = por %p70, %p71
      %p73 = scmp.ne.s32.totalorder %s59, %s60
      %p74 = scmp.eq.s32.totalorder %s26, 1
      %p75 = por %p73, %p74
      %p77 = scmp.ne.s32.totalorder %s60, %s76
      %p78 = scmp.eq.s32.totalorder %s26, 0
      %p79 = por %p77, %p78
      %s81 = sadd.s32 %s80, 1
      %p84 = scmp.eq.s32.totalorder %s20, 1
      %p85 = scmp.ne.s32.totalorder %s80, %s82
      %p86 = scmp.eq.s32.totalorder %s20, 0
      %p87 = por %p85, %p86
      %p88 = scmp.ne.s32.totalorder %s80, %s82
      %p89 = scmp.eq.s32.totalorder %s25, 1
      %p90 = por %p88, %p89
      %p91 = scmp.ne.s32.totalorder %s82, %s83
      %p92 = scmp.eq.s32.totalorder %s25, 0
      %p93 = por %p91, %p92
      %p94 = scmp.ne.s32.totalorder %s82, %s83
      %p95 = scmp.eq.s32.totalorder %s26, 1
      %p96 = por %p94, %p95
      %p98 = scmp.ne.s32.totalorder %s83, %s97
      %p99 = scmp.eq.s32.totalorder %s26, 0
      %p100 = por %p98, %p99
      %s102 = sadd.s32 %s101, 1
      %p105 = scmp.eq.s32.totalorder %s20, 1
      %p106 = scmp.ne.s32.totalorder %s101, %s103
      %p107 = scmp.eq.s32.totalorder %s20, 0
      %p108 = por %p106, %p107
      %p109 = scmp.ne.s32.totalorder %s101, %s103
      %p110 = scmp.eq.s32.totalorder %s25, 1
      %p111 = por %p109, %p110
      %p112 = scmp.ne.s32.totalorder %s103, %s104
      %p113 = scmp.eq.s32.totalorder %s25, 0
      %p114 = por %p112, %p113
      %p115 = scmp.ne.s32.totalorder %s103, %s104
      %p116 = scmp.eq.s32.totalorder %s26, 1
      %p117 = por %p115, %p116
      %p119 = scmp.ne.s32.totalorder %s104, %s118
      %p120 = scmp.eq.s32.totalorder %s26, 0
      %p121 = por %p119, %p120
      %s123 = sadd.s32 %s122, 1
      %p126 = scmp.eq.s32.totalorder %s20, 1
      %p127 = scmp.ne.s32.totalorder %s122, %s124
      %p128 = scmp.eq.s32.totalorder %s20, 0
      %p129 = por %p127, %p128
      %p130 = scmp.ne.s32.totalorder %s122, %s124
      %p131 = scmp.eq.s32.totalorder %s25, 1
      %p132 = por %p130, %p131
      %p133 = scmp.ne.s32.totalorder %s124, %s125
      %p134 = scmp.eq.s32.totalorder %s25, 0
      %p135 = por %p133, %p134
      %p136 = scmp.ne.s32.totalorder %s124, %s125
      %p137 = scmp.eq.s32.totalorder %s26, 1
      %p138 = por %p136, %p137
      %p140 = scmp.ne.s32.totalorder %s125, %s139
      %p141 = scmp.eq.s32.totalorder %s26, 0
      %p142 = por %p140, %p141
      %s144 = sadd.s32 %s143, 1
      %p147 = scmp.eq.s32.totalorder %s20, 1
      %p148 = scmp.ne.s32.totalorder %s143, %s145
      %p149 = scmp.eq.s32.totalorder %s20, 0
      %p150 = por %p148, %p149
      %p151 = scmp.ne.s32.totalorder %s143, %s145
      %p152 = scmp.eq.s32.totalorder %s25, 1
      %p153 = por %p151, %p152
      %p154 = scmp.ne.s32.totalorder %s145, %s146
      %p155 = scmp.eq.s32.totalorder %s25, 0
      %p156 = por %p154, %p155
      %p157 = scmp.ne.s32.totalorder %s145, %s146
      %p158 = scmp.eq.s32.totalorder %s26, 1
      %p159 = por %p157, %p158
      %p161 = scmp.ne.s32.totalorder %s146, %s160
      %p162 = scmp.eq.s32.totalorder %s26, 0
      %p163 = por %p161, %p162
      %s165 = sadd.s32 %s164, 1
      %p168 = scmp.eq.s32.totalorder %s20, 1
      %p169 = scmp.ne.s32.totalorder %s164, %s166
      %p170 = scmp.eq.s32.totalorder %s20, 0
      %p171 = por %p169, %p170
      %p172 = scmp.ne.s32.totalorder %s164, %s166
      %p173 = scmp.eq.s32.totalorder %s25, 1
      %p174 = por %p172, %p173
      %p175 = scmp.ne.s32.totalorder %s166, %s167
      %p176 = scmp.eq.s32.totalorder %s25, 0
      %p177 = por %p175, %p176
      %p178 = scmp.ne.s32.totalorder %s166, %s167
      %p179 = scmp.eq.s32.totalorder %s26, 1
      %p180 = por %p178, %p179
      %p182 = scmp.ne.s32.totalorder %s167, %s181
      %p183 = scmp.eq.s32.totalorder %s26, 0
      %p184 = por %p182, %p183
      %s186 = sadd.s32 %s185, 1
      %p189 = scmp.eq.s32.totalorder %s20, 1
      %p190 = scmp.ne.s32.totalorder %s185, %s187
      %p191 = scmp.eq.s32.totalorder %s20, 0
      %p192 = por %p190, %p191
      %p193 = scmp.ne.s32.totalorder %s185, %s187
      %p194 = scmp.eq.s32.totalorder %s25, 1
      %p195 = por %p193, %p194
      %p196 = scmp.ne.s32.totalorder %s187, %s188
      %p197 = scmp.eq.s32.totalorder %s25, 0
      %p198 = por %p196, %p197
      %p199 = scmp.ne.s32.totalorder %s187, %s188
      %p200 = scmp.eq.s32.totalorder %s26, 1
      %p201 = por %p199, %p200
      %p203 = scmp.ne.s32.totalorder %s188, %s202
      %p204 = scmp.eq.s32.totalorder %s26, 0
      %p205 = por %p203, %p204
      %s207 = sadd.s32 %s206, 1
      %p210 = scmp.eq.s32.totalorder %s20, 1
      %p211 = scmp.ne.s32.totalorder %s206, %s208
      %p212 = scmp.eq.s32.totalorder %s20, 0
      %p213 = por %p211, %p212
      %p214 = scmp.ne.s32.totalorder %s206, %s208
      %p215 = scmp.eq.s32.totalorder %s25, 1
      %p216 = por %p214, %p215
      %p217 = scmp.ne.s32.totalorder %s208, %s209
      %p218 = scmp.eq.s32.totalorder %s25, 0
      %p219 = por %p217, %p218
      %p220 = scmp.ne.s32.totalorder %s208, %s209
      %p221 = scmp.eq.s32.totalorder %s26, 1
      %p222 = por %p220, %p221
      %p224 = scmp.ne.s32.totalorder %s209, %s223
      %p225 = scmp.eq.s32.totalorder %s26, 0
      %p226 = por %p224, %p225
      %s228 = sadd.s32 %s227, 1
      %p231 = scmp.eq.s32.totalorder %s20, 1
      %p232 = scmp.ne.s32.totalorder %s227, %s229
      %p233 = scmp.eq.s32.totalorder %s20, 0
      %p234 = por %p232, %p233
      %p235 = scmp.ne.s32.totalorder %s227, %s229
      %p236 = scmp.eq.s32.totalorder %s25, 1
      %p237 = por %p235, %p236
      %p238 = scmp.ne.s32.totalorder %s229, %s230
      %p239 = scmp.eq.s32.totalorder %s25, 0
      %p240 = por %p238, %p239
      %p241 = scmp.ne.s32.totalorder %s229, %s230
      %p242 = scmp.eq.s32.totalorder %s26, 1
      %p243 = por %p241, %p242
      %p245 = scmp.ne.s32.totalorder %s230, %s244
      %p246 = scmp.eq.s32.totalorder %s26, 0
      %p247 = por %p245, %p246
      %s248 = ssub.s32 %s20, %s27
      %p249 = scmp.eq.s32.totalorder %s248, 0
      %s251 = sadd.s32 %s250, 1
      %s252 = scalar_select %p249, %s250, %s251
      %p255 = pneg %p249
      %p256 = scmp.eq.s32.totalorder %s20, 1
      %p257 = por %p255, %p256
      %p258 = scmp.ne.s32.totalorder %s250, %s253
      %p259 = scmp.eq.s32.totalorder %s20, 0
      %p260 = por %p258, %p259
      %p261 = scmp.ne.s32.totalorder %s250, %s253
      %p262 = scmp.eq.s32.totalorder %s25, 1
      %p263 = por %p261, %p262
      %p264 = scmp.ne.s32.totalorder %s253, %s254
      %p265 = scmp.eq.s32.totalorder %s25, 0
      %p266 = por %p264, %p265
      %p267 = scmp.ne.s32.totalorder %s253, %s254
      %p268 = scmp.eq.s32.totalorder %s26, 1
      %p269 = por %p267, %p268
      %p271 = scmp.ne.s32.totalorder %s254, %s270
      %p272 = scmp.eq.s32.totalorder %s26, 0
      %p273 = por %p271, %p272
      %p274 = scmp.le.s32.totalorder 1, %s20
      %p275 = scmp.lt.s32.totalorder %s20, 3
      %p276 = pnand %p274, %p275
      %p277 = pneg %p276
      // Predicated region
      $region9: #{tpu_custom_call.1} parent=5 // pred_check
        _
      $region10: #{tpu_custom_call.1} parent=5 // pred_check_branch
        %279 = sbr.rel (%p276) target = $region12
      $region11: #{tpu_custom_call.1} parent=5 // pred_region
        %s280 = ssub.s32 %s20, 1
        // Predicated region
        $region13: #{tpu_custom_call.1} parent=11 // pred_check
          %p281 = pneg %p93
        $region14: #{tpu_custom_call.1} parent=11 // pred_check_branch
          %283 = sbr.rel (%p281) target = $region16
        $region15: #{tpu_custom_call.1} parent=11 // pred_region
          _
        $region16: #{tpu_custom_call.1} parent=11 // pred_fallthru
          _
        // Predicated region
        $region17: #{tpu_custom_call.1} parent=11 // pred_check
          %p284 = pneg %p114
        $region18: #{tpu_custom_call.1} parent=11 // pred_check_branch
          %286 = sbr.rel (%p284) target = $region20
        $region19: #{tpu_custom_call.1} parent=11 // pred_region
          _
        $region20: #{tpu_custom_call.1} parent=11 // pred_fallthru
          _
        // Predicated region
        $region21: #{tpu_custom_call.1} parent=11 // pred_check
          %p287 = pneg %p135
        $region22: #{tpu_custom_call.1} parent=11 // pred_check_branch
          %289 = sbr.rel (%p287) target = $region24
        $region23: #{tpu_custom_call.1} parent=11 // pred_region
          _
        $region24: #{tpu_custom_call.1} parent=11 // pred_fallthru
          _
        // Predicated region
        $region25: #{tpu_custom_call.1} parent=11 // pred_check
          %p290 = pneg %p156
        $region26: #{tpu_custom_call.1} parent=11 // pred_check_branch
          %292 = sbr.rel (%p290) target = $region28
        $region27: #{tpu_custom_call.1} parent=11 // pred_region
          _
        $region28: #{tpu_custom_call.1} parent=11 // pred_fallthru
          _
        // Predicated region
        $region29: #{tpu_custom_call.1} parent=11 // pred_check
          %p293 = pneg %p177
        $region30: #{tpu_custom_call.1} parent=11 // pred_check_branch
          %295 = sbr.rel (%p293) target = $region32
        $region31: #{tpu_custom_call.1} parent=11 // pred_region
          _
        $region32: #{tpu_custom_call.1} parent=11 // pred_fallthru
          _
        // Predicated region
        $region33: #{tpu_custom_call.1} parent=11 // pred_check
          %p296 = pneg %p198
        $region34: #{tpu_custom_call.1} parent=11 // pred_check_branch
          %298 = sbr.rel (%p296) target = $region36
        $region35: #{tpu_custom_call.1} parent=11 // pred_region
          %s300 = ssub.s32 9216, 9216
          %301 = vsyncadd [#allocation6], %s300
          %s302 = sshll.u32 [#allocation5], 4
          %s303 = int_to_ptr.vmem [resolvable:$true] %s302
          %308 = dma.hbm_to_vmem [thread:$0]  %s7, 9216, %s303, [#allocation6], 64, 64, 4
        $region36: #{tpu_custom_call.1} parent=11 // pred_fallthru
          _
        // Predicated region
        $region37: #{tpu_custom_call.1} parent=11 // pred_check
          %p309 = pneg %p219
        $region38: #{tpu_custom_call.1} parent=11 // pred_check_branch
          %311 = sbr.rel (%p309) target = $region40
        $region39: #{tpu_custom_call.1} parent=11 // pred_region
          _
        $region40: #{tpu_custom_call.1} parent=11 // pred_fallthru
          _
        // Predicated region
        $region41: #{tpu_custom_call.1} parent=11 // pred_check
          %p312 = pneg %p240
        $region42: #{tpu_custom_call.1} parent=11 // pred_check_branch
          %314 = sbr.rel (%p312) target = $region44
        $region43: #{tpu_custom_call.1} parent=11 // pred_region
          _
        $region44: #{tpu_custom_call.1} parent=11 // pred_fallthru
          _
      $region12: #{tpu_custom_call.1} parent=5 // pred_fallthru
        _
      %p315 = scmp.lt.s32.totalorder %s20, 2
      // Predicated region
      $region45: #{tpu_custom_call.1} parent=5 // pred_check
        %p316 = pneg %p315
      $region46: #{tpu_custom_call.1} parent=5 // pred_check_branch
        %318 = sbr.rel (%p316) target = $region48
      $region47: #{tpu_custom_call.1} parent=5 // pred_region
        // Predicated region
        $region49: #{tpu_custom_call.1} parent=47 // pred_check
          %p319 = pneg %p40
        $region50: #{tpu_custom_call.1} parent=47 // pred_check_branch
          %321 = sbr.rel (%p319) target = $region52
        $region51: #{tpu_custom_call.1} parent=47 // pred_region
          %p322 = scmp.lt.s32.totalorder %s20, 1
          %s323 = scalar_select %p322, %s20, 1
          %s324 = smul.addr %s323, 8
          %s325 = smul.addr %s324, 4
          %s326 = scalar_lea.vmem %s0, %s325
        $region52: #{tpu_custom_call.1} parent=47 // pred_fallthru
          _
        // Predicated region
        $region53: #{tpu_custom_call.1} parent=47 // pred_check
          %p327 = pneg %p66
        $region54: #{tpu_custom_call.1} parent=47 // pred_check_branch
          %329 = sbr.rel (%p327) target = $region56
        $region55: #{tpu_custom_call.1} parent=47 // pred_region
          %p330 = scmp.lt.s32.totalorder %s20, 1
          %s331 = scalar_select %p330, %s20, 1
          %s332 = smul.addr %s331, 32
          %s333 = smul.addr %s332, 4
          %s334 = scalar_lea.vmem %s1, %s333
        $region56: #{tpu_custom_call.1} parent=47 // pred_fallthru
          _
      $region48: #{tpu_custom_call.1} parent=5 // pred_fallthru
        _
      %p335 = scmp.le.s32.totalorder 1, %s20
      %p336 = scmp.lt.s32.totalorder %s20, 3
      %p337 = pnand %p335, %p336
      %p338 = pneg %p337
      // Predicated region
      $region57: #{tpu_custom_call.1} parent=5 // pred_check
        _
      $region58: #{tpu_custom_call.1} parent=5 // pred_check_branch
        %340 = sbr.rel (%p337) target = $region60
      $region59: #{tpu_custom_call.1} parent=5 // pred_region
        %s341 = ssub.s32 %s20, 1
        // Predicated region
        $region61: #{tpu_custom_call.1} parent=59 // pred_check
          %p342 = pneg %p198
        $region62: #{tpu_custom_call.1} parent=59 // pred_check_branch
          %344 = sbr.rel (%p342) target = $region64
        $region63: #{tpu_custom_call.1} parent=59 // pred_region
          %345 = dma.done [#allocation6], 9216
        $region64: #{tpu_custom_call.1} parent=59 // pred_fallthru
          _
        %p346 = scmp.lt.s32.totalorder %s25, 1
        %s347 = scalar_select %p346, %s25, 1
        %s348 = smul.addr %s347, 8
        %s349 = smul.addr %s348, 4
        %s350 = scalar_lea.vmem %s0, %s349
        %p351 = pneg %p46
        %p352 = pneg %p43
        %p353 = scmp.lt.s32.totalorder %s25, 1
        %s354 = scalar_select %p353, %s25, 1
        %s355 = smul.addr %s354, 32
        %s356 = smul.addr %s355, 4
        %s357 = scalar_lea.vmem %s1, %s356
        %p358 = pneg %p72
        %p359 = pneg %p69
        %p360 = pneg %p93
        %p361 = pneg %p90
        %p362 = pneg %p114
        %p363 = pneg %p111
        %p364 = pneg %p135
        %p365 = pneg %p132
        %p366 = pneg %p156
        %p367 = pneg %p153
        %p368 = pneg %p177
        %p369 = pneg %p174
        %p370 = pneg %p198
        %p371 = pneg %p195
        %p372 = pneg %p219
        %p373 = pneg %p216
        %p374 = pneg %p240
        %p375 = pneg %p237
        %p376 = pneg %p266
        %p377 = pneg %p263
        %s378 = sand.u32 %s253, 1
        %s379 = scalar_lea.sflag [#allocation7], %s378
        %s380 = sand.u32 %s253, 1
        %s381 = smul.addr %s380, 256
        %s382 = scalar_lea.vmem [#allocation8], %s381
        %p383 = scmp.lt.s32.totalorder %s25, 1
        %s384 = scalar_select %p383, %s25, 1
        %s385 = smul.addr %s384, 8
        %s386 = smul.addr %s385, 4
        %s387 = scalar_lea.vmem %s0, %s386
        %p388 = scmp.lt.s32.totalorder %s25, 1
        %s389 = scalar_select %p388, %s25, 1
        %s390 = smul.addr %s389, 32
        %s391 = smul.addr %s390, 4
        %s392 = scalar_lea.vmem %s1, %s391
        %vm394 = vcmask 60416
        %395 = vst.msk [vmem:[#allocation2] sm:$0xf] %vm394, 0
        %396 = vst.msk [vmem:[#allocation2 + $0x4] sm:$0xf] %vm394, 0
        %vm397 = vcmask 57344
        %398 = vst.msk [vmem:[#allocation2 + $0x8] sm:$0x1] %vm397, 0
        %s399 = scalar_lea.vmem [#allocation2], 204
        %400 = vst.msk [vmem:[%s399] sm:$0xf] %vm394, 0
        %401 = vst.msk [vmem:[%s399 + $0x4] sm:$0xf] %vm394, 0
        %402 = vst.msk [vmem:[%s399 + $0x8] sm:$0x1] %vm397, 0
        %vm403 = vcmask 57344
        %vm404 = vsmask.f32 256
        %vm405 = vmand %vm403, %vm404
        %v406 = vld [vmem:[#allocation2] sm:$0x1]
        %v407 = vsel %vm405, 0, %v406
        %408 = vst [vmem:[#allocation2] sm:$0x1] %v407
        %v409 = vld [vmem:[#allocation2 + $0xc] sm:$0x1]
        %v410 = vsel %vm405, 0, %v409
        %411 = vst [vmem:[#allocation2 + $0xc] sm:$0x1] %v410
        %v412 = vld [vmem:[#allocation2 + $0x18] sm:$0x1]
        %v413 = vsel %vm405, 0, %v412
        %414 = vst [vmem:[#allocation2 + $0x18] sm:$0x1] %v413
        %v415 = vld [vmem:[#allocation2 + $0x24] sm:$0x1]
        %v416 = vsel %vm405, 0, %v415
        %417 = vst [vmem:[#allocation2 + $0x24] sm:$0x1] %v416
        %v418 = vld [vmem:[#allocation2 + $0x30] sm:$0x1]
        %v419 = vsel %vm405, 0, %v418
        %420 = vst [vmem:[#allocation2 + $0x30] sm:$0x1] %v419
        %v421 = vld [vmem:[#allocation2 + $0x3c] sm:$0x1]
        %v422 = vsel %vm405, 0, %v421
        %423 = vst [vmem:[#allocation2 + $0x3c] sm:$0x1] %v422
        %v424 = vld [vmem:[#allocation2 + $0x48] sm:$0x1]
        %v425 = vsel %vm405, 0, %v424
        %426 = vst [vmem:[#allocation2 + $0x48] sm:$0x1] %v425
        %v427 = vld [vmem:[#allocation2 + $0x54] sm:$0x1]
        %v428 = vsel %vm405, 0, %v427
        %429 = vst [vmem:[#allocation2 + $0x54] sm:$0x1] %v428
        %v430 = vld [vmem:[#allocation2 + $0x60] sm:$0x1]
        %v431 = vsel %vm405, 0, %v430
        %432 = vst [vmem:[#allocation2 + $0x60] sm:$0x1] %v431
        %v433 = vld [vmem:[#allocation2 + $0x6c] sm:$0x1]
        %v434 = vsel %vm405, 0, %v433
        %435 = vst [vmem:[#allocation2 + $0x6c] sm:$0x1] %v434
        %v436 = vld [vmem:[#allocation2 + $0x78] sm:$0x1]
        %v437 = vsel %vm405, 0, %v436
        %438 = vst [vmem:[#allocation2 + $0x78] sm:$0x1] %v437
        %v439 = vld [vmem:[#allocation2 + $0x84] sm:$0x1]
        %v440 = vsel %vm405, 0, %v439
        %441 = vst [vmem:[#allocation2 + $0x84] sm:$0x1] %v440
        %v442 = vld [vmem:[#allocation2 + $0x90] sm:$0x1]
        %v443 = vsel %vm405, 0, %v442
        %444 = vst [vmem:[#allocation2 + $0x90] sm:$0x1] %v443
        %v445 = vld [vmem:[#allocation2 + $0x9c] sm:$0x1]
        %v446 = vsel %vm405, 0, %v445
        %447 = vst [vmem:[#allocation2 + $0x9c] sm:$0x1] %v446
        %v448 = vld [vmem:[#allocation2 + $0xa8] sm:$0x1]
        %v449 = vsel %vm405, 0, %v448
        %450 = vst [vmem:[#allocation2 + $0xa8] sm:$0x1] %v449
        %v451 = vld [vmem:[#allocation2 + $0xb4] sm:$0x1]
        %v452 = vsel %vm405, 0, %v451
        %453 = vst [vmem:[#allocation2 + $0xb4] sm:$0x1] %v452
        %v454 = vld [vmem:[#allocation2 + $0xc0] sm:$0x1]
        %v455 = vsel %vm405, 0, %v454
        %456 = vst [vmem:[#allocation2 + $0xc0] sm:$0x1] %v455
        %v457 = vld [vmem:[#allocation2 + $0xcc] sm:$0x1]
        %v458 = vsel %vm405, 0, %v457
        %459 = vst [vmem:[#allocation2 + $0xcc] sm:$0x1] %v458
        %vm460 = vsmask.f32 7938
        %vm461 = vmand %vm403, %vm460
        %v462 = vld [vmem:[#allocation2 + $0x8] sm:$0x1]
        %v463 = vsel %vm461, 0, %v462
        %464 = vst [vmem:[#allocation2 + $0x8] sm:$0x1] %v463
        %v465 = vld [vmem:[#allocation2 + $0x14] sm:$0x1]
        %v466 = vsel %vm461, 0, %v465
        %467 = vst [vmem:[#allocation2 + $0x14] sm:$0x1] %v466
        %v468 = vld [vmem:[#allocation2 + $0x20] sm:$0x1]
        %v469 = vsel %vm461, 0, %v468
        %470 = vst [vmem:[#allocation2 + $0x20] sm:$0x1] %v469
        %v471 = vld [vmem:[#allocation2 + $0x2c] sm:$0x1]
        %v472 = vsel %vm461, 0, %v471
        %473 = vst [vmem:[#allocation2 + $0x2c] sm:$0x1] %v472
        %v474 = vld [vmem:[#allocation2 + $0x38] sm:$0x1]
        %v475 = vsel %vm461, 0, %v474
        %476 = vst [vmem:[#allocation2 + $0x38] sm:$0x1] %v475
        %v477 = vld [vmem:[#allocation2 + $0x44] sm:$0x1]
        %v478 = vsel %vm461, 0, %v477
        %479 = vst [vmem:[#allocation2 + $0x44] sm:$0x1] %v478
        %v480 = vld [vmem:[#allocation2 + $0x50] sm:$0x1]
        %v481 = vsel %vm461, 0, %v480
        %482 = vst [vmem:[#allocation2 + $0x50] sm:$0x1] %v481
        %v483 = vld [vmem:[#allocation2 + $0x5c] sm:$0x1]
        %v484 = vsel %vm461, 0, %v483
        %485 = vst [vmem:[#allocation2 + $0x5c] sm:$0x1] %v484
        %v486 = vld [vmem:[#allocation2 + $0x68] sm:$0x1]
        %v487 = vsel %vm461, 0, %v486
        %488 = vst [vmem:[#allocation2 + $0x68] sm:$0x1] %v487
        %v489 = vld [vmem:[#allocation2 + $0x74] sm:$0x1]
        %v490 = vsel %vm461, 0, %v489
        %491 = vst [vmem:[#allocation2 + $0x74] sm:$0x1] %v490
        %v492 = vld [vmem:[#allocation2 + $0x80] sm:$0x1]
        %v493 = vsel %vm461, 0, %v492
        %494 = vst [vmem:[#allocation2 + $0x80] sm:$0x1] %v493
        %v495 = vld [vmem:[#allocation2 + $0x8c] sm:$0x1]
        %v496 = vsel %vm461, 0, %v495
        %497 = vst [vmem:[#allocation2 + $0x8c] sm:$0x1] %v496
        %v498 = vld [vmem:[#allocation2 + $0x98] sm:$0x1]
        %v499 = vsel %vm461, 0, %v498
        %500 = vst [vmem:[#allocation2 + $0x98] sm:$0x1] %v499
        %v501 = vld [vmem:[#allocation2 + $0xa4] sm:$0x1]
        %v502 = vsel %vm461, 0, %v501
        %503 = vst [vmem:[#allocation2 + $0xa4] sm:$0x1] %v502
        %v504 = vld [vmem:[#allocation2 + $0xb0] sm:$0x1]
        %v505 = vsel %vm461, 0, %v504
        %506 = vst [vmem:[#allocation2 + $0xb0] sm:$0x1] %v505
        %v507 = vld [vmem:[#allocation2 + $0xbc] sm:$0x1]
        %v508 = vsel %vm461, 0, %v507
        %509 = vst [vmem:[#allocation2 + $0xbc] sm:$0x1] %v508
        %v510 = vld [vmem:[#allocation2 + $0xc8] sm:$0x1]
        %v511 = vsel %vm461, 0, %v510
        %512 = vst [vmem:[#allocation2 + $0xc8] sm:$0x1] %v511
        %v513 = vld [vmem:[#allocation2 + $0xd4] sm:$0x1]
        %v514 = vsel %vm461, 0, %v513
        %515 = vst [vmem:[#allocation2 + $0xd4] sm:$0x1] %v514
        %516 = vst [vmem:[#allocation3] sm:$0xf] 0
        %517 = vst [vmem:[#allocation3 + $0x4] sm:$0xf] 0
        %518 = vst [vmem:[#allocation3 + $0x8] sm:$0x1] 0
        %s519 = scalar_lea.vmem [#allocation3], 204
        %520 = vst [vmem:[%s519] sm:$0xf] 0
        %521 = vst [vmem:[%s519 + $0x4] sm:$0xf] 0
        %522 = vst [vmem:[%s519 + $0x8] sm:$0x1] 0
        %vm523 = vcmask 1040384
        %vm524 = vmand %vm523, %vm404
        %v525 = vld [vmem:[#allocation3] sm:$0x1]
        %v526 = vsel %vm524, 0, %v525
        %527 = vst [vmem:[#allocation3] sm:$0x1] %v526
        %v528 = vld [vmem:[#allocation3 + $0xc] sm:$0x1]
        %v529 = vsel %vm524, 0, %v528
        %530 = vst [vmem:[#allocation3 + $0xc] sm:$0x1] %v529
        %v531 = vld [vmem:[#allocation3 + $0x18] sm:$0x1]
        %v532 = vsel %vm524, 0, %v531
        %533 = vst [vmem:[#allocation3 + $0x18] sm:$0x1] %v532
        %v534 = vld [vmem:[#allocation3 + $0x24] sm:$0x1]
        %v535 = vsel %vm524, 0, %v534
        %536 = vst [vmem:[#allocation3 + $0x24] sm:$0x1] %v535
        %v537 = vld [vmem:[#allocation3 + $0x30] sm:$0x1]
        %v538 = vsel %vm524, 0, %v537
        %539 = vst [vmem:[#allocation3 + $0x30] sm:$0x1] %v538
        %v540 = vld [vmem:[#allocation3 + $0x3c] sm:$0x1]
        %v541 = vsel %vm524, 0, %v540
        %542 = vst [vmem:[#allocation3 + $0x3c] sm:$0x1] %v541
        %v543 = vld [vmem:[#allocation3 + $0x48] sm:$0x1]
        %v544 = vsel %vm524, 0, %v543
        %545 = vst [vmem:[#allocation3 + $0x48] sm:$0x1] %v544
        %v546 = vld [vmem:[#allocation3 + $0x54] sm:$0x1]
        %v547 = vsel %vm524, 0, %v546
        %548 = vst [vmem:[#allocation3 + $0x54] sm:$0x1] %v547
        %v549 = vld [vmem:[#allocation3 + $0x60] sm:$0x1]
        %v550 = vsel %vm524, 0, %v549
        %551 = vst [vmem:[#allocation3 + $0x60] sm:$0x1] %v550
        %v552 = vld [vmem:[#allocation3 + $0x6c] sm:$0x1]
        %v553 = vsel %vm524, 0, %v552
        %554 = vst [vmem:[#allocation3 + $0x6c] sm:$0x1] %v553
        %v555 = vld [vmem:[#allocation3 + $0x78] sm:$0x1]
        %v556 = vsel %vm524, 0, %v555
        %557 = vst [vmem:[#allocation3 + $0x78] sm:$0x1] %v556
        %v558 = vld [vmem:[#allocation3 + $0x84] sm:$0x1]
        %v559 = vsel %vm524, 0, %v558
        %560 = vst [vmem:[#allocation3 + $0x84] sm:$0x1] %v559
        %v561 = vld [vmem:[#allocation3 + $0x90] sm:$0x1]
        %v562 = vsel %vm524, 0, %v561
        %563 = vst [vmem:[#allocation3 + $0x90] sm:$0x1] %v562
        %v564 = vld [vmem:[#allocation3 + $0x9c] sm:$0x1]
        %v565 = vsel %vm524, 0, %v564
        %566 = vst [vmem:[#allocation3 + $0x9c] sm:$0x1] %v565
        %v567 = vld [vmem:[#allocation3 + $0xa8] sm:$0x1]
        %v568 = vsel %vm524, 0, %v567
        %569 = vst [vmem:[#allocation3 + $0xa8] sm:$0x1] %v568
        %v570 = vld [vmem:[#allocation3 + $0xb4] sm:$0x1]
        %v571 = vsel %vm524, 0, %v570
        %572 = vst [vmem:[#allocation3 + $0xb4] sm:$0x1] %v571
        %v573 = vld [vmem:[#allocation3 + $0xc0] sm:$0x1]
        %v574 = vsel %vm524, 0, %v573
        %575 = vst [vmem:[#allocation3 + $0xc0] sm:$0x1] %v574
        %v576 = vld [vmem:[#allocation3 + $0xcc] sm:$0x1]
        %v577 = vsel %vm524, 0, %v576
        %578 = vst [vmem:[#allocation3 + $0xcc] sm:$0x1] %v577
        %vm579 = vmand %vm523, %vm460
        %v580 = vld [vmem:[#allocation3 + $0x8] sm:$0x1]
        %v581 = vsel %vm579, 0, %v580
        %582 = vst [vmem:[#allocation3 + $0x8] sm:$0x1] %v581
        %v583 = vld [vmem:[#allocation3 + $0x14] sm:$0x1]
        %v584 = vsel %vm579, 0, %v583
        %585 = vst [vmem:[#allocation3 + $0x14] sm:$0x1] %v584
        %v586 = vld [vmem:[#allocation3 + $0x20] sm:$0x1]
        %v587 = vsel %vm579, 0, %v586
        %588 = vst [vmem:[#allocation3 + $0x20] sm:$0x1] %v587
        %v589 = vld [vmem:[#allocation3 + $0x2c] sm:$0x1]
        %v590 = vsel %vm579, 0, %v589
        %591 = vst [vmem:[#allocation3 + $0x2c] sm:$0x1] %v590
        %v592 = vld [vmem:[#allocation3 + $0x38] sm:$0x1]
        %v593 = vsel %vm579, 0, %v592
        %594 = vst [vmem:[#allocation3 + $0x38] sm:$0x1] %v593
        %v595 = vld [vmem:[#allocation3 + $0x44] sm:$0x1]
        %v596 = vsel %vm579, 0, %v595
        %597 = vst [vmem:[#allocation3 + $0x44] sm:$0x1] %v596
        %v598 = vld [vmem:[#allocation3 + $0x50] sm:$0x1]
        %v599 = vsel %vm579, 0, %v598
        %600 = vst [vmem:[#allocation3 + $0x50] sm:$0x1] %v599
        %v601 = vld [vmem:[#allocation3 + $0x5c] sm:$0x1]
        %v602 = vsel %vm579, 0, %v601
        %603 = vst [vmem:[#allocation3 + $0x5c] sm:$0x1] %v602
        %v604 = vld [vmem:[#allocation3 + $0x68] sm:$0x1]
        %v605 = vsel %vm579, 0, %v604
        %606 = vst [vmem:[#allocation3 + $0x68] sm:$0x1] %v605
        %v607 = vld [vmem:[#allocation3 + $0x74] sm:$0x1]
        %v608 = vsel %vm579, 0, %v607
        %609 = vst [vmem:[#allocation3 + $0x74] sm:$0x1] %v608
        %v610 = vld [vmem:[#allocation3 + $0x80] sm:$0x1]
        %v611 = vsel %vm579, 0, %v610
        %612 = vst [vmem:[#allocation3 + $0x80] sm:$0x1] %v611
        %v613 = vld [vmem:[#allocation3 + $0x8c] sm:$0x1]
        %v614 = vsel %vm579, 0, %v613
        %615 = vst [vmem:[#allocation3 + $0x8c] sm:$0x1] %v614
        %v616 = vld [vmem:[#allocation3 + $0x98] sm:$0x1]
        %v617 = vsel %vm579, 0, %v616
        %618 = vst [vmem:[#allocation3 + $0x98] sm:$0x1] %v617
        %v619 = vld [vmem:[#allocation3 + $0xa4] sm:$0x1]
        %v620 = vsel %vm579, 0, %v619
        %621 = vst [vmem:[#allocation3 + $0xa4] sm:$0x1] %v620
        %v622 = vld [vmem:[#allocation3 + $0xb0] sm:$0x1]
        %v623 = vsel %vm579, 0, %v622
        %624 = vst [vmem:[#allocation3 + $0xb0] sm:$0x1] %v623
        %v625 = vld [vmem:[#allocation3 + $0xbc] sm:$0x1]
        %v626 = vsel %vm579, 0, %v625
        %627 = vst [vmem:[#allocation3 + $0xbc] sm:$0x1] %v626
        %v628 = vld [vmem:[#allocation3 + $0xc8] sm:$0x1]
        %v629 = vsel %vm579, 0, %v628
        %630 = vst [vmem:[#allocation3 + $0xc8] sm:$0x1] %v629
        %v631 = vld [vmem:[#allocation3 + $0xd4] sm:$0x1]
        %v632 = vsel %vm579, 0, %v631
        %633 = vst [vmem:[#allocation3 + $0xd4] sm:$0x1] %v632
        %v634 = vld [vmem:[%s387] sm:$0xf]
        %v635 = vld [vmem:[%s387 + $0x4] sm:$0xf]
        %v636 = vld [vmem:[%s387 + $0x8] sm:$0xf]
        %v637 = vld [vmem:[%s387 + $0xc] sm:$0xf]
        %v638 = vld [vmem:[%s387 + $0x10] sm:$0xf]
        %v639 = vld [vmem:[%s387 + $0x14] sm:$0xf]
        %v640 = vld [vmem:[%s387 + $0x18] sm:$0xf]
        %v641 = vld [vmem:[%s387 + $0x1c] sm:$0xf]
        %v642 = vcombine.low %v634, %v638
        %v644 = vunpack.c.l.s4 1983009808
        %v645 = vunpack.c.0.s8 %v644
        %v646 = vlaneseq
        %v647 = vshrl.u32 %v646, 7
        %v648 = vsub.s32 %v645, %v647
        %v649 = vrot.slane %v642, %v648
        %v650 = vcombine.low %v636, %v640
        %v652 = vunpack.c.l.s4 1983009808
        %v653 = vunpack.c.0.s8 %v652
        %v654 = vlaneseq
        %v655 = vshrl.u32 %v654, 7
        %v656 = vsub.s32 %v653, %v655
        %v657 = vrot.slane %v650, %v656
        %v658 = vcombine.low %v649, %v657
        %v659 = vcombine.high %v649, %v657
        %v661 = vunpack.c.l.s4 1934713408
        %v662 = vunpack.c.0.s8 %v661
        %v663 = vlaneseq
        %v664 = vshrl.u32 %v663, 7
        %v665 = vsub.s32 %v662, %v664
        %v666 = vrot.slane %v658, %v665
        %v668 = vunpack.c.l.s4 1934713408
        %v669 = vunpack.c.0.s8 %v668
        %v670 = vlaneseq
        %v671 = vshrl.u32 %v670, 7
        %v672 = vsub.s32 %v669, %v671
        %v673 = vrot.slane %v659, %v672
        %v674 = vcombine.high %v666, 0
        %v675 = vcombine.high %v673, 0
        %v676 = vcombine.low %v635, %v639
        %v678 = vunpack.c.l.s4 1983009808
        %v679 = vunpack.c.0.s8 %v678
        %v680 = vlaneseq
        %v681 = vshrl.u32 %v680, 7
        %v682 = vsub.s32 %v679, %v681
        %v683 = vrot.slane %v676, %v682
        %v684 = vcombine.low %v637, %v641
        %v686 = vunpack.c.l.s4 1983009808
        %v687 = vunpack.c.0.s8 %v686
        %v688 = vlaneseq
        %v689 = vshrl.u32 %v688, 7
        %v690 = vsub.s32 %v687, %v689
        %v691 = vrot.slane %v684, %v690
        %v692 = vcombine.low %v683, %v691
        %v693 = vcombine.high %v683, %v691
        %v695 = vunpack.c.l.s4 1934713408
        %v696 = vunpack.c.0.s8 %v695
        %v697 = vlaneseq
        %v698 = vshrl.u32 %v697, 7
        %v699 = vsub.s32 %v696, %v698
        %v700 = vrot.slane %v692, %v699
        %v702 = vunpack.c.l.s4 1934713408
        %v703 = vunpack.c.0.s8 %v702
        %v704 = vlaneseq
        %v705 = vshrl.u32 %v704, 7
        %v706 = vsub.s32 %v703, %v705
        %v707 = vrot.slane %v693, %v706
        %v708 = vcombine.high %v700, 0
        %v709 = vcombine.high %v707, 0
        %v712 = vpack.i.b16 %v700, %v666
        %v713 = vshrl.u32 %v666, 16
        %v714 = vshrl.u32 %v700, 16
        %v715 = vpack.i.b16 %v714, %v713
        %v718 = vpack.i.b16 %v708, %v674
        %v719 = vshrl.u32 %v674, 16
        %v720 = vshrl.u32 %v708, 16
        %v721 = vpack.i.b16 %v720, %v719
        %v724 = vpack.i.b16 %v707, %v673
        %v725 = vshrl.u32 %v673, 16
        %v726 = vshrl.u32 %v707, 16
        %v727 = vpack.i.b16 %v726, %v725
        %v730 = vpack.i.b16 %v709, %v675
        %v731 = vshrl.u32 %v675, 16
        %v732 = vshrl.u32 %v709, 16
        %v733 = vpack.i.b16 %v732, %v731
        %v734 = vunpack.c.l.b16 %v715
        %v735 = vpack.c.b16 %v734, %v734
        %736 = vrot.lane.b32.xlu0 %v735, 4
        %v737 = vpop.permute.xlu0 %736
        %v738 = vunpack.c.l.b16 %v718
        %v739 = vpack.c.b16 %v738, %v738
        %740 = vrot.lane.b32.xlu0 %v739, 8
        %v741 = vpop.permute.xlu0 %740
        %v742 = vunpack.c.l.b16 %v721
        %v743 = vpack.c.b16 %v742, %v742
        %744 = vrot.lane.b32.xlu0 %v743, 12
        %v745 = vpop.permute.xlu0 %744
        %v746 = vunpack.c.l.b16 %v724
        %v747 = vpack.c.b16 %v746, %v746
        %748 = vrot.lane.b32.xlu0 %v747, 16
        %v749 = vpop.permute.xlu0 %748
        %v750 = vunpack.c.l.b16 %v727
        %v751 = vpack.c.b16 %v750, %v750
        %752 = vrot.lane.b32.xlu0 %v751, 20
        %v753 = vpop.permute.xlu0 %752
        %v754 = vunpack.c.l.b16 %v730
        %v755 = vpack.c.b16 %v754, %v754
        %756 = vrot.lane.b32.xlu0 %v755, 24
        %v757 = vpop.permute.xlu0 %756
        %v758 = vunpack.c.l.b16 %v733
        %v759 = vpack.c.b16 %v758, %v758
        %760 = vrot.lane.b32.xlu0 %v759, 28
        %v761 = vpop.permute.xlu0 %760
        %vm762 = vcmask 31744
        %v765 = vsel %vm762, %v712, %v737
        %vm766 = vcmask 64512
        %v768 = vsel %vm766, %v765, %v741
        %vm769 = vcmask 97280
        %v771 = vsel %vm769, %v768, %v745
        %vm772 = vcmask 130048
        %v774 = vsel %vm772, %v771, %v749
        %vm775 = vcmask 162816
        %v777 = vsel %vm775, %v774, %v753
        %vm778 = vcmask 195584
        %v780 = vsel %vm778, %v777, %v757
        %vm781 = vcmask 228352
        %v783 = vsel %vm781, %v780, %v761
        %v784 = vld [vmem:[%s2] sm:$0xf]
        %v785 = vld [vmem:[%s2 + $0x4] sm:$0xf]
        %v788 = vunpack.c.l.b16 %v784
        %v789 = vunpack.c.l.b16 %v785
        %v790 = vpack.c.b16 %v789, %v788
        %v792 = vsel %vm766, %v790, 0
        %vm794 = vcmask 1043456
        %v795 = vsel %vm794, %v783, 0
        %797 = vmatprep.subr.bf16.mxu0 0
        %798 = vmatpush1.bf16.msra.mxu0 0
        %799 = vmatprep.subr.bf16.mxu0 0
        %800 = vmatpush1.bf16.msra.mxu0 0
        %801 = vmatprep.subr.bf16.mxu0 0
        %802 = vmatpush1.bf16.msra.mxu0 0
        %803 = vmatprep.subr.bf16.mxu0 0
        %804 = vmatpush1.bf16.msra.mxu0 0
        %805 = vmatprep.subr.bf16.mxu0 0
        %806 = vmatpush1.bf16.msra.mxu0 0
        %807 = vmatprep.subr.bf16.mxu0 0
        %808 = vmatpush1.bf16.msra.mxu0 0
        %809 = vmatprep.subr.bf16.mxu0 0
        %810 = vmatpush1.bf16.msra.mxu0 0
        %811 = vmatprep.subr.bf16.mxu0 0
        %812 = vmatpush1.bf16.msra.mxu0 %v795
        %813 = vmatprep.subr.bf16.mxu0 0
        %814 = vmatpush2.bf16.msra.mxu0 0
        %815 = vmatprep.subr.bf16.mxu0 0
        %816 = vmatpush2.bf16.msra.mxu0 0
        %817 = vmatprep.subr.bf16.mxu0 0
        %818 = vmatpush2.bf16.msra.mxu0 0
        %819 = vmatprep.subr.bf16.mxu0 0
        %820 = vmatpush2.bf16.msra.mxu0 0
        %821 = vmatprep.subr.bf16.mxu0 0
        %822 = vmatpush2.bf16.msra.mxu0 0
        %823 = vmatprep.subr.bf16.mxu0 0
        %824 = vmatpush2.bf16.msra.mxu0 0
        %825 = vmatprep.subr.bf16.mxu0 0
        %826 = vmatpush2.bf16.msra.mxu0 0
        %827 = vmatprep.subr.bf16.mxu0 0
        %828 = vmatpush2.bf16.msra.mxu0 0
        %829 = vmatprep.mubr.bf16.mxu0 0
        %830 = vmatmul.mubr.bf16.gmra.mxu0 %v792
        %v831 = vpop.f32.mrf.mxu0
        %v832 = vadd.f32 0.0, %v831
        %v833 = vpop.f32.mrf.mxu0
        %v834 = vpop.f32.mrf.mxu0
        %v835 = vadd.f32 0.0, %v834
        %v836 = vpop.f32.mrf.mxu0
        %837 = vdwg.mxu0
        %840 = vrot.lane.b32.xlu0 %v832, 124
        %v841 = vpop.permute.xlu0 %840
        %842 = vrot.lane.b32.xlu0 %v835, 124
        %v843 = vpop.permute.xlu0 %842
        %846 = vrot.lane.b32.xlu0 %v832, 120
        %v847 = vpop.permute.xlu0 %846
        %848 = vrot.lane.b32.xlu0 %v835, 120
        %v849 = vpop.permute.xlu0 %848
        %852 = vrot.lane.b32.xlu0 %v832, 116
        %v853 = vpop.permute.xlu0 %852
        %854 = vrot.lane.b32.xlu0 %v835, 116
        %v855 = vpop.permute.xlu0 %854
        %858 = vrot.lane.b32.xlu0 %v832, 112
        %v859 = vpop.permute.xlu0 %858
        %860 = vrot.lane.b32.xlu0 %v835, 112
        %v861 = vpop.permute.xlu0 %860
        %864 = vrot.lane.b32.xlu0 %v832, 108
        %v865 = vpop.permute.xlu0 %864
        %866 = vrot.lane.b32.xlu0 %v835, 108
        %v867 = vpop.permute.xlu0 %866
        %870 = vrot.lane.b32.xlu0 %v832, 104
        %v871 = vpop.permute.xlu0 %870
        %872 = vrot.lane.b32.xlu0 %v835, 104
        %v873 = vpop.permute.xlu0 %872
        %876 = vrot.lane.b32.xlu0 %v832, 100
        %v877 = vpop.permute.xlu0 %876
        %878 = vrot.lane.b32.xlu0 %v835, 100
        %v879 = vpop.permute.xlu0 %878
        %v882 = vcombine.low %v832, %v847
        %v883 = vcombine.high %v832, %v847
        %v885 = vunpack.c.l.s4 1983009808
        %v886 = vunpack.c.0.s8 %v885
        %v887 = vlaneseq
        %v888 = vshrl.u32 %v887, 7
        %v889 = vsub.s32 %v886, %v888
        %v890 = vrot.slane %v882, %v889
        %v892 = vunpack.c.l.s4 1983009808
        %v893 = vunpack.c.0.s8 %v892
        %v894 = vlaneseq
        %v895 = vshrl.u32 %v894, 7
        %v896 = vsub.s32 %v893, %v895
        %v897 = vrot.slane %v883, %v896
        %v898 = vcombine.low %v841, %v853
        %v899 = vcombine.high %v841, %v853
        %v901 = vunpack.c.l.s4 1983009808
        %v902 = vunpack.c.0.s8 %v901
        %v903 = vlaneseq
        %v904 = vshrl.u32 %v903, 7
        %v905 = vsub.s32 %v902, %v904
        %v906 = vrot.slane %v898, %v905
        %v908 = vunpack.c.l.s4 1983009808
        %v909 = vunpack.c.0.s8 %v908
        %v910 = vlaneseq
        %v911 = vshrl.u32 %v910, 7
        %v912 = vsub.s32 %v909, %v911
        %v913 = vrot.slane %v899, %v912
        %v914 = vcombine.low %v859, %v871
        %v915 = vcombine.high %v859, %v871
        %v917 = vunpack.c.l.s4 1983009808
        %v918 = vunpack.c.0.s8 %v917
        %v919 = vlaneseq
        %v920 = vshrl.u32 %v919, 7
        %v921 = vsub.s32 %v918, %v920
        %v922 = vrot.slane %v914, %v921
        %v924 = vunpack.c.l.s4 1983009808
        %v925 = vunpack.c.0.s8 %v924
        %v926 = vlaneseq
        %v927 = vshrl.u32 %v926, 7
        %v928 = vsub.s32 %v925, %v927
        %v929 = vrot.slane %v915, %v928
        %v930 = vcombine.low %v865, %v877
        %v931 = vcombine.high %v865, %v877
        %v933 = vunpack.c.l.s4 1983009808
        %v934 = vunpack.c.0.s8 %v933
        %v935 = vlaneseq
        %v936 = vshrl.u32 %v935, 7
        %v937 = vsub.s32 %v934, %v936
        %v938 = vrot.slane %v930, %v937
        %v940 = vunpack.c.l.s4 1983009808
        %v941 = vunpack.c.0.s8 %v940
        %v942 = vlaneseq
        %v943 = vshrl.u32 %v942, 7
        %v944 = vsub.s32 %v941, %v943
        %v945 = vrot.slane %v931, %v944
        %v946 = vcombine.low %v890, %v906
        %v947 = vcombine.high %v890, %v906
        %v949 = vunpack.c.l.s4 1934713408
        %v950 = vunpack.c.0.s8 %v949
        %v951 = vlaneseq
        %v952 = vshrl.u32 %v951, 7
        %v953 = vsub.s32 %v950, %v952
        %v954 = vrot.slane %v946, %v953
        %v956 = vunpack.c.l.s4 1934713408
        %v957 = vunpack.c.0.s8 %v956
        %v958 = vlaneseq
        %v959 = vshrl.u32 %v958, 7
        %v960 = vsub.s32 %v957, %v959
        %v961 = vrot.slane %v947, %v960
        %v962 = vcombine.low %v897, %v913
        %v963 = vcombine.high %v897, %v913
        %v965 = vunpack.c.l.s4 1934713408
        %v966 = vunpack.c.0.s8 %v965
        %v967 = vlaneseq
        %v968 = vshrl.u32 %v967, 7
        %v969 = vsub.s32 %v966, %v968
        %v970 = vrot.slane %v962, %v969
        %v972 = vunpack.c.l.s4 1934713408
        %v973 = vunpack.c.0.s8 %v972
        %v974 = vlaneseq
        %v975 = vshrl.u32 %v974, 7
        %v976 = vsub.s32 %v973, %v975
        %v977 = vrot.slane %v963, %v976
        %v978 = vcombine.low %v922, %v938
        %v979 = vcombine.high %v922, %v938
        %v981 = vunpack.c.l.s4 1934713408
        %v982 = vunpack.c.0.s8 %v981
        %v983 = vlaneseq
        %v984 = vshrl.u32 %v983, 7
        %v985 = vsub.s32 %v982, %v984
        %v986 = vrot.slane %v978, %v985
        %v988 = vunpack.c.l.s4 1934713408
        %v989 = vunpack.c.0.s8 %v988
        %v990 = vlaneseq
        %v991 = vshrl.u32 %v990, 7
        %v992 = vsub.s32 %v989, %v991
        %v993 = vrot.slane %v979, %v992
        %v994 = vcombine.low %v929, %v945
        %v995 = vcombine.high %v929, %v945
        %v997 = vunpack.c.l.s4 1934713408
        %v998 = vunpack.c.0.s8 %v997
        %v999 = vlaneseq
        %v1000 = vshrl.u32 %v999, 7
        %v1001 = vsub.s32 %v998, %v1000
        %v1002 = vrot.slane %v994, %v1001
        %v1004 = vunpack.c.l.s4 1934713408
        %v1005 = vunpack.c.0.s8 %v1004
        %v1006 = vlaneseq
        %v1007 = vshrl.u32 %v1006, 7
        %v1008 = vsub.s32 %v1005, %v1007
        %v1009 = vrot.slane %v995, %v1008
        %v1010 = vcombine.low %v954, %v986
        %v1011 = vcombine.high %v954, %v986
        %v1012 = vcombine.low %v961, %v993
        %v1013 = vcombine.high %v961, %v993
        %v1014 = vcombine.low %v970, %v1002
        %v1015 = vcombine.high %v970, %v1002
        %v1016 = vcombine.low %v977, %v1009
        %v1017 = vcombine.high %v977, %v1009
        %v1018 = vcombine.low %v835, %v849
        %v1019 = vcombine.high %v835, %v849
        %v1021 = vunpack.c.l.s4 1983009808
        %v1022 = vunpack.c.0.s8 %v1021
        %v1023 = vlaneseq
        %v1024 = vshrl.u32 %v1023, 7
        %v1025 = vsub.s32 %v1022, %v1024
        %v1026 = vrot.slane %v1018, %v1025
        %v1028 = vunpack.c.l.s4 1983009808
        %v1029 = vunpack.c.0.s8 %v1028
        %v1030 = vlaneseq
        %v1031 = vshrl.u32 %v1030, 7
        %v1032 = vsub.s32 %v1029, %v1031
        %v1033 = vrot.slane %v1019, %v1032
        %v1034 = vcombine.low %v843, %v855
        %v1035 = vcombine.high %v843, %v855
        %v1037 = vunpack.c.l.s4 1983009808
        %v1038 = vunpack.c.0.s8 %v1037
        %v1039 = vlaneseq
        %v1040 = vshrl.u32 %v1039, 7
        %v1041 = vsub.s32 %v1038, %v1040
        %v1042 = vrot.slane %v1034, %v1041
        %v1044 = vunpack.c.l.s4 1983009808
        %v1045 = vunpack.c.0.s8 %v1044
        %v1046 = vlaneseq
        %v1047 = vshrl.u32 %v1046, 7
        %v1048 = vsub.s32 %v1045, %v1047
        %v1049 = vrot.slane %v1035, %v1048
        %v1050 = vcombine.low %v861, %v873
        %v1051 = vcombine.high %v861, %v873
        %v1053 = vunpack.c.l.s4 1983009808
        %v1054 = vunpack.c.0.s8 %v1053
        %v1055 = vlaneseq
        %v1056 = vshrl.u32 %v1055, 7
        %v1057 = vsub.s32 %v1054, %v1056
        %v1058 = vrot.slane %v1050, %v1057
        %v1060 = vunpack.c.l.s4 1983009808
        %v1061 = vunpack.c.0.s8 %v1060
        %v1062 = vlaneseq
        %v1063 = vshrl.u32 %v1062, 7
        %v1064 = vsub.s32 %v1061, %v1063
        %v1065 = vrot.slane %v1051, %v1064
        %v1066 = vcombine.low %v867, %v879
        %v1067 = vcombine.high %v867, %v879
        %v1069 = vunpack.c.l.s4 1983009808
        %v1070 = vunpack.c.0.s8 %v1069
        %v1071 = vlaneseq
        %v1072 = vshrl.u32 %v1071, 7
        %v1073 = vsub.s32 %v1070, %v1072
        %v1074 = vrot.slane %v1066, %v1073
        %v1076 = vunpack.c.l.s4 1983009808
        %v1077 = vunpack.c.0.s8 %v1076
        %v1078 = vlaneseq
        %v1079 = vshrl.u32 %v1078, 7
        %v1080 = vsub.s32 %v1077, %v1079
        %v1081 = vrot.slane %v1067, %v1080
        %v1082 = vcombine.low %v1026, %v1042
        %v1083 = vcombine.high %v1026, %v1042
        %v1085 = vunpack.c.l.s4 1934713408
        %v1086 = vunpack.c.0.s8 %v1085
        %v1087 = vlaneseq
        %v1088 = vshrl.u32 %v1087, 7
        %v1089 = vsub.s32 %v1086, %v1088
        %v1090 = vrot.slane %v1082, %v1089
        %v1092 = vunpack.c.l.s4 1934713408
        %v1093 = vunpack.c.0.s8 %v1092
        %v1094 = vlaneseq
        %v1095 = vshrl.u32 %v1094, 7
        %v1096 = vsub.s32 %v1093, %v1095
        %v1097 = vrot.slane %v1083, %v1096
        %v1098 = vcombine.low %v1033, %v1049
        %v1099 = vcombine.high %v1033, %v1049
        %v1101 = vunpack.c.l.s4 1934713408
        %v1102 = vunpack.c.0.s8 %v1101
        %v1103 = vlaneseq
        %v1104 = vshrl.u32 %v1103, 7
        %v1105 = vsub.s32 %v1102, %v1104
        %v1106 = vrot.slane %v1098, %v1105
        %v1108 = vunpack.c.l.s4 1934713408
        %v1109 = vunpack.c.0.s8 %v1108
        %v1110 = vlaneseq
        %v1111 = vshrl.u32 %v1110, 7
        %v1112 = vsub.s32 %v1109, %v1111
        %v1113 = vrot.slane %v1099, %v1112
        %v1114 = vcombine.low %v1058, %v1074
        %v1115 = vcombine.high %v1058, %v1074
        %v1117 = vunpack.c.l.s4 1934713408
        %v1118 = vunpack.c.0.s8 %v1117
        %v1119 = vlaneseq
        %v1120 = vshrl.u32 %v1119, 7
        %v1121 = vsub.s32 %v1118, %v1120
        %v1122 = vrot.slane %v1114, %v1121
        %v1124 = vunpack.c.l.s4 1934713408
        %v1125 = vunpack.c.0.s8 %v1124
        %v1126 = vlaneseq
        %v1127 = vshrl.u32 %v1126, 7
        %v1128 = vsub.s32 %v1125, %v1127
        %v1129 = vrot.slane %v1115, %v1128
        %v1130 = vcombine.low %v1065, %v1081
        %v1131 = vcombine.high %v1065, %v1081
        %v1133 = vunpack.c.l.s4 1934713408
        %v1134 = vunpack.c.0.s8 %v1133
        %v1135 = vlaneseq
        %v1136 = vshrl.u32 %v1135, 7
        %v1137 = vsub.s32 %v1134, %v1136
        %v1138 = vrot.slane %v1130, %v1137
        %v1140 = vunpack.c.l.s4 1934713408
        %v1141 = vunpack.c.0.s8 %v1140
        %v1142 = vlaneseq
        %v1143 = vshrl.u32 %v1142, 7
        %v1144 = vsub.s32 %v1141, %v1143
        %v1145 = vrot.slane %v1131, %v1144
        %v1146 = vcombine.low %v1090, %v1122
        %v1147 = vcombine.high %v1090, %v1122
        %v1148 = vcombine.low %v1097, %v1129
        %v1149 = vcombine.high %v1097, %v1129
        %v1150 = vcombine.low %v1106, %v1138
        %v1151 = vcombine.high %v1106, %v1138
        %v1152 = vcombine.low %v1113, %v1145
        %v1153 = vcombine.high %v1113, %v1145
        %v1154 = vpack.c.bf16 %v1010, %v1010
        %v1155 = vpack.c.bf16 %v1011, %v1011
        %v1156 = vpack.c.bf16 %v1012, %v1012
        %v1157 = vpack.c.bf16 %v1013, %v1013
        %v1158 = vpack.c.bf16 %v1014, %v1014
        %v1159 = vpack.c.bf16 %v1015, %v1015
        %v1160 = vpack.c.bf16 %v1016, %v1016
        %v1161 = vpack.c.bf16 %v1017, %v1017
        %v1162 = vpack.c.bf16 %v1146, %v1146
        %v1163 = vpack.c.bf16 %v1147, %v1147
        %v1164 = vpack.c.bf16 %v1148, %v1148
        %v1165 = vpack.c.bf16 %v1149, %v1149
        %v1166 = vpack.c.bf16 %v1150, %v1150
        %v1167 = vpack.c.bf16 %v1151, %v1151
        %v1168 = vpack.c.bf16 %v1152, %v1152
        %v1169 = vpack.c.bf16 %v1153, %v1153
        %v1170 = vld [vmem:[%s3] sm:$0xf]
        %v1171 = vld [vmem:[%s3 + $0x4] sm:$0xf]
        %v1174 = vunpack.c.l.b16 %v1170
        %v1175 = vunpack.c.l.b16 %v1171
        %v1176 = vpack.c.b16 %v1175, %v1174
        %v1178 = vsel %vm766, %v1176, 0
        %v1181 = vsel %vm794, %v1154, 0
        %1183 = vmatprep.subr.bf16.mxu0 0
        %1184 = vmatpush1.bf16.msra.mxu0 0
        %1185 = vmatprep.subr.bf16.mxu0 0
        %1186 = vmatpush1.bf16.msra.mxu0 0
        %1187 = vmatprep.subr.bf16.mxu0 0
        %1188 = vmatpush1.bf16.msra.mxu0 0
        %1189 = vmatprep.subr.bf16.mxu0 0
        %1190 = vmatpush1.bf16.msra.mxu0 0
        %1191 = vmatprep.subr.bf16.mxu0 0
        %1192 = vmatpush1.bf16.msra.mxu0 0
        %1193 = vmatprep.subr.bf16.mxu0 0
        %1194 = vmatpush1.bf16.msra.mxu0 0
        %1195 = vmatprep.subr.bf16.mxu0 0
        %1196 = vmatpush1.bf16.msra.mxu0 0
        %1197 = vmatprep.subr.bf16.mxu0 0
        %1198 = vmatpush1.bf16.msra.mxu0 %v1181
        %1199 = vmatprep.subr.bf16.mxu0 0
        %1200 = vmatpush2.bf16.msra.mxu0 0
        %1201 = vmatprep.subr.bf16.mxu0 0
        %1202 = vmatpush2.bf16.msra.mxu0 0
        %1203 = vmatprep.subr.bf16.mxu0 0
        %1204 = vmatpush2.bf16.msra.mxu0 0
        %1205 = vmatprep.subr.bf16.mxu0 0
        %1206 = vmatpush2.bf16.msra.mxu0 0
        %1207 = vmatprep.subr.bf16.mxu0 0
        %1208 = vmatpush2.bf16.msra.mxu0 0
        %1209 = vmatprep.subr.bf16.mxu0 0
        %1210 = vmatpush2.bf16.msra.mxu0 0
        %1211 = vmatprep.subr.bf16.mxu0 0
        %1212 = vmatpush2.bf16.msra.mxu0 0
        %1213 = vmatprep.subr.bf16.mxu0 0
        %1214 = vmatpush2.bf16.msra.mxu0 0
        %1215 = vmatprep.mubr.bf16.mxu0 0
        %1216 = vmatmul.mubr.bf16.gmra.mxu0 %v1178
        %v1217 = vpop.f32.mrf.mxu0
        %v1218 = vadd.f32 0.0, %v1217
        %v1219 = vpop.f32.mrf.mxu0
        %v1220 = vpop.f32.mrf.mxu0
        %v1221 = vadd.f32 0.0, %v1220
        %v1222 = vpop.f32.mrf.mxu0
        %1223 = vdwg.mxu0
        %v1225 = vsel %vm794, %v1155, 0
        %1227 = vmatprep.subr.bf16.mxu0 0
        %1228 = vmatpush1.bf16.msra.mxu0 0
        %1229 = vmatprep.subr.bf16.mxu0 0
        %1230 = vmatpush1.bf16.msra.mxu0 0
        %1231 = vmatprep.subr.bf16.mxu0 0
        %1232 = vmatpush1.bf16.msra.mxu0 0
        %1233 = vmatprep.subr.bf16.mxu0 0
        %1234 = vmatpush1.bf16.msra.mxu0 0
        %1235 = vmatprep.subr.bf16.mxu0 0
        %1236 = vmatpush1.bf16.msra.mxu0 0
        %1237 = vmatprep.subr.bf16.mxu0 0
        %1238 = vmatpush1.bf16.msra.mxu0 0
        %1239 = vmatprep.subr.bf16.mxu0 0
        %1240 = vmatpush1.bf16.msra.mxu0 0
        %1241 = vmatprep.subr.bf16.mxu0 0
        %1242 = vmatpush1.bf16.msra.mxu0 %v1225
        %1243 = vmatprep.subr.bf16.mxu0 0
        %1244 = vmatpush2.bf16.msra.mxu0 0
        %1245 = vmatprep.subr.bf16.mxu0 0
        %1246 = vmatpush2.bf16.msra.mxu0 0
        %1247 = vmatprep.subr.bf16.mxu0 0
        %1248 = vmatpush2.bf16.msra.mxu0 0
        %1249 = vmatprep.subr.bf16.mxu0 0
        %1250 = vmatpush2.bf16.msra.mxu0 0
        %1251 = vmatprep.subr.bf16.mxu0 0
        %1252 = vmatpush2.bf16.msra.mxu0 0
        %1253 = vmatprep.subr.bf16.mxu0 0
        %1254 = vmatpush2.bf16.msra.mxu0 0
        %1255 = vmatprep.subr.bf16.mxu0 0
        %1256 = vmatpush2.bf16.msra.mxu0 0
        %1257 = vmatprep.subr.bf16.mxu0 0
        %1258 = vmatpush2.bf16.msra.mxu0 0
        %1259 = vmatprep.mubr.bf16.mxu0 0
        %1260 = vmatmul.mubr.bf16.gmra.mxu0 %v1178
        %v1261 = vpop.f32.mrf.mxu0
        %v1262 = vadd.f32 0.0, %v1261
        %v1263 = vpop.f32.mrf.mxu0
        %v1264 = vpop.f32.mrf.mxu0
        %v1265 = vadd.f32 0.0, %v1264
        %v1266 = vpop.f32.mrf.mxu0
        %1267 = vdwg.mxu0
        %v1269 = vsel %vm794, %v1156, 0
        %1271 = vmatprep.subr.bf16.mxu0 0
        %1272 = vmatpush1.bf16.msra.mxu0 0
        %1273 = vmatprep.subr.bf16.mxu0 0
        %1274 = vmatpush1.bf16.msra.mxu0 0
        %1275 = vmatprep.subr.bf16.mxu0 0
        %1276 = vmatpush1.bf16.msra.mxu0 0
        %1277 = vmatprep.subr.bf16.mxu0 0
        %1278 = vmatpush1.bf16.msra.mxu0 0
        %1279 = vmatprep.subr.bf16.mxu0 0
        %1280 = vmatpush1.bf16.msra.mxu0 0
        %1281 = vmatprep.subr.bf16.mxu0 0
        %1282 = vmatpush1.bf16.msra.mxu0 0
        %1283 = vmatprep.subr.bf16.mxu0 0
        %1284 = vmatpush1.bf16.msra.mxu0 0
        %1285 = vmatprep.subr.bf16.mxu0 0
        %1286 = vmatpush1.bf16.msra.mxu0 %v1269
        %1287 = vmatprep.subr.bf16.mxu0 0
        %1288 = vmatpush2.bf16.msra.mxu0 0
        %1289 = vmatprep.subr.bf16.mxu0 0
        %1290 = vmatpush2.bf16.msra.mxu0 0
        %1291 = vmatprep.subr.bf16.mxu0 0
        %1292 = vmatpush2.bf16.msra.mxu0 0
        %1293 = vmatprep.subr.bf16.mxu0 0
        %1294 = vmatpush2.bf16.msra.mxu0 0
        %1295 = vmatprep.subr.bf16.mxu0 0
        %1296 = vmatpush2.bf16.msra.mxu0 0
        %1297 = vmatprep.subr.bf16.mxu0 0
        %1298 = vmatpush2.bf16.msra.mxu0 0
        %1299 = vmatprep.subr.bf16.mxu0 0
        %1300 = vmatpush2.bf16.msra.mxu0 0
        %1301 = vmatprep.subr.bf16.mxu0 0
        %1302 = vmatpush2.bf16.msra.mxu0 0
        %1303 = vmatprep.mubr.bf16.mxu0 0
        %1304 = vmatmul.mubr.bf16.gmra.mxu0 %v1178
        %v1305 = vpop.f32.mrf.mxu0
        %v1306 = vadd.f32 0.0, %v1305
        %v1307 = vpop.f32.mrf.mxu0
        %v1308 = vpop.f32.mrf.mxu0
        %v1309 = vadd.f32 0.0, %v1308
        %v1310 = vpop.f32.mrf.mxu0
        %1311 = vdwg.mxu0
        %v1313 = vsel %vm794, %v1157, 0
        %1315 = vmatprep.subr.bf16.mxu0 0
        %1316 = vmatpush1.bf16.msra.mxu0 0
        %1317 = vmatprep.subr.bf16.mxu0 0
        %1318 = vmatpush1.bf16.msra.mxu0 0
        %1319 = vmatprep.subr.bf16.mxu0 0
        %1320 = vmatpush1.bf16.msra.mxu0 0
        %1321 = vmatprep.subr.bf16.mxu0 0
        %1322 = vmatpush1.bf16.msra.mxu0 0
        %1323 = vmatprep.subr.bf16.mxu0 0
        %1324 = vmatpush1.bf16.msra.mxu0 0
        %1325 = vmatprep.subr.bf16.mxu0 0
        %1326 = vmatpush1.bf16.msra.mxu0 0
        %1327 = vmatprep.subr.bf16.mxu0 0
        %1328 = vmatpush1.bf16.msra.mxu0 0
        %1329 = vmatprep.subr.bf16.mxu0 0
        %1330 = vmatpush1.bf16.msra.mxu0 %v1313
        %1331 = vmatprep.subr.bf16.mxu0 0
        %1332 = vmatpush2.bf16.msra.mxu0 0
        %1333 = vmatprep.subr.bf16.mxu0 0
        %1334 = vmatpush2.bf16.msra.mxu0 0
        %1335 = vmatprep.subr.bf16.mxu0 0
        %1336 = vmatpush2.bf16.msra.mxu0 0
        %1337 = vmatprep.subr.bf16.mxu0 0
        %1338 = vmatpush2.bf16.msra.mxu0 0
        %1339 = vmatprep.subr.bf16.mxu0 0
        %1340 = vmatpush2.bf16.msra.mxu0 0
        %1341 = vmatprep.subr.bf16.mxu0 0
        %1342 = vmatpush2.bf16.msra.mxu0 0
        %1343 = vmatprep.subr.bf16.mxu0 0
        %1344 = vmatpush2.bf16.msra.mxu0 0
        %1345 = vmatprep.subr.bf16.mxu0 0
        %1346 = vmatpush2.bf16.msra.mxu0 0
        %1347 = vmatprep.mubr.bf16.mxu0 0
        %1348 = vmatmul.mubr.bf16.gmra.mxu0 %v1178
        %v1349 = vpop.f32.mrf.mxu0
        %v1350 = vadd.f32 0.0, %v1349
        %v1351 = vpop.f32.mrf.mxu0
        %v1352 = vpop.f32.mrf.mxu0
        %v1353 = vadd.f32 0.0, %v1352
        %v1354 = vpop.f32.mrf.mxu0
        %1355 = vdwg.mxu0
        %v1357 = vsel %vm794, %v1158, 0
        %1359 = vmatprep.subr.bf16.mxu0 0
        %1360 = vmatpush1.bf16.msra.mxu0 0
        %1361 = vmatprep.subr.bf16.mxu0 0
        %1362 = vmatpush1.bf16.msra.mxu0 0
        %1363 = vmatprep.subr.bf16.mxu0 0
        %1364 = vmatpush1.bf16.msra.mxu0 0
        %1365 = vmatprep.subr.bf16.mxu0 0
        %1366 = vmatpush1.bf16.msra.mxu0 0
        %1367 = vmatprep.subr.bf16.mxu0 0
        %1368 = vmatpush1.bf16.msra.mxu0 0
        %1369 = vmatprep.subr.bf16.mxu0 0
        %1370 = vmatpush1.bf16.msra.mxu0 0
        %1371 = vmatprep.subr.bf16.mxu0 0
        %1372 = vmatpush1.bf16.msra.mxu0 0
        %1373 = vmatprep.subr.bf16.mxu0 0
        %1374 = vmatpush1.bf16.msra.mxu0 %v1357
        %1375 = vmatprep.subr.bf16.mxu0 0
        %1376 = vmatpush2.bf16.msra.mxu0 0
        %1377 = vmatprep.subr.bf16.mxu0 0
        %1378 = vmatpush2.bf16.msra.mxu0 0
        %1379 = vmatprep.subr.bf16.mxu0 0
        %1380 = vmatpush2.bf16.msra.mxu0 0
        %1381 = vmatprep.subr.bf16.mxu0 0
        %1382 = vmatpush2.bf16.msra.mxu0 0
        %1383 = vmatprep.subr.bf16.mxu0 0
        %1384 = vmatpush2.bf16.msra.mxu0 0
        %1385 = vmatprep.subr.bf16.mxu0 0
        %1386 = vmatpush2.bf16.msra.mxu0 0
        %1387 = vmatprep.subr.bf16.mxu0 0
        %1388 = vmatpush2.bf16.msra.mxu0 0
        %1389 = vmatprep.subr.bf16.mxu0 0
        %1390 = vmatpush2.bf16.msra.mxu0 0
        %1391 = vmatprep.mubr.bf16.mxu0 0
        %1392 = vmatmul.mubr.bf16.gmra.mxu0 %v1178
        %v1393 = vpop.f32.mrf.mxu0
        %v1394 = vadd.f32 0.0, %v1393
        %v1395 = vpop.f32.mrf.mxu0
        %v1396 = vpop.f32.mrf.mxu0
        %v1397 = vadd.f32 0.0, %v1396
        %v1398 = vpop.f32.mrf.mxu0
        %1399 = vdwg.mxu0
        %v1401 = vsel %vm794, %v1159, 0
        %1403 = vmatprep.subr.bf16.mxu0 0
        %1404 = vmatpush1.bf16.msra.mxu0 0
        %1405 = vmatprep.subr.bf16.mxu0 0
        %1406 = vmatpush1.bf16.msra.mxu0 0
        %1407 = vmatprep.subr.bf16.mxu0 0
        %1408 = vmatpush1.bf16.msra.mxu0 0
        %1409 = vmatprep.subr.bf16.mxu0 0
        %1410 = vmatpush1.bf16.msra.mxu0 0
        %1411 = vmatprep.subr.bf16.mxu0 0
        %1412 = vmatpush1.bf16.msra.mxu0 0
        %1413 = vmatprep.subr.bf16.mxu0 0
        %1414 = vmatpush1.bf16.msra.mxu0 0
        %1415 = vmatprep.subr.bf16.mxu0 0
        %1416 = vmatpush1.bf16.msra.mxu0 0
        %1417 = vmatprep.subr.bf16.mxu0 0
        %1418 = vmatpush1.bf16.msra.mxu0 %v1401
        %1419 = vmatprep.subr.bf16.mxu0 0
        %1420 = vmatpush2.bf16.msra.mxu0 0
        %1421 = vmatprep.subr.bf16.mxu0 0
        %1422 = vmatpush2.bf16.msra.mxu0 0
        %1423 = vmatprep.subr.bf16.mxu0 0
        %1424 = vmatpush2.bf16.msra.mxu0 0
        %1425 = vmatprep.subr.bf16.mxu0 0
        %1426 = vmatpush2.bf16.msra.mxu0 0
        %1427 = vmatprep.subr.bf16.mxu0 0
        %1428 = vmatpush2.bf16.msra.mxu0 0
        %1429 = vmatprep.subr.bf16.mxu0 0
        %1430 = vmatpush2.bf16.msra.mxu0 0
        %1431 = vmatprep.subr.bf16.mxu0 0
        %1432 = vmatpush2.bf16.msra.mxu0 0
        %1433 = vmatprep.subr.bf16.mxu0 0
        %1434 = vmatpush2.bf16.msra.mxu0 0
        %1435 = vmatprep.mubr.bf16.mxu0 0
        %1436 = vmatmul.mubr.bf16.gmra.mxu0 %v1178
        %v1437 = vpop.f32.mrf.mxu0
        %v1438 = vadd.f32 0.0, %v1437
        %v1439 = vpop.f32.mrf.mxu0
        %v1440 = vpop.f32.mrf.mxu0
        %v1441 = vadd.f32 0.0, %v1440
        %v1442 = vpop.f32.mrf.mxu0
        %1443 = vdwg.mxu0
        %v1445 = vsel %vm794, %v1160, 0
        %1447 = vmatprep.subr.bf16.mxu0 0
        %1448 = vmatpush1.bf16.msra.mxu0 0
        %1449 = vmatprep.subr.bf16.mxu0 0
        %1450 = vmatpush1.bf16.msra.mxu0 0
        %1451 = vmatprep.subr.bf16.mxu0 0
        %1452 = vmatpush1.bf16.msra.mxu0 0
        %1453 = vmatprep.subr.bf16.mxu0 0
        %1454 = vmatpush1.bf16.msra.mxu0 0
        %1455 = vmatprep.subr.bf16.mxu0 0
        %1456 = vmatpush1.bf16.msra.mxu0 0
        %1457 = vmatprep.subr.bf16.mxu0 0
        %1458 = vmatpush1.bf16.msra.mxu0 0
        %1459 = vmatprep.subr.bf16.mxu0 0
        %1460 = vmatpush1.bf16.msra.mxu0 0
        %1461 = vmatprep.subr.bf16.mxu0 0
        %1462 = vmatpush1.bf16.msra.mxu0 %v1445
        %1463 = vmatprep.subr.bf16.mxu0 0
        %1464 = vmatpush2.bf16.msra.mxu0 0
        %1465 = vmatprep.subr.bf16.mxu0 0
        %1466 = vmatpush2.bf16.msra.mxu0 0
        %1467 = vmatprep.subr.bf16.mxu0 0
        %1468 = vmatpush2.bf16.msra.mxu0 0
        %1469 = vmatprep.subr.bf16.mxu0 0
        %1470 = vmatpush2.bf16.msra.mxu0 0
        %1471 = vmatprep.subr.bf16.mxu0 0
        %1472 = vmatpush2.bf16.msra.mxu0 0
        %1473 = vmatprep.subr.bf16.mxu0 0
        %1474 = vmatpush2.bf16.msra.mxu0 0
        %1475 = vmatprep.subr.bf16.mxu0 0
        %1476 = vmatpush2.bf16.msra.mxu0 0
        %1477 = vmatprep.subr.bf16.mxu0 0
        %1478 = vmatpush2.bf16.msra.mxu0 0
        %1479 = vmatprep.mubr.bf16.mxu0 0
        %1480 = vmatmul.mubr.bf16.gmra.mxu0 %v1178
        %v1481 = vpop.f32.mrf.mxu0
        %v1482 = vadd.f32 0.0, %v1481
        %v1483 = vpop.f32.mrf.mxu0
        %v1484 = vpop.f32.mrf.mxu0
        %v1485 = vadd.f32 0.0, %v1484
        %v1486 = vpop.f32.mrf.mxu0
        %1487 = vdwg.mxu0
        %v1489 = vsel %vm794, %v1161, 0
        %1491 = vmatprep.subr.bf16.mxu0 0
        %1492 = vmatpush1.bf16.msra.mxu0 0
        %1493 = vmatprep.subr.bf16.mxu0 0
        %1494 = vmatpush1.bf16.msra.mxu0 0
        %1495 = vmatprep.subr.bf16.mxu0 0
        %1496 = vmatpush1.bf16.msra.mxu0 0
        %1497 = vmatprep.subr.bf16.mxu0 0
        %1498 = vmatpush1.bf16.msra.mxu0 0
        %1499 = vmatprep.subr.bf16.mxu0 0
        %1500 = vmatpush1.bf16.msra.mxu0 0
        %1501 = vmatprep.subr.bf16.mxu0 0
        %1502 = vmatpush1.bf16.msra.mxu0 0
        %1503 = vmatprep.subr.bf16.mxu0 0
        %1504 = vmatpush1.bf16.msra.mxu0 0
        %1505 = vmatprep.subr.bf16.mxu0 0
        %1506 = vmatpush1.bf16.msra.mxu0 %v1489
        %1507 = vmatprep.subr.bf16.mxu0 0
        %1508 = vmatpush2.bf16.msra.mxu0 0
        %1509 = vmatprep.subr.bf16.mxu0 0
        %1510 = vmatpush2.bf16.msra.mxu0 0
        %1511 = vmatprep.subr.bf16.mxu0 0
        %1512 = vmatpush2.bf16.msra.mxu0 0
        %1513 = vmatprep.subr.bf16.mxu0 0
        %1514 = vmatpush2.bf16.msra.mxu0 0
        %1515 = vmatprep.subr.bf16.mxu0 0
        %1516 = vmatpush2.bf16.msra.mxu0 0
        %1517 = vmatprep.subr.bf16.mxu0 0
        %1518 = vmatpush2.bf16.msra.mxu0 0
        %1519 = vmatprep.subr.bf16.mxu0 0
        %1520 = vmatpush2.bf16.msra.mxu0 0
        %1521 = vmatprep.subr.bf16.mxu0 0
        %1522 = vmatpush2.bf16.msra.mxu0 0
        %1523 = vmatprep.mubr.bf16.mxu0 0
        %1524 = vmatmul.mubr.bf16.gmra.mxu0 %v1178
        %v1525 = vpop.f32.mrf.mxu0
        %v1526 = vadd.f32 0.0, %v1525
        %v1527 = vpop.f32.mrf.mxu0
        %v1528 = vpop.f32.mrf.mxu0
        %v1529 = vadd.f32 0.0, %v1528
        %v1530 = vpop.f32.mrf.mxu0
        %1531 = vdwg.mxu0
        %v1533 = vsel %vm794, %v1162, 0
        %1535 = vmatprep.subr.bf16.mxu0 0
        %1536 = vmatpush1.bf16.msra.mxu0 0
        %1537 = vmatprep.subr.bf16.mxu0 0
        %1538 = vmatpush1.bf16.msra.mxu0 0
        %1539 = vmatprep.subr.bf16.mxu0 0
        %1540 = vmatpush1.bf16.msra.mxu0 0
        %1541 = vmatprep.subr.bf16.mxu0 0
        %1542 = vmatpush1.bf16.msra.mxu0 0
        %1543 = vmatprep.subr.bf16.mxu0 0
        %1544 = vmatpush1.bf16.msra.mxu0 0
        %1545 = vmatprep.subr.bf16.mxu0 0
        %1546 = vmatpush1.bf16.msra.mxu0 0
        %1547 = vmatprep.subr.bf16.mxu0 0
        %1548 = vmatpush1.bf16.msra.mxu0 0
        %1549 = vmatprep.subr.bf16.mxu0 0
        %1550 = vmatpush1.bf16.msra.mxu0 %v1533
        %1551 = vmatprep.subr.bf16.mxu0 0
        %1552 = vmatpush2.bf16.msra.mxu0 0
        %1553 = vmatprep.subr.bf16.mxu0 0
        %1554 = vmatpush2.bf16.msra.mxu0 0
        %1555 = vmatprep.subr.bf16.mxu0 0
        %1556 = vmatpush2.bf16.msra.mxu0 0
        %1557 = vmatprep.subr.bf16.mxu0 0
        %1558 = vmatpush2.bf16.msra.mxu0 0
        %1559 = vmatprep.subr.bf16.mxu0 0
        %1560 = vmatpush2.bf16.msra.mxu0 0
        %1561 = vmatprep.subr.bf16.mxu0 0
        %1562 = vmatpush2.bf16.msra.mxu0 0
        %1563 = vmatprep.subr.bf16.mxu0 0
        %1564 = vmatpush2.bf16.msra.mxu0 0
        %1565 = vmatprep.subr.bf16.mxu0 0
        %1566 = vmatpush2.bf16.msra.mxu0 0
        %1567 = vmatprep.mubr.bf16.mxu0 0
        %1568 = vmatmul.mubr.bf16.gmra.mxu0 %v1178
        %v1569 = vpop.f32.mrf.mxu0
        %v1570 = vadd.f32 0.0, %v1569
        %v1571 = vpop.f32.mrf.mxu0
        %v1572 = vpop.f32.mrf.mxu0
        %v1573 = vadd.f32 0.0, %v1572
        %v1574 = vpop.f32.mrf.mxu0
        %1575 = vdwg.mxu0
        %v1577 = vsel %vm794, %v1163, 0
        %1579 = vmatprep.subr.bf16.mxu0 0
        %1580 = vmatpush1.bf16.msra.mxu0 0
        %1581 = vmatprep.subr.bf16.mxu0 0
        %1582 = vmatpush1.bf16.msra.mxu0 0
        %1583 = vmatprep.subr.bf16.mxu0 0
        %1584 = vmatpush1.bf16.msra.mxu0 0
        %1585 = vmatprep.subr.bf16.mxu0 0
        %1586 = vmatpush1.bf16.msra.mxu0 0
        %1587 = vmatprep.subr.bf16.mxu0 0
        %1588 = vmatpush1.bf16.msra.mxu0 0
        %1589 = vmatprep.subr.bf16.mxu0 0
        %1590 = vmatpush1.bf16.msra.mxu0 0
        %1591 = vmatprep.subr.bf16.mxu0 0
        %1592 = vmatpush1.bf16.msra.mxu0 0
        %1593 = vmatprep.subr.bf16.mxu0 0
        %1594 = vmatpush1.bf16.msra.mxu0 %v1577
        %1595 = vmatprep.subr.bf16.mxu0 0
        %1596 = vmatpush2.bf16.msra.mxu0 0
        %1597 = vmatprep.subr.bf16.mxu0 0
        %1598 = vmatpush2.bf16.msra.mxu0 0
        %1599 = vmatprep.subr.bf16.mxu0 0
        %1600 = vmatpush2.bf16.msra.mxu0 0
        %1601 = vmatprep.subr.bf16.mxu0 0
        %1602 = vmatpush2.bf16.msra.mxu0 0
        %1603 = vmatprep.subr.bf16.mxu0 0
        %1604 = vmatpush2.bf16.msra.mxu0 0
        %1605 = vmatprep.subr.bf16.mxu0 0
        %1606 = vmatpush2.bf16.msra.mxu0 0
        %1607 = vmatprep.subr.bf16.mxu0 0
        %1608 = vmatpush2.bf16.msra.mxu0 0
        %1609 = vmatprep.subr.bf16.mxu0 0
        %1610 = vmatpush2.bf16.msra.mxu0 0
        %1611 = vmatprep.mubr.bf16.mxu0 0
        %1612 = vmatmul.mubr.bf16.gmra.mxu0 %v1178
        %v1613 = vpop.f32.mrf.mxu0
        %v1614 = vadd.f32 0.0, %v1613
        %v1615 = vpop.f32.mrf.mxu0
        %v1616 = vpop.f32.mrf.mxu0
        %v1617 = vadd.f32 0.0, %v1616
        %v1618 = vpop.f32.mrf.mxu0
        %1619 = vdwg.mxu0
        %v1621 = vsel %vm794, %v1164, 0
        %1623 = vmatprep.subr.bf16.mxu0 0
        %1624 = vmatpush1.bf16.msra.mxu0 0
        %1625 = vmatprep.subr.bf16.mxu0 0
        %1626 = vmatpush1.bf16.msra.mxu0 0
        %1627 = vmatprep.subr.bf16.mxu0 0
        %1628 = vmatpush1.bf16.msra.mxu0 0
        %1629 = vmatprep.subr.bf16.mxu0 0
        %1630 = vmatpush1.bf16.msra.mxu0 0
        %1631 = vmatprep.subr.bf16.mxu0 0
        %1632 = vmatpush1.bf16.msra.mxu0 0
        %1633 = vmatprep.subr.bf16.mxu0 0
        %1634 = vmatpush1.bf16.msra.mxu0 0
        %1635 = vmatprep.subr.bf16.mxu0 0
        %1636 = vmatpush1.bf16.msra.mxu0 0
        %1637 = vmatprep.subr.bf16.mxu0 0
        %1638 = vmatpush1.bf16.msra.mxu0 %v1621
        %1639 = vmatprep.subr.bf16.mxu0 0
        %1640 = vmatpush2.bf16.msra.mxu0 0
        %1641 = vmatprep.subr.bf16.mxu0 0
        %1642 = vmatpush2.bf16.msra.mxu0 0
        %1643 = vmatprep.subr.bf16.mxu0 0
        %1644 = vmatpush2.bf16.msra.mxu0 0
        %1645 = vmatprep.subr.bf16.mxu0 0
        %1646 = vmatpush2.bf16.msra.mxu0 0
        %1647 = vmatprep.subr.bf16.mxu0 0
        %1648 = vmatpush2.bf16.msra.mxu0 0
        %1649 = vmatprep.subr.bf16.mxu0 0
        %1650 = vmatpush2.bf16.msra.mxu0 0
        %1651 = vmatprep.subr.bf16.mxu0 0
        %1652 = vmatpush2.bf16.msra.mxu0 0
        %1653 = vmatprep.subr.bf16.mxu0 0
        %1654 = vmatpush2.bf16.msra.mxu0 0
        %1655 = vmatprep.mubr.bf16.mxu0 0
        %1656 = vmatmul.mubr.bf16.gmra.mxu0 %v1178
        %v1657 = vpop.f32.mrf.mxu0
        %v1658 = vadd.f32 0.0, %v1657
        %v1659 = vpop.f32.mrf.mxu0
        %v1660 = vpop.f32.mrf.mxu0
        %v1661 = vadd.f32 0.0, %v1660
        %v1662 = vpop.f32.mrf.mxu0
        %1663 = vdwg.mxu0
        %v1665 = vsel %vm794, %v1165, 0
        %1667 = vmatprep.subr.bf16.mxu0 0
        %1668 = vmatpush1.bf16.msra.mxu0 0
        %1669 = vmatprep.subr.bf16.mxu0 0
        %1670 = vmatpush1.bf16.msra.mxu0 0
        %1671 = vmatprep.subr.bf16.mxu0 0
        %1672 = vmatpush1.bf16.msra.mxu0 0
        %1673 = vmatprep.subr.bf16.mxu0 0
        %1674 = vmatpush1.bf16.msra.mxu0 0
        %1675 = vmatprep.subr.bf16.mxu0 0
        %1676 = vmatpush1.bf16.msra.mxu0 0
        %1677 = vmatprep.subr.bf16.mxu0 0
        %1678 = vmatpush1.bf16.msra.mxu0 0
        %1679 = vmatprep.subr.bf16.mxu0 0
        %1680 = vmatpush1.bf16.msra.mxu0 0
        %1681 = vmatprep.subr.bf16.mxu0 0
        %1682 = vmatpush1.bf16.msra.mxu0 %v1665
        %1683 = vmatprep.subr.bf16.mxu0 0
        %1684 = vmatpush2.bf16.msra.mxu0 0
        %1685 = vmatprep.subr.bf16.mxu0 0
        %1686 = vmatpush2.bf16.msra.mxu0 0
        %1687 = vmatprep.subr.bf16.mxu0 0
        %1688 = vmatpush2.bf16.msra.mxu0 0
        %1689 = vmatprep.subr.bf16.mxu0 0
        %1690 = vmatpush2.bf16.msra.mxu0 0
        %1691 = vmatprep.subr.bf16.mxu0 0
        %1692 = vmatpush2.bf16.msra.mxu0 0
        %1693 = vmatprep.subr.bf16.mxu0 0
        %1694 = vmatpush2.bf16.msra.mxu0 0
        %1695 = vmatprep.subr.bf16.mxu0 0
        %1696 = vmatpush2.bf16.msra.mxu0 0
        %1697 = vmatprep.subr.bf16.mxu0 0
        %1698 = vmatpush2.bf16.msra.mxu0 0
        %1699 = vmatprep.mubr.bf16.mxu0 0
        %1700 = vmatmul.mubr.bf16.gmra.mxu0 %v1178
        %v1701 = vpop.f32.mrf.mxu0
        %v1702 = vadd.f32 0.0, %v1701
        %v1703 = vpop.f32.mrf.mxu0
        %v1704 = vpop.f32.mrf.mxu0
        %v1705 = vadd.f32 0.0, %v1704
        %v1706 = vpop.f32.mrf.mxu0
        %1707 = vdwg.mxu0
        %v1709 = vsel %vm794, %v1166, 0
        %1711 = vmatprep.subr.bf16.mxu0 0
        %1712 = vmatpush1.bf16.msra.mxu0 0
        %1713 = vmatprep.subr.bf16.mxu0 0
        %1714 = vmatpush1.bf16.msra.mxu0 0
        %1715 = vmatprep.subr.bf16.mxu0 0
        %1716 = vmatpush1.bf16.msra.mxu0 0
        %1717 = vmatprep.subr.bf16.mxu0 0
        %1718 = vmatpush1.bf16.msra.mxu0 0
        %1719 = vmatprep.subr.bf16.mxu0 0
        %1720 = vmatpush1.bf16.msra.mxu0 0
        %1721 = vmatprep.subr.bf16.mxu0 0
        %1722 = vmatpush1.bf16.msra.mxu0 0
        %1723 = vmatprep.subr.bf16.mxu0 0
        %1724 = vmatpush1.bf16.msra.mxu0 0
        %1725 = vmatprep.subr.bf16.mxu0 0
        %1726 = vmatpush1.bf16.msra.mxu0 %v1709
        %1727 = vmatprep.subr.bf16.mxu0 0
        %1728 = vmatpush2.bf16.msra.mxu0 0
        %1729 = vmatprep.subr.bf16.mxu0 0
        %1730 = vmatpush2.bf16.msra.mxu0 0
        %1731 = vmatprep.subr.bf16.mxu0 0
        %1732 = vmatpush2.bf16.msra.mxu0 0
        %1733 = vmatprep.subr.bf16.mxu0 0
        %1734 = vmatpush2.bf16.msra.mxu0 0
        %1735 = vmatprep.subr.bf16.mxu0 0
        %1736 = vmatpush2.bf16.msra.mxu0 0
        %1737 = vmatprep.subr.bf16.mxu0 0
        %1738 = vmatpush2.bf16.msra.mxu0 0
        %1739 = vmatprep.subr.bf16.mxu0 0
        %1740 = vmatpush2.bf16.msra.mxu0 0
        %1741 = vmatprep.subr.bf16.mxu0 0
        %1742 = vmatpush2.bf16.msra.mxu0 0
        %1743 = vmatprep.mubr.bf16.mxu0 0
        %1744 = vmatmul.mubr.bf16.gmra.mxu0 %v1178
        %v1745 = vpop.f32.mrf.mxu0
        %v1746 = vadd.f32 0.0, %v1745
        %v1747 = vpop.f32.mrf.mxu0
        %v1748 = vpop.f32.mrf.mxu0
        %v1749 = vadd.f32 0.0, %v1748
        %v1750 = vpop.f32.mrf.mxu0
        %1751 = vdwg.mxu0
        %v1753 = vsel %vm794, %v1167, 0
        %1755 = vmatprep.subr.bf16.mxu0 0
        %1756 = vmatpush1.bf16.msra.mxu0 0
        %1757 = vmatprep.subr.bf16.mxu0 0
        %1758 = vmatpush1.bf16.msra.mxu0 0
        %1759 = vmatprep.subr.bf16.mxu0 0
        %1760 = vmatpush1.bf16.msra.mxu0 0
        %1761 = vmatprep.subr.bf16.mxu0 0
        %1762 = vmatpush1.bf16.msra.mxu0 0
        %1763 = vmatprep.subr.bf16.mxu0 0
        %1764 = vmatpush1.bf16.msra.mxu0 0
        %1765 = vmatprep.subr.bf16.mxu0 0
        %1766 = vmatpush1.bf16.msra.mxu0 0
        %1767 = vmatprep.subr.bf16.mxu0 0
        %1768 = vmatpush1.bf16.msra.mxu0 0
        %1769 = vmatprep.subr.bf16.mxu0 0
        %1770 = vmatpush1.bf16.msra.mxu0 %v1753
        %1771 = vmatprep.subr.bf16.mxu0 0
        %1772 = vmatpush2.bf16.msra.mxu0 0
        %1773 = vmatprep.subr.bf16.mxu0 0
        %1774 = vmatpush2.bf16.msra.mxu0 0
        %1775 = vmatprep.subr.bf16.mxu0 0
        %1776 = vmatpush2.bf16.msra.mxu0 0
        %1777 = vmatprep.subr.bf16.mxu0 0
        %1778 = vmatpush2.bf16.msra.mxu0 0
        %1779 = vmatprep.subr.bf16.mxu0 0
        %1780 = vmatpush2.bf16.msra.mxu0 0
        %1781 = vmatprep.subr.bf16.mxu0 0
        %1782 = vmatpush2.bf16.msra.mxu0 0
        %1783 = vmatprep.subr.bf16.mxu0 0
        %1784 = vmatpush2.bf16.msra.mxu0 0
        %1785 = vmatprep.subr.bf16.mxu0 0
        %1786 = vmatpush2.bf16.msra.mxu0 0
        %1787 = vmatprep.mubr.bf16.mxu0 0
        %1788 = vmatmul.mubr.bf16.gmra.mxu0 %v1178
        %v1789 = vpop.f32.mrf.mxu0
        %v1790 = vadd.f32 0.0, %v1789
        %v1791 = vpop.f32.mrf.mxu0
        %v1792 = vpop.f32.mrf.mxu0
        %v1793 = vadd.f32 0.0, %v1792
        %v1794 = vpop.f32.mrf.mxu0
        %1795 = vdwg.mxu0
        %v1797 = vsel %vm794, %v1168, 0
        %1799 = vmatprep.subr.bf16.mxu0 0
        %1800 = vmatpush1.bf16.msra.mxu0 0
        %1801 = vmatprep.subr.bf16.mxu0 0
        %1802 = vmatpush1.bf16.msra.mxu0 0
        %1803 = vmatprep.subr.bf16.mxu0 0
        %1804 = vmatpush1.bf16.msra.mxu0 0
        %1805 = vmatprep.subr.bf16.mxu0 0
        %1806 = vmatpush1.bf16.msra.mxu0 0
        %1807 = vmatprep.subr.bf16.mxu0 0
        %1808 = vmatpush1.bf16.msra.mxu0 0
        %1809 = vmatprep.subr.bf16.mxu0 0
        %1810 = vmatpush1.bf16.msra.mxu0 0
        %1811 = vmatprep.subr.bf16.mxu0 0
        %1812 = vmatpush1.bf16.msra.mxu0 0
        %1813 = vmatprep.subr.bf16.mxu0 0
        %1814 = vmatpush1.bf16.msra.mxu0 %v1797
        %1815 = vmatprep.subr.bf16.mxu0 0
        %1816 = vmatpush2.bf16.msra.mxu0 0
        %1817 = vmatprep.subr.bf16.mxu0 0
        %1818 = vmatpush2.bf16.msra.mxu0 0
        %1819 = vmatprep.subr.bf16.mxu0 0
        %1820 = vmatpush2.bf16.msra.mxu0 0
        %1821 = vmatprep.subr.bf16.mxu0 0
        %1822 = vmatpush2.bf16.msra.mxu0 0
        %1823 = vmatprep.subr.bf16.mxu0 0
        %1824 = vmatpush2.bf16.msra.mxu0 0
        %1825 = vmatprep.subr.bf16.mxu0 0
        %1826 = vmatpush2.bf16.msra.mxu0 0
        %1827 = vmatprep.subr.bf16.mxu0 0
        %1828 = vmatpush2.bf16.msra.mxu0 0
        %1829 = vmatprep.subr.bf16.mxu0 0
        %1830 = vmatpush2.bf16.msra.mxu0 0
        %1831 = vmatprep.mubr.bf16.mxu0 0
        %1832 = vmatmul.mubr.bf16.gmra.mxu0 %v1178
        %v1833 = vpop.f32.mrf.mxu0
        %v1834 = vadd.f32 0.0, %v1833
        %v1835 = vpop.f32.mrf.mxu0
        %v1836 = vpop.f32.mrf.mxu0
        %v1837 = vadd.f32 0.0, %v1836
        %v1838 = vpop.f32.mrf.mxu0
        %1839 = vdwg.mxu0
        %v1841 = vsel %vm794, %v1169, 0
        %1843 = vmatprep.subr.bf16.mxu0 0
        %1844 = vmatpush1.bf16.msra.mxu0 0
        %1845 = vmatprep.subr.bf16.mxu0 0
        %1846 = vmatpush1.bf16.msra.mxu0 0
        %1847 = vmatprep.subr.bf16.mxu0 0
        %1848 = vmatpush1.bf16.msra.mxu0 0
        %1849 = vmatprep.subr.bf16.mxu0 0
        %1850 = vmatpush1.bf16.msra.mxu0 0
        %1851 = vmatprep.subr.bf16.mxu0 0
        %1852 = vmatpush1.bf16.msra.mxu0 0
        %1853 = vmatprep.subr.bf16.mxu0 0
        %1854 = vmatpush1.bf16.msra.mxu0 0
        %1855 = vmatprep.subr.bf16.mxu0 0
        %1856 = vmatpush1.bf16.msra.mxu0 0
        %1857 = vmatprep.subr.bf16.mxu0 0
        %1858 = vmatpush1.bf16.msra.mxu0 %v1841
        %1859 = vmatprep.subr.bf16.mxu0 0
        %1860 = vmatpush2.bf16.msra.mxu0 0
        %1861 = vmatprep.subr.bf16.mxu0 0
        %1862 = vmatpush2.bf16.msra.mxu0 0
        %1863 = vmatprep.subr.bf16.mxu0 0
        %1864 = vmatpush2.bf16.msra.mxu0 0
        %1865 = vmatprep.subr.bf16.mxu0 0
        %1866 = vmatpush2.bf16.msra.mxu0 0
        %1867 = vmatprep.subr.bf16.mxu0 0
        %1868 = vmatpush2.bf16.msra.mxu0 0
        %1869 = vmatprep.subr.bf16.mxu0 0
        %1870 = vmatpush2.bf16.msra.mxu0 0
        %1871 = vmatprep.subr.bf16.mxu0 0
        %1872 = vmatpush2.bf16.msra.mxu0 0
        %1873 = vmatprep.subr.bf16.mxu0 0
        %1874 = vmatpush2.bf16.msra.mxu0 0
        %1875 = vmatprep.mubr.bf16.mxu0 0
        %1876 = vmatmul.mubr.bf16.gmra.mxu0 %v1178
        %v1877 = vpop.f32.mrf.mxu0
        %v1878 = vadd.f32 0.0, %v1877
        %v1879 = vpop.f32.mrf.mxu0
        %v1880 = vpop.f32.mrf.mxu0
        %v1881 = vadd.f32 0.0, %v1880
        %v1882 = vpop.f32.mrf.mxu0
        %1883 = vdwg.mxu0
        %v1884 = vld [vmem:[%s392] sm:$0xf]
        %v1885 = vld [vmem:[%s392 + $0x4] sm:$0xf]
        %v1886 = vld [vmem:[%s392 + $0x8] sm:$0xf]
        %v1887 = vld [vmem:[%s392 + $0xc] sm:$0xf]
        %v1888 = vld [vmem:[%s392 + $0x10] sm:$0xf]
        %v1889 = vld [vmem:[%s392 + $0x14] sm:$0xf]
        %v1890 = vld [vmem:[%s392 + $0x18] sm:$0xf]
        %v1891 = vld [vmem:[%s392 + $0x1c] sm:$0xf]
        %v1892 = vld [vmem:[%s392 + $0x20] sm:$0xf]
        %v1893 = vld [vmem:[%s392 + $0x24] sm:$0xf]
        %v1894 = vld [vmem:[%s392 + $0x28] sm:$0xf]
        %v1895 = vld [vmem:[%s392 + $0x2c] sm:$0xf]
        %v1896 = vld [vmem:[%s392 + $0x30] sm:$0xf]
        %v1897 = vld [vmem:[%s392 + $0x34] sm:$0xf]
        %v1898 = vld [vmem:[%s392 + $0x38] sm:$0xf]
        %v1899 = vld [vmem:[%s392 + $0x3c] sm:$0xf]
        %v1900 = vld [vmem:[%s392 + $0x40] sm:$0xf]
        %v1901 = vld [vmem:[%s392 + $0x44] sm:$0xf]
        %v1902 = vld [vmem:[%s392 + $0x48] sm:$0xf]
        %v1903 = vld [vmem:[%s392 + $0x4c] sm:$0xf]
        %v1904 = vld [vmem:[%s392 + $0x50] sm:$0xf]
        %v1905 = vld [vmem:[%s392 + $0x54] sm:$0xf]
        %v1906 = vld [vmem:[%s392 + $0x58] sm:$0xf]
        %v1907 = vld [vmem:[%s392 + $0x5c] sm:$0xf]
        %v1908 = vld [vmem:[%s392 + $0x60] sm:$0xf]
        %v1909 = vld [vmem:[%s392 + $0x64] sm:$0xf]
        %v1910 = vld [vmem:[%s392 + $0x68] sm:$0xf]
        %v1911 = vld [vmem:[%s392 + $0x6c] sm:$0xf]
        %v1912 = vld [vmem:[%s392 + $0x70] sm:$0xf]
        %v1913 = vld [vmem:[%s392 + $0x74] sm:$0xf]
        %v1914 = vld [vmem:[%s392 + $0x78] sm:$0xf]
        %v1915 = vld [vmem:[%s392 + $0x7c] sm:$0xf]
        %vm1916 = vsmask.f32 4368
        %vm1917 = vmor %vm404, %vm1916
        %v1919 = vshrl.u32 %v1884, 16
        %v1921 = vrot.slane %v1919, 7
        %v1922 = vshll.u32 %v1884, 16
        %v1924 = vor.u32 %v1921, %v1922
        %v1925 = vrot.slane %v1921, 4
        %v1927 = vshrl.u32 %v1885, 16
        %v1929 = vrot.slane %v1927, 7
        %v1930 = vshll.u32 %v1885, 16
        %v1932 = vor.u32 %v1929, %v1930
        %v1933 = vsel %vm1917, %v1925, %v1932
        %v1934 = vrot.slane %v1929, 4
        %v1936 = vshrl.u32 %v1886, 16
        %v1938 = vrot.slane %v1936, 7
        %v1939 = vshll.u32 %v1886, 16
        %v1941 = vor.u32 %v1938, %v1939
        %v1942 = vrot.slane %v1938, 4
        %v1944 = vshrl.u32 %v1887, 16
        %v1946 = vrot.slane %v1944, 7
        %v1947 = vshll.u32 %v1887, 16
        %v1949 = vor.u32 %v1946, %v1947
        %v1950 = vsel %vm1917, %v1942, %v1949
        %v1951 = vrot.slane %v1946, 4
        %v1953 = vshrl.u32 %v1888, 16
        %v1955 = vrot.slane %v1953, 7
        %v1956 = vshll.u32 %v1888, 16
        %v1958 = vor.u32 %v1955, %v1956
        %v1959 = vrot.slane %v1955, 4
        %v1961 = vshrl.u32 %v1889, 16
        %v1963 = vrot.slane %v1961, 7
        %v1964 = vshll.u32 %v1889, 16
        %v1966 = vor.u32 %v1963, %v1964
        %v1967 = vsel %vm1917, %v1959, %v1966
        %v1968 = vrot.slane %v1963, 4
        %v1970 = vshrl.u32 %v1890, 16
        %v1972 = vrot.slane %v1970, 7
        %v1973 = vshll.u32 %v1890, 16
        %v1975 = vor.u32 %v1972, %v1973
        %v1976 = vrot.slane %v1972, 4
        %v1978 = vshrl.u32 %v1891, 16
        %v1980 = vrot.slane %v1978, 7
        %v1981 = vshll.u32 %v1891, 16
        %v1983 = vor.u32 %v1980, %v1981
        %v1984 = vsel %vm1917, %v1976, %v1983
        %v1985 = vrot.slane %v1980, 4
        %v1987 = vshrl.u32 %v1892, 16
        %v1989 = vrot.slane %v1987, 7
        %v1990 = vshll.u32 %v1892, 16
        %v1992 = vor.u32 %v1989, %v1990
        %v1993 = vrot.slane %v1989, 4
        %v1995 = vshrl.u32 %v1893, 16
        %v1997 = vrot.slane %v1995, 7
        %v1998 = vshll.u32 %v1893, 16
        %v2000 = vor.u32 %v1997, %v1998
        %v2001 = vsel %vm1917, %v1993, %v2000
        %v2002 = vrot.slane %v1997, 4
        %v2004 = vshrl.u32 %v1894, 16
        %v2006 = vrot.slane %v2004, 7
        %v2007 = vshll.u32 %v1894, 16
        %v2009 = vor.u32 %v2006, %v2007
        %v2010 = vrot.slane %v2006, 4
        %v2012 = vshrl.u32 %v1895, 16
        %v2014 = vrot.slane %v2012, 7
        %v2015 = vshll.u32 %v1895, 16
        %v2017 = vor.u32 %v2014, %v2015
        %v2018 = vsel %vm1917, %v2010, %v2017
        %v2019 = vrot.slane %v2014, 4
        %v2021 = vshrl.u32 %v1896, 16
        %v2023 = vrot.slane %v2021, 7
        %v2024 = vshll.u32 %v1896, 16
        %v2026 = vor.u32 %v2023, %v2024
        %v2027 = vrot.slane %v2023, 4
        %v2029 = vshrl.u32 %v1897, 16
        %v2031 = vrot.slane %v2029, 7
        %v2032 = vshll.u32 %v1897, 16
        %v2034 = vor.u32 %v2031, %v2032
        %v2035 = vsel %vm1917, %v2027, %v2034
        %v2036 = vrot.slane %v2031, 4
        %v2038 = vshrl.u32 %v1898, 16
        %v2040 = vrot.slane %v2038, 7
        %v2041 = vshll.u32 %v1898, 16
        %v2043 = vor.u32 %v2040, %v2041
        %v2044 = vrot.slane %v2040, 4
        %v2046 = vshrl.u32 %v1899, 16
        %v2048 = vrot.slane %v2046, 7
        %v2049 = vshll.u32 %v1899, 16
        %v2051 = vor.u32 %v2048, %v2049
        %v2052 = vsel %vm1917, %v2044, %v2051
        %v2053 = vrot.slane %v2048, 4
        %v2055 = vshrl.u32 %v1900, 16
        %v2057 = vrot.slane %v2055, 7
        %v2058 = vshll.u32 %v1900, 16
        %v2060 = vor.u32 %v2057, %v2058
        %v2061 = vrot.slane %v2057, 4
        %v2063 = vshrl.u32 %v1901, 16
        %v2065 = vrot.slane %v2063, 7
        %v2066 = vshll.u32 %v1901, 16
        %v2068 = vor.u32 %v2065, %v2066
        %v2069 = vsel %vm1917, %v2061, %v2068
        %v2070 = vrot.slane %v2065, 4
        %v2072 = vshrl.u32 %v1902, 16
        %v2074 = vrot.slane %v2072, 7
        %v2075 = vshll.u32 %v1902, 16
        %v2077 = vor.u32 %v2074, %v2075
        %v2078 = vrot.slane %v2074, 4
        %v2080 = vshrl.u32 %v1903, 16
        %v2082 = vrot.slane %v2080, 7
        %v2083 = vshll.u32 %v1903, 16
        %v2085 = vor.u32 %v2082, %v2083
        %v2086 = vsel %vm1917, %v2078, %v2085
        %v2087 = vrot.slane %v2082, 4
        %v2089 = vshrl.u32 %v1904, 16
        %v2091 = vrot.slane %v2089, 7
        %v2092 = vshll.u32 %v1904, 16
        %v2094 = vor.u32 %v2091, %v2092
        %v2095 = vrot.slane %v2091, 4
        %v2097 = vshrl.u32 %v1905, 16
        %v2099 = vrot.slane %v2097, 7
        %v2100 = vshll.u32 %v1905, 16
        %v2102 = vor.u32 %v2099, %v2100
        %v2103 = vsel %vm1917, %v2095, %v2102
        %v2104 = vrot.slane %v2099, 4
        %v2106 = vshrl.u32 %v1906, 16
        %v2108 = vrot.slane %v2106, 7
        %v2109 = vshll.u32 %v1906, 16
        %v2111 = vor.u32 %v2108, %v2109
        %v2112 = vrot.slane %v2108, 4
        %v2114 = vshrl.u32 %v1907, 16
        %v2116 = vrot.slane %v2114, 7
        %v2117 = vshll.u32 %v1907, 16
        %v2119 = vor.u32 %v2116, %v2117
        %v2120 = vsel %vm1917, %v2112, %v2119
        %v2121 = vrot.slane %v2116, 4
        %v2123 = vshrl.u32 %v1908, 16
        %v2125 = vrot.slane %v2123, 7
        %v2126 = vshll.u32 %v1908, 16
        %v2128 = vor.u32 %v2125, %v2126
        %v2129 = vrot.slane %v2125, 4
        %v2131 = vshrl.u32 %v1909, 16
        %v2133 = vrot.slane %v2131, 7
        %v2134 = vshll.u32 %v1909, 16
        %v2136 = vor.u32 %v2133, %v2134
        %v2137 = vsel %vm1917, %v2129, %v2136
        %v2138 = vrot.slane %v2133, 4
        %v2140 = vshrl.u32 %v1910, 16
        %v2142 = vrot.slane %v2140, 7
        %v2143 = vshll.u32 %v1910, 16
        %v2145 = vor.u32 %v2142, %v2143
        %v2146 = vrot.slane %v2142, 4
        %v2148 = vshrl.u32 %v1911, 16
        %v2150 = vrot.slane %v2148, 7
        %v2151 = vshll.u32 %v1911, 16
        %v2153 = vor.u32 %v2150, %v2151
        %v2154 = vsel %vm1917, %v2146, %v2153
        %v2155 = vrot.slane %v2150, 4
        %v2157 = vshrl.u32 %v1912, 16
        %v2159 = vrot.slane %v2157, 7
        %v2160 = vshll.u32 %v1912, 16
        %v2162 = vor.u32 %v2159, %v2160
        %v2163 = vrot.slane %v2159, 4
        %v2165 = vshrl.u32 %v1913, 16
        %v2167 = vrot.slane %v2165, 7
        %v2168 = vshll.u32 %v1913, 16
        %v2170 = vor.u32 %v2167, %v2168
        %v2171 = vsel %vm1917, %v2163, %v2170
        %v2172 = vrot.slane %v2167, 4
        %v2174 = vshrl.u32 %v1914, 16
        %v2176 = vrot.slane %v2174, 7
        %v2177 = vshll.u32 %v1914, 16
        %v2179 = vor.u32 %v2176, %v2177
        %v2180 = vrot.slane %v2176, 4
        %v2182 = vshrl.u32 %v1915, 16
        %v2184 = vrot.slane %v2182, 7
        %v2185 = vshll.u32 %v1915, 16
        %v2187 = vor.u32 %v2184, %v2185
        %v2188 = vsel %vm1917, %v2180, %v2187
        %v2189 = vrot.slane %v2184, 4
        %s2238 = scalar_lea.vmem [#allocation2], 12
        %vm2239 = vcmask 27648
        %vm2240 = vmand %vm2239, %vm460
        %v2241 = vld [vmem:[%s2238] sm:$0xf]
        %v2242 = vsel %vm2240, %v1924, %v2241
        %2243 = vst [vmem:[%s2238] sm:$0xf] %v2242
        %vm2244 = vcmask 27648
        %2245 = vst.msk [vmem:[%s2238 + $0x4] sm:$0xf] %vm2244, %v1933
        %vm2246 = vcmask 24576
        %vm2247 = vmand %vm2246, %vm404
        %v2248 = vld [vmem:[%s2238 + $0x8] sm:$0x1]
        %v2249 = vsel %vm2247, %v1934, %v2248
        %2250 = vst [vmem:[%s2238 + $0x8] sm:$0x1] %v2249
        %v2251 = vld [vmem:[%s2238 + $0xc] sm:$0xf]
        %v2252 = vsel %vm2240, %v1941, %v2251
        %2253 = vst [vmem:[%s2238 + $0xc] sm:$0xf] %v2252
        %2254 = vst.msk [vmem:[%s2238 + $0x10] sm:$0xf] %vm2244, %v1950
        %v2255 = vld [vmem:[%s2238 + $0x14] sm:$0x1]
        %v2256 = vsel %vm2247, %v1951, %v2255
        %2257 = vst [vmem:[%s2238 + $0x14] sm:$0x1] %v2256
        %v2258 = vld [vmem:[%s2238 + $0x18] sm:$0xf]
        %v2259 = vsel %vm2240, %v1958, %v2258
        %2260 = vst [vmem:[%s2238 + $0x18] sm:$0xf] %v2259
        %2261 = vst.msk [vmem:[%s2238 + $0x1c] sm:$0xf] %vm2244, %v1967
        %v2262 = vld [vmem:[%s2238 + $0x20] sm:$0x1]
        %v2263 = vsel %vm2247, %v1968, %v2262
        %2264 = vst [vmem:[%s2238 + $0x20] sm:$0x1] %v2263
        %v2265 = vld [vmem:[%s2238 + $0x24] sm:$0xf]
        %v2266 = vsel %vm2240, %v1975, %v2265
        %2267 = vst [vmem:[%s2238 + $0x24] sm:$0xf] %v2266
        %2268 = vst.msk [vmem:[%s2238 + $0x28] sm:$0xf] %vm2244, %v1984
        %v2269 = vld [vmem:[%s2238 + $0x2c] sm:$0x1]
        %v2270 = vsel %vm2247, %v1985, %v2269
        %2271 = vst [vmem:[%s2238 + $0x2c] sm:$0x1] %v2270
        %v2272 = vld [vmem:[%s2238 + $0x30] sm:$0xf]
        %v2273 = vsel %vm2240, %v1992, %v2272
        %2274 = vst [vmem:[%s2238 + $0x30] sm:$0xf] %v2273
        %2275 = vst.msk [vmem:[%s2238 + $0x34] sm:$0xf] %vm2244, %v2001
        %v2276 = vld [vmem:[%s2238 + $0x38] sm:$0x1]
        %v2277 = vsel %vm2247, %v2002, %v2276
        %2278 = vst [vmem:[%s2238 + $0x38] sm:$0x1] %v2277
        %v2279 = vld [vmem:[%s2238 + $0x3c] sm:$0xf]
        %v2280 = vsel %vm2240, %v2009, %v2279
        %2281 = vst [vmem:[%s2238 + $0x3c] sm:$0xf] %v2280
        %2282 = vst.msk [vmem:[%s2238 + $0x40] sm:$0xf] %vm2244, %v2018
        %v2283 = vld [vmem:[%s2238 + $0x44] sm:$0x1]
        %v2284 = vsel %vm2247, %v2019, %v2283
        %2285 = vst [vmem:[%s2238 + $0x44] sm:$0x1] %v2284
        %v2286 = vld [vmem:[%s2238 + $0x48] sm:$0xf]
        %v2287 = vsel %vm2240, %v2026, %v2286
        %2288 = vst [vmem:[%s2238 + $0x48] sm:$0xf] %v2287
        %2289 = vst.msk [vmem:[%s2238 + $0x4c] sm:$0xf] %vm2244, %v2035
        %v2290 = vld [vmem:[%s2238 + $0x50] sm:$0x1]
        %v2291 = vsel %vm2247, %v2036, %v2290
        %2292 = vst [vmem:[%s2238 + $0x50] sm:$0x1] %v2291
        %v2293 = vld [vmem:[%s2238 + $0x54] sm:$0xf]
        %v2294 = vsel %vm2240, %v2043, %v2293
        %2295 = vst [vmem:[%s2238 + $0x54] sm:$0xf] %v2294
        %2296 = vst.msk [vmem:[%s2238 + $0x58] sm:$0xf] %vm2244, %v2052
        %v2297 = vld [vmem:[%s2238 + $0x5c] sm:$0x1]
        %v2298 = vsel %vm2247, %v2053, %v2297
        %2299 = vst [vmem:[%s2238 + $0x5c] sm:$0x1] %v2298
        %v2300 = vld [vmem:[%s2238 + $0x60] sm:$0xf]
        %v2301 = vsel %vm2240, %v2060, %v2300
        %2302 = vst [vmem:[%s2238 + $0x60] sm:$0xf] %v2301
        %2303 = vst.msk [vmem:[%s2238 + $0x64] sm:$0xf] %vm2244, %v2069
        %v2304 = vld [vmem:[%s2238 + $0x68] sm:$0x1]
        %v2305 = vsel %vm2247, %v2070, %v2304
        %2306 = vst [vmem:[%s2238 + $0x68] sm:$0x1] %v2305
        %v2307 = vld [vmem:[%s2238 + $0x6c] sm:$0xf]
        %v2308 = vsel %vm2240, %v2077, %v2307
        %2309 = vst [vmem:[%s2238 + $0x6c] sm:$0xf] %v2308
        %2310 = vst.msk [vmem:[%s2238 + $0x70] sm:$0xf] %vm2244, %v2086
        %v2311 = vld [vmem:[%s2238 + $0x74] sm:$0x1]
        %v2312 = vsel %vm2247, %v2087, %v2311
        %2313 = vst [vmem:[%s2238 + $0x74] sm:$0x1] %v2312
        %v2314 = vld [vmem:[%s2238 + $0x78] sm:$0xf]
        %v2315 = vsel %vm2240, %v2094, %v2314
        %2316 = vst [vmem:[%s2238 + $0x78] sm:$0xf] %v2315
        %2317 = vst.msk [vmem:[%s2238 + $0x7c] sm:$0xf] %vm2244, %v2103
        %v2318 = vld [vmem:[%s2238 + $0x80] sm:$0x1]
        %v2319 = vsel %vm2247, %v2104, %v2318
        %2320 = vst [vmem:[%s2238 + $0x80] sm:$0x1] %v2319
        %v2321 = vld [vmem:[%s2238 + $0x84] sm:$0xf]
        %v2322 = vsel %vm2240, %v2111, %v2321
        %2323 = vst [vmem:[%s2238 + $0x84] sm:$0xf] %v2322
        %2324 = vst.msk [vmem:[%s2238 + $0x88] sm:$0xf] %vm2244, %v2120
        %v2325 = vld [vmem:[%s2238 + $0x8c] sm:$0x1]
        %v2326 = vsel %vm2247, %v2121, %v2325
        %2327 = vst [vmem:[%s2238 + $0x8c] sm:$0x1] %v2326
        %v2328 = vld [vmem:[%s2238 + $0x90] sm:$0xf]
        %v2329 = vsel %vm2240, %v2128, %v2328
        %2330 = vst [vmem:[%s2238 + $0x90] sm:$0xf] %v2329
        %2331 = vst.msk [vmem:[%s2238 + $0x94] sm:$0xf] %vm2244, %v2137
        %v2332 = vld [vmem:[%s2238 + $0x98] sm:$0x1]
        %v2333 = vsel %vm2247, %v2138, %v2332
        %2334 = vst [vmem:[%s2238 + $0x98] sm:$0x1] %v2333
        %v2335 = vld [vmem:[%s2238 + $0x9c] sm:$0xf]
        %v2336 = vsel %vm2240, %v2145, %v2335
        %2337 = vst [vmem:[%s2238 + $0x9c] sm:$0xf] %v2336
        %2338 = vst.msk [vmem:[%s2238 + $0xa0] sm:$0xf] %vm2244, %v2154
        %v2339 = vld [vmem:[%s2238 + $0xa4] sm:$0x1]
        %v2340 = vsel %vm2247, %v2155, %v2339
        %2341 = vst [vmem:[%s2238 + $0xa4] sm:$0x1] %v2340
        %v2342 = vld [vmem:[%s2238 + $0xa8] sm:$0xf]
        %v2343 = vsel %vm2240, %v2162, %v2342
        %2344 = vst [vmem:[%s2238 + $0xa8] sm:$0xf] %v2343
        %2345 = vst.msk [vmem:[%s2238 + $0xac] sm:$0xf] %vm2244, %v2171
        %v2346 = vld [vmem:[%s2238 + $0xb0] sm:$0x1]
        %v2347 = vsel %vm2247, %v2172, %v2346
        %2348 = vst [vmem:[%s2238 + $0xb0] sm:$0x1] %v2347
        %v2349 = vld [vmem:[%s2238 + $0xb4] sm:$0xf]
        %v2350 = vsel %vm2240, %v2179, %v2349
        %2351 = vst [vmem:[%s2238 + $0xb4] sm:$0xf] %v2350
        %2352 = vst.msk [vmem:[%s2238 + $0xb8] sm:$0xf] %vm2244, %v2188
        %v2353 = vld [vmem:[%s2238 + $0xbc] sm:$0x1]
        %v2354 = vsel %vm2247, %v2189, %v2353
        %2355 = vst [vmem:[%s2238 + $0xbc] sm:$0x1] %v2354
        %v2356 = vpack.c.bf16 %v1221, %v1218
        %v2357 = vpack.c.bf16 %v1265, %v1262
        %v2358 = vpack.c.bf16 %v1309, %v1306
        %v2359 = vpack.c.bf16 %v1353, %v1350
        %v2360 = vpack.c.bf16 %v1397, %v1394
        %v2361 = vpack.c.bf16 %v1441, %v1438
        %v2362 = vpack.c.bf16 %v1485, %v1482
        %v2363 = vpack.c.bf16 %v1529, %v1526
        %v2364 = vpack.c.bf16 %v1573, %v1570
        %v2365 = vpack.c.bf16 %v1617, %v1614
        %v2366 = vpack.c.bf16 %v1661, %v1658
        %v2367 = vpack.c.bf16 %v1705, %v1702
        %v2368 = vpack.c.bf16 %v1749, %v1746
        %v2369 = vpack.c.bf16 %v1793, %v1790
        %v2370 = vpack.c.bf16 %v1837, %v1834
        %v2371 = vpack.c.bf16 %v1881, %v1878
        %v2388 = vunpack.c.l.b16 %v2356
        %v2389 = vunpack.c.h.b16 %v2356
        %v2390 = vunpack.c.l.b16 %v2357
        %v2391 = vunpack.c.h.b16 %v2357
        %v2392 = vunpack.c.l.b16 %v2358
        %v2393 = vunpack.c.h.b16 %v2358
        %v2394 = vunpack.c.l.b16 %v2359
        %v2395 = vunpack.c.h.b16 %v2359
        %v2396 = vunpack.c.l.b16 %v2360
        %v2397 = vunpack.c.h.b16 %v2360
        %v2398 = vunpack.c.l.b16 %v2361
        %v2399 = vunpack.c.h.b16 %v2361
        %v2400 = vunpack.c.l.b16 %v2362
        %v2401 = vunpack.c.h.b16 %v2362
        %v2402 = vunpack.c.l.b16 %v2363
        %v2403 = vunpack.c.h.b16 %v2363
        %v2404 = vunpack.c.l.b16 %v2364
        %v2405 = vunpack.c.h.b16 %v2364
        %v2406 = vunpack.c.l.b16 %v2365
        %v2407 = vunpack.c.h.b16 %v2365
        %v2408 = vunpack.c.l.b16 %v2366
        %v2409 = vunpack.c.h.b16 %v2366
        %v2410 = vunpack.c.l.b16 %v2367
        %v2411 = vunpack.c.h.b16 %v2367
        %v2412 = vunpack.c.l.b16 %v2368
        %v2413 = vunpack.c.h.b16 %v2368
        %v2414 = vunpack.c.l.b16 %v2369
        %v2415 = vunpack.c.h.b16 %v2369
        %v2416 = vunpack.c.l.b16 %v2370
        %v2417 = vunpack.c.h.b16 %v2370
        %v2418 = vunpack.c.l.b16 %v2371
        %v2419 = vunpack.c.h.b16 %v2371
        %v2420 = vpack.c.b16 %v2388, %v2388
        %v2421 = vpack.c.b16 %v2389, %v2389
        %v2422 = vpack.c.b16 %v2390, %v2390
        %v2423 = vpack.c.b16 %v2391, %v2391
        %v2424 = vpack.c.b16 %v2392, %v2392
        %v2425 = vpack.c.b16 %v2393, %v2393
        %v2426 = vpack.c.b16 %v2394, %v2394
        %v2427 = vpack.c.b16 %v2395, %v2395
        %v2428 = vpack.c.b16 %v2396, %v2396
        %v2429 = vpack.c.b16 %v2397, %v2397
        %v2430 = vpack.c.b16 %v2398, %v2398
        %v2431 = vpack.c.b16 %v2399, %v2399
        %v2432 = vpack.c.b16 %v2400, %v2400
        %v2433 = vpack.c.b16 %v2401, %v2401
        %v2434 = vpack.c.b16 %v2402, %v2402
        %v2435 = vpack.c.b16 %v2403, %v2403
        %v2436 = vpack.c.b16 %v2404, %v2404
        %v2437 = vpack.c.b16 %v2405, %v2405
        %v2438 = vpack.c.b16 %v2406, %v2406
        %v2439 = vpack.c.b16 %v2407, %v2407
        %v2440 = vpack.c.b16 %v2408, %v2408
        %v2441 = vpack.c.b16 %v2409, %v2409
        %v2442 = vpack.c.b16 %v2410, %v2410
        %v2443 = vpack.c.b16 %v2411, %v2411
        %v2444 = vpack.c.b16 %v2412, %v2412
        %v2445 = vpack.c.b16 %v2413, %v2413
        %v2446 = vpack.c.b16 %v2414, %v2414
        %v2447 = vpack.c.b16 %v2415, %v2415
        %v2448 = vpack.c.b16 %v2416, %v2416
        %v2449 = vpack.c.b16 %v2417, %v2417
        %v2450 = vpack.c.b16 %v2418, %v2418
        %v2451 = vpack.c.b16 %v2419, %v2419
        %v2453 = vshrl.u32 %v2420, 16
        %v2455 = vrot.slane %v2453, 7
        %v2456 = vshll.u32 %v2420, 16
        %v2458 = vor.u32 %v2455, %v2456
        %v2459 = vrot.slane %v2455, 4
        %v2461 = vshrl.u32 %v2421, 16
        %v2463 = vrot.slane %v2461, 7
        %v2464 = vshll.u32 %v2421, 16
        %v2466 = vor.u32 %v2463, %v2464
        %v2467 = vsel %vm1917, %v2459, %v2466
        %v2468 = vrot.slane %v2463, 4
        %v2470 = vshrl.u32 %v2422, 16
        %v2472 = vrot.slane %v2470, 7
        %v2473 = vshll.u32 %v2422, 16
        %v2475 = vor.u32 %v2472, %v2473
        %v2476 = vrot.slane %v2472, 4
        %v2478 = vshrl.u32 %v2423, 16
        %v2480 = vrot.slane %v2478, 7
        %v2481 = vshll.u32 %v2423, 16
        %v2483 = vor.u32 %v2480, %v2481
        %v2484 = vsel %vm1917, %v2476, %v2483
        %v2485 = vrot.slane %v2480, 4
        %v2487 = vshrl.u32 %v2424, 16
        %v2489 = vrot.slane %v2487, 7
        %v2490 = vshll.u32 %v2424, 16
        %v2492 = vor.u32 %v2489, %v2490
        %v2493 = vrot.slane %v2489, 4
        %v2495 = vshrl.u32 %v2425, 16
        %v2497 = vrot.slane %v2495, 7
        %v2498 = vshll.u32 %v2425, 16
        %v2500 = vor.u32 %v2497, %v2498
        %v2501 = vsel %vm1917, %v2493, %v2500
        %v2502 = vrot.slane %v2497, 4
        %v2504 = vshrl.u32 %v2426, 16
        %v2506 = vrot.slane %v2504, 7
        %v2507 = vshll.u32 %v2426, 16
        %v2509 = vor.u32 %v2506, %v2507
        %v2510 = vrot.slane %v2506, 4
        %v2512 = vshrl.u32 %v2427, 16
        %v2514 = vrot.slane %v2512, 7
        %v2515 = vshll.u32 %v2427, 16
        %v2517 = vor.u32 %v2514, %v2515
        %v2518 = vsel %vm1917, %v2510, %v2517
        %v2519 = vrot.slane %v2514, 4
        %v2521 = vshrl.u32 %v2428, 16
        %v2523 = vrot.slane %v2521, 7
        %v2524 = vshll.u32 %v2428, 16
        %v2526 = vor.u32 %v2523, %v2524
        %v2527 = vrot.slane %v2523, 4
        %v2529 = vshrl.u32 %v2429, 16
        %v2531 = vrot.slane %v2529, 7
        %v2532 = vshll.u32 %v2429, 16
        %v2534 = vor.u32 %v2531, %v2532
        %v2535 = vsel %vm1917, %v2527, %v2534
        %v2536 = vrot.slane %v2531, 4
        %v2538 = vshrl.u32 %v2430, 16
        %v2540 = vrot.slane %v2538, 7
        %v2541 = vshll.u32 %v2430, 16
        %v2543 = vor.u32 %v2540, %v2541
        %v2544 = vrot.slane %v2540, 4
        %v2546 = vshrl.u32 %v2431, 16
        %v2548 = vrot.slane %v2546, 7
        %v2549 = vshll.u32 %v2431, 16
        %v2551 = vor.u32 %v2548, %v2549
        %v2552 = vsel %vm1917, %v2544, %v2551
        %v2553 = vrot.slane %v2548, 4
        %v2555 = vshrl.u32 %v2432, 16
        %v2557 = vrot.slane %v2555, 7
        %v2558 = vshll.u32 %v2432, 16
        %v2560 = vor.u32 %v2557, %v2558
        %v2561 = vrot.slane %v2557, 4
        %v2563 = vshrl.u32 %v2433, 16
        %v2565 = vrot.slane %v2563, 7
        %v2566 = vshll.u32 %v2433, 16
        %v2568 = vor.u32 %v2565, %v2566
        %v2569 = vsel %vm1917, %v2561, %v2568
        %v2570 = vrot.slane %v2565, 4
        %v2572 = vshrl.u32 %v2434, 16
        %v2574 = vrot.slane %v2572, 7
        %v2575 = vshll.u32 %v2434, 16
        %v2577 = vor.u32 %v2574, %v2575
        %v2578 = vrot.slane %v2574, 4
        %v2580 = vshrl.u32 %v2435, 16
        %v2582 = vrot.slane %v2580, 7
        %v2583 = vshll.u32 %v2435, 16
        %v2585 = vor.u32 %v2582, %v2583
        %v2586 = vsel %vm1917, %v2578, %v2585
        %v2587 = vrot.slane %v2582, 4
        %v2589 = vshrl.u32 %v2436, 16
        %v2591 = vrot.slane %v2589, 7
        %v2592 = vshll.u32 %v2436, 16
        %v2594 = vor.u32 %v2591, %v2592
        %v2595 = vrot.slane %v2591, 4
        %v2597 = vshrl.u32 %v2437, 16
        %v2599 = vrot.slane %v2597, 7
        %v2600 = vshll.u32 %v2437, 16
        %v2602 = vor.u32 %v2599, %v2600
        %v2603 = vsel %vm1917, %v2595, %v2602
        %v2604 = vrot.slane %v2599, 4
        %v2606 = vshrl.u32 %v2438, 16
        %v2608 = vrot.slane %v2606, 7
        %v2609 = vshll.u32 %v2438, 16
        %v2611 = vor.u32 %v2608, %v2609
        %v2612 = vrot.slane %v2608, 4
        %v2614 = vshrl.u32 %v2439, 16
        %v2616 = vrot.slane %v2614, 7
        %v2617 = vshll.u32 %v2439, 16
        %v2619 = vor.u32 %v2616, %v2617
        %v2620 = vsel %vm1917, %v2612, %v2619
        %v2621 = vrot.slane %v2616, 4
        %v2623 = vshrl.u32 %v2440, 16
        %v2625 = vrot.slane %v2623, 7
        %v2626 = vshll.u32 %v2440, 16
        %v2628 = vor.u32 %v2625, %v2626
        %v2629 = vrot.slane %v2625, 4
        %v2631 = vshrl.u32 %v2441, 16
        %v2633 = vrot.slane %v2631, 7
        %v2634 = vshll.u32 %v2441, 16
        %v2636 = vor.u32 %v2633, %v2634
        %v2637 = vsel %vm1917, %v2629, %v2636
        %v2638 = vrot.slane %v2633, 4
        %v2640 = vshrl.u32 %v2442, 16
        %v2642 = vrot.slane %v2640, 7
        %v2643 = vshll.u32 %v2442, 16
        %v2645 = vor.u32 %v2642, %v2643
        %v2646 = vrot.slane %v2642, 4
        %v2648 = vshrl.u32 %v2443, 16
        %v2650 = vrot.slane %v2648, 7
        %v2651 = vshll.u32 %v2443, 16
        %v2653 = vor.u32 %v2650, %v2651
        %v2654 = vsel %vm1917, %v2646, %v2653
        %v2655 = vrot.slane %v2650, 4
        %v2657 = vshrl.u32 %v2444, 16
        %v2659 = vrot.slane %v2657, 7
        %v2660 = vshll.u32 %v2444, 16
        %v2662 = vor.u32 %v2659, %v2660
        %v2663 = vrot.slane %v2659, 4
        %v2665 = vshrl.u32 %v2445, 16
        %v2667 = vrot.slane %v2665, 7
        %v2668 = vshll.u32 %v2445, 16
        %v2670 = vor.u32 %v2667, %v2668
        %v2671 = vsel %vm1917, %v2663, %v2670
        %v2672 = vrot.slane %v2667, 4
        %v2674 = vshrl.u32 %v2446, 16
        %v2676 = vrot.slane %v2674, 7
        %v2677 = vshll.u32 %v2446, 16
        %v2679 = vor.u32 %v2676, %v2677
        %v2680 = vrot.slane %v2676, 4
        %v2682 = vshrl.u32 %v2447, 16
        %v2684 = vrot.slane %v2682, 7
        %v2685 = vshll.u32 %v2447, 16
        %v2687 = vor.u32 %v2684, %v2685
        %v2688 = vsel %vm1917, %v2680, %v2687
        %v2689 = vrot.slane %v2684, 4
        %v2691 = vshrl.u32 %v2448, 16
        %v2693 = vrot.slane %v2691, 7
        %v2694 = vshll.u32 %v2448, 16
        %v2696 = vor.u32 %v2693, %v2694
        %v2697 = vrot.slane %v2693, 4
        %v2699 = vshrl.u32 %v2449, 16
        %v2701 = vrot.slane %v2699, 7
        %v2702 = vshll.u32 %v2449, 16
        %v2704 = vor.u32 %v2701, %v2702
        %v2705 = vsel %vm1917, %v2697, %v2704
        %v2706 = vrot.slane %v2701, 4
        %v2708 = vshrl.u32 %v2450, 16
        %v2710 = vrot.slane %v2708, 7
        %v2711 = vshll.u32 %v2450, 16
        %v2713 = vor.u32 %v2710, %v2711
        %v2714 = vrot.slane %v2710, 4
        %v2716 = vshrl.u32 %v2451, 16
        %v2718 = vrot.slane %v2716, 7
        %v2719 = vshll.u32 %v2451, 16
        %v2721 = vor.u32 %v2718, %v2719
        %v2722 = vsel %vm1917, %v2714, %v2721
        %v2723 = vrot.slane %v2718, 4
        %2724 = vrot.lane.b32.xlu0 %v2458, 4
        %v2725 = vpop.permute.xlu0 %2724
        %2726 = vrot.lane.b32.xlu0 %v2467, 4
        %v2727 = vpop.permute.xlu0 %2726
        %2728 = vrot.lane.b32.xlu0 %v2468, 4
        %v2729 = vpop.permute.xlu0 %2728
        %2730 = vrot.lane.b32.xlu0 %v2475, 4
        %v2731 = vpop.permute.xlu0 %2730
        %2732 = vrot.lane.b32.xlu0 %v2484, 4
        %v2733 = vpop.permute.xlu0 %2732
        %2734 = vrot.lane.b32.xlu0 %v2485, 4
        %v2735 = vpop.permute.xlu0 %2734
        %2736 = vrot.lane.b32.xlu0 %v2492, 4
        %v2737 = vpop.permute.xlu0 %2736
        %2738 = vrot.lane.b32.xlu0 %v2501, 4
        %v2739 = vpop.permute.xlu0 %2738
        %2740 = vrot.lane.b32.xlu0 %v2502, 4
        %v2741 = vpop.permute.xlu0 %2740
        %2742 = vrot.lane.b32.xlu0 %v2509, 4
        %v2743 = vpop.permute.xlu0 %2742
        %2744 = vrot.lane.b32.xlu0 %v2518, 4
        %v2745 = vpop.permute.xlu0 %2744
        %2746 = vrot.lane.b32.xlu0 %v2519, 4
        %v2747 = vpop.permute.xlu0 %2746
        %2748 = vrot.lane.b32.xlu0 %v2526, 4
        %v2749 = vpop.permute.xlu0 %2748
        %2750 = vrot.lane.b32.xlu0 %v2535, 4
        %v2751 = vpop.permute.xlu0 %2750
        %2752 = vrot.lane.b32.xlu0 %v2536, 4
        %v2753 = vpop.permute.xlu0 %2752
        %2754 = vrot.lane.b32.xlu0 %v2543, 4
        %v2755 = vpop.permute.xlu0 %2754
        %2756 = vrot.lane.b32.xlu0 %v2552, 4
        %v2757 = vpop.permute.xlu0 %2756
        %2758 = vrot.lane.b32.xlu0 %v2553, 4
        %v2759 = vpop.permute.xlu0 %2758
        %2760 = vrot.lane.b32.xlu0 %v2560, 4
        %v2761 = vpop.permute.xlu0 %2760
        %2762 = vrot.lane.b32.xlu0 %v2569, 4
        %v2763 = vpop.permute.xlu0 %2762
        %2764 = vrot.lane.b32.xlu0 %v2570, 4
        %v2765 = vpop.permute.xlu0 %2764
        %2766 = vrot.lane.b32.xlu0 %v2577, 4
        %v2767 = vpop.permute.xlu0 %2766
        %2768 = vrot.lane.b32.xlu0 %v2586, 4
        %v2769 = vpop.permute.xlu0 %2768
        %2770 = vrot.lane.b32.xlu0 %v2587, 4
        %v2771 = vpop.permute.xlu0 %2770
        %2772 = vrot.lane.b32.xlu0 %v2594, 4
        %v2773 = vpop.permute.xlu0 %2772
        %2774 = vrot.lane.b32.xlu0 %v2603, 4
        %v2775 = vpop.permute.xlu0 %2774
        %2776 = vrot.lane.b32.xlu0 %v2604, 4
        %v2777 = vpop.permute.xlu0 %2776
        %2778 = vrot.lane.b32.xlu0 %v2611, 4
        %v2779 = vpop.permute.xlu0 %2778
        %2780 = vrot.lane.b32.xlu0 %v2620, 4
        %v2781 = vpop.permute.xlu0 %2780
        %2782 = vrot.lane.b32.xlu0 %v2621, 4
        %v2783 = vpop.permute.xlu0 %2782
        %2784 = vrot.lane.b32.xlu0 %v2628, 4
        %v2785 = vpop.permute.xlu0 %2784
        %2786 = vrot.lane.b32.xlu0 %v2637, 4
        %v2787 = vpop.permute.xlu0 %2786
        %2788 = vrot.lane.b32.xlu0 %v2638, 4
        %v2789 = vpop.permute.xlu0 %2788
        %2790 = vrot.lane.b32.xlu0 %v2645, 4
        %v2791 = vpop.permute.xlu0 %2790
        %2792 = vrot.lane.b32.xlu0 %v2654, 4
        %v2793 = vpop.permute.xlu0 %2792
        %2794 = vrot.lane.b32.xlu0 %v2655, 4
        %v2795 = vpop.permute.xlu0 %2794
        %2796 = vrot.lane.b32.xlu0 %v2662, 4
        %v2797 = vpop.permute.xlu0 %2796
        %2798 = vrot.lane.b32.xlu0 %v2671, 4
        %v2799 = vpop.permute.xlu0 %2798
        %2800 = vrot.lane.b32.xlu0 %v2672, 4
        %v2801 = vpop.permute.xlu0 %2800
        %2802 = vrot.lane.b32.xlu0 %v2679, 4
        %v2803 = vpop.permute.xlu0 %2802
        %2804 = vrot.lane.b32.xlu0 %v2688, 4
        %v2805 = vpop.permute.xlu0 %2804
        %2806 = vrot.lane.b32.xlu0 %v2689, 4
        %v2807 = vpop.permute.xlu0 %2806
        %2808 = vrot.lane.b32.xlu0 %v2696, 4
        %v2809 = vpop.permute.xlu0 %2808
        %2810 = vrot.lane.b32.xlu0 %v2705, 4
        %v2811 = vpop.permute.xlu0 %2810
        %2812 = vrot.lane.b32.xlu0 %v2706, 4
        %v2813 = vpop.permute.xlu0 %2812
        %2814 = vrot.lane.b32.xlu0 %v2713, 4
        %v2815 = vpop.permute.xlu0 %2814
        %2816 = vrot.lane.b32.xlu0 %v2722, 4
        %v2817 = vpop.permute.xlu0 %2816
        %2818 = vrot.lane.b32.xlu0 %v2723, 4
        %v2819 = vpop.permute.xlu0 %2818
        %vm2868 = vcmask 60448
        %vm2869 = vmand %vm2868, %vm460
        %v2870 = vld [vmem:[%s2238] sm:$0xf]
        %v2871 = vsel %vm2869, %v2725, %v2870
        %2872 = vst [vmem:[%s2238] sm:$0xf] %v2871
        %vm2873 = vcmask 60448
        %2874 = vst.msk [vmem:[%s2238 + $0x4] sm:$0xf] %vm2873, %v2727
        %vm2875 = vcmask 57376
        %vm2876 = vmand %vm2875, %vm404
        %v2877 = vld [vmem:[%s2238 + $0x8] sm:$0x1]
        %v2878 = vsel %vm2876, %v2729, %v2877
        %2879 = vst [vmem:[%s2238 + $0x8] sm:$0x1] %v2878
        %v2880 = vld [vmem:[%s2238 + $0xc] sm:$0xf]
        %v2881 = vsel %vm2869, %v2731, %v2880
        %2882 = vst [vmem:[%s2238 + $0xc] sm:$0xf] %v2881
        %2883 = vst.msk [vmem:[%s2238 + $0x10] sm:$0xf] %vm2873, %v2733
        %v2884 = vld [vmem:[%s2238 + $0x14] sm:$0x1]
        %v2885 = vsel %vm2876, %v2735, %v2884
        %2886 = vst [vmem:[%s2238 + $0x14] sm:$0x1] %v2885
        %v2887 = vld [vmem:[%s2238 + $0x18] sm:$0xf]
        %v2888 = vsel %vm2869, %v2737, %v2887
        %2889 = vst [vmem:[%s2238 + $0x18] sm:$0xf] %v2888
        %2890 = vst.msk [vmem:[%s2238 + $0x1c] sm:$0xf] %vm2873, %v2739
        %v2891 = vld [vmem:[%s2238 + $0x20] sm:$0x1]
        %v2892 = vsel %vm2876, %v2741, %v2891
        %2893 = vst [vmem:[%s2238 + $0x20] sm:$0x1] %v2892
        %v2894 = vld [vmem:[%s2238 + $0x24] sm:$0xf]
        %v2895 = vsel %vm2869, %v2743, %v2894
        %2896 = vst [vmem:[%s2238 + $0x24] sm:$0xf] %v2895
        %2897 = vst.msk [vmem:[%s2238 + $0x28] sm:$0xf] %vm2873, %v2745
        %v2898 = vld [vmem:[%s2238 + $0x2c] sm:$0x1]
        %v2899 = vsel %vm2876, %v2747, %v2898
        %2900 = vst [vmem:[%s2238 + $0x2c] sm:$0x1] %v2899
        %v2901 = vld [vmem:[%s2238 + $0x30] sm:$0xf]
        %v2902 = vsel %vm2869, %v2749, %v2901
        %2903 = vst [vmem:[%s2238 + $0x30] sm:$0xf] %v2902
        %2904 = vst.msk [vmem:[%s2238 + $0x34] sm:$0xf] %vm2873, %v2751
        %v2905 = vld [vmem:[%s2238 + $0x38] sm:$0x1]
        %v2906 = vsel %vm2876, %v2753, %v2905
        %2907 = vst [vmem:[%s2238 + $0x38] sm:$0x1] %v2906
        %v2908 = vld [vmem:[%s2238 + $0x3c] sm:$0xf]
        %v2909 = vsel %vm2869, %v2755, %v2908
        %2910 = vst [vmem:[%s2238 + $0x3c] sm:$0xf] %v2909
        %2911 = vst.msk [vmem:[%s2238 + $0x40] sm:$0xf] %vm2873, %v2757
        %v2912 = vld [vmem:[%s2238 + $0x44] sm:$0x1]
        %v2913 = vsel %vm2876, %v2759, %v2912
        %2914 = vst [vmem:[%s2238 + $0x44] sm:$0x1] %v2913
        %v2915 = vld [vmem:[%s2238 + $0x48] sm:$0xf]
        %v2916 = vsel %vm2869, %v2761, %v2915
        %2917 = vst [vmem:[%s2238 + $0x48] sm:$0xf] %v2916
        %2918 = vst.msk [vmem:[%s2238 + $0x4c] sm:$0xf] %vm2873, %v2763
        %v2919 = vld [vmem:[%s2238 + $0x50] sm:$0x1]
        %v2920 = vsel %vm2876, %v2765, %v2919
        %2921 = vst [vmem:[%s2238 + $0x50] sm:$0x1] %v2920
        %v2922 = vld [vmem:[%s2238 + $0x54] sm:$0xf]
        %v2923 = vsel %vm2869, %v2767, %v2922
        %2924 = vst [vmem:[%s2238 + $0x54] sm:$0xf] %v2923
        %2925 = vst.msk [vmem:[%s2238 + $0x58] sm:$0xf] %vm2873, %v2769
        %v2926 = vld [vmem:[%s2238 + $0x5c] sm:$0x1]
        %v2927 = vsel %vm2876, %v2771, %v2926
        %2928 = vst [vmem:[%s2238 + $0x5c] sm:$0x1] %v2927
        %v2929 = vld [vmem:[%s2238 + $0x60] sm:$0xf]
        %v2930 = vsel %vm2869, %v2773, %v2929
        %2931 = vst [vmem:[%s2238 + $0x60] sm:$0xf] %v2930
        %2932 = vst.msk [vmem:[%s2238 + $0x64] sm:$0xf] %vm2873, %v2775
        %v2933 = vld [vmem:[%s2238 + $0x68] sm:$0x1]
        %v2934 = vsel %vm2876, %v2777, %v2933
        %2935 = vst [vmem:[%s2238 + $0x68] sm:$0x1] %v2934
        %v2936 = vld [vmem:[%s2238 + $0x6c] sm:$0xf]
        %v2937 = vsel %vm2869, %v2779, %v2936
        %2938 = vst [vmem:[%s2238 + $0x6c] sm:$0xf] %v2937
        %2939 = vst.msk [vmem:[%s2238 + $0x70] sm:$0xf] %vm2873, %v2781
        %v2940 = vld [vmem:[%s2238 + $0x74] sm:$0x1]
        %v2941 = vsel %vm2876, %v2783, %v2940
        %2942 = vst [vmem:[%s2238 + $0x74] sm:$0x1] %v2941
        %v2943 = vld [vmem:[%s2238 + $0x78] sm:$0xf]
        %v2944 = vsel %vm2869, %v2785, %v2943
        %2945 = vst [vmem:[%s2238 + $0x78] sm:$0xf] %v2944
        %2946 = vst.msk [vmem:[%s2238 + $0x7c] sm:$0xf] %vm2873, %v2787
        %v2947 = vld [vmem:[%s2238 + $0x80] sm:$0x1]
        %v2948 = vsel %vm2876, %v2789, %v2947
        %2949 = vst [vmem:[%s2238 + $0x80] sm:$0x1] %v2948
        %v2950 = vld [vmem:[%s2238 + $0x84] sm:$0xf]
        %v2951 = vsel %vm2869, %v2791, %v2950
        %2952 = vst [vmem:[%s2238 + $0x84] sm:$0xf] %v2951
        %2953 = vst.msk [vmem:[%s2238 + $0x88] sm:$0xf] %vm2873, %v2793
        %v2954 = vld [vmem:[%s2238 + $0x8c] sm:$0x1]
        %v2955 = vsel %vm2876, %v2795, %v2954
        %2956 = vst [vmem:[%s2238 + $0x8c] sm:$0x1] %v2955
        %v2957 = vld [vmem:[%s2238 + $0x90] sm:$0xf]
        %v2958 = vsel %vm2869, %v2797, %v2957
        %2959 = vst [vmem:[%s2238 + $0x90] sm:$0xf] %v2958
        %2960 = vst.msk [vmem:[%s2238 + $0x94] sm:$0xf] %vm2873, %v2799
        %v2961 = vld [vmem:[%s2238 + $0x98] sm:$0x1]
        %v2962 = vsel %vm2876, %v2801, %v2961
        %2963 = vst [vmem:[%s2238 + $0x98] sm:$0x1] %v2962
        %v2964 = vld [vmem:[%s2238 + $0x9c] sm:$0xf]
        %v2965 = vsel %vm2869, %v2803, %v2964
        %2966 = vst [vmem:[%s2238 + $0x9c] sm:$0xf] %v2965
        %2967 = vst.msk [vmem:[%s2238 + $0xa0] sm:$0xf] %vm2873, %v2805
        %v2968 = vld [vmem:[%s2238 + $0xa4] sm:$0x1]
        %v2969 = vsel %vm2876, %v2807, %v2968
        %2970 = vst [vmem:[%s2238 + $0xa4] sm:$0x1] %v2969
        %v2971 = vld [vmem:[%s2238 + $0xa8] sm:$0xf]
        %v2972 = vsel %vm2869, %v2809, %v2971
        %2973 = vst [vmem:[%s2238 + $0xa8] sm:$0xf] %v2972
        %2974 = vst.msk [vmem:[%s2238 + $0xac] sm:$0xf] %vm2873, %v2811
        %v2975 = vld [vmem:[%s2238 + $0xb0] sm:$0x1]
        %v2976 = vsel %vm2876, %v2813, %v2975
        %2977 = vst [vmem:[%s2238 + $0xb0] sm:$0x1] %v2976
        %v2978 = vld [vmem:[%s2238 + $0xb4] sm:$0xf]
        %v2979 = vsel %vm2869, %v2815, %v2978
        %2980 = vst [vmem:[%s2238 + $0xb4] sm:$0xf] %v2979
        %2981 = vst.msk [vmem:[%s2238 + $0xb8] sm:$0xf] %vm2873, %v2817
        %v2982 = vld [vmem:[%s2238 + $0xbc] sm:$0x1]
        %v2983 = vsel %vm2876, %v2819, %v2982
        %2984 = vst [vmem:[%s2238 + $0xbc] sm:$0x1] %v2983
        %v2985 = vld [vmem:[#allocation2] sm:$0xf]
        %v2986 = vld [vmem:[#allocation2 + $0x4] sm:$0xf]
        %v2987 = vld [vmem:[#allocation2 + $0xc] sm:$0xf]
        %v2988 = vld [vmem:[#allocation2 + $0x10] sm:$0xf]
        %v2989 = vld [vmem:[#allocation2 + $0x18] sm:$0xf]
        %v2990 = vld [vmem:[#allocation2 + $0x1c] sm:$0xf]
        %v2991 = vld [vmem:[#allocation2 + $0x24] sm:$0xf]
        %v2992 = vld [vmem:[#allocation2 + $0x28] sm:$0xf]
        %v2993 = vld [vmem:[#allocation2 + $0x30] sm:$0xf]
        %v2994 = vld [vmem:[#allocation2 + $0x34] sm:$0xf]
        %v2995 = vld [vmem:[#allocation2 + $0x3c] sm:$0xf]
        %v2996 = vld [vmem:[#allocation2 + $0x40] sm:$0xf]
        %v2997 = vld [vmem:[#allocation2 + $0x48] sm:$0xf]
        %v2998 = vld [vmem:[#allocation2 + $0x4c] sm:$0xf]
        %v2999 = vld [vmem:[#allocation2 + $0x54] sm:$0xf]
        %v3000 = vld [vmem:[#allocation2 + $0x58] sm:$0xf]
        %v3001 = vld [vmem:[#allocation2 + $0x60] sm:$0xf]
        %v3002 = vld [vmem:[#allocation2 + $0x64] sm:$0xf]
        %v3003 = vld [vmem:[#allocation2 + $0x6c] sm:$0xf]
        %v3004 = vld [vmem:[#allocation2 + $0x70] sm:$0xf]
        %v3005 = vld [vmem:[#allocation2 + $0x78] sm:$0xf]
        %v3006 = vld [vmem:[#allocation2 + $0x7c] sm:$0xf]
        %v3007 = vld [vmem:[#allocation2 + $0x84] sm:$0xf]
        %v3008 = vld [vmem:[#allocation2 + $0x88] sm:$0xf]
        %v3009 = vld [vmem:[#allocation2 + $0x90] sm:$0xf]
        %v3010 = vld [vmem:[#allocation2 + $0x94] sm:$0xf]
        %v3011 = vld [vmem:[#allocation2 + $0x9c] sm:$0xf]
        %v3012 = vld [vmem:[#allocation2 + $0xa0] sm:$0xf]
        %v3013 = vld [vmem:[#allocation2 + $0xa8] sm:$0xf]
        %v3014 = vld [vmem:[#allocation2 + $0xac] sm:$0xf]
        %v3015 = vld [vmem:[#allocation2 + $0xb4] sm:$0xf]
        %v3016 = vld [vmem:[#allocation2 + $0xb8] sm:$0xf]
        %3017 = vst.msk [vmem:[#allocation4] sm:$0xf] %vm394, %v2985
        %3018 = vst.msk [vmem:[#allocation4 + $0x4] sm:$0xf] %vm394, %v2986
        %3019 = vst.msk [vmem:[#allocation4 + $0x8] sm:$0xf] %vm394, %v2987
        %3020 = vst.msk [vmem:[#allocation4 + $0xc] sm:$0xf] %vm394, %v2988
        %3021 = vst.msk [vmem:[#allocation4 + $0x10] sm:$0xf] %vm394, %v2989
        %3022 = vst.msk [vmem:[#allocation4 + $0x14] sm:$0xf] %vm394, %v2990
        %3023 = vst.msk [vmem:[#allocation4 + $0x18] sm:$0xf] %vm394, %v2991
        %3024 = vst.msk [vmem:[#allocation4 + $0x1c] sm:$0xf] %vm394, %v2992
        %3025 = vst.msk [vmem:[#allocation4 + $0x20] sm:$0xf] %vm394, %v2993
        %3026 = vst.msk [vmem:[#allocation4 + $0x24] sm:$0xf] %vm394, %v2994
        %3027 = vst.msk [vmem:[#allocation4 + $0x28] sm:$0xf] %vm394, %v2995
        %3028 = vst.msk [vmem:[#allocation4 + $0x2c] sm:$0xf] %vm394, %v2996
        %3029 = vst.msk [vmem:[#allocation4 + $0x30] sm:$0xf] %vm394, %v2997
        %3030 = vst.msk [vmem:[#allocation4 + $0x34] sm:$0xf] %vm394, %v2998
        %3031 = vst.msk [vmem:[#allocation4 + $0x38] sm:$0xf] %vm394, %v2999
        %3032 = vst.msk [vmem:[#allocation4 + $0x3c] sm:$0xf] %vm394, %v3000
        %3033 = vst.msk [vmem:[#allocation4 + $0x40] sm:$0xf] %vm394, %v3001
        %3034 = vst.msk [vmem:[#allocation4 + $0x44] sm:$0xf] %vm394, %v3002
        %3035 = vst.msk [vmem:[#allocation4 + $0x48] sm:$0xf] %vm394, %v3003
        %3036 = vst.msk [vmem:[#allocation4 + $0x4c] sm:$0xf] %vm394, %v3004
        %3037 = vst.msk [vmem:[#allocation4 + $0x50] sm:$0xf] %vm394, %v3005
        %3038 = vst.msk [vmem:[#allocation4 + $0x54] sm:$0xf] %vm394, %v3006
        %3039 = vst.msk [vmem:[#allocation4 + $0x58] sm:$0xf] %vm394, %v3007
        %3040 = vst.msk [vmem:[#allocation4 + $0x5c] sm:$0xf] %vm394, %v3008
        %3041 = vst.msk [vmem:[#allocation4 + $0x60] sm:$0xf] %vm394, %v3009
        %3042 = vst.msk [vmem:[#allocation4 + $0x64] sm:$0xf] %vm394, %v3010
        %3043 = vst.msk [vmem:[#allocation4 + $0x68] sm:$0xf] %vm394, %v3011
        %3044 = vst.msk [vmem:[#allocation4 + $0x6c] sm:$0xf] %vm394, %v3012
        %3045 = vst.msk [vmem:[#allocation4 + $0x70] sm:$0xf] %vm394, %v3013
        %3046 = vst.msk [vmem:[#allocation4 + $0x74] sm:$0xf] %vm394, %v3014
        %3047 = vst.msk [vmem:[#allocation4 + $0x78] sm:$0xf] %vm394, %v3015
        %3048 = vst.msk [vmem:[#allocation4 + $0x7c] sm:$0xf] %vm394, %v3016
        %v3049 = vld [vmem:[#allocation2] sm:$0xf]
        %v3050 = vld [vmem:[#allocation2 + $0x4] sm:$0xf]
        %v3051 = vld [vmem:[#allocation2 + $0x8] sm:$0x1]
        %v3052 = vld [vmem:[#allocation2 + $0xc] sm:$0xf]
        %v3053 = vld [vmem:[#allocation2 + $0x10] sm:$0xf]
        %v3054 = vld [vmem:[#allocation2 + $0x14] sm:$0x1]
        %v3055 = vld [vmem:[#allocation2 + $0x18] sm:$0xf]
        %v3056 = vld [vmem:[#allocation2 + $0x1c] sm:$0xf]
        %v3057 = vld [vmem:[#allocation2 + $0x20] sm:$0x1]
        %v3058 = vld [vmem:[#allocation2 + $0x24] sm:$0xf]
        %v3059 = vld [vmem:[#allocation2 + $0x28] sm:$0xf]
        %v3060 = vld [vmem:[#allocation2 + $0x2c] sm:$0x1]
        %v3061 = vld [vmem:[#allocation2 + $0x30] sm:$0xf]
        %v3062 = vld [vmem:[#allocation2 + $0x34] sm:$0xf]
        %v3063 = vld [vmem:[#allocation2 + $0x38] sm:$0x1]
        %v3064 = vld [vmem:[#allocation2 + $0x3c] sm:$0xf]
        %v3065 = vld [vmem:[#allocation2 + $0x40] sm:$0xf]
        %v3066 = vld [vmem:[#allocation2 + $0x44] sm:$0x1]
        %v3067 = vld [vmem:[#allocation2 + $0x48] sm:$0xf]
        %v3068 = vld [vmem:[#allocation2 + $0x4c] sm:$0xf]
        %v3069 = vld [vmem:[#allocation2 + $0x50] sm:$0x1]
        %v3070 = vld [vmem:[#allocation2 + $0x54] sm:$0xf]
        %v3071 = vld [vmem:[#allocation2 + $0x58] sm:$0xf]
        %v3072 = vld [vmem:[#allocation2 + $0x5c] sm:$0x1]
        %v3073 = vld [vmem:[#allocation2 + $0x60] sm:$0xf]
        %v3074 = vld [vmem:[#allocation2 + $0x64] sm:$0xf]
        %v3075 = vld [vmem:[#allocation2 + $0x68] sm:$0x1]
        %v3076 = vld [vmem:[#allocation2 + $0x6c] sm:$0xf]
        %v3077 = vld [vmem:[#allocation2 + $0x70] sm:$0xf]
        %v3078 = vld [vmem:[#allocation2 + $0x74] sm:$0x1]
        %v3079 = vld [vmem:[#allocation2 + $0x78] sm:$0xf]
        %v3080 = vld [vmem:[#allocation2 + $0x7c] sm:$0xf]
        %v3081 = vld [vmem:[#allocation2 + $0x80] sm:$0x1]
        %v3082 = vld [vmem:[#allocation2 + $0x84] sm:$0xf]
        %v3083 = vld [vmem:[#allocation2 + $0x88] sm:$0xf]
        %v3084 = vld [vmem:[#allocation2 + $0x8c] sm:$0x1]
        %v3085 = vld [vmem:[#allocation2 + $0x90] sm:$0xf]
        %v3086 = vld [vmem:[#allocation2 + $0x94] sm:$0xf]
        %v3087 = vld [vmem:[#allocation2 + $0x98] sm:$0x1]
        %v3088 = vld [vmem:[#allocation2 + $0x9c] sm:$0xf]
        %v3089 = vld [vmem:[#allocation2 + $0xa0] sm:$0xf]
        %v3090 = vld [vmem:[#allocation2 + $0xa4] sm:$0x1]
        %v3091 = vld [vmem:[#allocation2 + $0xa8] sm:$0xf]
        %v3092 = vld [vmem:[#allocation2 + $0xac] sm:$0xf]
        %v3093 = vld [vmem:[#allocation2 + $0xb0] sm:$0x1]
        %v3094 = vld [vmem:[#allocation2 + $0xb4] sm:$0xf]
        %v3095 = vld [vmem:[#allocation2 + $0xb8] sm:$0xf]
        %v3096 = vld [vmem:[#allocation2 + $0xbc] sm:$0x1]
        %vm3097 = vsmask.f32 3328
        %vm3098 = vsmask.f32 7440
        %vm3099 = vmor %vm3097, %vm3098
        %v3101 = vshrl.u32 %v3049, 16
        %v3103 = vrot.slane %v3101, 4
        %v3104 = vshll.u32 %v3049, 16
        %v3106 = vrot.slane %v3104, 5
        %v3107 = vor.u32 %v3103, %v3106
        %v3108 = vrot.slane %v3107, 4
        %v3110 = vshll.u32 %v3050, 16
        %v3112 = vrot.slane %v3110, 5
        %v3113 = vsel %vm3099, %v3108, %v3112
        %v3114 = vshrl.u32 %v3050, 16
        %v3116 = vrot.slane %v3114, 4
        %v3117 = vor.u32 %v3116, %v3112
        %v3118 = vrot.slane %v3117, 4
        %v3120 = vshll.u32 %v3051, 16
        %v3122 = vrot.slane %v3120, 5
        %v3123 = vsel %vm3099, %v3118, %v3122
        %v3125 = vshrl.u32 %v3052, 16
        %v3127 = vrot.slane %v3125, 4
        %v3128 = vshll.u32 %v3052, 16
        %v3130 = vrot.slane %v3128, 5
        %v3131 = vor.u32 %v3127, %v3130
        %v3132 = vrot.slane %v3131, 4
        %v3134 = vshll.u32 %v3053, 16
        %v3136 = vrot.slane %v3134, 5
        %v3137 = vsel %vm3099, %v3132, %v3136
        %v3138 = vshrl.u32 %v3053, 16
        %v3140 = vrot.slane %v3138, 4
        %v3141 = vor.u32 %v3140, %v3136
        %v3142 = vrot.slane %v3141, 4
        %v3144 = vshll.u32 %v3054, 16
        %v3146 = vrot.slane %v3144, 5
        %v3147 = vsel %vm3099, %v3142, %v3146
        %v3149 = vshrl.u32 %v3055, 16
        %v3151 = vrot.slane %v3149, 4
        %v3152 = vshll.u32 %v3055, 16
        %v3154 = vrot.slane %v3152, 5
        %v3155 = vor.u32 %v3151, %v3154
        %v3156 = vrot.slane %v3155, 4
        %v3158 = vshll.u32 %v3056, 16
        %v3160 = vrot.slane %v3158, 5
        %v3161 = vsel %vm3099, %v3156, %v3160
        %v3162 = vshrl.u32 %v3056, 16
        %v3164 = vrot.slane %v3162, 4
        %v3165 = vor.u32 %v3164, %v3160
        %v3166 = vrot.slane %v3165, 4
        %v3168 = vshll.u32 %v3057, 16
        %v3170 = vrot.slane %v3168, 5
        %v3171 = vsel %vm3099, %v3166, %v3170
        %v3173 = vshrl.u32 %v3058, 16
        %v3175 = vrot.slane %v3173, 4
        %v3176 = vshll.u32 %v3058, 16
        %v3178 = vrot.slane %v3176, 5
        %v3179 = vor.u32 %v3175, %v3178
        %v3180 = vrot.slane %v3179, 4
        %v3182 = vshll.u32 %v3059, 16
        %v3184 = vrot.slane %v3182, 5
        %v3185 = vsel %vm3099, %v3180, %v3184
        %v3186 = vshrl.u32 %v3059, 16
        %v3188 = vrot.slane %v3186, 4
        %v3189 = vor.u32 %v3188, %v3184
        %v3190 = vrot.slane %v3189, 4
        %v3192 = vshll.u32 %v3060, 16
        %v3194 = vrot.slane %v3192, 5
        %v3195 = vsel %vm3099, %v3190, %v3194
        %v3197 = vshrl.u32 %v3061, 16
        %v3199 = vrot.slane %v3197, 4
        %v3200 = vshll.u32 %v3061, 16
        %v3202 = vrot.slane %v3200, 5
        %v3203 = vor.u32 %v3199, %v3202
        %v3204 = vrot.slane %v3203, 4
        %v3206 = vshll.u32 %v3062, 16
        %v3208 = vrot.slane %v3206, 5
        %v3209 = vsel %vm3099, %v3204, %v3208
        %v3210 = vshrl.u32 %v3062, 16
        %v3212 = vrot.slane %v3210, 4
        %v3213 = vor.u32 %v3212, %v3208
        %v3214 = vrot.slane %v3213, 4
        %v3216 = vshll.u32 %v3063, 16
        %v3218 = vrot.slane %v3216, 5
        %v3219 = vsel %vm3099, %v3214, %v3218
        %v3221 = vshrl.u32 %v3064, 16
        %v3223 = vrot.slane %v3221, 4
        %v3224 = vshll.u32 %v3064, 16
        %v3226 = vrot.slane %v3224, 5
        %v3227 = vor.u32 %v3223, %v3226
        %v3228 = vrot.slane %v3227, 4
        %v3230 = vshll.u32 %v3065, 16
        %v3232 = vrot.slane %v3230, 5
        %v3233 = vsel %vm3099, %v3228, %v3232
        %v3234 = vshrl.u32 %v3065, 16
        %v3236 = vrot.slane %v3234, 4
        %v3237 = vor.u32 %v3236, %v3232
        %v3238 = vrot.slane %v3237, 4
        %v3240 = vshll.u32 %v3066, 16
        %v3242 = vrot.slane %v3240, 5
        %v3243 = vsel %vm3099, %v3238, %v3242
        %v3245 = vshrl.u32 %v3067, 16
        %v3247 = vrot.slane %v3245, 4
        %v3248 = vshll.u32 %v3067, 16
        %v3250 = vrot.slane %v3248, 5
        %v3251 = vor.u32 %v3247, %v3250
        %v3252 = vrot.slane %v3251, 4
        %v3254 = vshll.u32 %v3068, 16
        %v3256 = vrot.slane %v3254, 5
        %v3257 = vsel %vm3099, %v3252, %v3256
        %v3258 = vshrl.u32 %v3068, 16
        %v3260 = vrot.slane %v3258, 4
        %v3261 = vor.u32 %v3260, %v3256
        %v3262 = vrot.slane %v3261, 4
        %v3264 = vshll.u32 %v3069, 16
        %v3266 = vrot.slane %v3264, 5
        %v3267 = vsel %vm3099, %v3262, %v3266
        %v3269 = vshrl.u32 %v3070, 16
        %v3271 = vrot.slane %v3269, 4
        %v3272 = vshll.u32 %v3070, 16
        %v3274 = vrot.slane %v3272, 5
        %v3275 = vor.u32 %v3271, %v3274
        %v3276 = vrot.slane %v3275, 4
        %v3278 = vshll.u32 %v3071, 16
        %v3280 = vrot.slane %v3278, 5
        %v3281 = vsel %vm3099, %v3276, %v3280
        %v3282 = vshrl.u32 %v3071, 16
        %v3284 = vrot.slane %v3282, 4
        %v3285 = vor.u32 %v3284, %v3280
        %v3286 = vrot.slane %v3285, 4
        %v3288 = vshll.u32 %v3072, 16
        %v3290 = vrot.slane %v3288, 5
        %v3291 = vsel %vm3099, %v3286, %v3290
        %v3293 = vshrl.u32 %v3073, 16
        %v3295 = vrot.slane %v3293, 4
        %v3296 = vshll.u32 %v3073, 16
        %v3298 = vrot.slane %v3296, 5
        %v3299 = vor.u32 %v3295, %v3298
        %v3300 = vrot.slane %v3299, 4
        %v3302 = vshll.u32 %v3074, 16
        %v3304 = vrot.slane %v3302, 5
        %v3305 = vsel %vm3099, %v3300, %v3304
        %v3306 = vshrl.u32 %v3074, 16
        %v3308 = vrot.slane %v3306, 4
        %v3309 = vor.u32 %v3308, %v3304
        %v3310 = vrot.slane %v3309, 4
        %v3312 = vshll.u32 %v3075, 16
        %v3314 = vrot.slane %v3312, 5
        %v3315 = vsel %vm3099, %v3310, %v3314
        %v3317 = vshrl.u32 %v3076, 16
        %v3319 = vrot.slane %v3317, 4
        %v3320 = vshll.u32 %v3076, 16
        %v3322 = vrot.slane %v3320, 5
        %v3323 = vor.u32 %v3319, %v3322
        %v3324 = vrot.slane %v3323, 4
        %v3326 = vshll.u32 %v3077, 16
        %v3328 = vrot.slane %v3326, 5
        %v3329 = vsel %vm3099, %v3324, %v3328
        %v3330 = vshrl.u32 %v3077, 16
        %v3332 = vrot.slane %v3330, 4
        %v3333 = vor.u32 %v3332, %v3328
        %v3334 = vrot.slane %v3333, 4
        %v3336 = vshll.u32 %v3078, 16
        %v3338 = vrot.slane %v3336, 5
        %v3339 = vsel %vm3099, %v3334, %v3338
        %v3341 = vshrl.u32 %v3079, 16
        %v3343 = vrot.slane %v3341, 4
        %v3344 = vshll.u32 %v3079, 16
        %v3346 = vrot.slane %v3344, 5
        %v3347 = vor.u32 %v3343, %v3346
        %v3348 = vrot.slane %v3347, 4
        %v3350 = vshll.u32 %v3080, 16
        %v3352 = vrot.slane %v3350, 5
        %v3353 = vsel %vm3099, %v3348, %v3352
        %v3354 = vshrl.u32 %v3080, 16
        %v3356 = vrot.slane %v3354, 4
        %v3357 = vor.u32 %v3356, %v3352
        %v3358 = vrot.slane %v3357, 4
        %v3360 = vshll.u32 %v3081, 16
        %v3362 = vrot.slane %v3360, 5
        %v3363 = vsel %vm3099, %v3358, %v3362
        %v3365 = vshrl.u32 %v3082, 16
        %v3367 = vrot.slane %v3365, 4
        %v3368 = vshll.u32 %v3082, 16
        %v3370 = vrot.slane %v3368, 5
        %v3371 = vor.u32 %v3367, %v3370
        %v3372 = vrot.slane %v3371, 4
        %v3374 = vshll.u32 %v3083, 16
        %v3376 = vrot.slane %v3374, 5
        %v3377 = vsel %vm3099, %v3372, %v3376
        %v3378 = vshrl.u32 %v3083, 16
        %v3380 = vrot.slane %v3378, 4
        %v3381 = vor.u32 %v3380, %v3376
        %v3382 = vrot.slane %v3381, 4
        %v3384 = vshll.u32 %v3084, 16
        %v3386 = vrot.slane %v3384, 5
        %v3387 = vsel %vm3099, %v3382, %v3386
        %v3389 = vshrl.u32 %v3085, 16
        %v3391 = vrot.slane %v3389, 4
        %v3392 = vshll.u32 %v3085, 16
        %v3394 = vrot.slane %v3392, 5
        %v3395 = vor.u32 %v3391, %v3394
        %v3396 = vrot.slane %v3395, 4
        %v3398 = vshll.u32 %v3086, 16
        %v3400 = vrot.slane %v3398, 5
        %v3401 = vsel %vm3099, %v3396, %v3400
        %v3402 = vshrl.u32 %v3086, 16
        %v3404 = vrot.slane %v3402, 4
        %v3405 = vor.u32 %v3404, %v3400
        %v3406 = vrot.slane %v3405, 4
        %v3408 = vshll.u32 %v3087, 16
        %v3410 = vrot.slane %v3408, 5
        %v3411 = vsel %vm3099, %v3406, %v3410
        %v3413 = vshrl.u32 %v3088, 16
        %v3415 = vrot.slane %v3413, 4
        %v3416 = vshll.u32 %v3088, 16
        %v3418 = vrot.slane %v3416, 5
        %v3419 = vor.u32 %v3415, %v3418
        %v3420 = vrot.slane %v3419, 4
        %v3422 = vshll.u32 %v3089, 16
        %v3424 = vrot.slane %v3422, 5
        %v3425 = vsel %vm3099, %v3420, %v3424
        %v3426 = vshrl.u32 %v3089, 16
        %v3428 = vrot.slane %v3426, 4
        %v3429 = vor.u32 %v3428, %v3424
        %v3430 = vrot.slane %v3429, 4
        %v3432 = vshll.u32 %v3090, 16
        %v3434 = vrot.slane %v3432, 5
        %v3435 = vsel %vm3099, %v3430, %v3434
        %v3437 = vshrl.u32 %v3091, 16
        %v3439 = vrot.slane %v3437, 4
        %v3440 = vshll.u32 %v3091, 16
        %v3442 = vrot.slane %v3440, 5
        %v3443 = vor.u32 %v3439, %v3442
        %v3444 = vrot.slane %v3443, 4
        %v3446 = vshll.u32 %v3092, 16
        %v3448 = vrot.slane %v3446, 5
        %v3449 = vsel %vm3099, %v3444, %v3448
        %v3450 = vshrl.u32 %v3092, 16
        %v3452 = vrot.slane %v3450, 4
        %v3453 = vor.u32 %v3452, %v3448
        %v3454 = vrot.slane %v3453, 4
        %v3456 = vshll.u32 %v3093, 16
        %v3458 = vrot.slane %v3456, 5
        %v3459 = vsel %vm3099, %v3454, %v3458
        %v3461 = vshrl.u32 %v3094, 16
        %v3463 = vrot.slane %v3461, 4
        %v3464 = vshll.u32 %v3094, 16
        %v3466 = vrot.slane %v3464, 5
        %v3467 = vor.u32 %v3463, %v3466
        %v3468 = vrot.slane %v3467, 4
        %v3470 = vshll.u32 %v3095, 16
        %v3472 = vrot.slane %v3470, 5
        %v3473 = vsel %vm3099, %v3468, %v3472
        %v3474 = vshrl.u32 %v3095, 16
        %v3476 = vrot.slane %v3474, 4
        %v3477 = vor.u32 %v3476, %v3472
        %v3478 = vrot.slane %v3477, 4
        %v3480 = vshll.u32 %v3096, 16
        %v3482 = vrot.slane %v3480, 5
        %v3483 = vsel %vm3099, %v3478, %v3482
        %3484 = vrot.lane.b32.xlu0 %v3113, 8
        %v3485 = vpop.permute.xlu0 %3484
        %3486 = vrot.lane.b32.xlu0 %v3123, 8
        %v3487 = vpop.permute.xlu0 %3486
        %3488 = vrot.lane.b32.xlu0 %v3137, 8
        %v3489 = vpop.permute.xlu0 %3488
        %3490 = vrot.lane.b32.xlu0 %v3147, 8
        %v3491 = vpop.permute.xlu0 %3490
        %3492 = vrot.lane.b32.xlu0 %v3161, 8
        %v3493 = vpop.permute.xlu0 %3492
        %3494 = vrot.lane.b32.xlu0 %v3171, 8
        %v3495 = vpop.permute.xlu0 %3494
        %3496 = vrot.lane.b32.xlu0 %v3185, 8
        %v3497 = vpop.permute.xlu0 %3496
        %3498 = vrot.lane.b32.xlu0 %v3195, 8
        %v3499 = vpop.permute.xlu0 %3498
        %3500 = vrot.lane.b32.xlu0 %v3209, 8
        %v3501 = vpop.permute.xlu0 %3500
        %3502 = vrot.lane.b32.xlu0 %v3219, 8
        %v3503 = vpop.permute.xlu0 %3502
        %3504 = vrot.lane.b32.xlu0 %v3233, 8
        %v3505 = vpop.permute.xlu0 %3504
        %3506 = vrot.lane.b32.xlu0 %v3243, 8
        %v3507 = vpop.permute.xlu0 %3506
        %3508 = vrot.lane.b32.xlu0 %v3257, 8
        %v3509 = vpop.permute.xlu0 %3508
        %3510 = vrot.lane.b32.xlu0 %v3267, 8
        %v3511 = vpop.permute.xlu0 %3510
        %3512 = vrot.lane.b32.xlu0 %v3281, 8
        %v3513 = vpop.permute.xlu0 %3512
        %3514 = vrot.lane.b32.xlu0 %v3291, 8
        %v3515 = vpop.permute.xlu0 %3514
        %3516 = vrot.lane.b32.xlu0 %v3305, 8
        %v3517 = vpop.permute.xlu0 %3516
        %3518 = vrot.lane.b32.xlu0 %v3315, 8
        %v3519 = vpop.permute.xlu0 %3518
        %3520 = vrot.lane.b32.xlu0 %v3329, 8
        %v3521 = vpop.permute.xlu0 %3520
        %3522 = vrot.lane.b32.xlu0 %v3339, 8
        %v3523 = vpop.permute.xlu0 %3522
        %3524 = vrot.lane.b32.xlu0 %v3353, 8
        %v3525 = vpop.permute.xlu0 %3524
        %3526 = vrot.lane.b32.xlu0 %v3363, 8
        %v3527 = vpop.permute.xlu0 %3526
        %3528 = vrot.lane.b32.xlu0 %v3377, 8
        %v3529 = vpop.permute.xlu0 %3528
        %3530 = vrot.lane.b32.xlu0 %v3387, 8
        %v3531 = vpop.permute.xlu0 %3530
        %3532 = vrot.lane.b32.xlu0 %v3401, 8
        %v3533 = vpop.permute.xlu0 %3532
        %3534 = vrot.lane.b32.xlu0 %v3411, 8
        %v3535 = vpop.permute.xlu0 %3534
        %3536 = vrot.lane.b32.xlu0 %v3425, 8
        %v3537 = vpop.permute.xlu0 %3536
        %3538 = vrot.lane.b32.xlu0 %v3435, 8
        %v3539 = vpop.permute.xlu0 %3538
        %3540 = vrot.lane.b32.xlu0 %v3449, 8
        %v3541 = vpop.permute.xlu0 %3540
        %3542 = vrot.lane.b32.xlu0 %v3459, 8
        %v3543 = vpop.permute.xlu0 %3542
        %3544 = vrot.lane.b32.xlu0 %v3473, 8
        %v3545 = vpop.permute.xlu0 %3544
        %3546 = vrot.lane.b32.xlu0 %v3483, 8
        %v3547 = vpop.permute.xlu0 %3546
        %vm3580 = vcmask 126016
        %3581 = vst.msk [vmem:[#allocation4] sm:$0xf] %vm3580, %v3485
        %3582 = vst.msk [vmem:[#allocation4 + $0x4] sm:$0xf] %vm3580, %v3487
        %3583 = vst.msk [vmem:[#allocation4 + $0x8] sm:$0xf] %vm3580, %v3489
        %3584 = vst.msk [vmem:[#allocation4 + $0xc] sm:$0xf] %vm3580, %v3491
        %3585 = vst.msk [vmem:[#allocation4 + $0x10] sm:$0xf] %vm3580, %v3493
        %3586 = vst.msk [vmem:[#allocation4 + $0x14] sm:$0xf] %vm3580, %v3495
        %3587 = vst.msk [vmem:[#allocation4 + $0x18] sm:$0xf] %vm3580, %v3497
        %3588 = vst.msk [vmem:[#allocation4 + $0x1c] sm:$0xf] %vm3580, %v3499
        %3589 = vst.msk [vmem:[#allocation4 + $0x20] sm:$0xf] %vm3580, %v3501
        %3590 = vst.msk [vmem:[#allocation4 + $0x24] sm:$0xf] %vm3580, %v3503
        %3591 = vst.msk [vmem:[#allocation4 + $0x28] sm:$0xf] %vm3580, %v3505
        %3592 = vst.msk [vmem:[#allocation4 + $0x2c] sm:$0xf] %vm3580, %v3507
        %3593 = vst.msk [vmem:[#allocation4 + $0x30] sm:$0xf] %vm3580, %v3509
        %3594 = vst.msk [vmem:[#allocation4 + $0x34] sm:$0xf] %vm3580, %v3511
        %3595 = vst.msk [vmem:[#allocation4 + $0x38] sm:$0xf] %vm3580, %v3513
        %3596 = vst.msk [vmem:[#allocation4 + $0x3c] sm:$0xf] %vm3580, %v3515
        %3597 = vst.msk [vmem:[#allocation4 + $0x40] sm:$0xf] %vm3580, %v3517
        %3598 = vst.msk [vmem:[#allocation4 + $0x44] sm:$0xf] %vm3580, %v3519
        %3599 = vst.msk [vmem:[#allocation4 + $0x48] sm:$0xf] %vm3580, %v3521
        %3600 = vst.msk [vmem:[#allocation4 + $0x4c] sm:$0xf] %vm3580, %v3523
        %3601 = vst.msk [vmem:[#allocation4 + $0x50] sm:$0xf] %vm3580, %v3525
        %3602 = vst.msk [vmem:[#allocation4 + $0x54] sm:$0xf] %vm3580, %v3527
        %3603 = vst.msk [vmem:[#allocation4 + $0x58] sm:$0xf] %vm3580, %v3529
        %3604 = vst.msk [vmem:[#allocation4 + $0x5c] sm:$0xf] %vm3580, %v3531
        %3605 = vst.msk [vmem:[#allocation4 + $0x60] sm:$0xf] %vm3580, %v3533
        %3606 = vst.msk [vmem:[#allocation4 + $0x64] sm:$0xf] %vm3580, %v3535
        %3607 = vst.msk [vmem:[#allocation4 + $0x68] sm:$0xf] %vm3580, %v3537
        %3608 = vst.msk [vmem:[#allocation4 + $0x6c] sm:$0xf] %vm3580, %v3539
        %3609 = vst.msk [vmem:[#allocation4 + $0x70] sm:$0xf] %vm3580, %v3541
        %3610 = vst.msk [vmem:[#allocation4 + $0x74] sm:$0xf] %vm3580, %v3543
        %3611 = vst.msk [vmem:[#allocation4 + $0x78] sm:$0xf] %vm3580, %v3545
        %3612 = vst.msk [vmem:[#allocation4 + $0x7c] sm:$0xf] %vm3580, %v3547
        %v3613 = vld [vmem:[#allocation2] sm:$0xe]
        %v3614 = vld [vmem:[#allocation2 + $0x4] sm:$0xf]
        %v3615 = vld [vmem:[#allocation2 + $0x8] sm:$0x1]
        %v3616 = vld [vmem:[#allocation2 + $0xc] sm:$0xe]
        %v3617 = vld [vmem:[#allocation2 + $0x10] sm:$0xf]
        %v3618 = vld [vmem:[#allocation2 + $0x14] sm:$0x1]
        %v3619 = vld [vmem:[#allocation2 + $0x18] sm:$0xe]
        %v3620 = vld [vmem:[#allocation2 + $0x1c] sm:$0xf]
        %v3621 = vld [vmem:[#allocation2 + $0x20] sm:$0x1]
        %v3622 = vld [vmem:[#allocation2 + $0x24] sm:$0xe]
        %v3623 = vld [vmem:[#allocation2 + $0x28] sm:$0xf]
        %v3624 = vld [vmem:[#allocation2 + $0x2c] sm:$0x1]
        %v3625 = vld [vmem:[#allocation2 + $0x30] sm:$0xe]
        %v3626 = vld [vmem:[#allocation2 + $0x34] sm:$0xf]
        %v3627 = vld [vmem:[#allocation2 + $0x38] sm:$0x1]
        %v3628 = vld [vmem:[#allocation2 + $0x3c] sm:$0xe]
        %v3629 = vld [vmem:[#allocation2 + $0x40] sm:$0xf]
        %v3630 = vld [vmem:[#allocation2 + $0x44] sm:$0x1]
        %v3631 = vld [vmem:[#allocation2 + $0x48] sm:$0xe]
        %v3632 = vld [vmem:[#allocation2 + $0x4c] sm:$0xf]
        %v3633 = vld [vmem:[#allocation2 + $0x50] sm:$0x1]
        %v3634 = vld [vmem:[#allocation2 + $0x54] sm:$0xe]
        %v3635 = vld [vmem:[#allocation2 + $0x58] sm:$0xf]
        %v3636 = vld [vmem:[#allocation2 + $0x5c] sm:$0x1]
        %v3637 = vld [vmem:[#allocation2 + $0x60] sm:$0xe]
        %v3638 = vld [vmem:[#allocation2 + $0x64] sm:$0xf]
        %v3639 = vld [vmem:[#allocation2 + $0x68] sm:$0x1]
        %v3640 = vld [vmem:[#allocation2 + $0x6c] sm:$0xe]
        %v3641 = vld [vmem:[#allocation2 + $0x70] sm:$0xf]
        %v3642 = vld [vmem:[#allocation2 + $0x74] sm:$0x1]
        %v3643 = vld [vmem:[#allocation2 + $0x78] sm:$0xe]
        %v3644 = vld [vmem:[#allocation2 + $0x7c] sm:$0xf]
        %v3645 = vld [vmem:[#allocation2 + $0x80] sm:$0x1]
        %v3646 = vld [vmem:[#allocation2 + $0x84] sm:$0xe]
        %v3647 = vld [vmem:[#allocation2 + $0x88] sm:$0xf]
        %v3648 = vld [vmem:[#allocation2 + $0x8c] sm:$0x1]
        %v3649 = vld [vmem:[#allocation2 + $0x90] sm:$0xe]
        %v3650 = vld [vmem:[#allocation2 + $0x94] sm:$0xf]
        %v3651 = vld [vmem:[#allocation2 + $0x98] sm:$0x1]
        %v3652 = vld [vmem:[#allocation2 + $0x9c] sm:$0xe]
        %v3653 = vld [vmem:[#allocation2 + $0xa0] sm:$0xf]
        %v3654 = vld [vmem:[#allocation2 + $0xa4] sm:$0x1]
        %v3655 = vld [vmem:[#allocation2 + $0xa8] sm:$0xe]
        %v3656 = vld [vmem:[#allocation2 + $0xac] sm:$0xf]
        %v3657 = vld [vmem:[#allocation2 + $0xb0] sm:$0x1]
        %v3658 = vld [vmem:[#allocation2 + $0xb4] sm:$0xe]
        %v3659 = vld [vmem:[#allocation2 + $0xb8] sm:$0xf]
        %v3660 = vld [vmem:[#allocation2 + $0xbc] sm:$0x1]
        %vm3709 = vcmask 1042432
        %vm3710 = vcmask 1046532
        %vm3711 = vmor %vm3709, %vm3710
        %v3712 = vrot.slane %v3613, 5
        %v3713 = vrot.slane %v3712, 4
        %v3714 = vrot.slane %v3614, 5
        %v3715 = vsel %vm3711, %v3713, %v3714
        %v3716 = vrot.slane %v3714, 4
        %v3717 = vrot.slane %v3615, 5
        %v3718 = vsel %vm3711, %v3716, %v3717
        %v3719 = vrot.slane %v3616, 5
        %v3720 = vrot.slane %v3719, 4
        %v3721 = vrot.slane %v3617, 5
        %v3722 = vsel %vm3711, %v3720, %v3721
        %v3723 = vrot.slane %v3721, 4
        %v3724 = vrot.slane %v3618, 5
        %v3725 = vsel %vm3711, %v3723, %v3724
        %v3726 = vrot.slane %v3619, 5
        %v3727 = vrot.slane %v3726, 4
        %v3728 = vrot.slane %v3620, 5
        %v3729 = vsel %vm3711, %v3727, %v3728
        %v3730 = vrot.slane %v3728, 4
        %v3731 = vrot.slane %v3621, 5
        %v3732 = vsel %vm3711, %v3730, %v3731
        %v3733 = vrot.slane %v3622, 5
        %v3734 = vrot.slane %v3733, 4
        %v3735 = vrot.slane %v3623, 5
        %v3736 = vsel %vm3711, %v3734, %v3735
        %v3737 = vrot.slane %v3735, 4
        %v3738 = vrot.slane %v3624, 5
        %v3739 = vsel %vm3711, %v3737, %v3738
        %v3740 = vrot.slane %v3625, 5
        %v3741 = vrot.slane %v3740, 4
        %v3742 = vrot.slane %v3626, 5
        %v3743 = vsel %vm3711, %v3741, %v3742
        %v3744 = vrot.slane %v3742, 4
        %v3745 = vrot.slane %v3627, 5
        %v3746 = vsel %vm3711, %v3744, %v3745
        %v3747 = vrot.slane %v3628, 5
        %v3748 = vrot.slane %v3747, 4
        %v3749 = vrot.slane %v3629, 5
        %v3750 = vsel %vm3711, %v3748, %v3749
        %v3751 = vrot.slane %v3749, 4
        %v3752 = vrot.slane %v3630, 5
        %v3753 = vsel %vm3711, %v3751, %v3752
        %v3754 = vrot.slane %v3631, 5
        %v3755 = vrot.slane %v3754, 4
        %v3756 = vrot.slane %v3632, 5
        %v3757 = vsel %vm3711, %v3755, %v3756
        %v3758 = vrot.slane %v3756, 4
        %v3759 = vrot.slane %v3633, 5
        %v3760 = vsel %vm3711, %v3758, %v3759
        %v3761 = vrot.slane %v3634, 5
        %v3762 = vrot.slane %v3761, 4
        %v3763 = vrot.slane %v3635, 5
        %v3764 = vsel %vm3711, %v3762, %v3763
        %v3765 = vrot.slane %v3763, 4
        %v3766 = vrot.slane %v3636, 5
        %v3767 = vsel %vm3711, %v3765, %v3766
        %v3768 = vrot.slane %v3637, 5
        %v3769 = vrot.slane %v3768, 4
        %v3770 = vrot.slane %v3638, 5
        %v3771 = vsel %vm3711, %v3769, %v3770
        %v3772 = vrot.slane %v3770, 4
        %v3773 = vrot.slane %v3639, 5
        %v3774 = vsel %vm3711, %v3772, %v3773
        %v3775 = vrot.slane %v3640, 5
        %v3776 = vrot.slane %v3775, 4
        %v3777 = vrot.slane %v3641, 5
        %v3778 = vsel %vm3711, %v3776, %v3777
        %v3779 = vrot.slane %v3777, 4
        %v3780 = vrot.slane %v3642, 5
        %v3781 = vsel %vm3711, %v3779, %v3780
        %v3782 = vrot.slane %v3643, 5
        %v3783 = vrot.slane %v3782, 4
        %v3784 = vrot.slane %v3644, 5
        %v3785 = vsel %vm3711, %v3783, %v3784
        %v3786 = vrot.slane %v3784, 4
        %v3787 = vrot.slane %v3645, 5
        %v3788 = vsel %vm3711, %v3786, %v3787
        %v3789 = vrot.slane %v3646, 5
        %v3790 = vrot.slane %v3789, 4
        %v3791 = vrot.slane %v3647, 5
        %v3792 = vsel %vm3711, %v3790, %v3791
        %v3793 = vrot.slane %v3791, 4
        %v3794 = vrot.slane %v3648, 5
        %v3795 = vsel %vm3711, %v3793, %v3794
        %v3796 = vrot.slane %v3649, 5
        %v3797 = vrot.slane %v3796, 4
        %v3798 = vrot.slane %v3650, 5
        %v3799 = vsel %vm3711, %v3797, %v3798
        %v3800 = vrot.slane %v3798, 4
        %v3801 = vrot.slane %v3651, 5
        %v3802 = vsel %vm3711, %v3800, %v3801
        %v3803 = vrot.slane %v3652, 5
        %v3804 = vrot.slane %v3803, 4
        %v3805 = vrot.slane %v3653, 5
        %v3806 = vsel %vm3711, %v3804, %v3805
        %v3807 = vrot.slane %v3805, 4
        %v3808 = vrot.slane %v3654, 5
        %v3809 = vsel %vm3711, %v3807, %v3808
        %v3810 = vrot.slane %v3655, 5
        %v3811 = vrot.slane %v3810, 4
        %v3812 = vrot.slane %v3656, 5
        %v3813 = vsel %vm3711, %v3811, %v3812
        %v3814 = vrot.slane %v3812, 4
        %v3815 = vrot.slane %v3657, 5
        %v3816 = vsel %vm3711, %v3814, %v3815
        %v3817 = vrot.slane %v3658, 5
        %v3818 = vrot.slane %v3817, 4
        %v3819 = vrot.slane %v3659, 5
        %v3820 = vsel %vm3711, %v3818, %v3819
        %v3821 = vrot.slane %v3819, 4
        %v3822 = vrot.slane %v3660, 5
        %v3823 = vsel %vm3711, %v3821, %v3822
        %3824 = vrot.lane.b32.xlu0 %v3715, 16
        %v3825 = vpop.permute.xlu0 %3824
        %3826 = vrot.lane.b32.xlu0 %v3718, 16
        %v3827 = vpop.permute.xlu0 %3826
        %3828 = vrot.lane.b32.xlu0 %v3722, 16
        %v3829 = vpop.permute.xlu0 %3828
        %3830 = vrot.lane.b32.xlu0 %v3725, 16
        %v3831 = vpop.permute.xlu0 %3830
        %3832 = vrot.lane.b32.xlu0 %v3729, 16
        %v3833 = vpop.permute.xlu0 %3832
        %3834 = vrot.lane.b32.xlu0 %v3732, 16
        %v3835 = vpop.permute.xlu0 %3834
        %3836 = vrot.lane.b32.xlu0 %v3736, 16
        %v3837 = vpop.permute.xlu0 %3836
        %3838 = vrot.lane.b32.xlu0 %v3739, 16
        %v3839 = vpop.permute.xlu0 %3838
        %3840 = vrot.lane.b32.xlu0 %v3743, 16
        %v3841 = vpop.permute.xlu0 %3840
        %3842 = vrot.lane.b32.xlu0 %v3746, 16
        %v3843 = vpop.permute.xlu0 %3842
        %3844 = vrot.lane.b32.xlu0 %v3750, 16
        %v3845 = vpop.permute.xlu0 %3844
        %3846 = vrot.lane.b32.xlu0 %v3753, 16
        %v3847 = vpop.permute.xlu0 %3846
        %3848 = vrot.lane.b32.xlu0 %v3757, 16
        %v3849 = vpop.permute.xlu0 %3848
        %3850 = vrot.lane.b32.xlu0 %v3760, 16
        %v3851 = vpop.permute.xlu0 %3850
        %3852 = vrot.lane.b32.xlu0 %v3764, 16
        %v3853 = vpop.permute.xlu0 %3852
        %3854 = vrot.lane.b32.xlu0 %v3767, 16
        %v3855 = vpop.permute.xlu0 %3854
        %3856 = vrot.lane.b32.xlu0 %v3771, 16
        %v3857 = vpop.permute.xlu0 %3856
        %3858 = vrot.lane.b32.xlu0 %v3774, 16
        %v3859 = vpop.permute.xlu0 %3858
        %3860 = vrot.lane.b32.xlu0 %v3778, 16
        %v3861 = vpop.permute.xlu0 %3860
        %3862 = vrot.lane.b32.xlu0 %v3781, 16
        %v3863 = vpop.permute.xlu0 %3862
        %3864 = vrot.lane.b32.xlu0 %v3785, 16
        %v3865 = vpop.permute.xlu0 %3864
        %3866 = vrot.lane.b32.xlu0 %v3788, 16
        %v3867 = vpop.permute.xlu0 %3866
        %3868 = vrot.lane.b32.xlu0 %v3792, 16
        %v3869 = vpop.permute.xlu0 %3868
        %3870 = vrot.lane.b32.xlu0 %v3795, 16
        %v3871 = vpop.permute.xlu0 %3870
        %3872 = vrot.lane.b32.xlu0 %v3799, 16
        %v3873 = vpop.permute.xlu0 %3872
        %3874 = vrot.lane.b32.xlu0 %v3802, 16
        %v3875 = vpop.permute.xlu0 %3874
        %3876 = vrot.lane.b32.xlu0 %v3806, 16
        %v3877 = vpop.permute.xlu0 %3876
        %3878 = vrot.lane.b32.xlu0 %v3809, 16
        %v3879 = vpop.permute.xlu0 %3878
        %3880 = vrot.lane.b32.xlu0 %v3813, 16
        %v3881 = vpop.permute.xlu0 %3880
        %3882 = vrot.lane.b32.xlu0 %v3816, 16
        %v3883 = vpop.permute.xlu0 %3882
        %3884 = vrot.lane.b32.xlu0 %v3820, 16
        %v3885 = vpop.permute.xlu0 %3884
        %3886 = vrot.lane.b32.xlu0 %v3823, 16
        %v3887 = vpop.permute.xlu0 %3886
        %vm3920 = vcmask 191616
        %3921 = vst.msk [vmem:[#allocation4] sm:$0xf] %vm3920, %v3825
        %3922 = vst.msk [vmem:[#allocation4 + $0x4] sm:$0xf] %vm3920, %v3827
        %3923 = vst.msk [vmem:[#allocation4 + $0x8] sm:$0xf] %vm3920, %v3829
        %3924 = vst.msk [vmem:[#allocation4 + $0xc] sm:$0xf] %vm3920, %v3831
        %3925 = vst.msk [vmem:[#allocation4 + $0x10] sm:$0xf] %vm3920, %v3833
        %3926 = vst.msk [vmem:[#allocation4 + $0x14] sm:$0xf] %vm3920, %v3835
        %3927 = vst.msk [vmem:[#allocation4 + $0x18] sm:$0xf] %vm3920, %v3837
        %3928 = vst.msk [vmem:[#allocation4 + $0x1c] sm:$0xf] %vm3920, %v3839
        %3929 = vst.msk [vmem:[#allocation4 + $0x20] sm:$0xf] %vm3920, %v3841
        %3930 = vst.msk [vmem:[#allocation4 + $0x24] sm:$0xf] %vm3920, %v3843
        %3931 = vst.msk [vmem:[#allocation4 + $0x28] sm:$0xf] %vm3920, %v3845
        %3932 = vst.msk [vmem:[#allocation4 + $0x2c] sm:$0xf] %vm3920, %v3847
        %3933 = vst.msk [vmem:[#allocation4 + $0x30] sm:$0xf] %vm3920, %v3849
        %3934 = vst.msk [vmem:[#allocation4 + $0x34] sm:$0xf] %vm3920, %v3851
        %3935 = vst.msk [vmem:[#allocation4 + $0x38] sm:$0xf] %vm3920, %v3853
        %3936 = vst.msk [vmem:[#allocation4 + $0x3c] sm:$0xf] %vm3920, %v3855
        %3937 = vst.msk [vmem:[#allocation4 + $0x40] sm:$0xf] %vm3920, %v3857
        %3938 = vst.msk [vmem:[#allocation4 + $0x44] sm:$0xf] %vm3920, %v3859
        %3939 = vst.msk [vmem:[#allocation4 + $0x48] sm:$0xf] %vm3920, %v3861
        %3940 = vst.msk [vmem:[#allocation4 + $0x4c] sm:$0xf] %vm3920, %v3863
        %3941 = vst.msk [vmem:[#allocation4 + $0x50] sm:$0xf] %vm3920, %v3865
        %3942 = vst.msk [vmem:[#allocation4 + $0x54] sm:$0xf] %vm3920, %v3867
        %3943 = vst.msk [vmem:[#allocation4 + $0x58] sm:$0xf] %vm3920, %v3869
        %3944 = vst.msk [vmem:[#allocation4 + $0x5c] sm:$0xf] %vm3920, %v3871
        %3945 = vst.msk [vmem:[#allocation4 + $0x60] sm:$0xf] %vm3920, %v3873
        %3946 = vst.msk [vmem:[#allocation4 + $0x64] sm:$0xf] %vm3920, %v3875
        %3947 = vst.msk [vmem:[#allocation4 + $0x68] sm:$0xf] %vm3920, %v3877
        %3948 = vst.msk [vmem:[#allocation4 + $0x6c] sm:$0xf] %vm3920, %v3879
        %3949 = vst.msk [vmem:[#allocation4 + $0x70] sm:$0xf] %vm3920, %v3881
        %3950 = vst.msk [vmem:[#allocation4 + $0x74] sm:$0xf] %vm3920, %v3883
        %3951 = vst.msk [vmem:[#allocation4 + $0x78] sm:$0xf] %vm3920, %v3885
        %3952 = vst.msk [vmem:[#allocation4 + $0x7c] sm:$0xf] %vm3920, %v3887
        %v3953 = vld [vmem:[%s2238] sm:$0xf]
        %v3954 = vld [vmem:[%s2238 + $0x4] sm:$0xf]
        %v3955 = vld [vmem:[%s2238 + $0xc] sm:$0xf]
        %v3956 = vld [vmem:[%s2238 + $0x10] sm:$0xf]
        %v3957 = vld [vmem:[%s2238 + $0x18] sm:$0xf]
        %v3958 = vld [vmem:[%s2238 + $0x1c] sm:$0xf]
        %v3959 = vld [vmem:[%s2238 + $0x24] sm:$0xf]
        %v3960 = vld [vmem:[%s2238 + $0x28] sm:$0xf]
        %v3961 = vld [vmem:[%s2238 + $0x30] sm:$0xf]
        %v3962 = vld [vmem:[%s2238 + $0x34] sm:$0xf]
        %v3963 = vld [vmem:[%s2238 + $0x3c] sm:$0xf]
        %v3964 = vld [vmem:[%s2238 + $0x40] sm:$0xf]
        %v3965 = vld [vmem:[%s2238 + $0x48] sm:$0xf]
        %v3966 = vld [vmem:[%s2238 + $0x4c] sm:$0xf]
        %v3967 = vld [vmem:[%s2238 + $0x54] sm:$0xf]
        %v3968 = vld [vmem:[%s2238 + $0x58] sm:$0xf]
        %v3969 = vld [vmem:[%s2238 + $0x60] sm:$0xf]
        %v3970 = vld [vmem:[%s2238 + $0x64] sm:$0xf]
        %v3971 = vld [vmem:[%s2238 + $0x6c] sm:$0xf]
        %v3972 = vld [vmem:[%s2238 + $0x70] sm:$0xf]
        %v3973 = vld [vmem:[%s2238 + $0x78] sm:$0xf]
        %v3974 = vld [vmem:[%s2238 + $0x7c] sm:$0xf]
        %v3975 = vld [vmem:[%s2238 + $0x84] sm:$0xf]
        %v3976 = vld [vmem:[%s2238 + $0x88] sm:$0xf]
        %v3977 = vld [vmem:[%s2238 + $0x90] sm:$0xf]
        %v3978 = vld [vmem:[%s2238 + $0x94] sm:$0xf]
        %v3979 = vld [vmem:[%s2238 + $0x9c] sm:$0xf]
        %v3980 = vld [vmem:[%s2238 + $0xa0] sm:$0xf]
        %v3981 = vld [vmem:[%s2238 + $0xa8] sm:$0xf]
        %v3982 = vld [vmem:[%s2238 + $0xac] sm:$0xf]
        %v3983 = vld [vmem:[%s2238 + $0xb4] sm:$0xf]
        %v3984 = vld [vmem:[%s2238 + $0xb8] sm:$0xf]
        %4017 = vrot.lane.b32.xlu0 %v3953, 24
        %v4018 = vpop.permute.xlu0 %4017
        %4019 = vrot.lane.b32.xlu0 %v3954, 24
        %v4020 = vpop.permute.xlu0 %4019
        %4021 = vrot.lane.b32.xlu0 %v3955, 24
        %v4022 = vpop.permute.xlu0 %4021
        %4023 = vrot.lane.b32.xlu0 %v3956, 24
        %v4024 = vpop.permute.xlu0 %4023
        %4025 = vrot.lane.b32.xlu0 %v3957, 24
        %v4026 = vpop.permute.xlu0 %4025
        %4027 = vrot.lane.b32.xlu0 %v3958, 24
        %v4028 = vpop.permute.xlu0 %4027
        %4029 = vrot.lane.b32.xlu0 %v3959, 24
        %v4030 = vpop.permute.xlu0 %4029
        %4031 = vrot.lane.b32.xlu0 %v3960, 24
        %v4032 = vpop.permute.xlu0 %4031
        %4033 = vrot.lane.b32.xlu0 %v3961, 24
        %v4034 = vpop.permute.xlu0 %4033
        %4035 = vrot.lane.b32.xlu0 %v3962, 24
        %v4036 = vpop.permute.xlu0 %4035
        %4037 = vrot.lane.b32.xlu0 %v3963, 24
        %v4038 = vpop.permute.xlu0 %4037
        %4039 = vrot.lane.b32.xlu0 %v3964, 24
        %v4040 = vpop.permute.xlu0 %4039
        %4041 = vrot.lane.b32.xlu0 %v3965, 24
        %v4042 = vpop.permute.xlu0 %4041
        %4043 = vrot.lane.b32.xlu0 %v3966, 24
        %v4044 = vpop.permute.xlu0 %4043
        %4045 = vrot.lane.b32.xlu0 %v3967, 24
        %v4046 = vpop.permute.xlu0 %4045
        %4047 = vrot.lane.b32.xlu0 %v3968, 24
        %v4048 = vpop.permute.xlu0 %4047
        %4049 = vrot.lane.b32.xlu0 %v3969, 24
        %v4050 = vpop.permute.xlu0 %4049
        %4051 = vrot.lane.b32.xlu0 %v3970, 24
        %v4052 = vpop.permute.xlu0 %4051
        %4053 = vrot.lane.b32.xlu0 %v3971, 24
        %v4054 = vpop.permute.xlu0 %4053
        %4055 = vrot.lane.b32.xlu0 %v3972, 24
        %v4056 = vpop.permute.xlu0 %4055
        %4057 = vrot.lane.b32.xlu0 %v3973, 24
        %v4058 = vpop.permute.xlu0 %4057
        %4059 = vrot.lane.b32.xlu0 %v3974, 24
        %v4060 = vpop.permute.xlu0 %4059
        %4061 = vrot.lane.b32.xlu0 %v3975, 24
        %v4062 = vpop.permute.xlu0 %4061
        %4063 = vrot.lane.b32.xlu0 %v3976, 24
        %v4064 = vpop.permute.xlu0 %4063
        %4065 = vrot.lane.b32.xlu0 %v3977, 24
        %v4066 = vpop.permute.xlu0 %4065
        %4067 = vrot.lane.b32.xlu0 %v3978, 24
        %v4068 = vpop.permute.xlu0 %4067
        %4069 = vrot.lane.b32.xlu0 %v3979, 24
        %v4070 = vpop.permute.xlu0 %4069
        %4071 = vrot.lane.b32.xlu0 %v3980, 24
        %v4072 = vpop.permute.xlu0 %4071
        %4073 = vrot.lane.b32.xlu0 %v3981, 24
        %v4074 = vpop.permute.xlu0 %4073
        %4075 = vrot.lane.b32.xlu0 %v3982, 24
        %v4076 = vpop.permute.xlu0 %4075
        %4077 = vrot.lane.b32.xlu0 %v3983, 24
        %v4078 = vpop.permute.xlu0 %4077
        %4079 = vrot.lane.b32.xlu0 %v3984, 24
        %v4080 = vpop.permute.xlu0 %4079
        %vm4113 = vcmask 257216
        %4114 = vst.msk [vmem:[#allocation4] sm:$0xf] %vm4113, %v4018
        %4115 = vst.msk [vmem:[#allocation4 + $0x4] sm:$0xf] %vm4113, %v4020
        %4116 = vst.msk [vmem:[#allocation4 + $0x8] sm:$0xf] %vm4113, %v4022
        %4117 = vst.msk [vmem:[#allocation4 + $0xc] sm:$0xf] %vm4113, %v4024
        %4118 = vst.msk [vmem:[#allocation4 + $0x10] sm:$0xf] %vm4113, %v4026
        %4119 = vst.msk [vmem:[#allocation4 + $0x14] sm:$0xf] %vm4113, %v4028
        %4120 = vst.msk [vmem:[#allocation4 + $0x18] sm:$0xf] %vm4113, %v4030
        %4121 = vst.msk [vmem:[#allocation4 + $0x1c] sm:$0xf] %vm4113, %v4032
        %4122 = vst.msk [vmem:[#allocation4 + $0x20] sm:$0xf] %vm4113, %v4034
        %4123 = vst.msk [vmem:[#allocation4 + $0x24] sm:$0xf] %vm4113, %v4036
        %4124 = vst.msk [vmem:[#allocation4 + $0x28] sm:$0xf] %vm4113, %v4038
        %4125 = vst.msk [vmem:[#allocation4 + $0x2c] sm:$0xf] %vm4113, %v4040
        %4126 = vst.msk [vmem:[#allocation4 + $0x30] sm:$0xf] %vm4113, %v4042
        %4127 = vst.msk [vmem:[#allocation4 + $0x34] sm:$0xf] %vm4113, %v4044
        %4128 = vst.msk [vmem:[#allocation4 + $0x38] sm:$0xf] %vm4113, %v4046
        %4129 = vst.msk [vmem:[#allocation4 + $0x3c] sm:$0xf] %vm4113, %v4048
        %4130 = vst.msk [vmem:[#allocation4 + $0x40] sm:$0xf] %vm4113, %v4050
        %4131 = vst.msk [vmem:[#allocation4 + $0x44] sm:$0xf] %vm4113, %v4052
        %4132 = vst.msk [vmem:[#allocation4 + $0x48] sm:$0xf] %vm4113, %v4054
        %4133 = vst.msk [vmem:[#allocation4 + $0x4c] sm:$0xf] %vm4113, %v4056
        %4134 = vst.msk [vmem:[#allocation4 + $0x50] sm:$0xf] %vm4113, %v4058
        %4135 = vst.msk [vmem:[#allocation4 + $0x54] sm:$0xf] %vm4113, %v4060
        %4136 = vst.msk [vmem:[#allocation4 + $0x58] sm:$0xf] %vm4113, %v4062
        %4137 = vst.msk [vmem:[#allocation4 + $0x5c] sm:$0xf] %vm4113, %v4064
        %4138 = vst.msk [vmem:[#allocation4 + $0x60] sm:$0xf] %vm4113, %v4066
        %4139 = vst.msk [vmem:[#allocation4 + $0x64] sm:$0xf] %vm4113, %v4068
        %4140 = vst.msk [vmem:[#allocation4 + $0x68] sm:$0xf] %vm4113, %v4070
        %4141 = vst.msk [vmem:[#allocation4 + $0x6c] sm:$0xf] %vm4113, %v4072
        %4142 = vst.msk [vmem:[#allocation4 + $0x70] sm:$0xf] %vm4113, %v4074
        %4143 = vst.msk [vmem:[#allocation4 + $0x74] sm:$0xf] %vm4113, %v4076
        %4144 = vst.msk [vmem:[#allocation4 + $0x78] sm:$0xf] %vm4113, %v4078
        %4145 = vst.msk [vmem:[#allocation4 + $0x7c] sm:$0xf] %vm4113, %v4080
        %v4146 = vld [vmem:[%s2238] sm:$0xf]
        %v4147 = vld [vmem:[%s2238 + $0x4] sm:$0xf]
        %v4148 = vld [vmem:[%s2238 + $0x8] sm:$0x1]
        %v4149 = vld [vmem:[%s2238 + $0xc] sm:$0xf]
        %v4150 = vld [vmem:[%s2238 + $0x10] sm:$0xf]
        %v4151 = vld [vmem:[%s2238 + $0x14] sm:$0x1]
        %v4152 = vld [vmem:[%s2238 + $0x18] sm:$0xf]
        %v4153 = vld [vmem:[%s2238 + $0x1c] sm:$0xf]
        %v4154 = vld [vmem:[%s2238 + $0x20] sm:$0x1]
        %v4155 = vld [vmem:[%s2238 + $0x24] sm:$0xf]
        %v4156 = vld [vmem:[%s2238 + $0x28] sm:$0xf]
        %v4157 = vld [vmem:[%s2238 + $0x2c] sm:$0x1]
        %v4158 = vld [vmem:[%s2238 + $0x30] sm:$0xf]
        %v4159 = vld [vmem:[%s2238 + $0x34] sm:$0xf]
        %v4160 = vld [vmem:[%s2238 + $0x38] sm:$0x1]
        %v4161 = vld [vmem:[%s2238 + $0x3c] sm:$0xf]
        %v4162 = vld [vmem:[%s2238 + $0x40] sm:$0xf]
        %v4163 = vld [vmem:[%s2238 + $0x44] sm:$0x1]
        %v4164 = vld [vmem:[%s2238 + $0x48] sm:$0xf]
        %v4165 = vld [vmem:[%s2238 + $0x4c] sm:$0xf]
        %v4166 = vld [vmem:[%s2238 + $0x50] sm:$0x1]
        %v4167 = vld [vmem:[%s2238 + $0x54] sm:$0xf]
        %v4168 = vld [vmem:[%s2238 + $0x58] sm:$0xf]
        %v4169 = vld [vmem:[%s2238 + $0x5c] sm:$0x1]
        %v4170 = vld [vmem:[%s2238 + $0x60] sm:$0xf]
        %v4171 = vld [vmem:[%s2238 + $0x64] sm:$0xf]
        %v4172 = vld [vmem:[%s2238 + $0x68] sm:$0x1]
        %v4173 = vld [vmem:[%s2238 + $0x6c] sm:$0xf]
        %v4174 = vld [vmem:[%s2238 + $0x70] sm:$0xf]
        %v4175 = vld [vmem:[%s2238 + $0x74] sm:$0x1]
        %v4176 = vld [vmem:[%s2238 + $0x78] sm:$0xf]
        %v4177 = vld [vmem:[%s2238 + $0x7c] sm:$0xf]
        %v4178 = vld [vmem:[%s2238 + $0x80] sm:$0x1]
        %v4179 = vld [vmem:[%s2238 + $0x84] sm:$0xf]
        %v4180 = vld [vmem:[%s2238 + $0x88] sm:$0xf]
        %v4181 = vld [vmem:[%s2238 + $0x8c] sm:$0x1]
        %v4182 = vld [vmem:[%s2238 + $0x90] sm:$0xf]
        %v4183 = vld [vmem:[%s2238 + $0x94] sm:$0xf]
        %v4184 = vld [vmem:[%s2238 + $0x98] sm:$0x1]
        %v4185 = vld [vmem:[%s2238 + $0x9c] sm:$0xf]
        %v4186 = vld [vmem:[%s2238 + $0xa0] sm:$0xf]
        %v4187 = vld [vmem:[%s2238 + $0xa4] sm:$0x1]
        %v4188 = vld [vmem:[%s2238 + $0xa8] sm:$0xf]
        %v4189 = vld [vmem:[%s2238 + $0xac] sm:$0xf]
        %v4190 = vld [vmem:[%s2238 + $0xb0] sm:$0x1]
        %v4191 = vld [vmem:[%s2238 + $0xb4] sm:$0xf]
        %v4192 = vld [vmem:[%s2238 + $0xb8] sm:$0xf]
        %v4193 = vld [vmem:[%s2238 + $0xbc] sm:$0x1]
        %v4195 = vshrl.u32 %v4146, 16
        %v4197 = vrot.slane %v4195, 4
        %v4198 = vshll.u32 %v4146, 16
        %v4200 = vrot.slane %v4198, 5
        %v4201 = vor.u32 %v4197, %v4200
        %v4202 = vrot.slane %v4201, 4
        %v4204 = vshll.u32 %v4147, 16
        %v4206 = vrot.slane %v4204, 5
        %v4207 = vsel %vm3099, %v4202, %v4206
        %v4208 = vshrl.u32 %v4147, 16
        %v4210 = vrot.slane %v4208, 4
        %v4211 = vor.u32 %v4210, %v4206
        %v4212 = vrot.slane %v4211, 4
        %v4214 = vshll.u32 %v4148, 16
        %v4216 = vrot.slane %v4214, 5
        %v4217 = vsel %vm3099, %v4212, %v4216
        %v4219 = vshrl.u32 %v4149, 16
        %v4221 = vrot.slane %v4219, 4
        %v4222 = vshll.u32 %v4149, 16
        %v4224 = vrot.slane %v4222, 5
        %v4225 = vor.u32 %v4221, %v4224
        %v4226 = vrot.slane %v4225, 4
        %v4228 = vshll.u32 %v4150, 16
        %v4230 = vrot.slane %v4228, 5
        %v4231 = vsel %vm3099, %v4226, %v4230
        %v4232 = vshrl.u32 %v4150, 16
        %v4234 = vrot.slane %v4232, 4
        %v4235 = vor.u32 %v4234, %v4230
        %v4236 = vrot.slane %v4235, 4
        %v4238 = vshll.u32 %v4151, 16
        %v4240 = vrot.slane %v4238, 5
        %v4241 = vsel %vm3099, %v4236, %v4240
        %v4243 = vshrl.u32 %v4152, 16
        %v4245 = vrot.slane %v4243, 4
        %v4246 = vshll.u32 %v4152, 16
        %v4248 = vrot.slane %v4246, 5
        %v4249 = vor.u32 %v4245, %v4248
        %v4250 = vrot.slane %v4249, 4
        %v4252 = vshll.u32 %v4153, 16
        %v4254 = vrot.slane %v4252, 5
        %v4255 = vsel %vm3099, %v4250, %v4254
        %v4256 = vshrl.u32 %v4153, 16
        %v4258 = vrot.slane %v4256, 4
        %v4259 = vor.u32 %v4258, %v4254
        %v4260 = vrot.slane %v4259, 4
        %v4262 = vshll.u32 %v4154, 16
        %v4264 = vrot.slane %v4262, 5
        %v4265 = vsel %vm3099, %v4260, %v4264
        %v4267 = vshrl.u32 %v4155, 16
        %v4269 = vrot.slane %v4267, 4
        %v4270 = vshll.u32 %v4155, 16
        %v4272 = vrot.slane %v4270, 5
        %v4273 = vor.u32 %v4269, %v4272
        %v4274 = vrot.slane %v4273, 4
        %v4276 = vshll.u32 %v4156, 16
        %v4278 = vrot.slane %v4276, 5
        %v4279 = vsel %vm3099, %v4274, %v4278
        %v4280 = vshrl.u32 %v4156, 16
        %v4282 = vrot.slane %v4280, 4
        %v4283 = vor.u32 %v4282, %v4278
        %v4284 = vrot.slane %v4283, 4
        %v4286 = vshll.u32 %v4157, 16
        %v4288 = vrot.slane %v4286, 5
        %v4289 = vsel %vm3099, %v4284, %v4288
        %v4291 = vshrl.u32 %v4158, 16
        %v4293 = vrot.slane %v4291, 4
        %v4294 = vshll.u32 %v4158, 16
        %v4296 = vrot.slane %v4294, 5
        %v4297 = vor.u32 %v4293, %v4296
        %v4298 = vrot.slane %v4297, 4
        %v4300 = vshll.u32 %v4159, 16
        %v4302 = vrot.slane %v4300, 5
        %v4303 = vsel %vm3099, %v4298, %v4302
        %v4304 = vshrl.u32 %v4159, 16
        %v4306 = vrot.slane %v4304, 4
        %v4307 = vor.u32 %v4306, %v4302
        %v4308 = vrot.slane %v4307, 4
        %v4310 = vshll.u32 %v4160, 16
        %v4312 = vrot.slane %v4310, 5
        %v4313 = vsel %vm3099, %v4308, %v4312
        %v4315 = vshrl.u32 %v4161, 16
        %v4317 = vrot.slane %v4315, 4
        %v4318 = vshll.u32 %v4161, 16
        %v4320 = vrot.slane %v4318, 5
        %v4321 = vor.u32 %v4317, %v4320
        %v4322 = vrot.slane %v4321, 4
        %v4324 = vshll.u32 %v4162, 16
        %v4326 = vrot.slane %v4324, 5
        %v4327 = vsel %vm3099, %v4322, %v4326
        %v4328 = vshrl.u32 %v4162, 16
        %v4330 = vrot.slane %v4328, 4
        %v4331 = vor.u32 %v4330, %v4326
        %v4332 = vrot.slane %v4331, 4
        %v4334 = vshll.u32 %v4163, 16
        %v4336 = vrot.slane %v4334, 5
        %v4337 = vsel %vm3099, %v4332, %v4336
        %v4339 = vshrl.u32 %v4164, 16
        %v4341 = vrot.slane %v4339, 4
        %v4342 = vshll.u32 %v4164, 16
        %v4344 = vrot.slane %v4342, 5
        %v4345 = vor.u32 %v4341, %v4344
        %v4346 = vrot.slane %v4345, 4
        %v4348 = vshll.u32 %v4165, 16
        %v4350 = vrot.slane %v4348, 5
        %v4351 = vsel %vm3099, %v4346, %v4350
        %v4352 = vshrl.u32 %v4165, 16
        %v4354 = vrot.slane %v4352, 4
        %v4355 = vor.u32 %v4354, %v4350
        %v4356 = vrot.slane %v4355, 4
        %v4358 = vshll.u32 %v4166, 16
        %v4360 = vrot.slane %v4358, 5
        %v4361 = vsel %vm3099, %v4356, %v4360
        %v4363 = vshrl.u32 %v4167, 16
        %v4365 = vrot.slane %v4363, 4
        %v4366 = vshll.u32 %v4167, 16
        %v4368 = vrot.slane %v4366, 5
        %v4369 = vor.u32 %v4365, %v4368
        %v4370 = vrot.slane %v4369, 4
        %v4372 = vshll.u32 %v4168, 16
        %v4374 = vrot.slane %v4372, 5
        %v4375 = vsel %vm3099, %v4370, %v4374
        %v4376 = vshrl.u32 %v4168, 16
        %v4378 = vrot.slane %v4376, 4
        %v4379 = vor.u32 %v4378, %v4374
        %v4380 = vrot.slane %v4379, 4
        %v4382 = vshll.u32 %v4169, 16
        %v4384 = vrot.slane %v4382, 5
        %v4385 = vsel %vm3099, %v4380, %v4384
        %v4387 = vshrl.u32 %v4170, 16
        %v4389 = vrot.slane %v4387, 4
        %v4390 = vshll.u32 %v4170, 16
        %v4392 = vrot.slane %v4390, 5
        %v4393 = vor.u32 %v4389, %v4392
        %v4394 = vrot.slane %v4393, 4
        %v4396 = vshll.u32 %v4171, 16
        %v4398 = vrot.slane %v4396, 5
        %v4399 = vsel %vm3099, %v4394, %v4398
        %v4400 = vshrl.u32 %v4171, 16
        %v4402 = vrot.slane %v4400, 4
        %v4403 = vor.u32 %v4402, %v4398
        %v4404 = vrot.slane %v4403, 4
        %v4406 = vshll.u32 %v4172, 16
        %v4408 = vrot.slane %v4406, 5
        %v4409 = vsel %vm3099, %v4404, %v4408
        %v4411 = vshrl.u32 %v4173, 16
        %v4413 = vrot.slane %v4411, 4
        %v4414 = vshll.u32 %v4173, 16
        %v4416 = vrot.slane %v4414, 5
        %v4417 = vor.u32 %v4413, %v4416
        %v4418 = vrot.slane %v4417, 4
        %v4420 = vshll.u32 %v4174, 16
        %v4422 = vrot.slane %v4420, 5
        %v4423 = vsel %vm3099, %v4418, %v4422
        %v4424 = vshrl.u32 %v4174, 16
        %v4426 = vrot.slane %v4424, 4
        %v4427 = vor.u32 %v4426, %v4422
        %v4428 = vrot.slane %v4427, 4
        %v4430 = vshll.u32 %v4175, 16
        %v4432 = vrot.slane %v4430, 5
        %v4433 = vsel %vm3099, %v4428, %v4432
        %v4435 = vshrl.u32 %v4176, 16
        %v4437 = vrot.slane %v4435, 4
        %v4438 = vshll.u32 %v4176, 16
        %v4440 = vrot.slane %v4438, 5
        %v4441 = vor.u32 %v4437, %v4440
        %v4442 = vrot.slane %v4441, 4
        %v4444 = vshll.u32 %v4177, 16
        %v4446 = vrot.slane %v4444, 5
        %v4447 = vsel %vm3099, %v4442, %v4446
        %v4448 = vshrl.u32 %v4177, 16
        %v4450 = vrot.slane %v4448, 4
        %v4451 = vor.u32 %v4450, %v4446
        %v4452 = vrot.slane %v4451, 4
        %v4454 = vshll.u32 %v4178, 16
        %v4456 = vrot.slane %v4454, 5
        %v4457 = vsel %vm3099, %v4452, %v4456
        %v4459 = vshrl.u32 %v4179, 16
        %v4461 = vrot.slane %v4459, 4
        %v4462 = vshll.u32 %v4179, 16
        %v4464 = vrot.slane %v4462, 5
        %v4465 = vor.u32 %v4461, %v4464
        %v4466 = vrot.slane %v4465, 4
        %v4468 = vshll.u32 %v4180, 16
        %v4470 = vrot.slane %v4468, 5
        %v4471 = vsel %vm3099, %v4466, %v4470
        %v4472 = vshrl.u32 %v4180, 16
        %v4474 = vrot.slane %v4472, 4
        %v4475 = vor.u32 %v4474, %v4470
        %v4476 = vrot.slane %v4475, 4
        %v4478 = vshll.u32 %v4181, 16
        %v4480 = vrot.slane %v4478, 5
        %v4481 = vsel %vm3099, %v4476, %v4480
        %v4483 = vshrl.u32 %v4182, 16
        %v4485 = vrot.slane %v4483, 4
        %v4486 = vshll.u32 %v4182, 16
        %v4488 = vrot.slane %v4486, 5
        %v4489 = vor.u32 %v4485, %v4488
        %v4490 = vrot.slane %v4489, 4
        %v4492 = vshll.u32 %v4183, 16
        %v4494 = vrot.slane %v4492, 5
        %v4495 = vsel %vm3099, %v4490, %v4494
        %v4496 = vshrl.u32 %v4183, 16
        %v4498 = vrot.slane %v4496, 4
        %v4499 = vor.u32 %v4498, %v4494
        %v4500 = vrot.slane %v4499, 4
        %v4502 = vshll.u32 %v4184, 16
        %v4504 = vrot.slane %v4502, 5
        %v4505 = vsel %vm3099, %v4500, %v4504
        %v4507 = vshrl.u32 %v4185, 16
        %v4509 = vrot.slane %v4507, 4
        %v4510 = vshll.u32 %v4185, 16
        %v4512 = vrot.slane %v4510, 5
        %v4513 = vor.u32 %v4509, %v4512
        %v4514 = vrot.slane %v4513, 4
        %v4516 = vshll.u32 %v4186, 16
        %v4518 = vrot.slane %v4516, 5
        %v4519 = vsel %vm3099, %v4514, %v4518
        %v4520 = vshrl.u32 %v4186, 16
        %v4522 = vrot.slane %v4520, 4
        %v4523 = vor.u32 %v4522, %v4518
        %v4524 = vrot.slane %v4523, 4
        %v4526 = vshll.u32 %v4187, 16
        %v4528 = vrot.slane %v4526, 5
        %v4529 = vsel %vm3099, %v4524, %v4528
        %v4531 = vshrl.u32 %v4188, 16
        %v4533 = vrot.slane %v4531, 4
        %v4534 = vshll.u32 %v4188, 16
        %v4536 = vrot.slane %v4534, 5
        %v4537 = vor.u32 %v4533, %v4536
        %v4538 = vrot.slane %v4537, 4
        %v4540 = vshll.u32 %v4189, 16
        %v4542 = vrot.slane %v4540, 5
        %v4543 = vsel %vm3099, %v4538, %v4542
        %v4544 = vshrl.u32 %v4189, 16
        %v4546 = vrot.slane %v4544, 4
        %v4547 = vor.u32 %v4546, %v4542
        %v4548 = vrot.slane %v4547, 4
        %v4550 = vshll.u32 %v4190, 16
        %v4552 = vrot.slane %v4550, 5
        %v4553 = vsel %vm3099, %v4548, %v4552
        %v4555 = vshrl.u32 %v4191, 16
        %v4557 = vrot.slane %v4555, 4
        %v4558 = vshll.u32 %v4191, 16
        %v4560 = vrot.slane %v4558, 5
        %v4561 = vor.u32 %v4557, %v4560
        %v4562 = vrot.slane %v4561, 4
        %v4564 = vshll.u32 %v4192, 16
        %v4566 = vrot.slane %v4564, 5
        %v4567 = vsel %vm3099, %v4562, %v4566
        %v4568 = vshrl.u32 %v4192, 16
        %v4570 = vrot.slane %v4568, 4
        %v4571 = vor.u32 %v4570, %v4566
        %v4572 = vrot.slane %v4571, 4
        %v4574 = vshll.u32 %v4193, 16
        %v4576 = vrot.slane %v4574, 5
        %v4577 = vsel %vm3099, %v4572, %v4576
        %4578 = vrot.lane.b32.xlu0 %v4207, 32
        %v4579 = vpop.permute.xlu0 %4578
        %4580 = vrot.lane.b32.xlu0 %v4217, 32
        %v4581 = vpop.permute.xlu0 %4580
        %4582 = vrot.lane.b32.xlu0 %v4231, 32
        %v4583 = vpop.permute.xlu0 %4582
        %4584 = vrot.lane.b32.xlu0 %v4241, 32
        %v4585 = vpop.permute.xlu0 %4584
        %4586 = vrot.lane.b32.xlu0 %v4255, 32
        %v4587 = vpop.permute.xlu0 %4586
        %4588 = vrot.lane.b32.xlu0 %v4265, 32
        %v4589 = vpop.permute.xlu0 %4588
        %4590 = vrot.lane.b32.xlu0 %v4279, 32
        %v4591 = vpop.permute.xlu0 %4590
        %4592 = vrot.lane.b32.xlu0 %v4289, 32
        %v4593 = vpop.permute.xlu0 %4592
        %4594 = vrot.lane.b32.xlu0 %v4303, 32
        %v4595 = vpop.permute.xlu0 %4594
        %4596 = vrot.lane.b32.xlu0 %v4313, 32
        %v4597 = vpop.permute.xlu0 %4596
        %4598 = vrot.lane.b32.xlu0 %v4327, 32
        %v4599 = vpop.permute.xlu0 %4598
        %4600 = vrot.lane.b32.xlu0 %v4337, 32
        %v4601 = vpop.permute.xlu0 %4600
        %4602 = vrot.lane.b32.xlu0 %v4351, 32
        %v4603 = vpop.permute.xlu0 %4602
        %4604 = vrot.lane.b32.xlu0 %v4361, 32
        %v4605 = vpop.permute.xlu0 %4604
        %4606 = vrot.lane.b32.xlu0 %v4375, 32
        %v4607 = vpop.permute.xlu0 %4606
        %4608 = vrot.lane.b32.xlu0 %v4385, 32
        %v4609 = vpop.permute.xlu0 %4608
        %4610 = vrot.lane.b32.xlu0 %v4399, 32
        %v4611 = vpop.permute.xlu0 %4610
        %4612 = vrot.lane.b32.xlu0 %v4409, 32
        %v4613 = vpop.permute.xlu0 %4612
        %4614 = vrot.lane.b32.xlu0 %v4423, 32
        %v4615 = vpop.permute.xlu0 %4614
        %4616 = vrot.lane.b32.xlu0 %v4433, 32
        %v4617 = vpop.permute.xlu0 %4616
        %4618 = vrot.lane.b32.xlu0 %v4447, 32
        %v4619 = vpop.permute.xlu0 %4618
        %4620 = vrot.lane.b32.xlu0 %v4457, 32
        %v4621 = vpop.permute.xlu0 %4620
        %4622 = vrot.lane.b32.xlu0 %v4471, 32
        %v4623 = vpop.permute.xlu0 %4622
        %4624 = vrot.lane.b32.xlu0 %v4481, 32
        %v4625 = vpop.permute.xlu0 %4624
        %4626 = vrot.lane.b32.xlu0 %v4495, 32
        %v4627 = vpop.permute.xlu0 %4626
        %4628 = vrot.lane.b32.xlu0 %v4505, 32
        %v4629 = vpop.permute.xlu0 %4628
        %4630 = vrot.lane.b32.xlu0 %v4519, 32
        %v4631 = vpop.permute.xlu0 %4630
        %4632 = vrot.lane.b32.xlu0 %v4529, 32
        %v4633 = vpop.permute.xlu0 %4632
        %4634 = vrot.lane.b32.xlu0 %v4543, 32
        %v4635 = vpop.permute.xlu0 %4634
        %4636 = vrot.lane.b32.xlu0 %v4553, 32
        %v4637 = vpop.permute.xlu0 %4636
        %4638 = vrot.lane.b32.xlu0 %v4567, 32
        %v4639 = vpop.permute.xlu0 %4638
        %4640 = vrot.lane.b32.xlu0 %v4577, 32
        %v4641 = vpop.permute.xlu0 %4640
        %vm4674 = vcmask 322816
        %4675 = vst.msk [vmem:[#allocation4] sm:$0xf] %vm4674, %v4579
        %4676 = vst.msk [vmem:[#allocation4 + $0x4] sm:$0xf] %vm4674, %v4581
        %4677 = vst.msk [vmem:[#allocation4 + $0x8] sm:$0xf] %vm4674, %v4583
        %4678 = vst.msk [vmem:[#allocation4 + $0xc] sm:$0xf] %vm4674, %v4585
        %4679 = vst.msk [vmem:[#allocation4 + $0x10] sm:$0xf] %vm4674, %v4587
        %4680 = vst.msk [vmem:[#allocation4 + $0x14] sm:$0xf] %vm4674, %v4589
        %4681 = vst.msk [vmem:[#allocation4 + $0x18] sm:$0xf] %vm4674, %v4591
        %4682 = vst.msk [vmem:[#allocation4 + $0x1c] sm:$0xf] %vm4674, %v4593
        %4683 = vst.msk [vmem:[#allocation4 + $0x20] sm:$0xf] %vm4674, %v4595
        %4684 = vst.msk [vmem:[#allocation4 + $0x24] sm:$0xf] %vm4674, %v4597
        %4685 = vst.msk [vmem:[#allocation4 + $0x28] sm:$0xf] %vm4674, %v4599
        %4686 = vst.msk [vmem:[#allocation4 + $0x2c] sm:$0xf] %vm4674, %v4601
        %4687 = vst.msk [vmem:[#allocation4 + $0x30] sm:$0xf] %vm4674, %v4603
        %4688 = vst.msk [vmem:[#allocation4 + $0x34] sm:$0xf] %vm4674, %v4605
        %4689 = vst.msk [vmem:[#allocation4 + $0x38] sm:$0xf] %vm4674, %v4607
        %4690 = vst.msk [vmem:[#allocation4 + $0x3c] sm:$0xf] %vm4674, %v4609
        %4691 = vst.msk [vmem:[#allocation4 + $0x40] sm:$0xf] %vm4674, %v4611
        %4692 = vst.msk [vmem:[#allocation4 + $0x44] sm:$0xf] %vm4674, %v4613
        %4693 = vst.msk [vmem:[#allocation4 + $0x48] sm:$0xf] %vm4674, %v4615
        %4694 = vst.msk [vmem:[#allocation4 + $0x4c] sm:$0xf] %vm4674, %v4617
        %4695 = vst.msk [vmem:[#allocation4 + $0x50] sm:$0xf] %vm4674, %v4619
        %4696 = vst.msk [vmem:[#allocation4 + $0x54] sm:$0xf] %vm4674, %v4621
        %4697 = vst.msk [vmem:[#allocation4 + $0x58] sm:$0xf] %vm4674, %v4623
        %4698 = vst.msk [vmem:[#allocation4 + $0x5c] sm:$0xf] %vm4674, %v4625
        %4699 = vst.msk [vmem:[#allocation4 + $0x60] sm:$0xf] %vm4674, %v4627
        %4700 = vst.msk [vmem:[#allocation4 + $0x64] sm:$0xf] %vm4674, %v4629
        %4701 = vst.msk [vmem:[#allocation4 + $0x68] sm:$0xf] %vm4674, %v4631
        %4702 = vst.msk [vmem:[#allocation4 + $0x6c] sm:$0xf] %vm4674, %v4633
        %4703 = vst.msk [vmem:[#allocation4 + $0x70] sm:$0xf] %vm4674, %v4635
        %4704 = vst.msk [vmem:[#allocation4 + $0x74] sm:$0xf] %vm4674, %v4637
        %4705 = vst.msk [vmem:[#allocation4 + $0x78] sm:$0xf] %vm4674, %v4639
        %4706 = vst.msk [vmem:[#allocation4 + $0x7c] sm:$0xf] %vm4674, %v4641
        %v4707 = vld [vmem:[%s2238] sm:$0xe]
        %v4708 = vld [vmem:[%s2238 + $0x4] sm:$0xf]
        %v4709 = vld [vmem:[%s2238 + $0x8] sm:$0x1]
        %v4710 = vld [vmem:[%s2238 + $0xc] sm:$0xe]
        %v4711 = vld [vmem:[%s2238 + $0x10] sm:$0xf]
        %v4712 = vld [vmem:[%s2238 + $0x14] sm:$0x1]
        %v4713 = vld [vmem:[%s2238 + $0x18] sm:$0xe]
        %v4714 = vld [vmem:[%s2238 + $0x1c] sm:$0xf]
        %v4715 = vld [vmem:[%s2238 + $0x20] sm:$0x1]
        %v4716 = vld [vmem:[%s2238 + $0x24] sm:$0xe]
        %v4717 = vld [vmem:[%s2238 + $0x28] sm:$0xf]
        %v4718 = vld [vmem:[%s2238 + $0x2c] sm:$0x1]
        %v4719 = vld [vmem:[%s2238 + $0x30] sm:$0xe]
        %v4720 = vld [vmem:[%s2238 + $0x34] sm:$0xf]
        %v4721 = vld [vmem:[%s2238 + $0x38] sm:$0x1]
        %v4722 = vld [vmem:[%s2238 + $0x3c] sm:$0xe]
        %v4723 = vld [vmem:[%s2238 + $0x40] sm:$0xf]
        %v4724 = vld [vmem:[%s2238 + $0x44] sm:$0x1]
        %v4725 = vld [vmem:[%s2238 + $0x48] sm:$0xe]
        %v4726 = vld [vmem:[%s2238 + $0x4c] sm:$0xf]
        %v4727 = vld [vmem:[%s2238 + $0x50] sm:$0x1]
        %v4728 = vld [vmem:[%s2238 + $0x54] sm:$0xe]
        %v4729 = vld [vmem:[%s2238 + $0x58] sm:$0xf]
        %v4730 = vld [vmem:[%s2238 + $0x5c] sm:$0x1]
        %v4731 = vld [vmem:[%s2238 + $0x60] sm:$0xe]
        %v4732 = vld [vmem:[%s2238 + $0x64] sm:$0xf]
        %v4733 = vld [vmem:[%s2238 + $0x68] sm:$0x1]
        %v4734 = vld [vmem:[%s2238 + $0x6c] sm:$0xe]
        %v4735 = vld [vmem:[%s2238 + $0x70] sm:$0xf]
        %v4736 = vld [vmem:[%s2238 + $0x74] sm:$0x1]
        %v4737 = vld [vmem:[%s2238 + $0x78] sm:$0xe]
        %v4738 = vld [vmem:[%s2238 + $0x7c] sm:$0xf]
        %v4739 = vld [vmem:[%s2238 + $0x80] sm:$0x1]
        %v4740 = vld [vmem:[%s2238 + $0x84] sm:$0xe]
        %v4741 = vld [vmem:[%s2238 + $0x88] sm:$0xf]
        %v4742 = vld [vmem:[%s2238 + $0x8c] sm:$0x1]
        %v4743 = vld [vmem:[%s2238 + $0x90] sm:$0xe]
        %v4744 = vld [vmem:[%s2238 + $0x94] sm:$0xf]
        %v4745 = vld [vmem:[%s2238 + $0x98] sm:$0x1]
        %v4746 = vld [vmem:[%s2238 + $0x9c] sm:$0xe]
        %v4747 = vld [vmem:[%s2238 + $0xa0] sm:$0xf]
        %v4748 = vld [vmem:[%s2238 + $0xa4] sm:$0x1]
        %v4749 = vld [vmem:[%s2238 + $0xa8] sm:$0xe]
        %v4750 = vld [vmem:[%s2238 + $0xac] sm:$0xf]
        %v4751 = vld [vmem:[%s2238 + $0xb0] sm:$0x1]
        %v4752 = vld [vmem:[%s2238 + $0xb4] sm:$0xe]
        %v4753 = vld [vmem:[%s2238 + $0xb8] sm:$0xf]
        %v4754 = vld [vmem:[%s2238 + $0xbc] sm:$0x1]
        %v4803 = vrot.slane %v4707, 5
        %v4804 = vrot.slane %v4803, 4
        %v4805 = vrot.slane %v4708, 5
        %v4806 = vsel %vm3711, %v4804, %v4805
        %v4807 = vrot.slane %v4805, 4
        %v4808 = vrot.slane %v4709, 5
        %v4809 = vsel %vm3711, %v4807, %v4808
        %v4810 = vrot.slane %v4710, 5
        %v4811 = vrot.slane %v4810, 4
        %v4812 = vrot.slane %v4711, 5
        %v4813 = vsel %vm3711, %v4811, %v4812
        %v4814 = vrot.slane %v4812, 4
        %v4815 = vrot.slane %v4712, 5
        %v4816 = vsel %vm3711, %v4814, %v4815
        %v4817 = vrot.slane %v4713, 5
        %v4818 = vrot.slane %v4817, 4
        %v4819 = vrot.slane %v4714, 5
        %v4820 = vsel %vm3711, %v4818, %v4819
        %v4821 = vrot.slane %v4819, 4
        %v4822 = vrot.slane %v4715, 5
        %v4823 = vsel %vm3711, %v4821, %v4822
        %v4824 = vrot.slane %v4716, 5
        %v4825 = vrot.slane %v4824, 4
        %v4826 = vrot.slane %v4717, 5
        %v4827 = vsel %vm3711, %v4825, %v4826
        %v4828 = vrot.slane %v4826, 4
        %v4829 = vrot.slane %v4718, 5
        %v4830 = vsel %vm3711, %v4828, %v4829
        %v4831 = vrot.slane %v4719, 5
        %v4832 = vrot.slane %v4831, 4
        %v4833 = vrot.slane %v4720, 5
        %v4834 = vsel %vm3711, %v4832, %v4833
        %v4835 = vrot.slane %v4833, 4
        %v4836 = vrot.slane %v4721, 5
        %v4837 = vsel %vm3711, %v4835, %v4836
        %v4838 = vrot.slane %v4722, 5
        %v4839 = vrot.slane %v4838, 4
        %v4840 = vrot.slane %v4723, 5
        %v4841 = vsel %vm3711, %v4839, %v4840
        %v4842 = vrot.slane %v4840, 4
        %v4843 = vrot.slane %v4724, 5
        %v4844 = vsel %vm3711, %v4842, %v4843
        %v4845 = vrot.slane %v4725, 5
        %v4846 = vrot.slane %v4845, 4
        %v4847 = vrot.slane %v4726, 5
        %v4848 = vsel %vm3711, %v4846, %v4847
        %v4849 = vrot.slane %v4847, 4
        %v4850 = vrot.slane %v4727, 5
        %v4851 = vsel %vm3711, %v4849, %v4850
        %v4852 = vrot.slane %v4728, 5
        %v4853 = vrot.slane %v4852, 4
        %v4854 = vrot.slane %v4729, 5
        %v4855 = vsel %vm3711, %v4853, %v4854
        %v4856 = vrot.slane %v4854, 4
        %v4857 = vrot.slane %v4730, 5
        %v4858 = vsel %vm3711, %v4856, %v4857
        %v4859 = vrot.slane %v4731, 5
        %v4860 = vrot.slane %v4859, 4
        %v4861 = vrot.slane %v4732, 5
        %v4862 = vsel %vm3711, %v4860, %v4861
        %v4863 = vrot.slane %v4861, 4
        %v4864 = vrot.slane %v4733, 5
        %v4865 = vsel %vm3711, %v4863, %v4864
        %v4866 = vrot.slane %v4734, 5
        %v4867 = vrot.slane %v4866, 4
        %v4868 = vrot.slane %v4735, 5
        %v4869 = vsel %vm3711, %v4867, %v4868
        %v4870 = vrot.slane %v4868, 4
        %v4871 = vrot.slane %v4736, 5
        %v4872 = vsel %vm3711, %v4870, %v4871
        %v4873 = vrot.slane %v4737, 5
        %v4874 = vrot.slane %v4873, 4
        %v4875 = vrot.slane %v4738, 5
        %v4876 = vsel %vm3711, %v4874, %v4875
        %v4877 = vrot.slane %v4875, 4
        %v4878 = vrot.slane %v4739, 5
        %v4879 = vsel %vm3711, %v4877, %v4878
        %v4880 = vrot.slane %v4740, 5
        %v4881 = vrot.slane %v4880, 4
        %v4882 = vrot.slane %v4741, 5
        %v4883 = vsel %vm3711, %v4881, %v4882
        %v4884 = vrot.slane %v4882, 4
        %v4885 = vrot.slane %v4742, 5
        %v4886 = vsel %vm3711, %v4884, %v4885
        %v4887 = vrot.slane %v4743, 5
        %v4888 = vrot.slane %v4887, 4
        %v4889 = vrot.slane %v4744, 5
        %v4890 = vsel %vm3711, %v4888, %v4889
        %v4891 = vrot.slane %v4889, 4
        %v4892 = vrot.slane %v4745, 5
        %v4893 = vsel %vm3711, %v4891, %v4892
        %v4894 = vrot.slane %v4746, 5
        %v4895 = vrot.slane %v4894, 4
        %v4896 = vrot.slane %v4747, 5
        %v4897 = vsel %vm3711, %v4895, %v4896
        %v4898 = vrot.slane %v4896, 4
        %v4899 = vrot.slane %v4748, 5
        %v4900 = vsel %vm3711, %v4898, %v4899
        %v4901 = vrot.slane %v4749, 5
        %v4902 = vrot.slane %v4901, 4
        %v4903 = vrot.slane %v4750, 5
        %v4904 = vsel %vm3711, %v4902, %v4903
        %v4905 = vrot.slane %v4903, 4
        %v4906 = vrot.slane %v4751, 5
        %v4907 = vsel %vm3711, %v4905, %v4906
        %v4908 = vrot.slane %v4752, 5
        %v4909 = vrot.slane %v4908, 4
        %v4910 = vrot.slane %v4753, 5
        %v4911 = vsel %vm3711, %v4909, %v4910
        %v4912 = vrot.slane %v4910, 4
        %v4913 = vrot.slane %v4754, 5
        %v4914 = vsel %vm3711, %v4912, %v4913
        %4915 = vrot.lane.b32.xlu0 %v4806, 40
        %v4916 = vpop.permute.xlu0 %4915
        %4917 = vrot.lane.b32.xlu0 %v4809, 40
        %v4918 = vpop.permute.xlu0 %4917
        %4919 = vrot.lane.b32.xlu0 %v4813, 40
        %v4920 = vpop.permute.xlu0 %4919
        %4921 = vrot.lane.b32.xlu0 %v4816, 40
        %v4922 = vpop.permute.xlu0 %4921
        %4923 = vrot.lane.b32.xlu0 %v4820, 40
        %v4924 = vpop.permute.xlu0 %4923
        %4925 = vrot.lane.b32.xlu0 %v4823, 40
        %v4926 = vpop.permute.xlu0 %4925
        %4927 = vrot.lane.b32.xlu0 %v4827, 40
        %v4928 = vpop.permute.xlu0 %4927
        %4929 = vrot.lane.b32.xlu0 %v4830, 40
        %v4930 = vpop.permute.xlu0 %4929
        %4931 = vrot.lane.b32.xlu0 %v4834, 40
        %v4932 = vpop.permute.xlu0 %4931
        %4933 = vrot.lane.b32.xlu0 %v4837, 40
        %v4934 = vpop.permute.xlu0 %4933
        %4935 = vrot.lane.b32.xlu0 %v4841, 40
        %v4936 = vpop.permute.xlu0 %4935
        %4937 = vrot.lane.b32.xlu0 %v4844, 40
        %v4938 = vpop.permute.xlu0 %4937
        %4939 = vrot.lane.b32.xlu0 %v4848, 40
        %v4940 = vpop.permute.xlu0 %4939
        %4941 = vrot.lane.b32.xlu0 %v4851, 40
        %v4942 = vpop.permute.xlu0 %4941
        %4943 = vrot.lane.b32.xlu0 %v4855, 40
        %v4944 = vpop.permute.xlu0 %4943
        %4945 = vrot.lane.b32.xlu0 %v4858, 40
        %v4946 = vpop.permute.xlu0 %4945
        %4947 = vrot.lane.b32.xlu0 %v4862, 40
        %v4948 = vpop.permute.xlu0 %4947
        %4949 = vrot.lane.b32.xlu0 %v4865, 40
        %v4950 = vpop.permute.xlu0 %4949
        %4951 = vrot.lane.b32.xlu0 %v4869, 40
        %v4952 = vpop.permute.xlu0 %4951
        %4953 = vrot.lane.b32.xlu0 %v4872, 40
        %v4954 = vpop.permute.xlu0 %4953
        %4955 = vrot.lane.b32.xlu0 %v4876, 40
        %v4956 = vpop.permute.xlu0 %4955
        %4957 = vrot.lane.b32.xlu0 %v4879, 40
        %v4958 = vpop.permute.xlu0 %4957
        %4959 = vrot.lane.b32.xlu0 %v4883, 40
        %v4960 = vpop.permute.xlu0 %4959
        %4961 = vrot.lane.b32.xlu0 %v4886, 40
        %v4962 = vpop.permute.xlu0 %4961
        %4963 = vrot.lane.b32.xlu0 %v4890, 40
        %v4964 = vpop.permute.xlu0 %4963
        %4965 = vrot.lane.b32.xlu0 %v4893, 40
        %v4966 = vpop.permute.xlu0 %4965
        %4967 = vrot.lane.b32.xlu0 %v4897, 40
        %v4968 = vpop.permute.xlu0 %4967
        %4969 = vrot.lane.b32.xlu0 %v4900, 40
        %v4970 = vpop.permute.xlu0 %4969
        %4971 = vrot.lane.b32.xlu0 %v4904, 40
        %v4972 = vpop.permute.xlu0 %4971
        %4973 = vrot.lane.b32.xlu0 %v4907, 40
        %v4974 = vpop.permute.xlu0 %4973
        %4975 = vrot.lane.b32.xlu0 %v4911, 40
        %v4976 = vpop.permute.xlu0 %4975
        %4977 = vrot.lane.b32.xlu0 %v4914, 40
        %v4978 = vpop.permute.xlu0 %4977
        %vm5011 = vcmask 388416
        %5012 = vst.msk [vmem:[#allocation4] sm:$0xf] %vm5011, %v4916
        %5013 = vst.msk [vmem:[#allocation4 + $0x4] sm:$0xf] %vm5011, %v4918
        %5014 = vst.msk [vmem:[#allocation4 + $0x8] sm:$0xf] %vm5011, %v4920
        %5015 = vst.msk [vmem:[#allocation4 + $0xc] sm:$0xf] %vm5011, %v4922
        %5016 = vst.msk [vmem:[#allocation4 + $0x10] sm:$0xf] %vm5011, %v4924
        %5017 = vst.msk [vmem:[#allocation4 + $0x14] sm:$0xf] %vm5011, %v4926
        %5018 = vst.msk [vmem:[#allocation4 + $0x18] sm:$0xf] %vm5011, %v4928
        %5019 = vst.msk [vmem:[#allocation4 + $0x1c] sm:$0xf] %vm5011, %v4930
        %5020 = vst.msk [vmem:[#allocation4 + $0x20] sm:$0xf] %vm5011, %v4932
        %5021 = vst.msk [vmem:[#allocation4 + $0x24] sm:$0xf] %vm5011, %v4934
        %5022 = vst.msk [vmem:[#allocation4 + $0x28] sm:$0xf] %vm5011, %v4936
        %5023 = vst.msk [vmem:[#allocation4 + $0x2c] sm:$0xf] %vm5011, %v4938
        %5024 = vst.msk [vmem:[#allocation4 + $0x30] sm:$0xf] %vm5011, %v4940
        %5025 = vst.msk [vmem:[#allocation4 + $0x34] sm:$0xf] %vm5011, %v4942
        %5026 = vst.msk [vmem:[#allocation4 + $0x38] sm:$0xf] %vm5011, %v4944
        %5027 = vst.msk [vmem:[#allocation4 + $0x3c] sm:$0xf] %vm5011, %v4946
        %5028 = vst.msk [vmem:[#allocation4 + $0x40] sm:$0xf] %vm5011, %v4948
        %5029 = vst.msk [vmem:[#allocation4 + $0x44] sm:$0xf] %vm5011, %v4950
        %5030 = vst.msk [vmem:[#allocation4 + $0x48] sm:$0xf] %vm5011, %v4952
        %5031 = vst.msk [vmem:[#allocation4 + $0x4c] sm:$0xf] %vm5011, %v4954
        %5032 = vst.msk [vmem:[#allocation4 + $0x50] sm:$0xf] %vm5011, %v4956
        %5033 = vst.msk [vmem:[#allocation4 + $0x54] sm:$0xf] %vm5011, %v4958
        %5034 = vst.msk [vmem:[#allocation4 + $0x58] sm:$0xf] %vm5011, %v4960
        %5035 = vst.msk [vmem:[#allocation4 + $0x5c] sm:$0xf] %vm5011, %v4962
        %5036 = vst.msk [vmem:[#allocation4 + $0x60] sm:$0xf] %vm5011, %v4964
        %5037 = vst.msk [vmem:[#allocation4 + $0x64] sm:$0xf] %vm5011, %v4966
        %5038 = vst.msk [vmem:[#allocation4 + $0x68] sm:$0xf] %vm5011, %v4968
        %5039 = vst.msk [vmem:[#allocation4 + $0x6c] sm:$0xf] %vm5011, %v4970
        %5040 = vst.msk [vmem:[#allocation4 + $0x70] sm:$0xf] %vm5011, %v4972
        %5041 = vst.msk [vmem:[#allocation4 + $0x74] sm:$0xf] %vm5011, %v4974
        %5042 = vst.msk [vmem:[#allocation4 + $0x78] sm:$0xf] %vm5011, %v4976
        %5043 = vst.msk [vmem:[#allocation4 + $0x7c] sm:$0xf] %vm5011, %v4978
        %s5044 = scalar_lea.vmem [#allocation2], 24
        %v5045 = vld [vmem:[%s5044] sm:$0xf]
        %v5046 = vld [vmem:[%s5044 + $0x4] sm:$0xf]
        %v5047 = vld [vmem:[%s5044 + $0xc] sm:$0xf]
        %v5048 = vld [vmem:[%s5044 + $0x10] sm:$0xf]
        %v5049 = vld [vmem:[%s5044 + $0x18] sm:$0xf]
        %v5050 = vld [vmem:[%s5044 + $0x1c] sm:$0xf]
        %v5051 = vld [vmem:[%s5044 + $0x24] sm:$0xf]
        %v5052 = vld [vmem:[%s5044 + $0x28] sm:$0xf]
        %v5053 = vld [vmem:[%s5044 + $0x30] sm:$0xf]
        %v5054 = vld [vmem:[%s5044 + $0x34] sm:$0xf]
        %v5055 = vld [vmem:[%s5044 + $0x3c] sm:$0xf]
        %v5056 = vld [vmem:[%s5044 + $0x40] sm:$0xf]
        %v5057 = vld [vmem:[%s5044 + $0x48] sm:$0xf]
        %v5058 = vld [vmem:[%s5044 + $0x4c] sm:$0xf]
        %v5059 = vld [vmem:[%s5044 + $0x54] sm:$0xf]
        %v5060 = vld [vmem:[%s5044 + $0x58] sm:$0xf]
        %v5061 = vld [vmem:[%s5044 + $0x60] sm:$0xf]
        %v5062 = vld [vmem:[%s5044 + $0x64] sm:$0xf]
        %v5063 = vld [vmem:[%s5044 + $0x6c] sm:$0xf]
        %v5064 = vld [vmem:[%s5044 + $0x70] sm:$0xf]
        %v5065 = vld [vmem:[%s5044 + $0x78] sm:$0xf]
        %v5066 = vld [vmem:[%s5044 + $0x7c] sm:$0xf]
        %v5067 = vld [vmem:[%s5044 + $0x84] sm:$0xf]
        %v5068 = vld [vmem:[%s5044 + $0x88] sm:$0xf]
        %v5069 = vld [vmem:[%s5044 + $0x90] sm:$0xf]
        %v5070 = vld [vmem:[%s5044 + $0x94] sm:$0xf]
        %v5071 = vld [vmem:[%s5044 + $0x9c] sm:$0xf]
        %v5072 = vld [vmem:[%s5044 + $0xa0] sm:$0xf]
        %v5073 = vld [vmem:[%s5044 + $0xa8] sm:$0xf]
        %v5074 = vld [vmem:[%s5044 + $0xac] sm:$0xf]
        %v5075 = vld [vmem:[%s5044 + $0xb4] sm:$0xf]
        %v5076 = vld [vmem:[%s5044 + $0xb8] sm:$0xf]
        %5109 = vrot.lane.b32.xlu0 %v5045, 48
        %v5110 = vpop.permute.xlu0 %5109
        %5111 = vrot.lane.b32.xlu0 %v5046, 48
        %v5112 = vpop.permute.xlu0 %5111
        %5113 = vrot.lane.b32.xlu0 %v5047, 48
        %v5114 = vpop.permute.xlu0 %5113
        %5115 = vrot.lane.b32.xlu0 %v5048, 48
        %v5116 = vpop.permute.xlu0 %5115
        %5117 = vrot.lane.b32.xlu0 %v5049, 48
        %v5118 = vpop.permute.xlu0 %5117
        %5119 = vrot.lane.b32.xlu0 %v5050, 48
        %v5120 = vpop.permute.xlu0 %5119
        %5121 = vrot.lane.b32.xlu0 %v5051, 48
        %v5122 = vpop.permute.xlu0 %5121
        %5123 = vrot.lane.b32.xlu0 %v5052, 48
        %v5124 = vpop.permute.xlu0 %5123
        %5125 = vrot.lane.b32.xlu0 %v5053, 48
        %v5126 = vpop.permute.xlu0 %5125
        %5127 = vrot.lane.b32.xlu0 %v5054, 48
        %v5128 = vpop.permute.xlu0 %5127
        %5129 = vrot.lane.b32.xlu0 %v5055, 48
        %v5130 = vpop.permute.xlu0 %5129
        %5131 = vrot.lane.b32.xlu0 %v5056, 48
        %v5132 = vpop.permute.xlu0 %5131
        %5133 = vrot.lane.b32.xlu0 %v5057, 48
        %v5134 = vpop.permute.xlu0 %5133
        %5135 = vrot.lane.b32.xlu0 %v5058, 48
        %v5136 = vpop.permute.xlu0 %5135
        %5137 = vrot.lane.b32.xlu0 %v5059, 48
        %v5138 = vpop.permute.xlu0 %5137
        %5139 = vrot.lane.b32.xlu0 %v5060, 48
        %v5140 = vpop.permute.xlu0 %5139
        %5141 = vrot.lane.b32.xlu0 %v5061, 48
        %v5142 = vpop.permute.xlu0 %5141
        %5143 = vrot.lane.b32.xlu0 %v5062, 48
        %v5144 = vpop.permute.xlu0 %5143
        %5145 = vrot.lane.b32.xlu0 %v5063, 48
        %v5146 = vpop.permute.xlu0 %5145
        %5147 = vrot.lane.b32.xlu0 %v5064, 48
        %v5148 = vpop.permute.xlu0 %5147
        %5149 = vrot.lane.b32.xlu0 %v5065, 48
        %v5150 = vpop.permute.xlu0 %5149
        %5151 = vrot.lane.b32.xlu0 %v5066, 48
        %v5152 = vpop.permute.xlu0 %5151
        %5153 = vrot.lane.b32.xlu0 %v5067, 48
        %v5154 = vpop.permute.xlu0 %5153
        %5155 = vrot.lane.b32.xlu0 %v5068, 48
        %v5156 = vpop.permute.xlu0 %5155
        %5157 = vrot.lane.b32.xlu0 %v5069, 48
        %v5158 = vpop.permute.xlu0 %5157
        %5159 = vrot.lane.b32.xlu0 %v5070, 48
        %v5160 = vpop.permute.xlu0 %5159
        %5161 = vrot.lane.b32.xlu0 %v5071, 48
        %v5162 = vpop.permute.xlu0 %5161
        %5163 = vrot.lane.b32.xlu0 %v5072, 48
        %v5164 = vpop.permute.xlu0 %5163
        %5165 = vrot.lane.b32.xlu0 %v5073, 48
        %v5166 = vpop.permute.xlu0 %5165
        %5167 = vrot.lane.b32.xlu0 %v5074, 48
        %v5168 = vpop.permute.xlu0 %5167
        %5169 = vrot.lane.b32.xlu0 %v5075, 48
        %v5170 = vpop.permute.xlu0 %5169
        %5171 = vrot.lane.b32.xlu0 %v5076, 48
        %v5172 = vpop.permute.xlu0 %5171
        %vm5205 = vcmask 454016
        %5206 = vst.msk [vmem:[#allocation4] sm:$0xf] %vm5205, %v5110
        %5207 = vst.msk [vmem:[#allocation4 + $0x4] sm:$0xf] %vm5205, %v5112
        %5208 = vst.msk [vmem:[#allocation4 + $0x8] sm:$0xf] %vm5205, %v5114
        %5209 = vst.msk [vmem:[#allocation4 + $0xc] sm:$0xf] %vm5205, %v5116
        %5210 = vst.msk [vmem:[#allocation4 + $0x10] sm:$0xf] %vm5205, %v5118
        %5211 = vst.msk [vmem:[#allocation4 + $0x14] sm:$0xf] %vm5205, %v5120
        %5212 = vst.msk [vmem:[#allocation4 + $0x18] sm:$0xf] %vm5205, %v5122
        %5213 = vst.msk [vmem:[#allocation4 + $0x1c] sm:$0xf] %vm5205, %v5124
        %5214 = vst.msk [vmem:[#allocation4 + $0x20] sm:$0xf] %vm5205, %v5126
        %5215 = vst.msk [vmem:[#allocation4 + $0x24] sm:$0xf] %vm5205, %v5128
        %5216 = vst.msk [vmem:[#allocation4 + $0x28] sm:$0xf] %vm5205, %v5130
        %5217 = vst.msk [vmem:[#allocation4 + $0x2c] sm:$0xf] %vm5205, %v5132
        %5218 = vst.msk [vmem:[#allocation4 + $0x30] sm:$0xf] %vm5205, %v5134
        %5219 = vst.msk [vmem:[#allocation4 + $0x34] sm:$0xf] %vm5205, %v5136
        %5220 = vst.msk [vmem:[#allocation4 + $0x38] sm:$0xf] %vm5205, %v5138
        %5221 = vst.msk [vmem:[#allocation4 + $0x3c] sm:$0xf] %vm5205, %v5140
        %5222 = vst.msk [vmem:[#allocation4 + $0x40] sm:$0xf] %vm5205, %v5142
        %5223 = vst.msk [vmem:[#allocation4 + $0x44] sm:$0xf] %vm5205, %v5144
        %5224 = vst.msk [vmem:[#allocation4 + $0x48] sm:$0xf] %vm5205, %v5146
        %5225 = vst.msk [vmem:[#allocation4 + $0x4c] sm:$0xf] %vm5205, %v5148
        %5226 = vst.msk [vmem:[#allocation4 + $0x50] sm:$0xf] %vm5205, %v5150
        %5227 = vst.msk [vmem:[#allocation4 + $0x54] sm:$0xf] %vm5205, %v5152
        %5228 = vst.msk [vmem:[#allocation4 + $0x58] sm:$0xf] %vm5205, %v5154
        %5229 = vst.msk [vmem:[#allocation4 + $0x5c] sm:$0xf] %vm5205, %v5156
        %5230 = vst.msk [vmem:[#allocation4 + $0x60] sm:$0xf] %vm5205, %v5158
        %5231 = vst.msk [vmem:[#allocation4 + $0x64] sm:$0xf] %vm5205, %v5160
        %5232 = vst.msk [vmem:[#allocation4 + $0x68] sm:$0xf] %vm5205, %v5162
        %5233 = vst.msk [vmem:[#allocation4 + $0x6c] sm:$0xf] %vm5205, %v5164
        %5234 = vst.msk [vmem:[#allocation4 + $0x70] sm:$0xf] %vm5205, %v5166
        %5235 = vst.msk [vmem:[#allocation4 + $0x74] sm:$0xf] %vm5205, %v5168
        %5236 = vst.msk [vmem:[#allocation4 + $0x78] sm:$0xf] %vm5205, %v5170
        %5237 = vst.msk [vmem:[#allocation4 + $0x7c] sm:$0xf] %vm5205, %v5172
        %v5238 = vld [vmem:[%s5044] sm:$0xf]
        %v5239 = vld [vmem:[%s5044 + $0x4] sm:$0xf]
        %v5240 = vld [vmem:[%s5044 + $0x8] sm:$0x1]
        %v5241 = vld [vmem:[%s5044 + $0xc] sm:$0xf]
        %v5242 = vld [vmem:[%s5044 + $0x10] sm:$0xf]
        %v5243 = vld [vmem:[%s5044 + $0x14] sm:$0x1]
        %v5244 = vld [vmem:[%s5044 + $0x18] sm:$0xf]
        %v5245 = vld [vmem:[%s5044 + $0x1c] sm:$0xf]
        %v5246 = vld [vmem:[%s5044 + $0x20] sm:$0x1]
        %v5247 = vld [vmem:[%s5044 + $0x24] sm:$0xf]
        %v5248 = vld [vmem:[%s5044 + $0x28] sm:$0xf]
        %v5249 = vld [vmem:[%s5044 + $0x2c] sm:$0x1]
        %v5250 = vld [vmem:[%s5044 + $0x30] sm:$0xf]
        %v5251 = vld [vmem:[%s5044 + $0x34] sm:$0xf]
        %v5252 = vld [vmem:[%s5044 + $0x38] sm:$0x1]
        %v5253 = vld [vmem:[%s5044 + $0x3c] sm:$0xf]
        %v5254 = vld [vmem:[%s5044 + $0x40] sm:$0xf]
        %v5255 = vld [vmem:[%s5044 + $0x44] sm:$0x1]
        %v5256 = vld [vmem:[%s5044 + $0x48] sm:$0xf]
        %v5257 = vld [vmem:[%s5044 + $0x4c] sm:$0xf]
        %v5258 = vld [vmem:[%s5044 + $0x50] sm:$0x1]
        %v5259 = vld [vmem:[%s5044 + $0x54] sm:$0xf]
        %v5260 = vld [vmem:[%s5044 + $0x58] sm:$0xf]
        %v5261 = vld [vmem:[%s5044 + $0x5c] sm:$0x1]
        %v5262 = vld [vmem:[%s5044 + $0x60] sm:$0xf]
        %v5263 = vld [vmem:[%s5044 + $0x64] sm:$0xf]
        %v5264 = vld [vmem:[%s5044 + $0x68] sm:$0x1]
        %v5265 = vld [vmem:[%s5044 + $0x6c] sm:$0xf]
        %v5266 = vld [vmem:[%s5044 + $0x70] sm:$0xf]
        %v5267 = vld [vmem:[%s5044 + $0x74] sm:$0x1]
        %v5268 = vld [vmem:[%s5044 + $0x78] sm:$0xf]
        %v5269 = vld [vmem:[%s5044 + $0x7c] sm:$0xf]
        %v5270 = vld [vmem:[%s5044 + $0x80] sm:$0x1]
        %v5271 = vld [vmem:[%s5044 + $0x84] sm:$0xf]
        %v5272 = vld [vmem:[%s5044 + $0x88] sm:$0xf]
        %v5273 = vld [vmem:[%s5044 + $0x8c] sm:$0x1]
        %v5274 = vld [vmem:[%s5044 + $0x90] sm:$0xf]
        %v5275 = vld [vmem:[%s5044 + $0x94] sm:$0xf]
        %v5276 = vld [vmem:[%s5044 + $0x98] sm:$0x1]
        %v5277 = vld [vmem:[%s5044 + $0x9c] sm:$0xf]
        %v5278 = vld [vmem:[%s5044 + $0xa0] sm:$0xf]
        %v5279 = vld [vmem:[%s5044 + $0xa4] sm:$0x1]
        %v5280 = vld [vmem:[%s5044 + $0xa8] sm:$0xf]
        %v5281 = vld [vmem:[%s5044 + $0xac] sm:$0xf]
        %v5282 = vld [vmem:[%s5044 + $0xb0] sm:$0x1]
        %v5283 = vld [vmem:[%s5044 + $0xb4] sm:$0xf]
        %v5284 = vld [vmem:[%s5044 + $0xb8] sm:$0xf]
        %v5285 = vld [vmem:[%s5044 + $0xbc] sm:$0x1]
        %v5287 = vshrl.u32 %v5238, 16
        %v5289 = vrot.slane %v5287, 4
        %v5290 = vshll.u32 %v5238, 16
        %v5292 = vrot.slane %v5290, 5
        %v5293 = vor.u32 %v5289, %v5292
        %v5294 = vrot.slane %v5293, 4
        %v5296 = vshll.u32 %v5239, 16
        %v5298 = vrot.slane %v5296, 5
        %v5299 = vsel %vm3099, %v5294, %v5298
        %v5300 = vshrl.u32 %v5239, 16
        %v5302 = vrot.slane %v5300, 4
        %v5303 = vor.u32 %v5302, %v5298
        %v5304 = vrot.slane %v5303, 4
        %v5306 = vshll.u32 %v5240, 16
        %v5308 = vrot.slane %v5306, 5
        %v5309 = vsel %vm3099, %v5304, %v5308
        %v5311 = vshrl.u32 %v5241, 16
        %v5313 = vrot.slane %v5311, 4
        %v5314 = vshll.u32 %v5241, 16
        %v5316 = vrot.slane %v5314, 5
        %v5317 = vor.u32 %v5313, %v5316
        %v5318 = vrot.slane %v5317, 4
        %v5320 = vshll.u32 %v5242, 16
        %v5322 = vrot.slane %v5320, 5
        %v5323 = vsel %vm3099, %v5318, %v5322
        %v5324 = vshrl.u32 %v5242, 16
        %v5326 = vrot.slane %v5324, 4
        %v5327 = vor.u32 %v5326, %v5322
        %v5328 = vrot.slane %v5327, 4
        %v5330 = vshll.u32 %v5243, 16
        %v5332 = vrot.slane %v5330, 5
        %v5333 = vsel %vm3099, %v5328, %v5332
        %v5335 = vshrl.u32 %v5244, 16
        %v5337 = vrot.slane %v5335, 4
        %v5338 = vshll.u32 %v5244, 16
        %v5340 = vrot.slane %v5338, 5
        %v5341 = vor.u32 %v5337, %v5340
        %v5342 = vrot.slane %v5341, 4
        %v5344 = vshll.u32 %v5245, 16
        %v5346 = vrot.slane %v5344, 5
        %v5347 = vsel %vm3099, %v5342, %v5346
        %v5348 = vshrl.u32 %v5245, 16
        %v5350 = vrot.slane %v5348, 4
        %v5351 = vor.u32 %v5350, %v5346
        %v5352 = vrot.slane %v5351, 4
        %v5354 = vshll.u32 %v5246, 16
        %v5356 = vrot.slane %v5354, 5
        %v5357 = vsel %vm3099, %v5352, %v5356
        %v5359 = vshrl.u32 %v5247, 16
        %v5361 = vrot.slane %v5359, 4
        %v5362 = vshll.u32 %v5247, 16
        %v5364 = vrot.slane %v5362, 5
        %v5365 = vor.u32 %v5361, %v5364
        %v5366 = vrot.slane %v5365, 4
        %v5368 = vshll.u32 %v5248, 16
        %v5370 = vrot.slane %v5368, 5
        %v5371 = vsel %vm3099, %v5366, %v5370
        %v5372 = vshrl.u32 %v5248, 16
        %v5374 = vrot.slane %v5372, 4
        %v5375 = vor.u32 %v5374, %v5370
        %v5376 = vrot.slane %v5375, 4
        %v5378 = vshll.u32 %v5249, 16
        %v5380 = vrot.slane %v5378, 5
        %v5381 = vsel %vm3099, %v5376, %v5380
        %v5383 = vshrl.u32 %v5250, 16
        %v5385 = vrot.slane %v5383, 4
        %v5386 = vshll.u32 %v5250, 16
        %v5388 = vrot.slane %v5386, 5
        %v5389 = vor.u32 %v5385, %v5388
        %v5390 = vrot.slane %v5389, 4
        %v5392 = vshll.u32 %v5251, 16
        %v5394 = vrot.slane %v5392, 5
        %v5395 = vsel %vm3099, %v5390, %v5394
        %v5396 = vshrl.u32 %v5251, 16
        %v5398 = vrot.slane %v5396, 4
        %v5399 = vor.u32 %v5398, %v5394
        %v5400 = vrot.slane %v5399, 4
        %v5402 = vshll.u32 %v5252, 16
        %v5404 = vrot.slane %v5402, 5
        %v5405 = vsel %vm3099, %v5400, %v5404
        %v5407 = vshrl.u32 %v5253, 16
        %v5409 = vrot.slane %v5407, 4
        %v5410 = vshll.u32 %v5253, 16
        %v5412 = vrot.slane %v5410, 5
        %v5413 = vor.u32 %v5409, %v5412
        %v5414 = vrot.slane %v5413, 4
        %v5416 = vshll.u32 %v5254, 16
        %v5418 = vrot.slane %v5416, 5
        %v5419 = vsel %vm3099, %v5414, %v5418
        %v5420 = vshrl.u32 %v5254, 16
        %v5422 = vrot.slane %v5420, 4
        %v5423 = vor.u32 %v5422, %v5418
        %v5424 = vrot.slane %v5423, 4
        %v5426 = vshll.u32 %v5255, 16
        %v5428 = vrot.slane %v5426, 5
        %v5429 = vsel %vm3099, %v5424, %v5428
        %v5431 = vshrl.u32 %v5256, 16
        %v5433 = vrot.slane %v5431, 4
        %v5434 = vshll.u32 %v5256, 16
        %v5436 = vrot.slane %v5434, 5
        %v5437 = vor.u32 %v5433, %v5436
        %v5438 = vrot.slane %v5437, 4
        %v5440 = vshll.u32 %v5257, 16
        %v5442 = vrot.slane %v5440, 5
        %v5443 = vsel %vm3099, %v5438, %v5442
        %v5444 = vshrl.u32 %v5257, 16
        %v5446 = vrot.slane %v5444, 4
        %v5447 = vor.u32 %v5446, %v5442
        %v5448 = vrot.slane %v5447, 4
        %v5450 = vshll.u32 %v5258, 16
        %v5452 = vrot.slane %v5450, 5
        %v5453 = vsel %vm3099, %v5448, %v5452
        %v5455 = vshrl.u32 %v5259, 16
        %v5457 = vrot.slane %v5455, 4
        %v5458 = vshll.u32 %v5259, 16
        %v5460 = vrot.slane %v5458, 5
        %v5461 = vor.u32 %v5457, %v5460
        %v5462 = vrot.slane %v5461, 4
        %v5464 = vshll.u32 %v5260, 16
        %v5466 = vrot.slane %v5464, 5
        %v5467 = vsel %vm3099, %v5462, %v5466
        %v5468 = vshrl.u32 %v5260, 16
        %v5470 = vrot.slane %v5468, 4
        %v5471 = vor.u32 %v5470, %v5466
        %v5472 = vrot.slane %v5471, 4
        %v5474 = vshll.u32 %v5261, 16
        %v5476 = vrot.slane %v5474, 5
        %v5477 = vsel %vm3099, %v5472, %v5476
        %v5479 = vshrl.u32 %v5262, 16
        %v5481 = vrot.slane %v5479, 4
        %v5482 = vshll.u32 %v5262, 16
        %v5484 = vrot.slane %v5482, 5
        %v5485 = vor.u32 %v5481, %v5484
        %v5486 = vrot.slane %v5485, 4
        %v5488 = vshll.u32 %v5263, 16
        %v5490 = vrot.slane %v5488, 5
        %v5491 = vsel %vm3099, %v5486, %v5490
        %v5492 = vshrl.u32 %v5263, 16
        %v5494 = vrot.slane %v5492, 4
        %v5495 = vor.u32 %v5494, %v5490
        %v5496 = vrot.slane %v5495, 4
        %v5498 = vshll.u32 %v5264, 16
        %v5500 = vrot.slane %v5498, 5
        %v5501 = vsel %vm3099, %v5496, %v5500
        %v5503 = vshrl.u32 %v5265, 16
        %v5505 = vrot.slane %v5503, 4
        %v5506 = vshll.u32 %v5265, 16
        %v5508 = vrot.slane %v5506, 5
        %v5509 = vor.u32 %v5505, %v5508
        %v5510 = vrot.slane %v5509, 4
        %v5512 = vshll.u32 %v5266, 16
        %v5514 = vrot.slane %v5512, 5
        %v5515 = vsel %vm3099, %v5510, %v5514
        %v5516 = vshrl.u32 %v5266, 16
        %v5518 = vrot.slane %v5516, 4
        %v5519 = vor.u32 %v5518, %v5514
        %v5520 = vrot.slane %v5519, 4
        %v5522 = vshll.u32 %v5267, 16
        %v5524 = vrot.slane %v5522, 5
        %v5525 = vsel %vm3099, %v5520, %v5524
        %v5527 = vshrl.u32 %v5268, 16
        %v5529 = vrot.slane %v5527, 4
        %v5530 = vshll.u32 %v5268, 16
        %v5532 = vrot.slane %v5530, 5
        %v5533 = vor.u32 %v5529, %v5532
        %v5534 = vrot.slane %v5533, 4
        %v5536 = vshll.u32 %v5269, 16
        %v5538 = vrot.slane %v5536, 5
        %v5539 = vsel %vm3099, %v5534, %v5538
        %v5540 = vshrl.u32 %v5269, 16
        %v5542 = vrot.slane %v5540, 4
        %v5543 = vor.u32 %v5542, %v5538
        %v5544 = vrot.slane %v5543, 4
        %v5546 = vshll.u32 %v5270, 16
        %v5548 = vrot.slane %v5546, 5
        %v5549 = vsel %vm3099, %v5544, %v5548
        %v5551 = vshrl.u32 %v5271, 16
        %v5553 = vrot.slane %v5551, 4
        %v5554 = vshll.u32 %v5271, 16
        %v5556 = vrot.slane %v5554, 5
        %v5557 = vor.u32 %v5553, %v5556
        %v5558 = vrot.slane %v5557, 4
        %v5560 = vshll.u32 %v5272, 16
        %v5562 = vrot.slane %v5560, 5
        %v5563 = vsel %vm3099, %v5558, %v5562
        %v5564 = vshrl.u32 %v5272, 16
        %v5566 = vrot.slane %v5564, 4
        %v5567 = vor.u32 %v5566, %v5562
        %v5568 = vrot.slane %v5567, 4
        %v5570 = vshll.u32 %v5273, 16
        %v5572 = vrot.slane %v5570, 5
        %v5573 = vsel %vm3099, %v5568, %v5572
        %v5575 = vshrl.u32 %v5274, 16
        %v5577 = vrot.slane %v5575, 4
        %v5578 = vshll.u32 %v5274, 16
        %v5580 = vrot.slane %v5578, 5
        %v5581 = vor.u32 %v5577, %v5580
        %v5582 = vrot.slane %v5581, 4
        %v5584 = vshll.u32 %v5275, 16
        %v5586 = vrot.slane %v5584, 5
        %v5587 = vsel %vm3099, %v5582, %v5586
        %v5588 = vshrl.u32 %v5275, 16
        %v5590 = vrot.slane %v5588, 4
        %v5591 = vor.u32 %v5590, %v5586
        %v5592 = vrot.slane %v5591, 4
        %v5594 = vshll.u32 %v5276, 16
        %v5596 = vrot.slane %v5594, 5
        %v5597 = vsel %vm3099, %v5592, %v5596
        %v5599 = vshrl.u32 %v5277, 16
        %v5601 = vrot.slane %v5599, 4
        %v5602 = vshll.u32 %v5277, 16
        %v5604 = vrot.slane %v5602, 5
        %v5605 = vor.u32 %v5601, %v5604
        %v5606 = vrot.slane %v5605, 4
        %v5608 = vshll.u32 %v5278, 16
        %v5610 = vrot.slane %v5608, 5
        %v5611 = vsel %vm3099, %v5606, %v5610
        %v5612 = vshrl.u32 %v5278, 16
        %v5614 = vrot.slane %v5612, 4
        %v5615 = vor.u32 %v5614, %v5610
        %v5616 = vrot.slane %v5615, 4
        %v5618 = vshll.u32 %v5279, 16
        %v5620 = vrot.slane %v5618, 5
        %v5621 = vsel %vm3099, %v5616, %v5620
        %v5623 = vshrl.u32 %v5280, 16
        %v5625 = vrot.slane %v5623, 4
        %v5626 = vshll.u32 %v5280, 16
        %v5628 = vrot.slane %v5626, 5
        %v5629 = vor.u32 %v5625, %v5628
        %v5630 = vrot.slane %v5629, 4
        %v5632 = vshll.u32 %v5281, 16
        %v5634 = vrot.slane %v5632, 5
        %v5635 = vsel %vm3099, %v5630, %v5634
        %v5636 = vshrl.u32 %v5281, 16
        %v5638 = vrot.slane %v5636, 4
        %v5639 = vor.u32 %v5638, %v5634
        %v5640 = vrot.slane %v5639, 4
        %v5642 = vshll.u32 %v5282, 16
        %v5644 = vrot.slane %v5642, 5
        %v5645 = vsel %vm3099, %v5640, %v5644
        %v5647 = vshrl.u32 %v5283, 16
        %v5649 = vrot.slane %v5647, 4
        %v5650 = vshll.u32 %v5283, 16
        %v5652 = vrot.slane %v5650, 5
        %v5653 = vor.u32 %v5649, %v5652
        %v5654 = vrot.slane %v5653, 4
        %v5656 = vshll.u32 %v5284, 16
        %v5658 = vrot.slane %v5656, 5
        %v5659 = vsel %vm3099, %v5654, %v5658
        %v5660 = vshrl.u32 %v5284, 16
        %v5662 = vrot.slane %v5660, 4
        %v5663 = vor.u32 %v5662, %v5658
        %v5664 = vrot.slane %v5663, 4
        %v5666 = vshll.u32 %v5285, 16
        %v5668 = vrot.slane %v5666, 5
        %v5669 = vsel %vm3099, %v5664, %v5668
        %5670 = vrot.lane.b32.xlu0 %v5299, 56
        %v5671 = vpop.permute.xlu0 %5670
        %5672 = vrot.lane.b32.xlu0 %v5309, 56
        %v5673 = vpop.permute.xlu0 %5672
        %5674 = vrot.lane.b32.xlu0 %v5323, 56
        %v5675 = vpop.permute.xlu0 %5674
        %5676 = vrot.lane.b32.xlu0 %v5333, 56
        %v5677 = vpop.permute.xlu0 %5676
        %5678 = vrot.lane.b32.xlu0 %v5347, 56
        %v5679 = vpop.permute.xlu0 %5678
        %5680 = vrot.lane.b32.xlu0 %v5357, 56
        %v5681 = vpop.permute.xlu0 %5680
        %5682 = vrot.lane.b32.xlu0 %v5371, 56
        %v5683 = vpop.permute.xlu0 %5682
        %5684 = vrot.lane.b32.xlu0 %v5381, 56
        %v5685 = vpop.permute.xlu0 %5684
        %5686 = vrot.lane.b32.xlu0 %v5395, 56
        %v5687 = vpop.permute.xlu0 %5686
        %5688 = vrot.lane.b32.xlu0 %v5405, 56
        %v5689 = vpop.permute.xlu0 %5688
        %5690 = vrot.lane.b32.xlu0 %v5419, 56
        %v5691 = vpop.permute.xlu0 %5690
        %5692 = vrot.lane.b32.xlu0 %v5429, 56
        %v5693 = vpop.permute.xlu0 %5692
        %5694 = vrot.lane.b32.xlu0 %v5443, 56
        %v5695 = vpop.permute.xlu0 %5694
        %5696 = vrot.lane.b32.xlu0 %v5453, 56
        %v5697 = vpop.permute.xlu0 %5696
        %5698 = vrot.lane.b32.xlu0 %v5467, 56
        %v5699 = vpop.permute.xlu0 %5698
        %5700 = vrot.lane.b32.xlu0 %v5477, 56
        %v5701 = vpop.permute.xlu0 %5700
        %5702 = vrot.lane.b32.xlu0 %v5491, 56
        %v5703 = vpop.permute.xlu0 %5702
        %5704 = vrot.lane.b32.xlu0 %v5501, 56
        %v5705 = vpop.permute.xlu0 %5704
        %5706 = vrot.lane.b32.xlu0 %v5515, 56
        %v5707 = vpop.permute.xlu0 %5706
        %5708 = vrot.lane.b32.xlu0 %v5525, 56
        %v5709 = vpop.permute.xlu0 %5708
        %5710 = vrot.lane.b32.xlu0 %v5539, 56
        %v5711 = vpop.permute.xlu0 %5710
        %5712 = vrot.lane.b32.xlu0 %v5549, 56
        %v5713 = vpop.permute.xlu0 %5712
        %5714 = vrot.lane.b32.xlu0 %v5563, 56
        %v5715 = vpop.permute.xlu0 %5714
        %5716 = vrot.lane.b32.xlu0 %v5573, 56
        %v5717 = vpop.permute.xlu0 %5716
        %5718 = vrot.lane.b32.xlu0 %v5587, 56
        %v5719 = vpop.permute.xlu0 %5718
        %5720 = vrot.lane.b32.xlu0 %v5597, 56
        %v5721 = vpop.permute.xlu0 %5720
        %5722 = vrot.lane.b32.xlu0 %v5611, 56
        %v5723 = vpop.permute.xlu0 %5722
        %5724 = vrot.lane.b32.xlu0 %v5621, 56
        %v5725 = vpop.permute.xlu0 %5724
        %5726 = vrot.lane.b32.xlu0 %v5635, 56
        %v5727 = vpop.permute.xlu0 %5726
        %5728 = vrot.lane.b32.xlu0 %v5645, 56
        %v5729 = vpop.permute.xlu0 %5728
        %5730 = vrot.lane.b32.xlu0 %v5659, 56
        %v5731 = vpop.permute.xlu0 %5730
        %5732 = vrot.lane.b32.xlu0 %v5669, 56
        %v5733 = vpop.permute.xlu0 %5732
        %vm5766 = vcmask 519616
        %5767 = vst.msk [vmem:[#allocation4] sm:$0xf] %vm5766, %v5671
        %5768 = vst.msk [vmem:[#allocation4 + $0x4] sm:$0xf] %vm5766, %v5673
        %5769 = vst.msk [vmem:[#allocation4 + $0x8] sm:$0xf] %vm5766, %v5675
        %5770 = vst.msk [vmem:[#allocation4 + $0xc] sm:$0xf] %vm5766, %v5677
        %5771 = vst.msk [vmem:[#allocation4 + $0x10] sm:$0xf] %vm5766, %v5679
        %5772 = vst.msk [vmem:[#allocation4 + $0x14] sm:$0xf] %vm5766, %v5681
        %5773 = vst.msk [vmem:[#allocation4 + $0x18] sm:$0xf] %vm5766, %v5683
        %5774 = vst.msk [vmem:[#allocation4 + $0x1c] sm:$0xf] %vm5766, %v5685
        %5775 = vst.msk [vmem:[#allocation4 + $0x20] sm:$0xf] %vm5766, %v5687
        %5776 = vst.msk [vmem:[#allocation4 + $0x24] sm:$0xf] %vm5766, %v5689
        %5777 = vst.msk [vmem:[#allocation4 + $0x28] sm:$0xf] %vm5766, %v5691
        %5778 = vst.msk [vmem:[#allocation4 + $0x2c] sm:$0xf] %vm5766, %v5693
        %5779 = vst.msk [vmem:[#allocation4 + $0x30] sm:$0xf] %vm5766, %v5695
        %5780 = vst.msk [vmem:[#allocation4 + $0x34] sm:$0xf] %vm5766, %v5697
        %5781 = vst.msk [vmem:[#allocation4 + $0x38] sm:$0xf] %vm5766, %v5699
        %5782 = vst.msk [vmem:[#allocation4 + $0x3c] sm:$0xf] %vm5766, %v5701
        %5783 = vst.msk [vmem:[#allocation4 + $0x40] sm:$0xf] %vm5766, %v5703
        %5784 = vst.msk [vmem:[#allocation4 + $0x44] sm:$0xf] %vm5766, %v5705
        %5785 = vst.msk [vmem:[#allocation4 + $0x48] sm:$0xf] %vm5766, %v5707
        %5786 = vst.msk [vmem:[#allocation4 + $0x4c] sm:$0xf] %vm5766, %v5709
        %5787 = vst.msk [vmem:[#allocation4 + $0x50] sm:$0xf] %vm5766, %v5711
        %5788 = vst.msk [vmem:[#allocation4 + $0x54] sm:$0xf] %vm5766, %v5713
        %5789 = vst.msk [vmem:[#allocation4 + $0x58] sm:$0xf] %vm5766, %v5715
        %5790 = vst.msk [vmem:[#allocation4 + $0x5c] sm:$0xf] %vm5766, %v5717
        %5791 = vst.msk [vmem:[#allocation4 + $0x60] sm:$0xf] %vm5766, %v5719
        %5792 = vst.msk [vmem:[#allocation4 + $0x64] sm:$0xf] %vm5766, %v5721
        %5793 = vst.msk [vmem:[#allocation4 + $0x68] sm:$0xf] %vm5766, %v5723
        %5794 = vst.msk [vmem:[#allocation4 + $0x6c] sm:$0xf] %vm5766, %v5725
        %5795 = vst.msk [vmem:[#allocation4 + $0x70] sm:$0xf] %vm5766, %v5727
        %5796 = vst.msk [vmem:[#allocation4 + $0x74] sm:$0xf] %vm5766, %v5729
        %5797 = vst.msk [vmem:[#allocation4 + $0x78] sm:$0xf] %vm5766, %v5731
        %5798 = vst.msk [vmem:[#allocation4 + $0x7c] sm:$0xf] %vm5766, %v5733
        %v5799 = vld [vmem:[%s5044] sm:$0xe]
        %v5800 = vld [vmem:[%s5044 + $0x4] sm:$0xf]
        %v5801 = vld [vmem:[%s5044 + $0x8] sm:$0x1]
        %v5802 = vld [vmem:[%s5044 + $0xc] sm:$0xe]
        %v5803 = vld [vmem:[%s5044 + $0x10] sm:$0xf]
        %v5804 = vld [vmem:[%s5044 + $0x14] sm:$0x1]
        %v5805 = vld [vmem:[%s5044 + $0x18] sm:$0xe]
        %v5806 = vld [vmem:[%s5044 + $0x1c] sm:$0xf]
        %v5807 = vld [vmem:[%s5044 + $0x20] sm:$0x1]
        %v5808 = vld [vmem:[%s5044 + $0x24] sm:$0xe]
        %v5809 = vld [vmem:[%s5044 + $0x28] sm:$0xf]
        %v5810 = vld [vmem:[%s5044 + $0x2c] sm:$0x1]
        %v5811 = vld [vmem:[%s5044 + $0x30] sm:$0xe]
        %v5812 = vld [vmem:[%s5044 + $0x34] sm:$0xf]
        %v5813 = vld [vmem:[%s5044 + $0x38] sm:$0x1]
        %v5814 = vld [vmem:[%s5044 + $0x3c] sm:$0xe]
        %v5815 = vld [vmem:[%s5044 + $0x40] sm:$0xf]
        %v5816 = vld [vmem:[%s5044 + $0x44] sm:$0x1]
        %v5817 = vld [vmem:[%s5044 + $0x48] sm:$0xe]
        %v5818 = vld [vmem:[%s5044 + $0x4c] sm:$0xf]
        %v5819 = vld [vmem:[%s5044 + $0x50] sm:$0x1]
        %v5820 = vld [vmem:[%s5044 + $0x54] sm:$0xe]
        %v5821 = vld [vmem:[%s5044 + $0x58] sm:$0xf]
        %v5822 = vld [vmem:[%s5044 + $0x5c] sm:$0x1]
        %v5823 = vld [vmem:[%s5044 + $0x60] sm:$0xe]
        %v5824 = vld [vmem:[%s5044 + $0x64] sm:$0xf]
        %v5825 = vld [vmem:[%s5044 + $0x68] sm:$0x1]
        %v5826 = vld [vmem:[%s5044 + $0x6c] sm:$0xe]
        %v5827 = vld [vmem:[%s5044 + $0x70] sm:$0xf]
        %v5828 = vld [vmem:[%s5044 + $0x74] sm:$0x1]
        %v5829 = vld [vmem:[%s5044 + $0x78] sm:$0xe]
        %v5830 = vld [vmem:[%s5044 + $0x7c] sm:$0xf]
        %v5831 = vld [vmem:[%s5044 + $0x80] sm:$0x1]
        %v5832 = vld [vmem:[%s5044 + $0x84] sm:$0xe]
        %v5833 = vld [vmem:[%s5044 + $0x88] sm:$0xf]
        %v5834 = vld [vmem:[%s5044 + $0x8c] sm:$0x1]
        %v5835 = vld [vmem:[%s5044 + $0x90] sm:$0xe]
        %v5836 = vld [vmem:[%s5044 + $0x94] sm:$0xf]
        %v5837 = vld [vmem:[%s5044 + $0x98] sm:$0x1]
        %v5838 = vld [vmem:[%s5044 + $0x9c] sm:$0xe]
        %v5839 = vld [vmem:[%s5044 + $0xa0] sm:$0xf]
        %v5840 = vld [vmem:[%s5044 + $0xa4] sm:$0x1]
        %v5841 = vld [vmem:[%s5044 + $0xa8] sm:$0xe]
        %v5842 = vld [vmem:[%s5044 + $0xac] sm:$0xf]
        %v5843 = vld [vmem:[%s5044 + $0xb0] sm:$0x1]
        %v5844 = vld [vmem:[%s5044 + $0xb4] sm:$0xe]
        %v5845 = vld [vmem:[%s5044 + $0xb8] sm:$0xf]
        %v5846 = vld [vmem:[%s5044 + $0xbc] sm:$0x1]
        %v5895 = vrot.slane %v5799, 5
        %v5896 = vrot.slane %v5895, 4
        %v5897 = vrot.slane %v5800, 5
        %v5898 = vsel %vm3711, %v5896, %v5897
        %v5899 = vrot.slane %v5897, 4
        %v5900 = vrot.slane %v5801, 5
        %v5901 = vsel %vm3711, %v5899, %v5900
        %v5902 = vrot.slane %v5802, 5
        %v5903 = vrot.slane %v5902, 4
        %v5904 = vrot.slane %v5803, 5
        %v5905 = vsel %vm3711, %v5903, %v5904
        %v5906 = vrot.slane %v5904, 4
        %v5907 = vrot.slane %v5804, 5
        %v5908 = vsel %vm3711, %v5906, %v5907
        %v5909 = vrot.slane %v5805, 5
        %v5910 = vrot.slane %v5909, 4
        %v5911 = vrot.slane %v5806, 5
        %v5912 = vsel %vm3711, %v5910, %v5911
        %v5913 = vrot.slane %v5911, 4
        %v5914 = vrot.slane %v5807, 5
        %v5915 = vsel %vm3711, %v5913, %v5914
        %v5916 = vrot.slane %v5808, 5
        %v5917 = vrot.slane %v5916, 4
        %v5918 = vrot.slane %v5809, 5
        %v5919 = vsel %vm3711, %v5917, %v5918
        %v5920 = vrot.slane %v5918, 4
        %v5921 = vrot.slane %v5810, 5
        %v5922 = vsel %vm3711, %v5920, %v5921
        %v5923 = vrot.slane %v5811, 5
        %v5924 = vrot.slane %v5923, 4
        %v5925 = vrot.slane %v5812, 5
        %v5926 = vsel %vm3711, %v5924, %v5925
        %v5927 = vrot.slane %v5925, 4
        %v5928 = vrot.slane %v5813, 5
        %v5929 = vsel %vm3711, %v5927, %v5928
        %v5930 = vrot.slane %v5814, 5
        %v5931 = vrot.slane %v5930, 4
        %v5932 = vrot.slane %v5815, 5
        %v5933 = vsel %vm3711, %v5931, %v5932
        %v5934 = vrot.slane %v5932, 4
        %v5935 = vrot.slane %v5816, 5
        %v5936 = vsel %vm3711, %v5934, %v5935
        %v5937 = vrot.slane %v5817, 5
        %v5938 = vrot.slane %v5937, 4
        %v5939 = vrot.slane %v5818, 5
        %v5940 = vsel %vm3711, %v5938, %v5939
        %v5941 = vrot.slane %v5939, 4
        %v5942 = vrot.slane %v5819, 5
        %v5943 = vsel %vm3711, %v5941, %v5942
        %v5944 = vrot.slane %v5820, 5
        %v5945 = vrot.slane %v5944, 4
        %v5946 = vrot.slane %v5821, 5
        %v5947 = vsel %vm3711, %v5945, %v5946
        %v5948 = vrot.slane %v5946, 4
        %v5949 = vrot.slane %v5822, 5
        %v5950 = vsel %vm3711, %v5948, %v5949
        %v5951 = vrot.slane %v5823, 5
        %v5952 = vrot.slane %v5951, 4
        %v5953 = vrot.slane %v5824, 5
        %v5954 = vsel %vm3711, %v5952, %v5953
        %v5955 = vrot.slane %v5953, 4
        %v5956 = vrot.slane %v5825, 5
        %v5957 = vsel %vm3711, %v5955, %v5956
        %v5958 = vrot.slane %v5826, 5
        %v5959 = vrot.slane %v5958, 4
        %v5960 = vrot.slane %v5827, 5
        %v5961 = vsel %vm3711, %v5959, %v5960
        %v5962 = vrot.slane %v5960, 4
        %v5963 = vrot.slane %v5828, 5
        %v5964 = vsel %vm3711, %v5962, %v5963
        %v5965 = vrot.slane %v5829, 5
        %v5966 = vrot.slane %v5965, 4
        %v5967 = vrot.slane %v5830, 5
        %v5968 = vsel %vm3711, %v5966, %v5967
        %v5969 = vrot.slane %v5967, 4
        %v5970 = vrot.slane %v5831, 5
        %v5971 = vsel %vm3711, %v5969, %v5970
        %v5972 = vrot.slane %v5832, 5
        %v5973 = vrot.slane %v5972, 4
        %v5974 = vrot.slane %v5833, 5
        %v5975 = vsel %vm3711, %v5973, %v5974
        %v5976 = vrot.slane %v5974, 4
        %v5977 = vrot.slane %v5834, 5
        %v5978 = vsel %vm3711, %v5976, %v5977
        %v5979 = vrot.slane %v5835, 5
        %v5980 = vrot.slane %v5979, 4
        %v5981 = vrot.slane %v5836, 5
        %v5982 = vsel %vm3711, %v5980, %v5981
        %v5983 = vrot.slane %v5981, 4
        %v5984 = vrot.slane %v5837, 5
        %v5985 = vsel %vm3711, %v5983, %v5984
        %v5986 = vrot.slane %v5838, 5
        %v5987 = vrot.slane %v5986, 4
        %v5988 = vrot.slane %v5839, 5
        %v5989 = vsel %vm3711, %v5987, %v5988
        %v5990 = vrot.slane %v5988, 4
        %v5991 = vrot.slane %v5840, 5
        %v5992 = vsel %vm3711, %v5990, %v5991
        %v5993 = vrot.slane %v5841, 5
        %v5994 = vrot.slane %v5993, 4
        %v5995 = vrot.slane %v5842, 5
        %v5996 = vsel %vm3711, %v5994, %v5995
        %v5997 = vrot.slane %v5995, 4
        %v5998 = vrot.slane %v5843, 5
        %v5999 = vsel %vm3711, %v5997, %v5998
        %v6000 = vrot.slane %v5844, 5
        %v6001 = vrot.slane %v6000, 4
        %v6002 = vrot.slane %v5845, 5
        %v6003 = vsel %vm3711, %v6001, %v6002
        %v6004 = vrot.slane %v6002, 4
        %v6005 = vrot.slane %v5846, 5
        %v6006 = vsel %vm3711, %v6004, %v6005
        %6007 = vrot.lane.b32.xlu0 %v5898, 64
        %v6008 = vpop.permute.xlu0 %6007
        %6009 = vrot.lane.b32.xlu0 %v5901, 64
        %v6010 = vpop.permute.xlu0 %6009
        %6011 = vrot.lane.b32.xlu0 %v5905, 64
        %v6012 = vpop.permute.xlu0 %6011
        %6013 = vrot.lane.b32.xlu0 %v5908, 64
        %v6014 = vpop.permute.xlu0 %6013
        %6015 = vrot.lane.b32.xlu0 %v5912, 64
        %v6016 = vpop.permute.xlu0 %6015
        %6017 = vrot.lane.b32.xlu0 %v5915, 64
        %v6018 = vpop.permute.xlu0 %6017
        %6019 = vrot.lane.b32.xlu0 %v5919, 64
        %v6020 = vpop.permute.xlu0 %6019
        %6021 = vrot.lane.b32.xlu0 %v5922, 64
        %v6022 = vpop.permute.xlu0 %6021
        %6023 = vrot.lane.b32.xlu0 %v5926, 64
        %v6024 = vpop.permute.xlu0 %6023
        %6025 = vrot.lane.b32.xlu0 %v5929, 64
        %v6026 = vpop.permute.xlu0 %6025
        %6027 = vrot.lane.b32.xlu0 %v5933, 64
        %v6028 = vpop.permute.xlu0 %6027
        %6029 = vrot.lane.b32.xlu0 %v5936, 64
        %v6030 = vpop.permute.xlu0 %6029
        %6031 = vrot.lane.b32.xlu0 %v5940, 64
        %v6032 = vpop.permute.xlu0 %6031
        %6033 = vrot.lane.b32.xlu0 %v5943, 64
        %v6034 = vpop.permute.xlu0 %6033
        %6035 = vrot.lane.b32.xlu0 %v5947, 64
        %v6036 = vpop.permute.xlu0 %6035
        %6037 = vrot.lane.b32.xlu0 %v5950, 64
        %v6038 = vpop.permute.xlu0 %6037
        %6039 = vrot.lane.b32.xlu0 %v5954, 64
        %v6040 = vpop.permute.xlu0 %6039
        %6041 = vrot.lane.b32.xlu0 %v5957, 64
        %v6042 = vpop.permute.xlu0 %6041
        %6043 = vrot.lane.b32.xlu0 %v5961, 64
        %v6044 = vpop.permute.xlu0 %6043
        %6045 = vrot.lane.b32.xlu0 %v5964, 64
        %v6046 = vpop.permute.xlu0 %6045
        %6047 = vrot.lane.b32.xlu0 %v5968, 64
        %v6048 = vpop.permute.xlu0 %6047
        %6049 = vrot.lane.b32.xlu0 %v5971, 64
        %v6050 = vpop.permute.xlu0 %6049
        %6051 = vrot.lane.b32.xlu0 %v5975, 64
        %v6052 = vpop.permute.xlu0 %6051
        %6053 = vrot.lane.b32.xlu0 %v5978, 64
        %v6054 = vpop.permute.xlu0 %6053
        %6055 = vrot.lane.b32.xlu0 %v5982, 64
        %v6056 = vpop.permute.xlu0 %6055
        %6057 = vrot.lane.b32.xlu0 %v5985, 64
        %v6058 = vpop.permute.xlu0 %6057
        %6059 = vrot.lane.b32.xlu0 %v5989, 64
        %v6060 = vpop.permute.xlu0 %6059
        %6061 = vrot.lane.b32.xlu0 %v5992, 64
        %v6062 = vpop.permute.xlu0 %6061
        %6063 = vrot.lane.b32.xlu0 %v5996, 64
        %v6064 = vpop.permute.xlu0 %6063
        %6065 = vrot.lane.b32.xlu0 %v5999, 64
        %v6066 = vpop.permute.xlu0 %6065
        %6067 = vrot.lane.b32.xlu0 %v6003, 64
        %v6068 = vpop.permute.xlu0 %6067
        %6069 = vrot.lane.b32.xlu0 %v6006, 64
        %v6070 = vpop.permute.xlu0 %6069
        %vm6103 = vcmask 585216
        %6104 = vst.msk [vmem:[#allocation4] sm:$0xf] %vm6103, %v6008
        %6105 = vst.msk [vmem:[#allocation4 + $0x4] sm:$0xf] %vm6103, %v6010
        %6106 = vst.msk [vmem:[#allocation4 + $0x8] sm:$0xf] %vm6103, %v6012
        %6107 = vst.msk [vmem:[#allocation4 + $0xc] sm:$0xf] %vm6103, %v6014
        %6108 = vst.msk [vmem:[#allocation4 + $0x10] sm:$0xf] %vm6103, %v6016
        %6109 = vst.msk [vmem:[#allocation4 + $0x14] sm:$0xf] %vm6103, %v6018
        %6110 = vst.msk [vmem:[#allocation4 + $0x18] sm:$0xf] %vm6103, %v6020
        %6111 = vst.msk [vmem:[#allocation4 + $0x1c] sm:$0xf] %vm6103, %v6022
        %6112 = vst.msk [vmem:[#allocation4 + $0x20] sm:$0xf] %vm6103, %v6024
        %6113 = vst.msk [vmem:[#allocation4 + $0x24] sm:$0xf] %vm6103, %v6026
        %6114 = vst.msk [vmem:[#allocation4 + $0x28] sm:$0xf] %vm6103, %v6028
        %6115 = vst.msk [vmem:[#allocation4 + $0x2c] sm:$0xf] %vm6103, %v6030
        %6116 = vst.msk [vmem:[#allocation4 + $0x30] sm:$0xf] %vm6103, %v6032
        %6117 = vst.msk [vmem:[#allocation4 + $0x34] sm:$0xf] %vm6103, %v6034
        %6118 = vst.msk [vmem:[#allocation4 + $0x38] sm:$0xf] %vm6103, %v6036
        %6119 = vst.msk [vmem:[#allocation4 + $0x3c] sm:$0xf] %vm6103, %v6038
        %6120 = vst.msk [vmem:[#allocation4 + $0x40] sm:$0xf] %vm6103, %v6040
        %6121 = vst.msk [vmem:[#allocation4 + $0x44] sm:$0xf] %vm6103, %v6042
        %6122 = vst.msk [vmem:[#allocation4 + $0x48] sm:$0xf] %vm6103, %v6044
        %6123 = vst.msk [vmem:[#allocation4 + $0x4c] sm:$0xf] %vm6103, %v6046
        %6124 = vst.msk [vmem:[#allocation4 + $0x50] sm:$0xf] %vm6103, %v6048
        %6125 = vst.msk [vmem:[#allocation4 + $0x54] sm:$0xf] %vm6103, %v6050
        %6126 = vst.msk [vmem:[#allocation4 + $0x58] sm:$0xf] %vm6103, %v6052
        %6127 = vst.msk [vmem:[#allocation4 + $0x5c] sm:$0xf] %vm6103, %v6054
        %6128 = vst.msk [vmem:[#allocation4 + $0x60] sm:$0xf] %vm6103, %v6056
        %6129 = vst.msk [vmem:[#allocation4 + $0x64] sm:$0xf] %vm6103, %v6058
        %6130 = vst.msk [vmem:[#allocation4 + $0x68] sm:$0xf] %vm6103, %v6060
        %6131 = vst.msk [vmem:[#allocation4 + $0x6c] sm:$0xf] %vm6103, %v6062
        %6132 = vst.msk [vmem:[#allocation4 + $0x70] sm:$0xf] %vm6103, %v6064
        %6133 = vst.msk [vmem:[#allocation4 + $0x74] sm:$0xf] %vm6103, %v6066
        %6134 = vst.msk [vmem:[#allocation4 + $0x78] sm:$0xf] %vm6103, %v6068
        %6135 = vst.msk [vmem:[#allocation4 + $0x7c] sm:$0xf] %vm6103, %v6070
        %vm6136 = vcmask 1044032
        %6137 = vst.msk [vmem:[#allocation4] sm:$0xf] %vm6136, 0
        %6138 = vst.msk [vmem:[#allocation4 + $0x4] sm:$0xf] %vm6136, 0
        %6139 = vst.msk [vmem:[#allocation4 + $0x8] sm:$0xf] %vm6136, 0
        %6140 = vst.msk [vmem:[#allocation4 + $0xc] sm:$0xf] %vm6136, 0
        %6141 = vst.msk [vmem:[#allocation4 + $0x10] sm:$0xf] %vm6136, 0
        %6142 = vst.msk [vmem:[#allocation4 + $0x14] sm:$0xf] %vm6136, 0
        %6143 = vst.msk [vmem:[#allocation4 + $0x18] sm:$0xf] %vm6136, 0
        %6144 = vst.msk [vmem:[#allocation4 + $0x1c] sm:$0xf] %vm6136, 0
        %6145 = vst.msk [vmem:[#allocation4 + $0x20] sm:$0xf] %vm6136, 0
        %6146 = vst.msk [vmem:[#allocation4 + $0x24] sm:$0xf] %vm6136, 0
        %6147 = vst.msk [vmem:[#allocation4 + $0x28] sm:$0xf] %vm6136, 0
        %6148 = vst.msk [vmem:[#allocation4 + $0x2c] sm:$0xf] %vm6136, 0
        %6149 = vst.msk [vmem:[#allocation4 + $0x30] sm:$0xf] %vm6136, 0
        %6150 = vst.msk [vmem:[#allocation4 + $0x34] sm:$0xf] %vm6136, 0
        %6151 = vst.msk [vmem:[#allocation4 + $0x38] sm:$0xf] %vm6136, 0
        %6152 = vst.msk [vmem:[#allocation4 + $0x3c] sm:$0xf] %vm6136, 0
        %6153 = vst.msk [vmem:[#allocation4 + $0x40] sm:$0xf] %vm6136, 0
        %6154 = vst.msk [vmem:[#allocation4 + $0x44] sm:$0xf] %vm6136, 0
        %6155 = vst.msk [vmem:[#allocation4 + $0x48] sm:$0xf] %vm6136, 0
        %6156 = vst.msk [vmem:[#allocation4 + $0x4c] sm:$0xf] %vm6136, 0
        %6157 = vst.msk [vmem:[#allocation4 + $0x50] sm:$0xf] %vm6136, 0
        %6158 = vst.msk [vmem:[#allocation4 + $0x54] sm:$0xf] %vm6136, 0
        %6159 = vst.msk [vmem:[#allocation4 + $0x58] sm:$0xf] %vm6136, 0
        %6160 = vst.msk [vmem:[#allocation4 + $0x5c] sm:$0xf] %vm6136, 0
        %6161 = vst.msk [vmem:[#allocation4 + $0x60] sm:$0xf] %vm6136, 0
        %6162 = vst.msk [vmem:[#allocation4 + $0x64] sm:$0xf] %vm6136, 0
        %6163 = vst.msk [vmem:[#allocation4 + $0x68] sm:$0xf] %vm6136, 0
        %6164 = vst.msk [vmem:[#allocation4 + $0x6c] sm:$0xf] %vm6136, 0
        %6165 = vst.msk [vmem:[#allocation4 + $0x70] sm:$0xf] %vm6136, 0
        %6166 = vst.msk [vmem:[#allocation4 + $0x74] sm:$0xf] %vm6136, 0
        %6167 = vst.msk [vmem:[#allocation4 + $0x78] sm:$0xf] %vm6136, 0
        %6168 = vst.msk [vmem:[#allocation4 + $0x7c] sm:$0xf] %vm6136, 0
        %v6169 = vld [vmem:[#allocation4] sm:$0xf]
        %v6170 = vld [vmem:[#allocation4 + $0x4] sm:$0xf]
        %v6171 = vld [vmem:[#allocation4 + $0x8] sm:$0xf]
        %v6172 = vld [vmem:[#allocation4 + $0xc] sm:$0xf]
        %v6173 = vld [vmem:[#allocation4 + $0x10] sm:$0xf]
        %v6174 = vld [vmem:[#allocation4 + $0x14] sm:$0xf]
        %v6175 = vld [vmem:[#allocation4 + $0x18] sm:$0xf]
        %v6176 = vld [vmem:[#allocation4 + $0x1c] sm:$0xf]
        %v6177 = vld [vmem:[#allocation4 + $0x20] sm:$0xf]
        %v6178 = vld [vmem:[#allocation4 + $0x24] sm:$0xf]
        %v6179 = vld [vmem:[#allocation4 + $0x28] sm:$0xf]
        %v6180 = vld [vmem:[#allocation4 + $0x2c] sm:$0xf]
        %v6181 = vld [vmem:[#allocation4 + $0x30] sm:$0xf]
        %v6182 = vld [vmem:[#allocation4 + $0x34] sm:$0xf]
        %v6183 = vld [vmem:[#allocation4 + $0x38] sm:$0xf]
        %v6184 = vld [vmem:[#allocation4 + $0x3c] sm:$0xf]
        %v6185 = vld [vmem:[#allocation4 + $0x40] sm:$0xf]
        %v6186 = vld [vmem:[#allocation4 + $0x44] sm:$0xf]
        %v6187 = vld [vmem:[#allocation4 + $0x48] sm:$0xf]
        %v6188 = vld [vmem:[#allocation4 + $0x4c] sm:$0xf]
        %v6189 = vld [vmem:[#allocation4 + $0x50] sm:$0xf]
        %v6190 = vld [vmem:[#allocation4 + $0x54] sm:$0xf]
        %v6191 = vld [vmem:[#allocation4 + $0x58] sm:$0xf]
        %v6192 = vld [vmem:[#allocation4 + $0x5c] sm:$0xf]
        %v6193 = vld [vmem:[#allocation4 + $0x60] sm:$0xf]
        %v6194 = vld [vmem:[#allocation4 + $0x64] sm:$0xf]
        %v6195 = vld [vmem:[#allocation4 + $0x68] sm:$0xf]
        %v6196 = vld [vmem:[#allocation4 + $0x6c] sm:$0xf]
        %v6197 = vld [vmem:[#allocation4 + $0x70] sm:$0xf]
        %v6198 = vld [vmem:[#allocation4 + $0x74] sm:$0xf]
        %v6199 = vld [vmem:[#allocation4 + $0x78] sm:$0xf]
        %v6200 = vld [vmem:[#allocation4 + $0x7c] sm:$0xf]
        %v6201 = vld [vmem:[%s4] sm:$0xf]
        %v6202 = vld [vmem:[%s4 + $0x4] sm:$0xf]
        %v6203 = vld [vmem:[%s4 + $0x8] sm:$0xf]
        %v6204 = vld [vmem:[%s4 + $0xc] sm:$0xf]
        %v6205 = vld [vmem:[%s4 + $0x10] sm:$0xf]
        %v6206 = vld [vmem:[%s4 + $0x14] sm:$0xf]
        %v6207 = vld [vmem:[%s4 + $0x18] sm:$0xf]
        %v6208 = vld [vmem:[%s4 + $0x1c] sm:$0xf]
        %v6209 = vld [vmem:[%s4 + $0x20] sm:$0xf]
        %v6210 = vld [vmem:[%s4 + $0x24] sm:$0xf]
        %v6211 = vld [vmem:[%s4 + $0x28] sm:$0xf]
        %v6212 = vld [vmem:[%s4 + $0x2c] sm:$0xf]
        %v6213 = vld [vmem:[%s4 + $0x30] sm:$0xf]
        %v6214 = vld [vmem:[%s4 + $0x34] sm:$0xf]
        %v6215 = vld [vmem:[%s4 + $0x38] sm:$0xf]
        %v6216 = vld [vmem:[%s4 + $0x3c] sm:$0xf]
        %v6249 = vunpack.c.l.b16 %v6169
        %v6250 = vunpack.c.l.b16 %v6170
        %v6251 = vunpack.c.l.b16 %v6171
        %v6252 = vunpack.c.l.b16 %v6172
        %v6253 = vunpack.c.l.b16 %v6173
        %v6254 = vunpack.c.l.b16 %v6174
        %v6255 = vunpack.c.l.b16 %v6175
        %v6256 = vunpack.c.l.b16 %v6176
        %v6257 = vunpack.c.l.b16 %v6177
        %v6258 = vunpack.c.l.b16 %v6178
        %v6259 = vunpack.c.l.b16 %v6179
        %v6260 = vunpack.c.l.b16 %v6180
        %v6261 = vunpack.c.l.b16 %v6181
        %v6262 = vunpack.c.l.b16 %v6182
        %v6263 = vunpack.c.l.b16 %v6183
        %v6264 = vunpack.c.l.b16 %v6184
        %v6265 = vunpack.c.l.b16 %v6185
        %v6266 = vunpack.c.l.b16 %v6186
        %v6267 = vunpack.c.l.b16 %v6187
        %v6268 = vunpack.c.l.b16 %v6188
        %v6269 = vunpack.c.l.b16 %v6189
        %v6270 = vunpack.c.l.b16 %v6190
        %v6271 = vunpack.c.l.b16 %v6191
        %v6272 = vunpack.c.l.b16 %v6192
        %v6273 = vunpack.c.l.b16 %v6193
        %v6274 = vunpack.c.l.b16 %v6194
        %v6275 = vunpack.c.l.b16 %v6195
        %v6276 = vunpack.c.l.b16 %v6196
        %v6277 = vunpack.c.l.b16 %v6197
        %v6278 = vunpack.c.l.b16 %v6198
        %v6279 = vunpack.c.l.b16 %v6199
        %v6280 = vunpack.c.l.b16 %v6200
        %v6281 = vpack.c.b16 %v6250, %v6249
        %v6282 = vpack.c.b16 %v6252, %v6251
        %v6283 = vpack.c.b16 %v6254, %v6253
        %v6284 = vpack.c.b16 %v6256, %v6255
        %v6285 = vpack.c.b16 %v6258, %v6257
        %v6286 = vpack.c.b16 %v6260, %v6259
        %v6287 = vpack.c.b16 %v6262, %v6261
        %v6288 = vpack.c.b16 %v6264, %v6263
        %v6289 = vpack.c.b16 %v6266, %v6265
        %v6290 = vpack.c.b16 %v6268, %v6267
        %v6291 = vpack.c.b16 %v6270, %v6269
        %v6292 = vpack.c.b16 %v6272, %v6271
        %v6293 = vpack.c.b16 %v6274, %v6273
        %v6294 = vpack.c.b16 %v6276, %v6275
        %v6295 = vpack.c.b16 %v6278, %v6277
        %v6296 = vpack.c.b16 %v6280, %v6279
        %v6329 = vunpack.c.l.b16 %v6201
        %v6330 = vunpack.c.l.b16 %v6202
        %v6331 = vunpack.c.l.b16 %v6203
        %v6332 = vunpack.c.l.b16 %v6204
        %v6333 = vunpack.c.l.b16 %v6205
        %v6334 = vunpack.c.l.b16 %v6206
        %v6335 = vunpack.c.l.b16 %v6207
        %v6336 = vunpack.c.l.b16 %v6208
        %v6337 = vunpack.c.l.b16 %v6209
        %v6338 = vunpack.c.l.b16 %v6210
        %v6339 = vunpack.c.l.b16 %v6211
        %v6340 = vunpack.c.l.b16 %v6212
        %v6341 = vunpack.c.l.b16 %v6213
        %v6342 = vunpack.c.l.b16 %v6214
        %v6343 = vunpack.c.l.b16 %v6215
        %v6344 = vunpack.c.l.b16 %v6216
        %v6345 = vpack.c.b16 %v6330, %v6329
        %v6346 = vpack.c.b16 %v6332, %v6331
        %v6347 = vpack.c.b16 %v6334, %v6333
        %v6348 = vpack.c.b16 %v6336, %v6335
        %v6349 = vpack.c.b16 %v6338, %v6337
        %v6350 = vpack.c.b16 %v6340, %v6339
        %v6351 = vpack.c.b16 %v6342, %v6341
        %v6352 = vpack.c.b16 %v6344, %v6343
        %6361 = vmatprep.subr.bf16.mxu0 0
        %6362 = vmatpush1.bf16.msra.mxu0 %v6352
        %6363 = vmatprep.subr.bf16.mxu0 0
        %6364 = vmatpush1.bf16.msra.mxu0 %v6351
        %6365 = vmatprep.subr.bf16.mxu0 0
        %6366 = vmatpush1.bf16.msra.mxu0 %v6350
        %6367 = vmatprep.subr.bf16.mxu0 0
        %6368 = vmatpush1.bf16.msra.mxu0 %v6349
        %6369 = vmatprep.subr.bf16.mxu0 0
        %6370 = vmatpush1.bf16.msra.mxu0 %v6348
        %6371 = vmatprep.subr.bf16.mxu0 0
        %6372 = vmatpush1.bf16.msra.mxu0 %v6347
        %6373 = vmatprep.subr.bf16.mxu0 0
        %6374 = vmatpush1.bf16.msra.mxu0 %v6346
        %6375 = vmatprep.subr.bf16.mxu0 0
        %6376 = vmatpush1.bf16.msra.mxu0 %v6345
        %6377 = vmatprep.subr.bf16.mxu0 0
        %6378 = vmatpush2.bf16.msra.mxu0 0
        %6379 = vmatprep.subr.bf16.mxu0 0
        %6380 = vmatpush2.bf16.msra.mxu0 0
        %6381 = vmatprep.subr.bf16.mxu0 0
        %6382 = vmatpush2.bf16.msra.mxu0 0
        %6383 = vmatprep.subr.bf16.mxu0 0
        %6384 = vmatpush2.bf16.msra.mxu0 0
        %6385 = vmatprep.subr.bf16.mxu0 0
        %6386 = vmatpush2.bf16.msra.mxu0 0
        %6387 = vmatprep.subr.bf16.mxu0 0
        %6388 = vmatpush2.bf16.msra.mxu0 0
        %6389 = vmatprep.subr.bf16.mxu0 0
        %6390 = vmatpush2.bf16.msra.mxu0 0
        %6391 = vmatprep.subr.bf16.mxu0 0
        %6392 = vmatpush2.bf16.msra.mxu0 0
        %6393 = vmatprep.mubr.bf16.mxu0 0
        %6394 = vmatmul.mubr.bf16.gmra.mxu0 %v6281
        %v6395 = vpop.f32.mrf.mxu0
        %v6396 = vadd.f32 0.0, %v6395
        %v6397 = vpop.f32.mrf.mxu0
        %v6398 = vpop.f32.mrf.mxu0
        %v6399 = vadd.f32 0.0, %v6398
        %v6400 = vpop.f32.mrf.mxu0
        %6401 = vmatprep.mubr.bf16.mxu0 0
        %6402 = vmatmul.mubr.bf16.gmra.mxu0 %v6282
        %v6403 = vpop.f32.mrf.mxu0
        %v6404 = vadd.f32 0.0, %v6403
        %v6405 = vpop.f32.mrf.mxu0
        %v6406 = vpop.f32.mrf.mxu0
        %v6407 = vadd.f32 0.0, %v6406
        %v6408 = vpop.f32.mrf.mxu0
        %6409 = vmatprep.mubr.bf16.mxu0 0
        %6410 = vmatmul.mubr.bf16.gmra.mxu0 %v6283
        %v6411 = vpop.f32.mrf.mxu0
        %v6412 = vadd.f32 0.0, %v6411
        %v6413 = vpop.f32.mrf.mxu0
        %v6414 = vpop.f32.mrf.mxu0
        %v6415 = vadd.f32 0.0, %v6414
        %v6416 = vpop.f32.mrf.mxu0
        %6417 = vmatprep.mubr.bf16.mxu0 0
        %6418 = vmatmul.mubr.bf16.gmra.mxu0 %v6284
        %v6419 = vpop.f32.mrf.mxu0
        %v6420 = vadd.f32 0.0, %v6419
        %v6421 = vpop.f32.mrf.mxu0
        %v6422 = vpop.f32.mrf.mxu0
        %v6423 = vadd.f32 0.0, %v6422
        %v6424 = vpop.f32.mrf.mxu0
        %6425 = vmatprep.mubr.bf16.mxu0 0
        %6426 = vmatmul.mubr.bf16.gmra.mxu0 %v6285
        %v6427 = vpop.f32.mrf.mxu0
        %v6428 = vadd.f32 0.0, %v6427
        %v6429 = vpop.f32.mrf.mxu0
        %v6430 = vpop.f32.mrf.mxu0
        %v6431 = vadd.f32 0.0, %v6430
        %v6432 = vpop.f32.mrf.mxu0
        %6433 = vmatprep.mubr.bf16.mxu0 0
        %6434 = vmatmul.mubr.bf16.gmra.mxu0 %v6286
        %v6435 = vpop.f32.mrf.mxu0
        %v6436 = vadd.f32 0.0, %v6435
        %v6437 = vpop.f32.mrf.mxu0
        %v6438 = vpop.f32.mrf.mxu0
        %v6439 = vadd.f32 0.0, %v6438
        %v6440 = vpop.f32.mrf.mxu0
        %6441 = vmatprep.mubr.bf16.mxu0 0
        %6442 = vmatmul.mubr.bf16.gmra.mxu0 %v6287
        %v6443 = vpop.f32.mrf.mxu0
        %v6444 = vadd.f32 0.0, %v6443
        %v6445 = vpop.f32.mrf.mxu0
        %v6446 = vpop.f32.mrf.mxu0
        %v6447 = vadd.f32 0.0, %v6446
        %v6448 = vpop.f32.mrf.mxu0
        %6449 = vmatprep.mubr.bf16.mxu0 0
        %6450 = vmatmul.mubr.bf16.gmra.mxu0 %v6288
        %v6451 = vpop.f32.mrf.mxu0
        %v6452 = vadd.f32 0.0, %v6451
        %v6453 = vpop.f32.mrf.mxu0
        %v6454 = vpop.f32.mrf.mxu0
        %v6455 = vadd.f32 0.0, %v6454
        %v6456 = vpop.f32.mrf.mxu0
        %6457 = vmatprep.mubr.bf16.mxu0 0
        %6458 = vmatmul.mubr.bf16.gmra.mxu0 %v6289
        %v6459 = vpop.f32.mrf.mxu0
        %v6460 = vadd.f32 0.0, %v6459
        %v6461 = vpop.f32.mrf.mxu0
        %v6462 = vpop.f32.mrf.mxu0
        %v6463 = vadd.f32 0.0, %v6462
        %v6464 = vpop.f32.mrf.mxu0
        %6465 = vmatprep.mubr.bf16.mxu0 0
        %6466 = vmatmul.mubr.bf16.gmra.mxu0 %v6290
        %v6467 = vpop.f32.mrf.mxu0
        %v6468 = vadd.f32 0.0, %v6467
        %v6469 = vpop.f32.mrf.mxu0
        %v6470 = vpop.f32.mrf.mxu0
        %v6471 = vadd.f32 0.0, %v6470
        %v6472 = vpop.f32.mrf.mxu0
        %6473 = vmatprep.mubr.bf16.mxu0 0
        %6474 = vmatmul.mubr.bf16.gmra.mxu0 %v6291
        %v6475 = vpop.f32.mrf.mxu0
        %v6476 = vadd.f32 0.0, %v6475
        %v6477 = vpop.f32.mrf.mxu0
        %v6478 = vpop.f32.mrf.mxu0
        %v6479 = vadd.f32 0.0, %v6478
        %v6480 = vpop.f32.mrf.mxu0
        %6481 = vmatprep.mubr.bf16.mxu0 0
        %6482 = vmatmul.mubr.bf16.gmra.mxu0 %v6292
        %v6483 = vpop.f32.mrf.mxu0
        %v6484 = vadd.f32 0.0, %v6483
        %v6485 = vpop.f32.mrf.mxu0
        %v6486 = vpop.f32.mrf.mxu0
        %v6487 = vadd.f32 0.0, %v6486
        %v6488 = vpop.f32.mrf.mxu0
        %6489 = vmatprep.mubr.bf16.mxu0 0
        %6490 = vmatmul.mubr.bf16.gmra.mxu0 %v6293
        %v6491 = vpop.f32.mrf.mxu0
        %v6492 = vadd.f32 0.0, %v6491
        %v6493 = vpop.f32.mrf.mxu0
        %v6494 = vpop.f32.mrf.mxu0
        %v6495 = vadd.f32 0.0, %v6494
        %v6496 = vpop.f32.mrf.mxu0
        %6497 = vmatprep.mubr.bf16.mxu0 0
        %6498 = vmatmul.mubr.bf16.gmra.mxu0 %v6294
        %v6499 = vpop.f32.mrf.mxu0
        %v6500 = vadd.f32 0.0, %v6499
        %v6501 = vpop.f32.mrf.mxu0
        %v6502 = vpop.f32.mrf.mxu0
        %v6503 = vadd.f32 0.0, %v6502
        %v6504 = vpop.f32.mrf.mxu0
        %6505 = vmatprep.mubr.bf16.mxu0 0
        %6506 = vmatmul.mubr.bf16.gmra.mxu0 %v6295
        %v6507 = vpop.f32.mrf.mxu0
        %v6508 = vadd.f32 0.0, %v6507
        %v6509 = vpop.f32.mrf.mxu0
        %v6510 = vpop.f32.mrf.mxu0
        %v6511 = vadd.f32 0.0, %v6510
        %v6512 = vpop.f32.mrf.mxu0
        %6513 = vmatprep.mubr.bf16.mxu0 0
        %6514 = vmatmul.mubr.bf16.gmra.mxu0 %v6296
        %v6515 = vpop.f32.mrf.mxu0
        %v6516 = vadd.f32 0.0, %v6515
        %v6517 = vpop.f32.mrf.mxu0
        %v6518 = vpop.f32.mrf.mxu0
        %v6519 = vadd.f32 0.0, %v6518
        %v6520 = vpop.f32.mrf.mxu0
        %6521 = vdwg.mxu0
        %v6522 = vld [vmem:[%s5] sm:$0x1]
        %v6524 = vlaneseq
        %v6525 = vshrl.u32 %v6524, 7
        %v6526 = vsub.s32 0, %v6525
        %v6527 = vrot.slane %v6522, %v6526
        %v6529 = vmul.f32 %v6396, %v6527
        %v6530 = vmul.f32 %v6399, %v6527
        %v6531 = vmul.f32 %v6404, %v6527
        %v6532 = vmul.f32 %v6407, %v6527
        %v6533 = vmul.f32 %v6412, %v6527
        %v6534 = vmul.f32 %v6415, %v6527
        %v6535 = vmul.f32 %v6420, %v6527
        %v6536 = vmul.f32 %v6423, %v6527
        %v6537 = vmul.f32 %v6428, %v6527
        %v6538 = vmul.f32 %v6431, %v6527
        %v6539 = vmul.f32 %v6436, %v6527
        %v6540 = vmul.f32 %v6439, %v6527
        %v6541 = vmul.f32 %v6444, %v6527
        %v6542 = vmul.f32 %v6447, %v6527
        %v6543 = vmul.f32 %v6452, %v6527
        %v6544 = vmul.f32 %v6455, %v6527
        %v6545 = vmul.f32 %v6460, %v6527
        %v6546 = vmul.f32 %v6463, %v6527
        %v6547 = vmul.f32 %v6468, %v6527
        %v6548 = vmul.f32 %v6471, %v6527
        %v6549 = vmul.f32 %v6476, %v6527
        %v6550 = vmul.f32 %v6479, %v6527
        %v6551 = vmul.f32 %v6484, %v6527
        %v6552 = vmul.f32 %v6487, %v6527
        %v6553 = vmul.f32 %v6492, %v6527
        %v6554 = vmul.f32 %v6495, %v6527
        %v6555 = vmul.f32 %v6500, %v6527
        %v6556 = vmul.f32 %v6503, %v6527
        %v6557 = vmul.f32 %v6508, %v6527
        %v6558 = vmul.f32 %v6511, %v6527
        %v6559 = vmul.f32 %v6516, %v6527
        %v6560 = vmul.f32 %v6519, %v6527
        %v6561 = vld [vmem:[%s6] sm:$0x1]
        %v6563 = vlaneseq
        %v6564 = vshrl.u32 %v6563, 7
        %v6565 = vsub.s32 0, %v6564
        %v6566 = vrot.slane %v6561, %v6565
        %v6568 = vadd.f32 %v6529, %v6566
        %v6569 = vadd.f32 %v6530, %v6566
        %v6570 = vadd.f32 %v6531, %v6566
        %v6571 = vadd.f32 %v6532, %v6566
        %v6572 = vadd.f32 %v6533, %v6566
        %v6573 = vadd.f32 %v6534, %v6566
        %v6574 = vadd.f32 %v6535, %v6566
        %v6575 = vadd.f32 %v6536, %v6566
        %v6576 = vadd.f32 %v6537, %v6566
        %v6577 = vadd.f32 %v6538, %v6566
        %v6578 = vadd.f32 %v6539, %v6566
        %v6579 = vadd.f32 %v6540, %v6566
        %v6580 = vadd.f32 %v6541, %v6566
        %v6581 = vadd.f32 %v6542, %v6566
        %v6582 = vadd.f32 %v6543, %v6566
        %v6583 = vadd.f32 %v6544, %v6566
        %v6584 = vadd.f32 %v6545, %v6566
        %v6585 = vadd.f32 %v6546, %v6566
        %v6586 = vadd.f32 %v6547, %v6566
        %v6587 = vadd.f32 %v6548, %v6566
        %v6588 = vadd.f32 %v6549, %v6566
        %v6589 = vadd.f32 %v6550, %v6566
        %v6590 = vadd.f32 %v6551, %v6566
        %v6591 = vadd.f32 %v6552, %v6566
        %v6592 = vadd.f32 %v6553, %v6566
        %v6593 = vadd.f32 %v6554, %v6566
        %v6594 = vadd.f32 %v6555, %v6566
        %v6595 = vadd.f32 %v6556, %v6566
        %v6596 = vadd.f32 %v6557, %v6566
        %v6597 = vadd.f32 %v6558, %v6566
        %v6598 = vadd.f32 %v6559, %v6566
        %v6599 = vadd.f32 %v6560, %v6566
        %v6600 = vmax.f32 %v6568, 0.0
        %v6601 = vmax.f32 %v6569, 0.0
        %v6602 = vmax.f32 %v6570, 0.0
        %v6603 = vmax.f32 %v6571, 0.0
        %v6604 = vmax.f32 %v6572, 0.0
        %v6605 = vmax.f32 %v6573, 0.0
        %v6606 = vmax.f32 %v6574, 0.0
        %v6607 = vmax.f32 %v6575, 0.0
        %v6608 = vmax.f32 %v6576, 0.0
        %v6609 = vmax.f32 %v6577, 0.0
        %v6610 = vmax.f32 %v6578, 0.0
        %v6611 = vmax.f32 %v6579, 0.0
        %v6612 = vmax.f32 %v6580, 0.0
        %v6613 = vmax.f32 %v6581, 0.0
        %v6614 = vmax.f32 %v6582, 0.0
        %v6615 = vmax.f32 %v6583, 0.0
        %v6616 = vmax.f32 %v6584, 0.0
        %v6617 = vmax.f32 %v6585, 0.0
        %v6618 = vmax.f32 %v6586, 0.0
        %v6619 = vmax.f32 %v6587, 0.0
        %v6620 = vmax.f32 %v6588, 0.0
        %v6621 = vmax.f32 %v6589, 0.0
        %v6622 = vmax.f32 %v6590, 0.0
        %v6623 = vmax.f32 %v6591, 0.0
        %v6624 = vmax.f32 %v6592, 0.0
        %v6625 = vmax.f32 %v6593, 0.0
        %v6626 = vmax.f32 %v6594, 0.0
        %v6627 = vmax.f32 %v6595, 0.0
        %v6628 = vmax.f32 %v6596, 0.0
        %v6629 = vmax.f32 %v6597, 0.0
        %v6630 = vmax.f32 %v6598, 0.0
        %v6631 = vmax.f32 %v6599, 0.0
        %v6632 = vpack.c.bf16 %v6601, %v6600
        %v6633 = vpack.c.bf16 %v6603, %v6602
        %v6634 = vpack.c.bf16 %v6605, %v6604
        %v6635 = vpack.c.bf16 %v6607, %v6606
        %v6636 = vpack.c.bf16 %v6609, %v6608
        %v6637 = vpack.c.bf16 %v6611, %v6610
        %v6638 = vpack.c.bf16 %v6613, %v6612
        %v6639 = vpack.c.bf16 %v6615, %v6614
        %v6640 = vpack.c.bf16 %v6617, %v6616
        %v6641 = vpack.c.bf16 %v6619, %v6618
        %v6642 = vpack.c.bf16 %v6621, %v6620
        %v6643 = vpack.c.bf16 %v6623, %v6622
        %v6644 = vpack.c.bf16 %v6625, %v6624
        %v6645 = vpack.c.bf16 %v6627, %v6626
        %v6646 = vpack.c.bf16 %v6629, %v6628
        %v6647 = vpack.c.bf16 %v6631, %v6630
        %v6664 = vunpack.c.l.b16 %v6632
        %v6665 = vunpack.c.h.b16 %v6632
        %v6666 = vunpack.c.l.b16 %v6633
        %v6667 = vunpack.c.h.b16 %v6633
        %v6668 = vunpack.c.l.b16 %v6634
        %v6669 = vunpack.c.h.b16 %v6634
        %v6670 = vunpack.c.l.b16 %v6635
        %v6671 = vunpack.c.h.b16 %v6635
        %v6672 = vunpack.c.l.b16 %v6636
        %v6673 = vunpack.c.h.b16 %v6636
        %v6674 = vunpack.c.l.b16 %v6637
        %v6675 = vunpack.c.h.b16 %v6637
        %v6676 = vunpack.c.l.b16 %v6638
        %v6677 = vunpack.c.h.b16 %v6638
        %v6678 = vunpack.c.l.b16 %v6639
        %v6679 = vunpack.c.h.b16 %v6639
        %v6680 = vunpack.c.l.b16 %v6640
        %v6681 = vunpack.c.h.b16 %v6640
        %v6682 = vunpack.c.l.b16 %v6641
        %v6683 = vunpack.c.h.b16 %v6641
        %v6684 = vunpack.c.l.b16 %v6642
        %v6685 = vunpack.c.h.b16 %v6642
        %v6686 = vunpack.c.l.b16 %v6643
        %v6687 = vunpack.c.h.b16 %v6643
        %v6688 = vunpack.c.l.b16 %v6644
        %v6689 = vunpack.c.h.b16 %v6644
        %v6690 = vunpack.c.l.b16 %v6645
        %v6691 = vunpack.c.h.b16 %v6645
        %v6692 = vunpack.c.l.b16 %v6646
        %v6693 = vunpack.c.h.b16 %v6646
        %v6694 = vunpack.c.l.b16 %v6647
        %v6695 = vunpack.c.h.b16 %v6647
        %v6696 = vpack.c.b16 %v6664, %v6664
        %v6697 = vpack.c.b16 %v6665, %v6665
        %v6698 = vpack.c.b16 %v6666, %v6666
        %v6699 = vpack.c.b16 %v6667, %v6667
        %v6700 = vpack.c.b16 %v6668, %v6668
        %v6701 = vpack.c.b16 %v6669, %v6669
        %v6702 = vpack.c.b16 %v6670, %v6670
        %v6703 = vpack.c.b16 %v6671, %v6671
        %v6704 = vpack.c.b16 %v6672, %v6672
        %v6705 = vpack.c.b16 %v6673, %v6673
        %v6706 = vpack.c.b16 %v6674, %v6674
        %v6707 = vpack.c.b16 %v6675, %v6675
        %v6708 = vpack.c.b16 %v6676, %v6676
        %v6709 = vpack.c.b16 %v6677, %v6677
        %v6710 = vpack.c.b16 %v6678, %v6678
        %v6711 = vpack.c.b16 %v6679, %v6679
        %v6712 = vpack.c.b16 %v6680, %v6680
        %v6713 = vpack.c.b16 %v6681, %v6681
        %v6714 = vpack.c.b16 %v6682, %v6682
        %v6715 = vpack.c.b16 %v6683, %v6683
        %v6716 = vpack.c.b16 %v6684, %v6684
        %v6717 = vpack.c.b16 %v6685, %v6685
        %v6718 = vpack.c.b16 %v6686, %v6686
        %v6719 = vpack.c.b16 %v6687, %v6687
        %v6720 = vpack.c.b16 %v6688, %v6688
        %v6721 = vpack.c.b16 %v6689, %v6689
        %v6722 = vpack.c.b16 %v6690, %v6690
        %v6723 = vpack.c.b16 %v6691, %v6691
        %v6724 = vpack.c.b16 %v6692, %v6692
        %v6725 = vpack.c.b16 %v6693, %v6693
        %v6726 = vpack.c.b16 %v6694, %v6694
        %v6727 = vpack.c.b16 %v6695, %v6695
        %v6729 = vshrl.u32 %v6696, 16
        %v6731 = vrot.slane %v6729, 7
        %v6732 = vshll.u32 %v6696, 16
        %v6734 = vor.u32 %v6731, %v6732
        %v6735 = vrot.slane %v6731, 4
        %v6737 = vshrl.u32 %v6697, 16
        %v6739 = vrot.slane %v6737, 7
        %v6740 = vshll.u32 %v6697, 16
        %v6742 = vor.u32 %v6739, %v6740
        %v6743 = vsel %vm1917, %v6735, %v6742
        %v6744 = vrot.slane %v6739, 4
        %v6746 = vshrl.u32 %v6698, 16
        %v6748 = vrot.slane %v6746, 7
        %v6749 = vshll.u32 %v6698, 16
        %v6751 = vor.u32 %v6748, %v6749
        %v6752 = vrot.slane %v6748, 4
        %v6754 = vshrl.u32 %v6699, 16
        %v6756 = vrot.slane %v6754, 7
        %v6757 = vshll.u32 %v6699, 16
        %v6759 = vor.u32 %v6756, %v6757
        %v6760 = vsel %vm1917, %v6752, %v6759
        %v6761 = vrot.slane %v6756, 4
        %v6763 = vshrl.u32 %v6700, 16
        %v6765 = vrot.slane %v6763, 7
        %v6766 = vshll.u32 %v6700, 16
        %v6768 = vor.u32 %v6765, %v6766
        %v6769 = vrot.slane %v6765, 4
        %v6771 = vshrl.u32 %v6701, 16
        %v6773 = vrot.slane %v6771, 7
        %v6774 = vshll.u32 %v6701, 16
        %v6776 = vor.u32 %v6773, %v6774
        %v6777 = vsel %vm1917, %v6769, %v6776
        %v6778 = vrot.slane %v6773, 4
        %v6780 = vshrl.u32 %v6702, 16
        %v6782 = vrot.slane %v6780, 7
        %v6783 = vshll.u32 %v6702, 16
        %v6785 = vor.u32 %v6782, %v6783
        %v6786 = vrot.slane %v6782, 4
        %v6788 = vshrl.u32 %v6703, 16
        %v6790 = vrot.slane %v6788, 7
        %v6791 = vshll.u32 %v6703, 16
        %v6793 = vor.u32 %v6790, %v6791
        %v6794 = vsel %vm1917, %v6786, %v6793
        %v6795 = vrot.slane %v6790, 4
        %v6797 = vshrl.u32 %v6704, 16
        %v6799 = vrot.slane %v6797, 7
        %v6800 = vshll.u32 %v6704, 16
        %v6802 = vor.u32 %v6799, %v6800
        %v6803 = vrot.slane %v6799, 4
        %v6805 = vshrl.u32 %v6705, 16
        %v6807 = vrot.slane %v6805, 7
        %v6808 = vshll.u32 %v6705, 16
        %v6810 = vor.u32 %v6807, %v6808
        %v6811 = vsel %vm1917, %v6803, %v6810
        %v6812 = vrot.slane %v6807, 4
        %v6814 = vshrl.u32 %v6706, 16
        %v6816 = vrot.slane %v6814, 7
        %v6817 = vshll.u32 %v6706, 16
        %v6819 = vor.u32 %v6816, %v6817
        %v6820 = vrot.slane %v6816, 4
        %v6822 = vshrl.u32 %v6707, 16
        %v6824 = vrot.slane %v6822, 7
        %v6825 = vshll.u32 %v6707, 16
        %v6827 = vor.u32 %v6824, %v6825
        %v6828 = vsel %vm1917, %v6820, %v6827
        %v6829 = vrot.slane %v6824, 4
        %v6831 = vshrl.u32 %v6708, 16
        %v6833 = vrot.slane %v6831, 7
        %v6834 = vshll.u32 %v6708, 16
        %v6836 = vor.u32 %v6833, %v6834
        %v6837 = vrot.slane %v6833, 4
        %v6839 = vshrl.u32 %v6709, 16
        %v6841 = vrot.slane %v6839, 7
        %v6842 = vshll.u32 %v6709, 16
        %v6844 = vor.u32 %v6841, %v6842
        %v6845 = vsel %vm1917, %v6837, %v6844
        %v6846 = vrot.slane %v6841, 4
        %v6848 = vshrl.u32 %v6710, 16
        %v6850 = vrot.slane %v6848, 7
        %v6851 = vshll.u32 %v6710, 16
        %v6853 = vor.u32 %v6850, %v6851
        %v6854 = vrot.slane %v6850, 4
        %v6856 = vshrl.u32 %v6711, 16
        %v6858 = vrot.slane %v6856, 7
        %v6859 = vshll.u32 %v6711, 16
        %v6861 = vor.u32 %v6858, %v6859
        %v6862 = vsel %vm1917, %v6854, %v6861
        %v6863 = vrot.slane %v6858, 4
        %v6865 = vshrl.u32 %v6712, 16
        %v6867 = vrot.slane %v6865, 7
        %v6868 = vshll.u32 %v6712, 16
        %v6870 = vor.u32 %v6867, %v6868
        %v6871 = vrot.slane %v6867, 4
        %v6873 = vshrl.u32 %v6713, 16
        %v6875 = vrot.slane %v6873, 7
        %v6876 = vshll.u32 %v6713, 16
        %v6878 = vor.u32 %v6875, %v6876
        %v6879 = vsel %vm1917, %v6871, %v6878
        %v6880 = vrot.slane %v6875, 4
        %v6882 = vshrl.u32 %v6714, 16
        %v6884 = vrot.slane %v6882, 7
        %v6885 = vshll.u32 %v6714, 16
        %v6887 = vor.u32 %v6884, %v6885
        %v6888 = vrot.slane %v6884, 4
        %v6890 = vshrl.u32 %v6715, 16
        %v6892 = vrot.slane %v6890, 7
        %v6893 = vshll.u32 %v6715, 16
        %v6895 = vor.u32 %v6892, %v6893
        %v6896 = vsel %vm1917, %v6888, %v6895
        %v6897 = vrot.slane %v6892, 4
        %v6899 = vshrl.u32 %v6716, 16
        %v6901 = vrot.slane %v6899, 7
        %v6902 = vshll.u32 %v6716, 16
        %v6904 = vor.u32 %v6901, %v6902
        %v6905 = vrot.slane %v6901, 4
        %v6907 = vshrl.u32 %v6717, 16
        %v6909 = vrot.slane %v6907, 7
        %v6910 = vshll.u32 %v6717, 16
        %v6912 = vor.u32 %v6909, %v6910
        %v6913 = vsel %vm1917, %v6905, %v6912
        %v6914 = vrot.slane %v6909, 4
        %v6916 = vshrl.u32 %v6718, 16
        %v6918 = vrot.slane %v6916, 7
        %v6919 = vshll.u32 %v6718, 16
        %v6921 = vor.u32 %v6918, %v6919
        %v6922 = vrot.slane %v6918, 4
        %v6924 = vshrl.u32 %v6719, 16
        %v6926 = vrot.slane %v6924, 7
        %v6927 = vshll.u32 %v6719, 16
        %v6929 = vor.u32 %v6926, %v6927
        %v6930 = vsel %vm1917, %v6922, %v6929
        %v6931 = vrot.slane %v6926, 4
        %v6933 = vshrl.u32 %v6720, 16
        %v6935 = vrot.slane %v6933, 7
        %v6936 = vshll.u32 %v6720, 16
        %v6938 = vor.u32 %v6935, %v6936
        %v6939 = vrot.slane %v6935, 4
        %v6941 = vshrl.u32 %v6721, 16
        %v6943 = vrot.slane %v6941, 7
        %v6944 = vshll.u32 %v6721, 16
        %v6946 = vor.u32 %v6943, %v6944
        %v6947 = vsel %vm1917, %v6939, %v6946
        %v6948 = vrot.slane %v6943, 4
        %v6950 = vshrl.u32 %v6722, 16
        %v6952 = vrot.slane %v6950, 7
        %v6953 = vshll.u32 %v6722, 16
        %v6955 = vor.u32 %v6952, %v6953
        %v6956 = vrot.slane %v6952, 4
        %v6958 = vshrl.u32 %v6723, 16
        %v6960 = vrot.slane %v6958, 7
        %v6961 = vshll.u32 %v6723, 16
        %v6963 = vor.u32 %v6960, %v6961
        %v6964 = vsel %vm1917, %v6956, %v6963
        %v6965 = vrot.slane %v6960, 4
        %v6967 = vshrl.u32 %v6724, 16
        %v6969 = vrot.slane %v6967, 7
        %v6970 = vshll.u32 %v6724, 16
        %v6972 = vor.u32 %v6969, %v6970
        %v6973 = vrot.slane %v6969, 4
        %v6975 = vshrl.u32 %v6725, 16
        %v6977 = vrot.slane %v6975, 7
        %v6978 = vshll.u32 %v6725, 16
        %v6980 = vor.u32 %v6977, %v6978
        %v6981 = vsel %vm1917, %v6973, %v6980
        %v6982 = vrot.slane %v6977, 4
        %v6984 = vshrl.u32 %v6726, 16
        %v6986 = vrot.slane %v6984, 7
        %v6987 = vshll.u32 %v6726, 16
        %v6989 = vor.u32 %v6986, %v6987
        %v6990 = vrot.slane %v6986, 4
        %v6992 = vshrl.u32 %v6727, 16
        %v6994 = vrot.slane %v6992, 7
        %v6995 = vshll.u32 %v6727, 16
        %v6997 = vor.u32 %v6994, %v6995
        %v6998 = vsel %vm1917, %v6990, %v6997
        %v6999 = vrot.slane %v6994, 4
        %s7048 = scalar_lea.vmem [#allocation3], 12
        %vm7049 = vcmask 1043456
        %vm7050 = vmand %vm7049, %vm460
        %v7051 = vld [vmem:[%s7048] sm:$0xf]
        %v7052 = vsel %vm7050, %v6734, %v7051
        %7053 = vst [vmem:[%s7048] sm:$0xf] %v7052
        %7054 = vst [vmem:[%s7048 + $0x4] sm:$0xf] %v6743
        %v7055 = vld [vmem:[%s7048 + $0x8] sm:$0x1]
        %v7056 = vsel %vm524, %v6744, %v7055
        %7057 = vst [vmem:[%s7048 + $0x8] sm:$0x1] %v7056
        %v7058 = vld [vmem:[%s7048 + $0xc] sm:$0xf]
        %v7059 = vsel %vm7050, %v6751, %v7058
        %7060 = vst [vmem:[%s7048 + $0xc] sm:$0xf] %v7059
        %7061 = vst [vmem:[%s7048 + $0x10] sm:$0xf] %v6760
        %v7062 = vld [vmem:[%s7048 + $0x14] sm:$0x1]
        %v7063 = vsel %vm524, %v6761, %v7062
        %7064 = vst [vmem:[%s7048 + $0x14] sm:$0x1] %v7063
        %v7065 = vld [vmem:[%s7048 + $0x18] sm:$0xf]
        %v7066 = vsel %vm7050, %v6768, %v7065
        %7067 = vst [vmem:[%s7048 + $0x18] sm:$0xf] %v7066
        %7068 = vst [vmem:[%s7048 + $0x1c] sm:$0xf] %v6777
        %v7069 = vld [vmem:[%s7048 + $0x20] sm:$0x1]
        %v7070 = vsel %vm524, %v6778, %v7069
        %7071 = vst [vmem:[%s7048 + $0x20] sm:$0x1] %v7070
        %v7072 = vld [vmem:[%s7048 + $0x24] sm:$0xf]
        %v7073 = vsel %vm7050, %v6785, %v7072
        %7074 = vst [vmem:[%s7048 + $0x24] sm:$0xf] %v7073
        %7075 = vst [vmem:[%s7048 + $0x28] sm:$0xf] %v6794
        %v7076 = vld [vmem:[%s7048 + $0x2c] sm:$0x1]
        %v7077 = vsel %vm524, %v6795, %v7076
        %7078 = vst [vmem:[%s7048 + $0x2c] sm:$0x1] %v7077
        %v7079 = vld [vmem:[%s7048 + $0x30] sm:$0xf]
        %v7080 = vsel %vm7050, %v6802, %v7079
        %7081 = vst [vmem:[%s7048 + $0x30] sm:$0xf] %v7080
        %7082 = vst [vmem:[%s7048 + $0x34] sm:$0xf] %v6811
        %v7083 = vld [vmem:[%s7048 + $0x38] sm:$0x1]
        %v7084 = vsel %vm524, %v6812, %v7083
        %7085 = vst [vmem:[%s7048 + $0x38] sm:$0x1] %v7084
        %v7086 = vld [vmem:[%s7048 + $0x3c] sm:$0xf]
        %v7087 = vsel %vm7050, %v6819, %v7086
        %7088 = vst [vmem:[%s7048 + $0x3c] sm:$0xf] %v7087
        %7089 = vst [vmem:[%s7048 + $0x40] sm:$0xf] %v6828
        %v7090 = vld [vmem:[%s7048 + $0x44] sm:$0x1]
        %v7091 = vsel %vm524, %v6829, %v7090
        %7092 = vst [vmem:[%s7048 + $0x44] sm:$0x1] %v7091
        %v7093 = vld [vmem:[%s7048 + $0x48] sm:$0xf]
        %v7094 = vsel %vm7050, %v6836, %v7093
        %7095 = vst [vmem:[%s7048 + $0x48] sm:$0xf] %v7094
        %7096 = vst [vmem:[%s7048 + $0x4c] sm:$0xf] %v6845
        %v7097 = vld [vmem:[%s7048 + $0x50] sm:$0x1]
        %v7098 = vsel %vm524, %v6846, %v7097
        %7099 = vst [vmem:[%s7048 + $0x50] sm:$0x1] %v7098
        %v7100 = vld [vmem:[%s7048 + $0x54] sm:$0xf]
        %v7101 = vsel %vm7050, %v6853, %v7100
        %7102 = vst [vmem:[%s7048 + $0x54] sm:$0xf] %v7101
        %7103 = vst [vmem:[%s7048 + $0x58] sm:$0xf] %v6862
        %v7104 = vld [vmem:[%s7048 + $0x5c] sm:$0x1]
        %v7105 = vsel %vm524, %v6863, %v7104
        %7106 = vst [vmem:[%s7048 + $0x5c] sm:$0x1] %v7105
        %v7107 = vld [vmem:[%s7048 + $0x60] sm:$0xf]
        %v7108 = vsel %vm7050, %v6870, %v7107
        %7109 = vst [vmem:[%s7048 + $0x60] sm:$0xf] %v7108
        %7110 = vst [vmem:[%s7048 + $0x64] sm:$0xf] %v6879
        %v7111 = vld [vmem:[%s7048 + $0x68] sm:$0x1]
        %v7112 = vsel %vm524, %v6880, %v7111
        %7113 = vst [vmem:[%s7048 + $0x68] sm:$0x1] %v7112
        %v7114 = vld [vmem:[%s7048 + $0x6c] sm:$0xf]
        %v7115 = vsel %vm7050, %v6887, %v7114
        %7116 = vst [vmem:[%s7048 + $0x6c] sm:$0xf] %v7115
        %7117 = vst [vmem:[%s7048 + $0x70] sm:$0xf] %v6896
        %v7118 = vld [vmem:[%s7048 + $0x74] sm:$0x1]
        %v7119 = vsel %vm524, %v6897, %v7118
        %7120 = vst [vmem:[%s7048 + $0x74] sm:$0x1] %v7119
        %v7121 = vld [vmem:[%s7048 + $0x78] sm:$0xf]
        %v7122 = vsel %vm7050, %v6904, %v7121
        %7123 = vst [vmem:[%s7048 + $0x78] sm:$0xf] %v7122
        %7124 = vst [vmem:[%s7048 + $0x7c] sm:$0xf] %v6913
        %v7125 = vld [vmem:[%s7048 + $0x80] sm:$0x1]
        %v7126 = vsel %vm524, %v6914, %v7125
        %7127 = vst [vmem:[%s7048 + $0x80] sm:$0x1] %v7126
        %v7128 = vld [vmem:[%s7048 + $0x84] sm:$0xf]
        %v7129 = vsel %vm7050, %v6921, %v7128
        %7130 = vst [vmem:[%s7048 + $0x84] sm:$0xf] %v7129
        %7131 = vst [vmem:[%s7048 + $0x88] sm:$0xf] %v6930
        %v7132 = vld [vmem:[%s7048 + $0x8c] sm:$0x1]
        %v7133 = vsel %vm524, %v6931, %v7132
        %7134 = vst [vmem:[%s7048 + $0x8c] sm:$0x1] %v7133
        %v7135 = vld [vmem:[%s7048 + $0x90] sm:$0xf]
        %v7136 = vsel %vm7050, %v6938, %v7135
        %7137 = vst [vmem:[%s7048 + $0x90] sm:$0xf] %v7136
        %7138 = vst [vmem:[%s7048 + $0x94] sm:$0xf] %v6947
        %v7139 = vld [vmem:[%s7048 + $0x98] sm:$0x1]
        %v7140 = vsel %vm524, %v6948, %v7139
        %7141 = vst [vmem:[%s7048 + $0x98] sm:$0x1] %v7140
        %v7142 = vld [vmem:[%s7048 + $0x9c] sm:$0xf]
        %v7143 = vsel %vm7050, %v6955, %v7142
        %7144 = vst [vmem:[%s7048 + $0x9c] sm:$0xf] %v7143
        %7145 = vst [vmem:[%s7048 + $0xa0] sm:$0xf] %v6964
        %v7146 = vld [vmem:[%s7048 + $0xa4] sm:$0x1]
        %v7147 = vsel %vm524, %v6965, %v7146
        %7148 = vst [vmem:[%s7048 + $0xa4] sm:$0x1] %v7147
        %v7149 = vld [vmem:[%s7048 + $0xa8] sm:$0xf]
        %v7150 = vsel %vm7050, %v6972, %v7149
        %7151 = vst [vmem:[%s7048 + $0xa8] sm:$0xf] %v7150
        %7152 = vst [vmem:[%s7048 + $0xac] sm:$0xf] %v6981
        %v7153 = vld [vmem:[%s7048 + $0xb0] sm:$0x1]
        %v7154 = vsel %vm524, %v6982, %v7153
        %7155 = vst [vmem:[%s7048 + $0xb0] sm:$0x1] %v7154
        %v7156 = vld [vmem:[%s7048 + $0xb4] sm:$0xf]
        %v7157 = vsel %vm7050, %v6989, %v7156
        %7158 = vst [vmem:[%s7048 + $0xb4] sm:$0xf] %v7157
        %7159 = vst [vmem:[%s7048 + $0xb8] sm:$0xf] %v6998
        %v7160 = vld [vmem:[%s7048 + $0xbc] sm:$0x1]
        %v7161 = vsel %vm524, %v6999, %v7160
        %7162 = vst [vmem:[%s7048 + $0xbc] sm:$0x1] %v7161
        %v7163 = vld [vmem:[#allocation3] sm:$0xf]
        %v7164 = vld [vmem:[#allocation3 + $0x4] sm:$0xf]
        %v7165 = vld [vmem:[#allocation3 + $0xc] sm:$0xf]
        %v7166 = vld [vmem:[#allocation3 + $0x10] sm:$0xf]
        %v7167 = vld [vmem:[#allocation3 + $0x18] sm:$0xf]
        %v7168 = vld [vmem:[#allocation3 + $0x1c] sm:$0xf]
        %v7169 = vld [vmem:[#allocation3 + $0x24] sm:$0xf]
        %v7170 = vld [vmem:[#allocation3 + $0x28] sm:$0xf]
        %v7171 = vld [vmem:[#allocation3 + $0x30] sm:$0xf]
        %v7172 = vld [vmem:[#allocation3 + $0x34] sm:$0xf]
        %v7173 = vld [vmem:[#allocation3 + $0x3c] sm:$0xf]
        %v7174 = vld [vmem:[#allocation3 + $0x40] sm:$0xf]
        %v7175 = vld [vmem:[#allocation3 + $0x48] sm:$0xf]
        %v7176 = vld [vmem:[#allocation3 + $0x4c] sm:$0xf]
        %v7177 = vld [vmem:[#allocation3 + $0x54] sm:$0xf]
        %v7178 = vld [vmem:[#allocation3 + $0x58] sm:$0xf]
        %v7179 = vld [vmem:[#allocation3 + $0x60] sm:$0xf]
        %v7180 = vld [vmem:[#allocation3 + $0x64] sm:$0xf]
        %v7181 = vld [vmem:[#allocation3 + $0x6c] sm:$0xf]
        %v7182 = vld [vmem:[#allocation3 + $0x70] sm:$0xf]
        %v7183 = vld [vmem:[#allocation3 + $0x78] sm:$0xf]
        %v7184 = vld [vmem:[#allocation3 + $0x7c] sm:$0xf]
        %v7185 = vld [vmem:[#allocation3 + $0x84] sm:$0xf]
        %v7186 = vld [vmem:[#allocation3 + $0x88] sm:$0xf]
        %v7187 = vld [vmem:[#allocation3 + $0x90] sm:$0xf]
        %v7188 = vld [vmem:[#allocation3 + $0x94] sm:$0xf]
        %v7189 = vld [vmem:[#allocation3 + $0x9c] sm:$0xf]
        %v7190 = vld [vmem:[#allocation3 + $0xa0] sm:$0xf]
        %v7191 = vld [vmem:[#allocation3 + $0xa8] sm:$0xf]
        %v7192 = vld [vmem:[#allocation3 + $0xac] sm:$0xf]
        %v7193 = vld [vmem:[#allocation3 + $0xb4] sm:$0xf]
        %v7194 = vld [vmem:[#allocation3 + $0xb8] sm:$0xf]
        %v7195 = vld [vmem:[#allocation5] sm:$0xf]
        %v7196 = vld [vmem:[#allocation5 + $0x4] sm:$0xf]
        %v7197 = vld [vmem:[#allocation5 + $0x8] sm:$0xf]
        %v7198 = vld [vmem:[#allocation5 + $0xc] sm:$0xf]
        %v7199 = vld [vmem:[#allocation5 + $0x10] sm:$0xf]
        %v7200 = vld [vmem:[#allocation5 + $0x14] sm:$0xf]
        %v7201 = vld [vmem:[#allocation5 + $0x18] sm:$0xf]
        %v7202 = vld [vmem:[#allocation5 + $0x1c] sm:$0xf]
        %v7203 = vld [vmem:[#allocation5 + $0x20] sm:$0xf]
        %v7204 = vld [vmem:[#allocation5 + $0x24] sm:$0xf]
        %v7205 = vld [vmem:[#allocation5 + $0x28] sm:$0xf]
        %v7206 = vld [vmem:[#allocation5 + $0x2c] sm:$0xf]
        %v7207 = vld [vmem:[#allocation5 + $0x30] sm:$0xf]
        %v7208 = vld [vmem:[#allocation5 + $0x34] sm:$0xf]
        %v7209 = vld [vmem:[#allocation5 + $0x38] sm:$0xf]
        %v7210 = vld [vmem:[#allocation5 + $0x3c] sm:$0xf]
        %v7211 = vld [vmem:[#allocation3 + $0x8] sm:$0x1]
        %v7212 = vld [vmem:[#allocation3 + $0x14] sm:$0x1]
        %v7213 = vld [vmem:[#allocation3 + $0x20] sm:$0x1]
        %v7214 = vld [vmem:[#allocation3 + $0x2c] sm:$0x1]
        %v7215 = vld [vmem:[#allocation3 + $0x38] sm:$0x1]
        %v7216 = vld [vmem:[#allocation3 + $0x44] sm:$0x1]
        %v7217 = vld [vmem:[#allocation3 + $0x50] sm:$0x1]
        %v7218 = vld [vmem:[#allocation3 + $0x5c] sm:$0x1]
        %v7219 = vld [vmem:[#allocation3 + $0x68] sm:$0x1]
        %v7220 = vld [vmem:[#allocation3 + $0x74] sm:$0x1]
        %v7221 = vld [vmem:[#allocation3 + $0x80] sm:$0x1]
        %v7222 = vld [vmem:[#allocation3 + $0x8c] sm:$0x1]
        %v7223 = vld [vmem:[#allocation3 + $0x98] sm:$0x1]
        %v7224 = vld [vmem:[#allocation3 + $0xa4] sm:$0x1]
        %v7225 = vld [vmem:[#allocation3 + $0xb0] sm:$0x1]
        %v7226 = vld [vmem:[#allocation3 + $0xbc] sm:$0x1]
        %v7228 = vshrl.u32 %v7163, 16
        %v7230 = vrot.slane %v7228, 4
        %v7231 = vshll.u32 %v7163, 16
        %v7233 = vrot.slane %v7231, 5
        %v7234 = vor.u32 %v7230, %v7233
        %v7235 = vrot.slane %v7234, 4
        %v7237 = vshll.u32 %v7164, 16
        %v7239 = vrot.slane %v7237, 5
        %v7240 = vsel %vm3099, %v7235, %v7239
        %v7241 = vshrl.u32 %v7164, 16
        %v7243 = vrot.slane %v7241, 4
        %v7244 = vor.u32 %v7243, %v7239
        %v7245 = vrot.slane %v7244, 4
        %v7247 = vshll.u32 %v7211, 16
        %v7249 = vrot.slane %v7247, 5
        %v7250 = vsel %vm3099, %v7245, %v7249
        %v7252 = vshrl.u32 %v7165, 16
        %v7254 = vrot.slane %v7252, 4
        %v7255 = vshll.u32 %v7165, 16
        %v7257 = vrot.slane %v7255, 5
        %v7258 = vor.u32 %v7254, %v7257
        %v7259 = vrot.slane %v7258, 4
        %v7261 = vshll.u32 %v7166, 16
        %v7263 = vrot.slane %v7261, 5
        %v7264 = vsel %vm3099, %v7259, %v7263
        %v7265 = vshrl.u32 %v7166, 16
        %v7267 = vrot.slane %v7265, 4
        %v7268 = vor.u32 %v7267, %v7263
        %v7269 = vrot.slane %v7268, 4
        %v7271 = vshll.u32 %v7212, 16
        %v7273 = vrot.slane %v7271, 5
        %v7274 = vsel %vm3099, %v7269, %v7273
        %v7276 = vshrl.u32 %v7167, 16
        %v7278 = vrot.slane %v7276, 4
        %v7279 = vshll.u32 %v7167, 16
        %v7281 = vrot.slane %v7279, 5
        %v7282 = vor.u32 %v7278, %v7281
        %v7283 = vrot.slane %v7282, 4
        %v7285 = vshll.u32 %v7168, 16
        %v7287 = vrot.slane %v7285, 5
        %v7288 = vsel %vm3099, %v7283, %v7287
        %v7289 = vshrl.u32 %v7168, 16
        %v7291 = vrot.slane %v7289, 4
        %v7292 = vor.u32 %v7291, %v7287
        %v7293 = vrot.slane %v7292, 4
        %v7295 = vshll.u32 %v7213, 16
        %v7297 = vrot.slane %v7295, 5
        %v7298 = vsel %vm3099, %v7293, %v7297
        %v7300 = vshrl.u32 %v7169, 16
        %v7302 = vrot.slane %v7300, 4
        %v7303 = vshll.u32 %v7169, 16
        %v7305 = vrot.slane %v7303, 5
        %v7306 = vor.u32 %v7302, %v7305
        %v7307 = vrot.slane %v7306, 4
        %v7309 = vshll.u32 %v7170, 16
        %v7311 = vrot.slane %v7309, 5
        %v7312 = vsel %vm3099, %v7307, %v7311
        %v7313 = vshrl.u32 %v7170, 16
        %v7315 = vrot.slane %v7313, 4
        %v7316 = vor.u32 %v7315, %v7311
        %v7317 = vrot.slane %v7316, 4
        %v7319 = vshll.u32 %v7214, 16
        %v7321 = vrot.slane %v7319, 5
        %v7322 = vsel %vm3099, %v7317, %v7321
        %v7324 = vshrl.u32 %v7171, 16
        %v7326 = vrot.slane %v7324, 4
        %v7327 = vshll.u32 %v7171, 16
        %v7329 = vrot.slane %v7327, 5
        %v7330 = vor.u32 %v7326, %v7329
        %v7331 = vrot.slane %v7330, 4
        %v7333 = vshll.u32 %v7172, 16
        %v7335 = vrot.slane %v7333, 5
        %v7336 = vsel %vm3099, %v7331, %v7335
        %v7337 = vshrl.u32 %v7172, 16
        %v7339 = vrot.slane %v7337, 4
        %v7340 = vor.u32 %v7339, %v7335
        %v7341 = vrot.slane %v7340, 4
        %v7343 = vshll.u32 %v7215, 16
        %v7345 = vrot.slane %v7343, 5
        %v7346 = vsel %vm3099, %v7341, %v7345
        %v7348 = vshrl.u32 %v7173, 16
        %v7350 = vrot.slane %v7348, 4
        %v7351 = vshll.u32 %v7173, 16
        %v7353 = vrot.slane %v7351, 5
        %v7354 = vor.u32 %v7350, %v7353
        %v7355 = vrot.slane %v7354, 4
        %v7357 = vshll.u32 %v7174, 16
        %v7359 = vrot.slane %v7357, 5
        %v7360 = vsel %vm3099, %v7355, %v7359
        %v7361 = vshrl.u32 %v7174, 16
        %v7363 = vrot.slane %v7361, 4
        %v7364 = vor.u32 %v7363, %v7359
        %v7365 = vrot.slane %v7364, 4
        %v7367 = vshll.u32 %v7216, 16
        %v7369 = vrot.slane %v7367, 5
        %v7370 = vsel %vm3099, %v7365, %v7369
        %v7372 = vshrl.u32 %v7175, 16
        %v7374 = vrot.slane %v7372, 4
        %v7375 = vshll.u32 %v7175, 16
        %v7377 = vrot.slane %v7375, 5
        %v7378 = vor.u32 %v7374, %v7377
        %v7379 = vrot.slane %v7378, 4
        %v7381 = vshll.u32 %v7176, 16
        %v7383 = vrot.slane %v7381, 5
        %v7384 = vsel %vm3099, %v7379, %v7383
        %v7385 = vshrl.u32 %v7176, 16
        %v7387 = vrot.slane %v7385, 4
        %v7388 = vor.u32 %v7387, %v7383
        %v7389 = vrot.slane %v7388, 4
        %v7391 = vshll.u32 %v7217, 16
        %v7393 = vrot.slane %v7391, 5
        %v7394 = vsel %vm3099, %v7389, %v7393
        %v7396 = vshrl.u32 %v7177, 16
        %v7398 = vrot.slane %v7396, 4
        %v7399 = vshll.u32 %v7177, 16
        %v7401 = vrot.slane %v7399, 5
        %v7402 = vor.u32 %v7398, %v7401
        %v7403 = vrot.slane %v7402, 4
        %v7405 = vshll.u32 %v7178, 16
        %v7407 = vrot.slane %v7405, 5
        %v7408 = vsel %vm3099, %v7403, %v7407
        %v7409 = vshrl.u32 %v7178, 16
        %v7411 = vrot.slane %v7409, 4
        %v7412 = vor.u32 %v7411, %v7407
        %v7413 = vrot.slane %v7412, 4
        %v7415 = vshll.u32 %v7218, 16
        %v7417 = vrot.slane %v7415, 5
        %v7418 = vsel %vm3099, %v7413, %v7417
        %v7420 = vshrl.u32 %v7179, 16
        %v7422 = vrot.slane %v7420, 4
        %v7423 = vshll.u32 %v7179, 16
        %v7425 = vrot.slane %v7423, 5
        %v7426 = vor.u32 %v7422, %v7425
        %v7427 = vrot.slane %v7426, 4
        %v7429 = vshll.u32 %v7180, 16
        %v7431 = vrot.slane %v7429, 5
        %v7432 = vsel %vm3099, %v7427, %v7431
        %v7433 = vshrl.u32 %v7180, 16
        %v7435 = vrot.slane %v7433, 4
        %v7436 = vor.u32 %v7435, %v7431
        %v7437 = vrot.slane %v7436, 4
        %v7439 = vshll.u32 %v7219, 16
        %v7441 = vrot.slane %v7439, 5
        %v7442 = vsel %vm3099, %v7437, %v7441
        %v7444 = vshrl.u32 %v7181, 16
        %v7446 = vrot.slane %v7444, 4
        %v7447 = vshll.u32 %v7181, 16
        %v7449 = vrot.slane %v7447, 5
        %v7450 = vor.u32 %v7446, %v7449
        %v7451 = vrot.slane %v7450, 4
        %v7453 = vshll.u32 %v7182, 16
        %v7455 = vrot.slane %v7453, 5
        %v7456 = vsel %vm3099, %v7451, %v7455
        %v7457 = vshrl.u32 %v7182, 16
        %v7459 = vrot.slane %v7457, 4
        %v7460 = vor.u32 %v7459, %v7455
        %v7461 = vrot.slane %v7460, 4
        %v7463 = vshll.u32 %v7220, 16
        %v7465 = vrot.slane %v7463, 5
        %v7466 = vsel %vm3099, %v7461, %v7465
        %v7468 = vshrl.u32 %v7183, 16
        %v7470 = vrot.slane %v7468, 4
        %v7471 = vshll.u32 %v7183, 16
        %v7473 = vrot.slane %v7471, 5
        %v7474 = vor.u32 %v7470, %v7473
        %v7475 = vrot.slane %v7474, 4
        %v7477 = vshll.u32 %v7184, 16
        %v7479 = vrot.slane %v7477, 5
        %v7480 = vsel %vm3099, %v7475, %v7479
        %v7481 = vshrl.u32 %v7184, 16
        %v7483 = vrot.slane %v7481, 4
        %v7484 = vor.u32 %v7483, %v7479
        %v7485 = vrot.slane %v7484, 4
        %v7487 = vshll.u32 %v7221, 16
        %v7489 = vrot.slane %v7487, 5
        %v7490 = vsel %vm3099, %v7485, %v7489
        %v7492 = vshrl.u32 %v7185, 16
        %v7494 = vrot.slane %v7492, 4
        %v7495 = vshll.u32 %v7185, 16
        %v7497 = vrot.slane %v7495, 5
        %v7498 = vor.u32 %v7494, %v7497
        %v7499 = vrot.slane %v7498, 4
        %v7501 = vshll.u32 %v7186, 16
        %v7503 = vrot.slane %v7501, 5
        %v7504 = vsel %vm3099, %v7499, %v7503
        %v7505 = vshrl.u32 %v7186, 16
        %v7507 = vrot.slane %v7505, 4
        %v7508 = vor.u32 %v7507, %v7503
        %v7509 = vrot.slane %v7508, 4
        %v7511 = vshll.u32 %v7222, 16
        %v7513 = vrot.slane %v7511, 5
        %v7514 = vsel %vm3099, %v7509, %v7513
        %v7516 = vshrl.u32 %v7187, 16
        %v7518 = vrot.slane %v7516, 4
        %v7519 = vshll.u32 %v7187, 16
        %v7521 = vrot.slane %v7519, 5
        %v7522 = vor.u32 %v7518, %v7521
        %v7523 = vrot.slane %v7522, 4
        %v7525 = vshll.u32 %v7188, 16
        %v7527 = vrot.slane %v7525, 5
        %v7528 = vsel %vm3099, %v7523, %v7527
        %v7529 = vshrl.u32 %v7188, 16
        %v7531 = vrot.slane %v7529, 4
        %v7532 = vor.u32 %v7531, %v7527
        %v7533 = vrot.slane %v7532, 4
        %v7535 = vshll.u32 %v7223, 16
        %v7537 = vrot.slane %v7535, 5
        %v7538 = vsel %vm3099, %v7533, %v7537
        %v7540 = vshrl.u32 %v7189, 16
        %v7542 = vrot.slane %v7540, 4
        %v7543 = vshll.u32 %v7189, 16
        %v7545 = vrot.slane %v7543, 5
        %v7546 = vor.u32 %v7542, %v7545
        %v7547 = vrot.slane %v7546, 4
        %v7549 = vshll.u32 %v7190, 16
        %v7551 = vrot.slane %v7549, 5
        %v7552 = vsel %vm3099, %v7547, %v7551
        %v7553 = vshrl.u32 %v7190, 16
        %v7555 = vrot.slane %v7553, 4
        %v7556 = vor.u32 %v7555, %v7551
        %v7557 = vrot.slane %v7556, 4
        %v7559 = vshll.u32 %v7224, 16
        %v7561 = vrot.slane %v7559, 5
        %v7562 = vsel %vm3099, %v7557, %v7561
        %v7564 = vshrl.u32 %v7191, 16
        %v7566 = vrot.slane %v7564, 4
        %v7567 = vshll.u32 %v7191, 16
        %v7569 = vrot.slane %v7567, 5
        %v7570 = vor.u32 %v7566, %v7569
        %v7571 = vrot.slane %v7570, 4
        %v7573 = vshll.u32 %v7192, 16
        %v7575 = vrot.slane %v7573, 5
        %v7576 = vsel %vm3099, %v7571, %v7575
        %v7577 = vshrl.u32 %v7192, 16
        %v7579 = vrot.slane %v7577, 4
        %v7580 = vor.u32 %v7579, %v7575
        %v7581 = vrot.slane %v7580, 4
        %v7583 = vshll.u32 %v7225, 16
        %v7585 = vrot.slane %v7583, 5
        %v7586 = vsel %vm3099, %v7581, %v7585
        %v7588 = vshrl.u32 %v7193, 16
        %v7590 = vrot.slane %v7588, 4
        %v7591 = vshll.u32 %v7193, 16
        %v7593 = vrot.slane %v7591, 5
        %v7594 = vor.u32 %v7590, %v7593
        %v7595 = vrot.slane %v7594, 4
        %v7597 = vshll.u32 %v7194, 16
        %v7599 = vrot.slane %v7597, 5
        %v7600 = vsel %vm3099, %v7595, %v7599
        %v7601 = vshrl.u32 %v7194, 16
        %v7603 = vrot.slane %v7601, 4
        %v7604 = vor.u32 %v7603, %v7599
        %v7605 = vrot.slane %v7604, 4
        %v7607 = vshll.u32 %v7226, 16
        %v7609 = vrot.slane %v7607, 5
        %v7610 = vsel %vm3099, %v7605, %v7609
        %v7611 = vld [vmem:[#allocation5 + $0x40] sm:$0xf]
        %v7612 = vld [vmem:[#allocation5 + $0x44] sm:$0xf]
        %v7613 = vld [vmem:[#allocation5 + $0x48] sm:$0xf]
        %v7614 = vld [vmem:[#allocation5 + $0x4c] sm:$0xf]
        %v7615 = vld [vmem:[#allocation5 + $0x50] sm:$0xf]
        %v7616 = vld [vmem:[#allocation5 + $0x54] sm:$0xf]
        %v7617 = vld [vmem:[#allocation5 + $0x58] sm:$0xf]
        %v7618 = vld [vmem:[#allocation5 + $0x5c] sm:$0xf]
        %v7619 = vld [vmem:[#allocation5 + $0x60] sm:$0xf]
        %v7620 = vld [vmem:[#allocation5 + $0x64] sm:$0xf]
        %v7621 = vld [vmem:[#allocation5 + $0x68] sm:$0xf]
        %v7622 = vld [vmem:[#allocation5 + $0x6c] sm:$0xf]
        %v7623 = vld [vmem:[#allocation5 + $0x70] sm:$0xf]
        %v7624 = vld [vmem:[#allocation5 + $0x74] sm:$0xf]
        %v7625 = vld [vmem:[#allocation5 + $0x78] sm:$0xf]
        %v7626 = vld [vmem:[#allocation5 + $0x7c] sm:$0xf]
        %v7627 = vunpack.c.l.b16 %v7240
        %v7628 = vunpack.c.l.b16 %v7250
        %v7629 = vunpack.c.l.b16 %v7264
        %v7630 = vunpack.c.l.b16 %v7274
        %v7631 = vunpack.c.l.b16 %v7288
        %v7632 = vunpack.c.l.b16 %v7298
        %v7633 = vunpack.c.l.b16 %v7312
        %v7634 = vunpack.c.l.b16 %v7322
        %v7635 = vunpack.c.l.b16 %v7336
        %v7636 = vunpack.c.l.b16 %v7346
        %v7637 = vunpack.c.l.b16 %v7360
        %v7638 = vunpack.c.l.b16 %v7370
        %v7639 = vunpack.c.l.b16 %v7384
        %v7640 = vunpack.c.l.b16 %v7394
        %v7641 = vunpack.c.l.b16 %v7408
        %v7642 = vunpack.c.l.b16 %v7418
        %v7643 = vunpack.c.l.b16 %v7432
        %v7644 = vunpack.c.l.b16 %v7442
        %v7645 = vunpack.c.l.b16 %v7456
        %v7646 = vunpack.c.l.b16 %v7466
        %v7647 = vunpack.c.l.b16 %v7480
        %v7648 = vunpack.c.l.b16 %v7490
        %v7649 = vunpack.c.l.b16 %v7504
        %v7650 = vunpack.c.l.b16 %v7514
        %v7651 = vunpack.c.l.b16 %v7528
        %v7652 = vunpack.c.l.b16 %v7538
        %v7653 = vunpack.c.l.b16 %v7552
        %v7654 = vunpack.c.l.b16 %v7562
        %v7655 = vunpack.c.l.b16 %v7576
        %v7656 = vunpack.c.l.b16 %v7586
        %v7657 = vunpack.c.l.b16 %v7600
        %v7658 = vunpack.c.l.b16 %v7610
        %v7659 = vpack.c.b16 %v7628, %v7627
        %v7660 = vpack.c.b16 %v7630, %v7629
        %v7661 = vpack.c.b16 %v7632, %v7631
        %v7662 = vpack.c.b16 %v7634, %v7633
        %v7663 = vpack.c.b16 %v7636, %v7635
        %v7664 = vpack.c.b16 %v7638, %v7637
        %v7665 = vpack.c.b16 %v7640, %v7639
        %v7666 = vpack.c.b16 %v7642, %v7641
        %v7667 = vpack.c.b16 %v7644, %v7643
        %v7668 = vpack.c.b16 %v7646, %v7645
        %v7669 = vpack.c.b16 %v7648, %v7647
        %v7670 = vpack.c.b16 %v7650, %v7649
        %v7671 = vpack.c.b16 %v7652, %v7651
        %v7672 = vpack.c.b16 %v7654, %v7653
        %v7673 = vpack.c.b16 %v7656, %v7655
        %v7674 = vpack.c.b16 %v7658, %v7657
        %v7707 = vunpack.c.l.b16 %v7611
        %v7708 = vunpack.c.l.b16 %v7612
        %v7709 = vunpack.c.l.b16 %v7613
        %v7710 = vunpack.c.l.b16 %v7614
        %v7711 = vunpack.c.l.b16 %v7615
        %v7712 = vunpack.c.l.b16 %v7616
        %v7713 = vunpack.c.l.b16 %v7617
        %v7714 = vunpack.c.l.b16 %v7618
        %v7715 = vunpack.c.l.b16 %v7619
        %v7716 = vunpack.c.l.b16 %v7620
        %v7717 = vunpack.c.l.b16 %v7621
        %v7718 = vunpack.c.l.b16 %v7622
        %v7719 = vunpack.c.l.b16 %v7623
        %v7720 = vunpack.c.l.b16 %v7624
        %v7721 = vunpack.c.l.b16 %v7625
        %v7722 = vunpack.c.l.b16 %v7626
        %v7723 = vpack.c.b16 %v7708, %v7707
        %v7724 = vpack.c.b16 %v7710, %v7709
        %v7725 = vpack.c.b16 %v7712, %v7711
        %v7726 = vpack.c.b16 %v7714, %v7713
        %v7727 = vpack.c.b16 %v7716, %v7715
        %v7728 = vpack.c.b16 %v7718, %v7717
        %v7729 = vpack.c.b16 %v7720, %v7719
        %v7730 = vpack.c.b16 %v7722, %v7721
        %7739 = vmatprep.subr.bf16.mxu0 0
        %7740 = vmatpush1.bf16.msra.mxu0 %v7730
        %7741 = vmatprep.subr.bf16.mxu0 0
        %7742 = vmatpush1.bf16.msra.mxu0 %v7729
        %7743 = vmatprep.subr.bf16.mxu0 0
        %7744 = vmatpush1.bf16.msra.mxu0 %v7728
        %7745 = vmatprep.subr.bf16.mxu0 0
        %7746 = vmatpush1.bf16.msra.mxu0 %v7727
        %7747 = vmatprep.subr.bf16.mxu0 0
        %7748 = vmatpush1.bf16.msra.mxu0 %v7726
        %7749 = vmatprep.subr.bf16.mxu0 0
        %7750 = vmatpush1.bf16.msra.mxu0 %v7725
        %7751 = vmatprep.subr.bf16.mxu0 0
        %7752 = vmatpush1.bf16.msra.mxu0 %v7724
        %7753 = vmatprep.subr.bf16.mxu0 0
        %7754 = vmatpush1.bf16.msra.mxu0 %v7723
        %7755 = vmatprep.subr.bf16.mxu0 0
        %7756 = vmatpush2.bf16.msra.mxu0 0
        %7757 = vmatprep.subr.bf16.mxu0 0
        %7758 = vmatpush2.bf16.msra.mxu0 0
        %7759 = vmatprep.subr.bf16.mxu0 0
        %7760 = vmatpush2.bf16.msra.mxu0 0
        %7761 = vmatprep.subr.bf16.mxu0 0
        %7762 = vmatpush2.bf16.msra.mxu0 0
        %7763 = vmatprep.subr.bf16.mxu0 0
        %7764 = vmatpush2.bf16.msra.mxu0 0
        %7765 = vmatprep.subr.bf16.mxu0 0
        %7766 = vmatpush2.bf16.msra.mxu0 0
        %7767 = vmatprep.subr.bf16.mxu0 0
        %7768 = vmatpush2.bf16.msra.mxu0 0
        %7769 = vmatprep.subr.bf16.mxu0 0
        %7770 = vmatpush2.bf16.msra.mxu0 0
        %7771 = vmatprep.mubr.bf16.mxu0 0
        %7772 = vmatmul.mubr.bf16.gmra.mxu0 %v7659
        %v7773 = vpop.f32.mrf.mxu0
        %v7774 = vadd.f32 0.0, %v7773
        %v7775 = vpop.f32.mrf.mxu0
        %v7776 = vpop.f32.mrf.mxu0
        %v7777 = vadd.f32 0.0, %v7776
        %v7778 = vpop.f32.mrf.mxu0
        %7779 = vmatprep.mubr.bf16.mxu0 0
        %7780 = vmatmul.mubr.bf16.gmra.mxu0 %v7660
        %v7781 = vpop.f32.mrf.mxu0
        %v7782 = vadd.f32 0.0, %v7781
        %v7783 = vpop.f32.mrf.mxu0
        %v7784 = vpop.f32.mrf.mxu0
        %v7785 = vadd.f32 0.0, %v7784
        %v7786 = vpop.f32.mrf.mxu0
        %7787 = vmatprep.mubr.bf16.mxu0 0
        %7788 = vmatmul.mubr.bf16.gmra.mxu0 %v7661
        %v7789 = vpop.f32.mrf.mxu0
        %v7790 = vadd.f32 0.0, %v7789
        %v7791 = vpop.f32.mrf.mxu0
        %v7792 = vpop.f32.mrf.mxu0
        %v7793 = vadd.f32 0.0, %v7792
        %v7794 = vpop.f32.mrf.mxu0
        %7795 = vmatprep.mubr.bf16.mxu0 0
        %7796 = vmatmul.mubr.bf16.gmra.mxu0 %v7662
        %v7797 = vpop.f32.mrf.mxu0
        %v7798 = vadd.f32 0.0, %v7797
        %v7799 = vpop.f32.mrf.mxu0
        %v7800 = vpop.f32.mrf.mxu0
        %v7801 = vadd.f32 0.0, %v7800
        %v7802 = vpop.f32.mrf.mxu0
        %7803 = vmatprep.mubr.bf16.mxu0 0
        %7804 = vmatmul.mubr.bf16.gmra.mxu0 %v7663
        %v7805 = vpop.f32.mrf.mxu0
        %v7806 = vadd.f32 0.0, %v7805
        %v7807 = vpop.f32.mrf.mxu0
        %v7808 = vpop.f32.mrf.mxu0
        %v7809 = vadd.f32 0.0, %v7808
        %v7810 = vpop.f32.mrf.mxu0
        %7811 = vmatprep.mubr.bf16.mxu0 0
        %7812 = vmatmul.mubr.bf16.gmra.mxu0 %v7664
        %v7813 = vpop.f32.mrf.mxu0
        %v7814 = vadd.f32 0.0, %v7813
        %v7815 = vpop.f32.mrf.mxu0
        %v7816 = vpop.f32.mrf.mxu0
        %v7817 = vadd.f32 0.0, %v7816
        %v7818 = vpop.f32.mrf.mxu0
        %7819 = vmatprep.mubr.bf16.mxu0 0
        %7820 = vmatmul.mubr.bf16.gmra.mxu0 %v7665
        %v7821 = vpop.f32.mrf.mxu0
        %v7822 = vadd.f32 0.0, %v7821
        %v7823 = vpop.f32.mrf.mxu0
        %v7824 = vpop.f32.mrf.mxu0
        %v7825 = vadd.f32 0.0, %v7824
        %v7826 = vpop.f32.mrf.mxu0
        %7827 = vmatprep.mubr.bf16.mxu0 0
        %7828 = vmatmul.mubr.bf16.gmra.mxu0 %v7666
        %v7829 = vpop.f32.mrf.mxu0
        %v7830 = vadd.f32 0.0, %v7829
        %v7831 = vpop.f32.mrf.mxu0
        %v7832 = vpop.f32.mrf.mxu0
        %v7833 = vadd.f32 0.0, %v7832
        %v7834 = vpop.f32.mrf.mxu0
        %7835 = vmatprep.mubr.bf16.mxu0 0
        %7836 = vmatmul.mubr.bf16.gmra.mxu0 %v7667
        %v7837 = vpop.f32.mrf.mxu0
        %v7838 = vadd.f32 0.0, %v7837
        %v7839 = vpop.f32.mrf.mxu0
        %v7840 = vpop.f32.mrf.mxu0
        %v7841 = vadd.f32 0.0, %v7840
        %v7842 = vpop.f32.mrf.mxu0
        %7843 = vmatprep.mubr.bf16.mxu0 0
        %7844 = vmatmul.mubr.bf16.gmra.mxu0 %v7668
        %v7845 = vpop.f32.mrf.mxu0
        %v7846 = vadd.f32 0.0, %v7845
        %v7847 = vpop.f32.mrf.mxu0
        %v7848 = vpop.f32.mrf.mxu0
        %v7849 = vadd.f32 0.0, %v7848
        %v7850 = vpop.f32.mrf.mxu0
        %7851 = vmatprep.mubr.bf16.mxu0 0
        %7852 = vmatmul.mubr.bf16.gmra.mxu0 %v7669
        %v7853 = vpop.f32.mrf.mxu0
        %v7854 = vadd.f32 0.0, %v7853
        %v7855 = vpop.f32.mrf.mxu0
        %v7856 = vpop.f32.mrf.mxu0
        %v7857 = vadd.f32 0.0, %v7856
        %v7858 = vpop.f32.mrf.mxu0
        %7859 = vmatprep.mubr.bf16.mxu0 0
        %7860 = vmatmul.mubr.bf16.gmra.mxu0 %v7670
        %v7861 = vpop.f32.mrf.mxu0
        %v7862 = vadd.f32 0.0, %v7861
        %v7863 = vpop.f32.mrf.mxu0
        %v7864 = vpop.f32.mrf.mxu0
        %v7865 = vadd.f32 0.0, %v7864
        %v7866 = vpop.f32.mrf.mxu0
        %7867 = vmatprep.mubr.bf16.mxu0 0
        %7868 = vmatmul.mubr.bf16.gmra.mxu0 %v7671
        %v7869 = vpop.f32.mrf.mxu0
        %v7870 = vadd.f32 0.0, %v7869
        %v7871 = vpop.f32.mrf.mxu0
        %v7872 = vpop.f32.mrf.mxu0
        %v7873 = vadd.f32 0.0, %v7872
        %v7874 = vpop.f32.mrf.mxu0
        %7875 = vmatprep.mubr.bf16.mxu0 0
        %7876 = vmatmul.mubr.bf16.gmra.mxu0 %v7672
        %v7877 = vpop.f32.mrf.mxu0
        %v7878 = vadd.f32 0.0, %v7877
        %v7879 = vpop.f32.mrf.mxu0
        %v7880 = vpop.f32.mrf.mxu0
        %v7881 = vadd.f32 0.0, %v7880
        %v7882 = vpop.f32.mrf.mxu0
        %7883 = vmatprep.mubr.bf16.mxu0 0
        %7884 = vmatmul.mubr.bf16.gmra.mxu0 %v7673
        %v7885 = vpop.f32.mrf.mxu0
        %v7886 = vadd.f32 0.0, %v7885
        %v7887 = vpop.f32.mrf.mxu0
        %v7888 = vpop.f32.mrf.mxu0
        %v7889 = vadd.f32 0.0, %v7888
        %v7890 = vpop.f32.mrf.mxu0
        %7891 = vmatprep.mubr.bf16.mxu0 0
        %7892 = vmatmul.mubr.bf16.gmra.mxu0 %v7674
        %v7893 = vpop.f32.mrf.mxu0
        %v7894 = vadd.f32 0.0, %v7893
        %v7895 = vpop.f32.mrf.mxu0
        %v7896 = vpop.f32.mrf.mxu0
        %v7897 = vadd.f32 0.0, %v7896
        %v7898 = vpop.f32.mrf.mxu0
        %7899 = vdwg.mxu0
        %v7932 = vunpack.c.l.b16 %v7163
        %v7933 = vunpack.c.l.b16 %v7164
        %v7934 = vunpack.c.l.b16 %v7165
        %v7935 = vunpack.c.l.b16 %v7166
        %v7936 = vunpack.c.l.b16 %v7167
        %v7937 = vunpack.c.l.b16 %v7168
        %v7938 = vunpack.c.l.b16 %v7169
        %v7939 = vunpack.c.l.b16 %v7170
        %v7940 = vunpack.c.l.b16 %v7171
        %v7941 = vunpack.c.l.b16 %v7172
        %v7942 = vunpack.c.l.b16 %v7173
        %v7943 = vunpack.c.l.b16 %v7174
        %v7944 = vunpack.c.l.b16 %v7175
        %v7945 = vunpack.c.l.b16 %v7176
        %v7946 = vunpack.c.l.b16 %v7177
        %v7947 = vunpack.c.l.b16 %v7178
        %v7948 = vunpack.c.l.b16 %v7179
        %v7949 = vunpack.c.l.b16 %v7180
        %v7950 = vunpack.c.l.b16 %v7181
        %v7951 = vunpack.c.l.b16 %v7182
        %v7952 = vunpack.c.l.b16 %v7183
        %v7953 = vunpack.c.l.b16 %v7184
        %v7954 = vunpack.c.l.b16 %v7185
        %v7955 = vunpack.c.l.b16 %v7186
        %v7956 = vunpack.c.l.b16 %v7187
        %v7957 = vunpack.c.l.b16 %v7188
        %v7958 = vunpack.c.l.b16 %v7189
        %v7959 = vunpack.c.l.b16 %v7190
        %v7960 = vunpack.c.l.b16 %v7191
        %v7961 = vunpack.c.l.b16 %v7192
        %v7962 = vunpack.c.l.b16 %v7193
        %v7963 = vunpack.c.l.b16 %v7194
        %v7964 = vpack.c.b16 %v7933, %v7932
        %v7965 = vpack.c.b16 %v7935, %v7934
        %v7966 = vpack.c.b16 %v7937, %v7936
        %v7967 = vpack.c.b16 %v7939, %v7938
        %v7968 = vpack.c.b16 %v7941, %v7940
        %v7969 = vpack.c.b16 %v7943, %v7942
        %v7970 = vpack.c.b16 %v7945, %v7944
        %v7971 = vpack.c.b16 %v7947, %v7946
        %v7972 = vpack.c.b16 %v7949, %v7948
        %v7973 = vpack.c.b16 %v7951, %v7950
        %v7974 = vpack.c.b16 %v7953, %v7952
        %v7975 = vpack.c.b16 %v7955, %v7954
        %v7976 = vpack.c.b16 %v7957, %v7956
        %v7977 = vpack.c.b16 %v7959, %v7958
        %v7978 = vpack.c.b16 %v7961, %v7960
        %v7979 = vpack.c.b16 %v7963, %v7962
        %v8012 = vunpack.c.l.b16 %v7195
        %v8013 = vunpack.c.l.b16 %v7196
        %v8014 = vunpack.c.l.b16 %v7197
        %v8015 = vunpack.c.l.b16 %v7198
        %v8016 = vunpack.c.l.b16 %v7199
        %v8017 = vunpack.c.l.b16 %v7200
        %v8018 = vunpack.c.l.b16 %v7201
        %v8019 = vunpack.c.l.b16 %v7202
        %v8020 = vunpack.c.l.b16 %v7203
        %v8021 = vunpack.c.l.b16 %v7204
        %v8022 = vunpack.c.l.b16 %v7205
        %v8023 = vunpack.c.l.b16 %v7206
        %v8024 = vunpack.c.l.b16 %v7207
        %v8025 = vunpack.c.l.b16 %v7208
        %v8026 = vunpack.c.l.b16 %v7209
        %v8027 = vunpack.c.l.b16 %v7210
        %v8028 = vpack.c.b16 %v8013, %v8012
        %v8029 = vpack.c.b16 %v8015, %v8014
        %v8030 = vpack.c.b16 %v8017, %v8016
        %v8031 = vpack.c.b16 %v8019, %v8018
        %v8032 = vpack.c.b16 %v8021, %v8020
        %v8033 = vpack.c.b16 %v8023, %v8022
        %v8034 = vpack.c.b16 %v8025, %v8024
        %v8035 = vpack.c.b16 %v8027, %v8026
        %8044 = vmatprep.subr.bf16.mxu0 0
        %8045 = vmatpush1.bf16.msra.mxu0 %v8035
        %8046 = vmatprep.subr.bf16.mxu0 0
        %8047 = vmatpush1.bf16.msra.mxu0 %v8034
        %8048 = vmatprep.subr.bf16.mxu0 0
        %8049 = vmatpush1.bf16.msra.mxu0 %v8033
        %8050 = vmatprep.subr.bf16.mxu0 0
        %8051 = vmatpush1.bf16.msra.mxu0 %v8032
        %8052 = vmatprep.subr.bf16.mxu0 0
        %8053 = vmatpush1.bf16.msra.mxu0 %v8031
        %8054 = vmatprep.subr.bf16.mxu0 0
        %8055 = vmatpush1.bf16.msra.mxu0 %v8030
        %8056 = vmatprep.subr.bf16.mxu0 0
        %8057 = vmatpush1.bf16.msra.mxu0 %v8029
        %8058 = vmatprep.subr.bf16.mxu0 0
        %8059 = vmatpush1.bf16.msra.mxu0 %v8028
        %8060 = vmatprep.subr.bf16.mxu0 0
        %8061 = vmatpush2.bf16.msra.mxu0 0
        %8062 = vmatprep.subr.bf16.mxu0 0
        %8063 = vmatpush2.bf16.msra.mxu0 0
        %8064 = vmatprep.subr.bf16.mxu0 0
        %8065 = vmatpush2.bf16.msra.mxu0 0
        %8066 = vmatprep.subr.bf16.mxu0 0
        %8067 = vmatpush2.bf16.msra.mxu0 0
        %8068 = vmatprep.subr.bf16.mxu0 0
        %8069 = vmatpush2.bf16.msra.mxu0 0
        %8070 = vmatprep.subr.bf16.mxu0 0
        %8071 = vmatpush2.bf16.msra.mxu0 0
        %8072 = vmatprep.subr.bf16.mxu0 0
        %8073 = vmatpush2.bf16.msra.mxu0 0
        %8074 = vmatprep.subr.bf16.mxu0 0
        %8075 = vmatpush2.bf16.msra.mxu0 0
        %8076 = vmatprep.mubr.bf16.mxu0 0
        %8077 = vmatmul.mubr.bf16.gmra.mxu0 %v7964
        %v8078 = vpop.f32.mrf.mxu0
        %v8079 = vadd.f32 %v7774, %v8078
        %v8080 = vpop.f32.mrf.mxu0
        %v8081 = vpop.f32.mrf.mxu0
        %v8082 = vadd.f32 %v7777, %v8081
        %v8083 = vpop.f32.mrf.mxu0
        %8084 = vmatprep.mubr.bf16.mxu0 0
        %8085 = vmatmul.mubr.bf16.gmra.mxu0 %v7965
        %v8086 = vpop.f32.mrf.mxu0
        %v8087 = vadd.f32 %v7782, %v8086
        %v8088 = vpop.f32.mrf.mxu0
        %v8089 = vpop.f32.mrf.mxu0
        %v8090 = vadd.f32 %v7785, %v8089
        %v8091 = vpop.f32.mrf.mxu0
        %8092 = vmatprep.mubr.bf16.mxu0 0
        %8093 = vmatmul.mubr.bf16.gmra.mxu0 %v7966
        %v8094 = vpop.f32.mrf.mxu0
        %v8095 = vadd.f32 %v7790, %v8094
        %v8096 = vpop.f32.mrf.mxu0
        %v8097 = vpop.f32.mrf.mxu0
        %v8098 = vadd.f32 %v7793, %v8097
        %v8099 = vpop.f32.mrf.mxu0
        %8100 = vmatprep.mubr.bf16.mxu0 0
        %8101 = vmatmul.mubr.bf16.gmra.mxu0 %v7967
        %v8102 = vpop.f32.mrf.mxu0
        %v8103 = vadd.f32 %v7798, %v8102
        %v8104 = vpop.f32.mrf.mxu0
        %v8105 = vpop.f32.mrf.mxu0
        %v8106 = vadd.f32 %v7801, %v8105
        %v8107 = vpop.f32.mrf.mxu0
        %8108 = vmatprep.mubr.bf16.mxu0 0
        %8109 = vmatmul.mubr.bf16.gmra.mxu0 %v7968
        %v8110 = vpop.f32.mrf.mxu0
        %v8111 = vadd.f32 %v7806, %v8110
        %v8112 = vpop.f32.mrf.mxu0
        %v8113 = vpop.f32.mrf.mxu0
        %v8114 = vadd.f32 %v7809, %v8113
        %v8115 = vpop.f32.mrf.mxu0
        %8116 = vmatprep.mubr.bf16.mxu0 0
        %8117 = vmatmul.mubr.bf16.gmra.mxu0 %v7969
        %v8118 = vpop.f32.mrf.mxu0
        %v8119 = vadd.f32 %v7814, %v8118
        %v8120 = vpop.f32.mrf.mxu0
        %v8121 = vpop.f32.mrf.mxu0
        %v8122 = vadd.f32 %v7817, %v8121
        %v8123 = vpop.f32.mrf.mxu0
        %8124 = vmatprep.mubr.bf16.mxu0 0
        %8125 = vmatmul.mubr.bf16.gmra.mxu0 %v7970
        %v8126 = vpop.f32.mrf.mxu0
        %v8127 = vadd.f32 %v7822, %v8126
        %v8128 = vpop.f32.mrf.mxu0
        %v8129 = vpop.f32.mrf.mxu0
        %v8130 = vadd.f32 %v7825, %v8129
        %v8131 = vpop.f32.mrf.mxu0
        %8132 = vmatprep.mubr.bf16.mxu0 0
        %8133 = vmatmul.mubr.bf16.gmra.mxu0 %v7971
        %v8134 = vpop.f32.mrf.mxu0
        %v8135 = vadd.f32 %v7830, %v8134
        %v8136 = vpop.f32.mrf.mxu0
        %v8137 = vpop.f32.mrf.mxu0
        %v8138 = vadd.f32 %v7833, %v8137
        %v8139 = vpop.f32.mrf.mxu0
        %8140 = vmatprep.mubr.bf16.mxu0 0
        %8141 = vmatmul.mubr.bf16.gmra.mxu0 %v7972
        %v8142 = vpop.f32.mrf.mxu0
        %v8143 = vadd.f32 %v7838, %v8142
        %v8144 = vpop.f32.mrf.mxu0
        %v8145 = vpop.f32.mrf.mxu0
        %v8146 = vadd.f32 %v7841, %v8145
        %v8147 = vpop.f32.mrf.mxu0
        %8148 = vmatprep.mubr.bf16.mxu0 0
        %8149 = vmatmul.mubr.bf16.gmra.mxu0 %v7973
        %v8150 = vpop.f32.mrf.mxu0
        %v8151 = vadd.f32 %v7846, %v8150
        %v8152 = vpop.f32.mrf.mxu0
        %v8153 = vpop.f32.mrf.mxu0
        %v8154 = vadd.f32 %v7849, %v8153
        %v8155 = vpop.f32.mrf.mxu0
        %8156 = vmatprep.mubr.bf16.mxu0 0
        %8157 = vmatmul.mubr.bf16.gmra.mxu0 %v7974
        %v8158 = vpop.f32.mrf.mxu0
        %v8159 = vadd.f32 %v7854, %v8158
        %v8160 = vpop.f32.mrf.mxu0
        %v8161 = vpop.f32.mrf.mxu0
        %v8162 = vadd.f32 %v7857, %v8161
        %v8163 = vpop.f32.mrf.mxu0
        %8164 = vmatprep.mubr.bf16.mxu0 0
        %8165 = vmatmul.mubr.bf16.gmra.mxu0 %v7975
        %v8166 = vpop.f32.mrf.mxu0
        %v8167 = vadd.f32 %v7862, %v8166
        %v8168 = vpop.f32.mrf.mxu0
        %v8169 = vpop.f32.mrf.mxu0
        %v8170 = vadd.f32 %v7865, %v8169
        %v8171 = vpop.f32.mrf.mxu0
        %8172 = vmatprep.mubr.bf16.mxu0 0
        %8173 = vmatmul.mubr.bf16.gmra.mxu0 %v7976
        %v8174 = vpop.f32.mrf.mxu0
        %v8175 = vadd.f32 %v7870, %v8174
        %v8176 = vpop.f32.mrf.mxu0
        %v8177 = vpop.f32.mrf.mxu0
        %v8178 = vadd.f32 %v7873, %v8177
        %v8179 = vpop.f32.mrf.mxu0
        %8180 = vmatprep.mubr.bf16.mxu0 0
        %8181 = vmatmul.mubr.bf16.gmra.mxu0 %v7977
        %v8182 = vpop.f32.mrf.mxu0
        %v8183 = vadd.f32 %v7878, %v8182
        %v8184 = vpop.f32.mrf.mxu0
        %v8185 = vpop.f32.mrf.mxu0
        %v8186 = vadd.f32 %v7881, %v8185
        %v8187 = vpop.f32.mrf.mxu0
        %8188 = vmatprep.mubr.bf16.mxu0 0
        %8189 = vmatmul.mubr.bf16.gmra.mxu0 %v7978
        %v8190 = vpop.f32.mrf.mxu0
        %v8191 = vadd.f32 %v7886, %v8190
        %v8192 = vpop.f32.mrf.mxu0
        %v8193 = vpop.f32.mrf.mxu0
        %v8194 = vadd.f32 %v7889, %v8193
        %v8195 = vpop.f32.mrf.mxu0
        %8196 = vmatprep.mubr.bf16.mxu0 0
        %8197 = vmatmul.mubr.bf16.gmra.mxu0 %v7979
        %v8198 = vpop.f32.mrf.mxu0
        %v8199 = vadd.f32 %v7894, %v8198
        %v8200 = vpop.f32.mrf.mxu0
        %v8201 = vpop.f32.mrf.mxu0
        %v8202 = vadd.f32 %v7897, %v8201
        %v8203 = vpop.f32.mrf.mxu0
        %8204 = vdwg.mxu0
        %v8205 = vld [vmem:[#allocation3] sm:$0xe]
        %v8206 = vld [vmem:[#allocation3 + $0xc] sm:$0xe]
        %v8207 = vld [vmem:[#allocation3 + $0x18] sm:$0xe]
        %v8208 = vld [vmem:[#allocation3 + $0x24] sm:$0xe]
        %v8209 = vld [vmem:[#allocation3 + $0x30] sm:$0xe]
        %v8210 = vld [vmem:[#allocation3 + $0x3c] sm:$0xe]
        %v8211 = vld [vmem:[#allocation3 + $0x48] sm:$0xe]
        %v8212 = vld [vmem:[#allocation3 + $0x54] sm:$0xe]
        %v8213 = vld [vmem:[#allocation3 + $0x60] sm:$0xe]
        %v8214 = vld [vmem:[#allocation3 + $0x6c] sm:$0xe]
        %v8215 = vld [vmem:[#allocation3 + $0x78] sm:$0xe]
        %v8216 = vld [vmem:[#allocation3 + $0x84] sm:$0xe]
        %v8217 = vld [vmem:[#allocation3 + $0x90] sm:$0xe]
        %v8218 = vld [vmem:[#allocation3 + $0x9c] sm:$0xe]
        %v8219 = vld [vmem:[#allocation3 + $0xa8] sm:$0xe]
        %v8220 = vld [vmem:[#allocation3 + $0xb4] sm:$0xe]
        %v8253 = vrot.slane %v8205, 5
        %v8254 = vrot.slane %v8253, 4
        %v8255 = vrot.slane %v7164, 5
        %v8256 = vsel %vm3711, %v8254, %v8255
        %v8257 = vrot.slane %v8255, 4
        %v8258 = vrot.slane %v7211, 5
        %v8259 = vsel %vm3711, %v8257, %v8258
        %v8260 = vrot.slane %v8206, 5
        %v8261 = vrot.slane %v8260, 4
        %v8262 = vrot.slane %v7166, 5
        %v8263 = vsel %vm3711, %v8261, %v8262
        %v8264 = vrot.slane %v8262, 4
        %v8265 = vrot.slane %v7212, 5
        %v8266 = vsel %vm3711, %v8264, %v8265
        %v8267 = vrot.slane %v8207, 5
        %v8268 = vrot.slane %v8267, 4
        %v8269 = vrot.slane %v7168, 5
        %v8270 = vsel %vm3711, %v8268, %v8269
        %v8271 = vrot.slane %v8269, 4
        %v8272 = vrot.slane %v7213, 5
        %v8273 = vsel %vm3711, %v8271, %v8272
        %v8274 = vrot.slane %v8208, 5
        %v8275 = vrot.slane %v8274, 4
        %v8276 = vrot.slane %v7170, 5
        %v8277 = vsel %vm3711, %v8275, %v8276
        %v8278 = vrot.slane %v8276, 4
        %v8279 = vrot.slane %v7214, 5
        %v8280 = vsel %vm3711, %v8278, %v8279
        %v8281 = vrot.slane %v8209, 5
        %v8282 = vrot.slane %v8281, 4
        %v8283 = vrot.slane %v7172, 5
        %v8284 = vsel %vm3711, %v8282, %v8283
        %v8285 = vrot.slane %v8283, 4
        %v8286 = vrot.slane %v7215, 5
        %v8287 = vsel %vm3711, %v8285, %v8286
        %v8288 = vrot.slane %v8210, 5
        %v8289 = vrot.slane %v8288, 4
        %v8290 = vrot.slane %v7174, 5
        %v8291 = vsel %vm3711, %v8289, %v8290
        %v8292 = vrot.slane %v8290, 4
        %v8293 = vrot.slane %v7216, 5
        %v8294 = vsel %vm3711, %v8292, %v8293
        %v8295 = vrot.slane %v8211, 5
        %v8296 = vrot.slane %v8295, 4
        %v8297 = vrot.slane %v7176, 5
        %v8298 = vsel %vm3711, %v8296, %v8297
        %v8299 = vrot.slane %v8297, 4
        %v8300 = vrot.slane %v7217, 5
        %v8301 = vsel %vm3711, %v8299, %v8300
        %v8302 = vrot.slane %v8212, 5
        %v8303 = vrot.slane %v8302, 4
        %v8304 = vrot.slane %v7178, 5
        %v8305 = vsel %vm3711, %v8303, %v8304
        %v8306 = vrot.slane %v8304, 4
        %v8307 = vrot.slane %v7218, 5
        %v8308 = vsel %vm3711, %v8306, %v8307
        %v8309 = vrot.slane %v8213, 5
        %v8310 = vrot.slane %v8309, 4
        %v8311 = vrot.slane %v7180, 5
        %v8312 = vsel %vm3711, %v8310, %v8311
        %v8313 = vrot.slane %v8311, 4
        %v8314 = vrot.slane %v7219, 5
        %v8315 = vsel %vm3711, %v8313, %v8314
        %v8316 = vrot.slane %v8214, 5
        %v8317 = vrot.slane %v8316, 4
        %v8318 = vrot.slane %v7182, 5
        %v8319 = vsel %vm3711, %v8317, %v8318
        %v8320 = vrot.slane %v8318, 4
        %v8321 = vrot.slane %v7220, 5
        %v8322 = vsel %vm3711, %v8320, %v8321
        %v8323 = vrot.slane %v8215, 5
        %v8324 = vrot.slane %v8323, 4
        %v8325 = vrot.slane %v7184, 5
        %v8326 = vsel %vm3711, %v8324, %v8325
        %v8327 = vrot.slane %v8325, 4
        %v8328 = vrot.slane %v7221, 5
        %v8329 = vsel %vm3711, %v8327, %v8328
        %v8330 = vrot.slane %v8216, 5
        %v8331 = vrot.slane %v8330, 4
        %v8332 = vrot.slane %v7186, 5
        %v8333 = vsel %vm3711, %v8331, %v8332
        %v8334 = vrot.slane %v8332, 4
        %v8335 = vrot.slane %v7222, 5
        %v8336 = vsel %vm3711, %v8334, %v8335
        %v8337 = vrot.slane %v8217, 5
        %v8338 = vrot.slane %v8337, 4
        %v8339 = vrot.slane %v7188, 5
        %v8340 = vsel %vm3711, %v8338, %v8339
        %v8341 = vrot.slane %v8339, 4
        %v8342 = vrot.slane %v7223, 5
        %v8343 = vsel %vm3711, %v8341, %v8342
        %v8344 = vrot.slane %v8218, 5
        %v8345 = vrot.slane %v8344, 4
        %v8346 = vrot.slane %v7190, 5
        %v8347 = vsel %vm3711, %v8345, %v8346
        %v8348 = vrot.slane %v8346, 4
        %v8349 = vrot.slane %v7224, 5
        %v8350 = vsel %vm3711, %v8348, %v8349
        %v8351 = vrot.slane %v8219, 5
        %v8352 = vrot.slane %v8351, 4
        %v8353 = vrot.slane %v7192, 5
        %v8354 = vsel %vm3711, %v8352, %v8353
        %v8355 = vrot.slane %v8353, 4
        %v8356 = vrot.slane %v7225, 5
        %v8357 = vsel %vm3711, %v8355, %v8356
        %v8358 = vrot.slane %v8220, 5
        %v8359 = vrot.slane %v8358, 4
        %v8360 = vrot.slane %v7194, 5
        %v8361 = vsel %vm3711, %v8359, %v8360
        %v8362 = vrot.slane %v8360, 4
        %v8363 = vrot.slane %v7226, 5
        %v8364 = vsel %vm3711, %v8362, %v8363
        %v8365 = vld [vmem:[#allocation5 + $0x80] sm:$0xf]
        %v8366 = vld [vmem:[#allocation5 + $0x84] sm:$0xf]
        %v8367 = vld [vmem:[#allocation5 + $0x88] sm:$0xf]
        %v8368 = vld [vmem:[#allocation5 + $0x8c] sm:$0xf]
        %v8369 = vld [vmem:[#allocation5 + $0x90] sm:$0xf]
        %v8370 = vld [vmem:[#allocation5 + $0x94] sm:$0xf]
        %v8371 = vld [vmem:[#allocation5 + $0x98] sm:$0xf]
        %v8372 = vld [vmem:[#allocation5 + $0x9c] sm:$0xf]
        %v8373 = vld [vmem:[#allocation5 + $0xa0] sm:$0xf]
        %v8374 = vld [vmem:[#allocation5 + $0xa4] sm:$0xf]
        %v8375 = vld [vmem:[#allocation5 + $0xa8] sm:$0xf]
        %v8376 = vld [vmem:[#allocation5 + $0xac] sm:$0xf]
        %v8377 = vld [vmem:[#allocation5 + $0xb0] sm:$0xf]
        %v8378 = vld [vmem:[#allocation5 + $0xb4] sm:$0xf]
        %v8379 = vld [vmem:[#allocation5 + $0xb8] sm:$0xf]
        %v8380 = vld [vmem:[#allocation5 + $0xbc] sm:$0xf]
        %v8381 = vunpack.c.l.b16 %v8256
        %v8382 = vunpack.c.l.b16 %v8259
        %v8383 = vunpack.c.l.b16 %v8263
        %v8384 = vunpack.c.l.b16 %v8266
        %v8385 = vunpack.c.l.b16 %v8270
        %v8386 = vunpack.c.l.b16 %v8273
        %v8387 = vunpack.c.l.b16 %v8277
        %v8388 = vunpack.c.l.b16 %v8280
        %v8389 = vunpack.c.l.b16 %v8284
        %v8390 = vunpack.c.l.b16 %v8287
        %v8391 = vunpack.c.l.b16 %v8291
        %v8392 = vunpack.c.l.b16 %v8294
        %v8393 = vunpack.c.l.b16 %v8298
        %v8394 = vunpack.c.l.b16 %v8301
        %v8395 = vunpack.c.l.b16 %v8305
        %v8396 = vunpack.c.l.b16 %v8308
        %v8397 = vunpack.c.l.b16 %v8312
        %v8398 = vunpack.c.l.b16 %v8315
        %v8399 = vunpack.c.l.b16 %v8319
        %v8400 = vunpack.c.l.b16 %v8322
        %v8401 = vunpack.c.l.b16 %v8326
        %v8402 = vunpack.c.l.b16 %v8329
        %v8403 = vunpack.c.l.b16 %v8333
        %v8404 = vunpack.c.l.b16 %v8336
        %v8405 = vunpack.c.l.b16 %v8340
        %v8406 = vunpack.c.l.b16 %v8343
        %v8407 = vunpack.c.l.b16 %v8347
        %v8408 = vunpack.c.l.b16 %v8350
        %v8409 = vunpack.c.l.b16 %v8354
        %v8410 = vunpack.c.l.b16 %v8357
        %v8411 = vunpack.c.l.b16 %v8361
        %v8412 = vunpack.c.l.b16 %v8364
        %v8413 = vpack.c.b16 %v8382, %v8381
        %v8414 = vpack.c.b16 %v8384, %v8383
        %v8415 = vpack.c.b16 %v8386, %v8385
        %v8416 = vpack.c.b16 %v8388, %v8387
        %v8417 = vpack.c.b16 %v8390, %v8389
        %v8418 = vpack.c.b16 %v8392, %v8391
        %v8419 = vpack.c.b16 %v8394, %v8393
        %v8420 = vpack.c.b16 %v8396, %v8395
        %v8421 = vpack.c.b16 %v8398, %v8397
        %v8422 = vpack.c.b16 %v8400, %v8399
        %v8423 = vpack.c.b16 %v8402, %v8401
        %v8424 = vpack.c.b16 %v8404, %v8403
        %v8425 = vpack.c.b16 %v8406, %v8405
        %v8426 = vpack.c.b16 %v8408, %v8407
        %v8427 = vpack.c.b16 %v8410, %v8409
        %v8428 = vpack.c.b16 %v8412, %v8411
        %v8461 = vunpack.c.l.b16 %v8365
        %v8462 = vunpack.c.l.b16 %v8366
        %v8463 = vunpack.c.l.b16 %v8367
        %v8464 = vunpack.c.l.b16 %v8368
        %v8465 = vunpack.c.l.b16 %v8369
        %v8466 = vunpack.c.l.b16 %v8370
        %v8467 = vunpack.c.l.b16 %v8371
        %v8468 = vunpack.c.l.b16 %v8372
        %v8469 = vunpack.c.l.b16 %v8373
        %v8470 = vunpack.c.l.b16 %v8374
        %v8471 = vunpack.c.l.b16 %v8375
        %v8472 = vunpack.c.l.b16 %v8376
        %v8473 = vunpack.c.l.b16 %v8377
        %v8474 = vunpack.c.l.b16 %v8378
        %v8475 = vunpack.c.l.b16 %v8379
        %v8476 = vunpack.c.l.b16 %v8380
        %v8477 = vpack.c.b16 %v8462, %v8461
        %v8478 = vpack.c.b16 %v8464, %v8463
        %v8479 = vpack.c.b16 %v8466, %v8465
        %v8480 = vpack.c.b16 %v8468, %v8467
        %v8481 = vpack.c.b16 %v8470, %v8469
        %v8482 = vpack.c.b16 %v8472, %v8471
        %v8483 = vpack.c.b16 %v8474, %v8473
        %v8484 = vpack.c.b16 %v8476, %v8475
        %8493 = vmatprep.subr.bf16.mxu0 0
        %8494 = vmatpush1.bf16.msra.mxu0 %v8484
        %8495 = vmatprep.subr.bf16.mxu0 0
        %8496 = vmatpush1.bf16.msra.mxu0 %v8483
        %8497 = vmatprep.subr.bf16.mxu0 0
        %8498 = vmatpush1.bf16.msra.mxu0 %v8482
        %8499 = vmatprep.subr.bf16.mxu0 0
        %8500 = vmatpush1.bf16.msra.mxu0 %v8481
        %8501 = vmatprep.subr.bf16.mxu0 0
        %8502 = vmatpush1.bf16.msra.mxu0 %v8480
        %8503 = vmatprep.subr.bf16.mxu0 0
        %8504 = vmatpush1.bf16.msra.mxu0 %v8479
        %8505 = vmatprep.subr.bf16.mxu0 0
        %8506 = vmatpush1.bf16.msra.mxu0 %v8478
        %8507 = vmatprep.subr.bf16.mxu0 0
        %8508 = vmatpush1.bf16.msra.mxu0 %v8477
        %8509 = vmatprep.subr.bf16.mxu0 0
        %8510 = vmatpush2.bf16.msra.mxu0 0
        %8511 = vmatprep.subr.bf16.mxu0 0
        %8512 = vmatpush2.bf16.msra.mxu0 0
        %8513 = vmatprep.subr.bf16.mxu0 0
        %8514 = vmatpush2.bf16.msra.mxu0 0
        %8515 = vmatprep.subr.bf16.mxu0 0
        %8516 = vmatpush2.bf16.msra.mxu0 0
        %8517 = vmatprep.subr.bf16.mxu0 0
        %8518 = vmatpush2.bf16.msra.mxu0 0
        %8519 = vmatprep.subr.bf16.mxu0 0
        %8520 = vmatpush2.bf16.msra.mxu0 0
        %8521 = vmatprep.subr.bf16.mxu0 0
        %8522 = vmatpush2.bf16.msra.mxu0 0
        %8523 = vmatprep.subr.bf16.mxu0 0
        %8524 = vmatpush2.bf16.msra.mxu0 0
        %8525 = vmatprep.mubr.bf16.mxu0 0
        %8526 = vmatmul.mubr.bf16.gmra.mxu0 %v8413
        %v8527 = vpop.f32.mrf.mxu0
        %v8528 = vadd.f32 0.0, %v8527
        %v8529 = vpop.f32.mrf.mxu0
        %v8530 = vpop.f32.mrf.mxu0
        %v8531 = vadd.f32 0.0, %v8530
        %v8532 = vpop.f32.mrf.mxu0
        %8533 = vmatprep.mubr.bf16.mxu0 0
        %8534 = vmatmul.mubr.bf16.gmra.mxu0 %v8414
        %v8535 = vpop.f32.mrf.mxu0
        %v8536 = vadd.f32 0.0, %v8535
        %v8537 = vpop.f32.mrf.mxu0
        %v8538 = vpop.f32.mrf.mxu0
        %v8539 = vadd.f32 0.0, %v8538
        %v8540 = vpop.f32.mrf.mxu0
        %8541 = vmatprep.mubr.bf16.mxu0 0
        %8542 = vmatmul.mubr.bf16.gmra.mxu0 %v8415
        %v8543 = vpop.f32.mrf.mxu0
        %v8544 = vadd.f32 0.0, %v8543
        %v8545 = vpop.f32.mrf.mxu0
        %v8546 = vpop.f32.mrf.mxu0
        %v8547 = vadd.f32 0.0, %v8546
        %v8548 = vpop.f32.mrf.mxu0
        %8549 = vmatprep.mubr.bf16.mxu0 0
        %8550 = vmatmul.mubr.bf16.gmra.mxu0 %v8416
        %v8551 = vpop.f32.mrf.mxu0
        %v8552 = vadd.f32 0.0, %v8551
        %v8553 = vpop.f32.mrf.mxu0
        %v8554 = vpop.f32.mrf.mxu0
        %v8555 = vadd.f32 0.0, %v8554
        %v8556 = vpop.f32.mrf.mxu0
        %8557 = vmatprep.mubr.bf16.mxu0 0
        %8558 = vmatmul.mubr.bf16.gmra.mxu0 %v8417
        %v8559 = vpop.f32.mrf.mxu0
        %v8560 = vadd.f32 0.0, %v8559
        %v8561 = vpop.f32.mrf.mxu0
        %v8562 = vpop.f32.mrf.mxu0
        %v8563 = vadd.f32 0.0, %v8562
        %v8564 = vpop.f32.mrf.mxu0
        %8565 = vmatprep.mubr.bf16.mxu0 0
        %8566 = vmatmul.mubr.bf16.gmra.mxu0 %v8418
        %v8567 = vpop.f32.mrf.mxu0
        %v8568 = vadd.f32 0.0, %v8567
        %v8569 = vpop.f32.mrf.mxu0
        %v8570 = vpop.f32.mrf.mxu0
        %v8571 = vadd.f32 0.0, %v8570
        %v8572 = vpop.f32.mrf.mxu0
        %8573 = vmatprep.mubr.bf16.mxu0 0
        %8574 = vmatmul.mubr.bf16.gmra.mxu0 %v8419
        %v8575 = vpop.f32.mrf.mxu0
        %v8576 = vadd.f32 0.0, %v8575
        %v8577 = vpop.f32.mrf.mxu0
        %v8578 = vpop.f32.mrf.mxu0
        %v8579 = vadd.f32 0.0, %v8578
        %v8580 = vpop.f32.mrf.mxu0
        %8581 = vmatprep.mubr.bf16.mxu0 0
        %8582 = vmatmul.mubr.bf16.gmra.mxu0 %v8420
        %v8583 = vpop.f32.mrf.mxu0
        %v8584 = vadd.f32 0.0, %v8583
        %v8585 = vpop.f32.mrf.mxu0
        %v8586 = vpop.f32.mrf.mxu0
        %v8587 = vadd.f32 0.0, %v8586
        %v8588 = vpop.f32.mrf.mxu0
        %8589 = vmatprep.mubr.bf16.mxu0 0
        %8590 = vmatmul.mubr.bf16.gmra.mxu0 %v8421
        %v8591 = vpop.f32.mrf.mxu0
        %v8592 = vadd.f32 0.0, %v8591
        %v8593 = vpop.f32.mrf.mxu0
        %v8594 = vpop.f32.mrf.mxu0
        %v8595 = vadd.f32 0.0, %v8594
        %v8596 = vpop.f32.mrf.mxu0
        %8597 = vmatprep.mubr.bf16.mxu0 0
        %8598 = vmatmul.mubr.bf16.gmra.mxu0 %v8422
        %v8599 = vpop.f32.mrf.mxu0
        %v8600 = vadd.f32 0.0, %v8599
        %v8601 = vpop.f32.mrf.mxu0
        %v8602 = vpop.f32.mrf.mxu0
        %v8603 = vadd.f32 0.0, %v8602
        %v8604 = vpop.f32.mrf.mxu0
        %8605 = vmatprep.mubr.bf16.mxu0 0
        %8606 = vmatmul.mubr.bf16.gmra.mxu0 %v8423
        %v8607 = vpop.f32.mrf.mxu0
        %v8608 = vadd.f32 0.0, %v8607
        %v8609 = vpop.f32.mrf.mxu0
        %v8610 = vpop.f32.mrf.mxu0
        %v8611 = vadd.f32 0.0, %v8610
        %v8612 = vpop.f32.mrf.mxu0
        %8613 = vmatprep.mubr.bf16.mxu0 0
        %8614 = vmatmul.mubr.bf16.gmra.mxu0 %v8424
        %v8615 = vpop.f32.mrf.mxu0
        %v8616 = vadd.f32 0.0, %v8615
        %v8617 = vpop.f32.mrf.mxu0
        %v8618 = vpop.f32.mrf.mxu0
        %v8619 = vadd.f32 0.0, %v8618
        %v8620 = vpop.f32.mrf.mxu0
        %8621 = vmatprep.mubr.bf16.mxu0 0
        %8622 = vmatmul.mubr.bf16.gmra.mxu0 %v8425
        %v8623 = vpop.f32.mrf.mxu0
        %v8624 = vadd.f32 0.0, %v8623
        %v8625 = vpop.f32.mrf.mxu0
        %v8626 = vpop.f32.mrf.mxu0
        %v8627 = vadd.f32 0.0, %v8626
        %v8628 = vpop.f32.mrf.mxu0
        %8629 = vmatprep.mubr.bf16.mxu0 0
        %8630 = vmatmul.mubr.bf16.gmra.mxu0 %v8426
        %v8631 = vpop.f32.mrf.mxu0
        %v8632 = vadd.f32 0.0, %v8631
        %v8633 = vpop.f32.mrf.mxu0
        %v8634 = vpop.f32.mrf.mxu0
        %v8635 = vadd.f32 0.0, %v8634
        %v8636 = vpop.f32.mrf.mxu0
        %8637 = vmatprep.mubr.bf16.mxu0 0
        %8638 = vmatmul.mubr.bf16.gmra.mxu0 %v8427
        %v8639 = vpop.f32.mrf.mxu0
        %v8640 = vadd.f32 0.0, %v8639
        %v8641 = vpop.f32.mrf.mxu0
        %v8642 = vpop.f32.mrf.mxu0
        %v8643 = vadd.f32 0.0, %v8642
        %v8644 = vpop.f32.mrf.mxu0
        %8645 = vmatprep.mubr.bf16.mxu0 0
        %8646 = vmatmul.mubr.bf16.gmra.mxu0 %v8428
        %v8647 = vpop.f32.mrf.mxu0
        %v8648 = vadd.f32 0.0, %v8647
        %v8649 = vpop.f32.mrf.mxu0
        %v8650 = vpop.f32.mrf.mxu0
        %v8651 = vadd.f32 0.0, %v8650
        %v8652 = vpop.f32.mrf.mxu0
        %8653 = vdwg.mxu0
        %v8654 = vadd.f32 %v8079, %v8528
        %v8655 = vadd.f32 %v8082, %v8531
        %v8656 = vadd.f32 %v8087, %v8536
        %v8657 = vadd.f32 %v8090, %v8539
        %v8658 = vadd.f32 %v8095, %v8544
        %v8659 = vadd.f32 %v8098, %v8547
        %v8660 = vadd.f32 %v8103, %v8552
        %v8661 = vadd.f32 %v8106, %v8555
        %v8662 = vadd.f32 %v8111, %v8560
        %v8663 = vadd.f32 %v8114, %v8563
        %v8664 = vadd.f32 %v8119, %v8568
        %v8665 = vadd.f32 %v8122, %v8571
        %v8666 = vadd.f32 %v8127, %v8576
        %v8667 = vadd.f32 %v8130, %v8579
        %v8668 = vadd.f32 %v8135, %v8584
        %v8669 = vadd.f32 %v8138, %v8587
        %v8670 = vadd.f32 %v8143, %v8592
        %v8671 = vadd.f32 %v8146, %v8595
        %v8672 = vadd.f32 %v8151, %v8600
        %v8673 = vadd.f32 %v8154, %v8603
        %v8674 = vadd.f32 %v8159, %v8608
        %v8675 = vadd.f32 %v8162, %v8611
        %v8676 = vadd.f32 %v8167, %v8616
        %v8677 = vadd.f32 %v8170, %v8619
        %v8678 = vadd.f32 %v8175, %v8624
        %v8679 = vadd.f32 %v8178, %v8627
        %v8680 = vadd.f32 %v8183, %v8632
        %v8681 = vadd.f32 %v8186, %v8635
        %v8682 = vadd.f32 %v8191, %v8640
        %v8683 = vadd.f32 %v8194, %v8643
        %v8684 = vadd.f32 %v8199, %v8648
        %v8685 = vadd.f32 %v8202, %v8651
        %v8686 = vld [vmem:[%s7048] sm:$0xf]
        %v8687 = vld [vmem:[%s7048 + $0x4] sm:$0xf]
        %v8688 = vld [vmem:[%s7048 + $0xc] sm:$0xf]
        %v8689 = vld [vmem:[%s7048 + $0x10] sm:$0xf]
        %v8690 = vld [vmem:[%s7048 + $0x18] sm:$0xf]
        %v8691 = vld [vmem:[%s7048 + $0x1c] sm:$0xf]
        %v8692 = vld [vmem:[%s7048 + $0x24] sm:$0xf]
        %v8693 = vld [vmem:[%s7048 + $0x28] sm:$0xf]
        %v8694 = vld [vmem:[%s7048 + $0x30] sm:$0xf]
        %v8695 = vld [vmem:[%s7048 + $0x34] sm:$0xf]
        %v8696 = vld [vmem:[%s7048 + $0x3c] sm:$0xf]
        %v8697 = vld [vmem:[%s7048 + $0x40] sm:$0xf]
        %v8698 = vld [vmem:[%s7048 + $0x48] sm:$0xf]
        %v8699 = vld [vmem:[%s7048 + $0x4c] sm:$0xf]
        %v8700 = vld [vmem:[%s7048 + $0x54] sm:$0xf]
        %v8701 = vld [vmem:[%s7048 + $0x58] sm:$0xf]
        %v8702 = vld [vmem:[%s7048 + $0x60] sm:$0xf]
        %v8703 = vld [vmem:[%s7048 + $0x64] sm:$0xf]
        %v8704 = vld [vmem:[%s7048 + $0x6c] sm:$0xf]
        %v8705 = vld [vmem:[%s7048 + $0x70] sm:$0xf]
        %v8706 = vld [vmem:[%s7048 + $0x78] sm:$0xf]
        %v8707 = vld [vmem:[%s7048 + $0x7c] sm:$0xf]
        %v8708 = vld [vmem:[%s7048 + $0x84] sm:$0xf]
        %v8709 = vld [vmem:[%s7048 + $0x88] sm:$0xf]
        %v8710 = vld [vmem:[%s7048 + $0x90] sm:$0xf]
        %v8711 = vld [vmem:[%s7048 + $0x94] sm:$0xf]
        %v8712 = vld [vmem:[%s7048 + $0x9c] sm:$0xf]
        %v8713 = vld [vmem:[%s7048 + $0xa0] sm:$0xf]
        %v8714 = vld [vmem:[%s7048 + $0xa8] sm:$0xf]
        %v8715 = vld [vmem:[%s7048 + $0xac] sm:$0xf]
        %v8716 = vld [vmem:[%s7048 + $0xb4] sm:$0xf]
        %v8717 = vld [vmem:[%s7048 + $0xb8] sm:$0xf]
        %v8718 = vld [vmem:[#allocation5 + $0xc0] sm:$0xf]
        %v8719 = vld [vmem:[#allocation5 + $0xc4] sm:$0xf]
        %v8720 = vld [vmem:[#allocation5 + $0xc8] sm:$0xf]
        %v8721 = vld [vmem:[#allocation5 + $0xcc] sm:$0xf]
        %v8722 = vld [vmem:[#allocation5 + $0xd0] sm:$0xf]
        %v8723 = vld [vmem:[#allocation5 + $0xd4] sm:$0xf]
        %v8724 = vld [vmem:[#allocation5 + $0xd8] sm:$0xf]
        %v8725 = vld [vmem:[#allocation5 + $0xdc] sm:$0xf]
        %v8726 = vld [vmem:[#allocation5 + $0xe0] sm:$0xf]
        %v8727 = vld [vmem:[#allocation5 + $0xe4] sm:$0xf]
        %v8728 = vld [vmem:[#allocation5 + $0xe8] sm:$0xf]
        %v8729 = vld [vmem:[#allocation5 + $0xec] sm:$0xf]
        %v8730 = vld [vmem:[#allocation5 + $0xf0] sm:$0xf]
        %v8731 = vld [vmem:[#allocation5 + $0xf4] sm:$0xf]
        %v8732 = vld [vmem:[#allocation5 + $0xf8] sm:$0xf]
        %v8733 = vld [vmem:[#allocation5 + $0xfc] sm:$0xf]
        %v8766 = vunpack.c.l.b16 %v8686
        %v8767 = vunpack.c.l.b16 %v8687
        %v8768 = vunpack.c.l.b16 %v8688
        %v8769 = vunpack.c.l.b16 %v8689
        %v8770 = vunpack.c.l.b16 %v8690
        %v8771 = vunpack.c.l.b16 %v8691
        %v8772 = vunpack.c.l.b16 %v8692
        %v8773 = vunpack.c.l.b16 %v8693
        %v8774 = vunpack.c.l.b16 %v8694
        %v8775 = vunpack.c.l.b16 %v8695
        %v8776 = vunpack.c.l.b16 %v8696
        %v8777 = vunpack.c.l.b16 %v8697
        %v8778 = vunpack.c.l.b16 %v8698
        %v8779 = vunpack.c.l.b16 %v8699
        %v8780 = vunpack.c.l.b16 %v8700
        %v8781 = vunpack.c.l.b16 %v8701
        %v8782 = vunpack.c.l.b16 %v8702
        %v8783 = vunpack.c.l.b16 %v8703
        %v8784 = vunpack.c.l.b16 %v8704
        %v8785 = vunpack.c.l.b16 %v8705
        %v8786 = vunpack.c.l.b16 %v8706
        %v8787 = vunpack.c.l.b16 %v8707
        %v8788 = vunpack.c.l.b16 %v8708
        %v8789 = vunpack.c.l.b16 %v8709
        %v8790 = vunpack.c.l.b16 %v8710
        %v8791 = vunpack.c.l.b16 %v8711
        %v8792 = vunpack.c.l.b16 %v8712
        %v8793 = vunpack.c.l.b16 %v8713
        %v8794 = vunpack.c.l.b16 %v8714
        %v8795 = vunpack.c.l.b16 %v8715
        %v8796 = vunpack.c.l.b16 %v8716
        %v8797 = vunpack.c.l.b16 %v8717
        %v8798 = vpack.c.b16 %v8767, %v8766
        %v8799 = vpack.c.b16 %v8769, %v8768
        %v8800 = vpack.c.b16 %v8771, %v8770
        %v8801 = vpack.c.b16 %v8773, %v8772
        %v8802 = vpack.c.b16 %v8775, %v8774
        %v8803 = vpack.c.b16 %v8777, %v8776
        %v8804 = vpack.c.b16 %v8779, %v8778
        %v8805 = vpack.c.b16 %v8781, %v8780
        %v8806 = vpack.c.b16 %v8783, %v8782
        %v8807 = vpack.c.b16 %v8785, %v8784
        %v8808 = vpack.c.b16 %v8787, %v8786
        %v8809 = vpack.c.b16 %v8789, %v8788
        %v8810 = vpack.c.b16 %v8791, %v8790
        %v8811 = vpack.c.b16 %v8793, %v8792
        %v8812 = vpack.c.b16 %v8795, %v8794
        %v8813 = vpack.c.b16 %v8797, %v8796
        %v8846 = vunpack.c.l.b16 %v8718
        %v8847 = vunpack.c.l.b16 %v8719
        %v8848 = vunpack.c.l.b16 %v8720
        %v8849 = vunpack.c.l.b16 %v8721
        %v8850 = vunpack.c.l.b16 %v8722
        %v8851 = vunpack.c.l.b16 %v8723
        %v8852 = vunpack.c.l.b16 %v8724
        %v8853 = vunpack.c.l.b16 %v8725
        %v8854 = vunpack.c.l.b16 %v8726
        %v8855 = vunpack.c.l.b16 %v8727
        %v8856 = vunpack.c.l.b16 %v8728
        %v8857 = vunpack.c.l.b16 %v8729
        %v8858 = vunpack.c.l.b16 %v8730
        %v8859 = vunpack.c.l.b16 %v8731
        %v8860 = vunpack.c.l.b16 %v8732
        %v8861 = vunpack.c.l.b16 %v8733
        %v8862 = vpack.c.b16 %v8847, %v8846
        %v8863 = vpack.c.b16 %v8849, %v8848
        %v8864 = vpack.c.b16 %v8851, %v8850
        %v8865 = vpack.c.b16 %v8853, %v8852
        %v8866 = vpack.c.b16 %v8855, %v8854
        %v8867 = vpack.c.b16 %v8857, %v8856
        %v8868 = vpack.c.b16 %v8859, %v8858
        %v8869 = vpack.c.b16 %v8861, %v8860
        %8878 = vmatprep.subr.bf16.mxu0 0
        %8879 = vmatpush1.bf16.msra.mxu0 %v8869
        %8880 = vmatprep.subr.bf16.mxu0 0
        %8881 = vmatpush1.bf16.msra.mxu0 %v8868
        %8882 = vmatprep.subr.bf16.mxu0 0
        %8883 = vmatpush1.bf16.msra.mxu0 %v8867
        %8884 = vmatprep.subr.bf16.mxu0 0
        %8885 = vmatpush1.bf16.msra.mxu0 %v8866
        %8886 = vmatprep.subr.bf16.mxu0 0
        %8887 = vmatpush1.bf16.msra.mxu0 %v8865
        %8888 = vmatprep.subr.bf16.mxu0 0
        %8889 = vmatpush1.bf16.msra.mxu0 %v8864
        %8890 = vmatprep.subr.bf16.mxu0 0
        %8891 = vmatpush1.bf16.msra.mxu0 %v8863
        %8892 = vmatprep.subr.bf16.mxu0 0
        %8893 = vmatpush1.bf16.msra.mxu0 %v8862
        %8894 = vmatprep.subr.bf16.mxu0 0
        %8895 = vmatpush2.bf16.msra.mxu0 0
        %8896 = vmatprep.subr.bf16.mxu0 0
        %8897 = vmatpush2.bf16.msra.mxu0 0
        %8898 = vmatprep.subr.bf16.mxu0 0
        %8899 = vmatpush2.bf16.msra.mxu0 0
        %8900 = vmatprep.subr.bf16.mxu0 0
        %8901 = vmatpush2.bf16.msra.mxu0 0
        %8902 = vmatprep.subr.bf16.mxu0 0
        %8903 = vmatpush2.bf16.msra.mxu0 0
        %8904 = vmatprep.subr.bf16.mxu0 0
        %8905 = vmatpush2.bf16.msra.mxu0 0
        %8906 = vmatprep.subr.bf16.mxu0 0
        %8907 = vmatpush2.bf16.msra.mxu0 0
        %8908 = vmatprep.subr.bf16.mxu0 0
        %8909 = vmatpush2.bf16.msra.mxu0 0
        %8910 = vmatprep.mubr.bf16.mxu0 0
        %8911 = vmatmul.mubr.bf16.gmra.mxu0 %v8798
        %v8912 = vpop.f32.mrf.mxu0
        %v8913 = vadd.f32 0.0, %v8912
        %v8914 = vpop.f32.mrf.mxu0
        %v8915 = vpop.f32.mrf.mxu0
        %v8916 = vadd.f32 0.0, %v8915
        %v8917 = vpop.f32.mrf.mxu0
        %8918 = vmatprep.mubr.bf16.mxu0 0
        %8919 = vmatmul.mubr.bf16.gmra.mxu0 %v8799
        %v8920 = vpop.f32.mrf.mxu0
        %v8921 = vadd.f32 0.0, %v8920
        %v8922 = vpop.f32.mrf.mxu0
        %v8923 = vpop.f32.mrf.mxu0
        %v8924 = vadd.f32 0.0, %v8923
        %v8925 = vpop.f32.mrf.mxu0
        %8926 = vmatprep.mubr.bf16.mxu0 0
        %8927 = vmatmul.mubr.bf16.gmra.mxu0 %v8800
        %v8928 = vpop.f32.mrf.mxu0
        %v8929 = vadd.f32 0.0, %v8928
        %v8930 = vpop.f32.mrf.mxu0
        %v8931 = vpop.f32.mrf.mxu0
        %v8932 = vadd.f32 0.0, %v8931
        %v8933 = vpop.f32.mrf.mxu0
        %8934 = vmatprep.mubr.bf16.mxu0 0
        %8935 = vmatmul.mubr.bf16.gmra.mxu0 %v8801
        %v8936 = vpop.f32.mrf.mxu0
        %v8937 = vadd.f32 0.0, %v8936
        %v8938 = vpop.f32.mrf.mxu0
        %v8939 = vpop.f32.mrf.mxu0
        %v8940 = vadd.f32 0.0, %v8939
        %v8941 = vpop.f32.mrf.mxu0
        %8942 = vmatprep.mubr.bf16.mxu0 0
        %8943 = vmatmul.mubr.bf16.gmra.mxu0 %v8802
        %v8944 = vpop.f32.mrf.mxu0
        %v8945 = vadd.f32 0.0, %v8944
        %v8946 = vpop.f32.mrf.mxu0
        %v8947 = vpop.f32.mrf.mxu0
        %v8948 = vadd.f32 0.0, %v8947
        %v8949 = vpop.f32.mrf.mxu0
        %8950 = vmatprep.mubr.bf16.mxu0 0
        %8951 = vmatmul.mubr.bf16.gmra.mxu0 %v8803
        %v8952 = vpop.f32.mrf.mxu0
        %v8953 = vadd.f32 0.0, %v8952
        %v8954 = vpop.f32.mrf.mxu0
        %v8955 = vpop.f32.mrf.mxu0
        %v8956 = vadd.f32 0.0, %v8955
        %v8957 = vpop.f32.mrf.mxu0
        %8958 = vmatprep.mubr.bf16.mxu0 0
        %8959 = vmatmul.mubr.bf16.gmra.mxu0 %v8804
        %v8960 = vpop.f32.mrf.mxu0
        %v8961 = vadd.f32 0.0, %v8960
        %v8962 = vpop.f32.mrf.mxu0
        %v8963 = vpop.f32.mrf.mxu0
        %v8964 = vadd.f32 0.0, %v8963
        %v8965 = vpop.f32.mrf.mxu0
        %8966 = vmatprep.mubr.bf16.mxu0 0
        %8967 = vmatmul.mubr.bf16.gmra.mxu0 %v8805
        %v8968 = vpop.f32.mrf.mxu0
        %v8969 = vadd.f32 0.0, %v8968
        %v8970 = vpop.f32.mrf.mxu0
        %v8971 = vpop.f32.mrf.mxu0
        %v8972 = vadd.f32 0.0, %v8971
        %v8973 = vpop.f32.mrf.mxu0
        %8974 = vmatprep.mubr.bf16.mxu0 0
        %8975 = vmatmul.mubr.bf16.gmra.mxu0 %v8806
        %v8976 = vpop.f32.mrf.mxu0
        %v8977 = vadd.f32 0.0, %v8976
        %v8978 = vpop.f32.mrf.mxu0
        %v8979 = vpop.f32.mrf.mxu0
        %v8980 = vadd.f32 0.0, %v8979
        %v8981 = vpop.f32.mrf.mxu0
        %8982 = vmatprep.mubr.bf16.mxu0 0
        %8983 = vmatmul.mubr.bf16.gmra.mxu0 %v8807
        %v8984 = vpop.f32.mrf.mxu0
        %v8985 = vadd.f32 0.0, %v8984
        %v8986 = vpop.f32.mrf.mxu0
        %v8987 = vpop.f32.mrf.mxu0
        %v8988 = vadd.f32 0.0, %v8987
        %v8989 = vpop.f32.mrf.mxu0
        %8990 = vmatprep.mubr.bf16.mxu0 0
        %8991 = vmatmul.mubr.bf16.gmra.mxu0 %v8808
        %v8992 = vpop.f32.mrf.mxu0
        %v8993 = vadd.f32 0.0, %v8992
        %v8994 = vpop.f32.mrf.mxu0
        %v8995 = vpop.f32.mrf.mxu0
        %v8996 = vadd.f32 0.0, %v8995
        %v8997 = vpop.f32.mrf.mxu0
        %8998 = vmatprep.mubr.bf16.mxu0 0
        %8999 = vmatmul.mubr.bf16.gmra.mxu0 %v8809
        %v9000 = vpop.f32.mrf.mxu0
        %v9001 = vadd.f32 0.0, %v9000
        %v9002 = vpop.f32.mrf.mxu0
        %v9003 = vpop.f32.mrf.mxu0
        %v9004 = vadd.f32 0.0, %v9003
        %v9005 = vpop.f32.mrf.mxu0
        %9006 = vmatprep.mubr.bf16.mxu0 0
        %9007 = vmatmul.mubr.bf16.gmra.mxu0 %v8810
        %v9008 = vpop.f32.mrf.mxu0
        %v9009 = vadd.f32 0.0, %v9008
        %v9010 = vpop.f32.mrf.mxu0
        %v9011 = vpop.f32.mrf.mxu0
        %v9012 = vadd.f32 0.0, %v9011
        %v9013 = vpop.f32.mrf.mxu0
        %9014 = vmatprep.mubr.bf16.mxu0 0
        %9015 = vmatmul.mubr.bf16.gmra.mxu0 %v8811
        %v9016 = vpop.f32.mrf.mxu0
        %v9017 = vadd.f32 0.0, %v9016
        %v9018 = vpop.f32.mrf.mxu0
        %v9019 = vpop.f32.mrf.mxu0
        %v9020 = vadd.f32 0.0, %v9019
        %v9021 = vpop.f32.mrf.mxu0
        %9022 = vmatprep.mubr.bf16.mxu0 0
        %9023 = vmatmul.mubr.bf16.gmra.mxu0 %v8812
        %v9024 = vpop.f32.mrf.mxu0
        %v9025 = vadd.f32 0.0, %v9024
        %v9026 = vpop.f32.mrf.mxu0
        %v9027 = vpop.f32.mrf.mxu0
        %v9028 = vadd.f32 0.0, %v9027
        %v9029 = vpop.f32.mrf.mxu0
        %9030 = vmatprep.mubr.bf16.mxu0 0
        %9031 = vmatmul.mubr.bf16.gmra.mxu0 %v8813
        %v9032 = vpop.f32.mrf.mxu0
        %v9033 = vadd.f32 0.0, %v9032
        %v9034 = vpop.f32.mrf.mxu0
        %v9035 = vpop.f32.mrf.mxu0
        %v9036 = vadd.f32 0.0, %v9035
        %v9037 = vpop.f32.mrf.mxu0
        %9038 = vdwg.mxu0
        %v9039 = vadd.f32 %v8654, %v8913
        %v9040 = vadd.f32 %v8655, %v8916
        %v9041 = vadd.f32 %v8656, %v8921
        %v9042 = vadd.f32 %v8657, %v8924
        %v9043 = vadd.f32 %v8658, %v8929
        %v9044 = vadd.f32 %v8659, %v8932
        %v9045 = vadd.f32 %v8660, %v8937
        %v9046 = vadd.f32 %v8661, %v8940
        %v9047 = vadd.f32 %v8662, %v8945
        %v9048 = vadd.f32 %v8663, %v8948
        %v9049 = vadd.f32 %v8664, %v8953
        %v9050 = vadd.f32 %v8665, %v8956
        %v9051 = vadd.f32 %v8666, %v8961
        %v9052 = vadd.f32 %v8667, %v8964
        %v9053 = vadd.f32 %v8668, %v8969
        %v9054 = vadd.f32 %v8669, %v8972
        %v9055 = vadd.f32 %v8670, %v8977
        %v9056 = vadd.f32 %v8671, %v8980
        %v9057 = vadd.f32 %v8672, %v8985
        %v9058 = vadd.f32 %v8673, %v8988
        %v9059 = vadd.f32 %v8674, %v8993
        %v9060 = vadd.f32 %v8675, %v8996
        %v9061 = vadd.f32 %v8676, %v9001
        %v9062 = vadd.f32 %v8677, %v9004
        %v9063 = vadd.f32 %v8678, %v9009
        %v9064 = vadd.f32 %v8679, %v9012
        %v9065 = vadd.f32 %v8680, %v9017
        %v9066 = vadd.f32 %v8681, %v9020
        %v9067 = vadd.f32 %v8682, %v9025
        %v9068 = vadd.f32 %v8683, %v9028
        %v9069 = vadd.f32 %v8684, %v9033
        %v9070 = vadd.f32 %v8685, %v9036
        %v9071 = vld [vmem:[%s7048] sm:$0xf]
        %v9072 = vld [vmem:[%s7048 + $0x4] sm:$0xf]
        %v9073 = vld [vmem:[%s7048 + $0x8] sm:$0x1]
        %v9074 = vld [vmem:[%s7048 + $0xc] sm:$0xf]
        %v9075 = vld [vmem:[%s7048 + $0x10] sm:$0xf]
        %v9076 = vld [vmem:[%s7048 + $0x14] sm:$0x1]
        %v9077 = vld [vmem:[%s7048 + $0x18] sm:$0xf]
        %v9078 = vld [vmem:[%s7048 + $0x1c] sm:$0xf]
        %v9079 = vld [vmem:[%s7048 + $0x20] sm:$0x1]
        %v9080 = vld [vmem:[%s7048 + $0x24] sm:$0xf]
        %v9081 = vld [vmem:[%s7048 + $0x28] sm:$0xf]
        %v9082 = vld [vmem:[%s7048 + $0x2c] sm:$0x1]
        %v9083 = vld [vmem:[%s7048 + $0x30] sm:$0xf]
        %v9084 = vld [vmem:[%s7048 + $0x34] sm:$0xf]
        %v9085 = vld [vmem:[%s7048 + $0x38] sm:$0x1]
        %v9086 = vld [vmem:[%s7048 + $0x3c] sm:$0xf]
        %v9087 = vld [vmem:[%s7048 + $0x40] sm:$0xf]
        %v9088 = vld [vmem:[%s7048 + $0x44] sm:$0x1]
        %v9089 = vld [vmem:[%s7048 + $0x48] sm:$0xf]
        %v9090 = vld [vmem:[%s7048 + $0x4c] sm:$0xf]
        %v9091 = vld [vmem:[%s7048 + $0x50] sm:$0x1]
        %v9092 = vld [vmem:[%s7048 + $0x54] sm:$0xf]
        %v9093 = vld [vmem:[%s7048 + $0x58] sm:$0xf]
        %v9094 = vld [vmem:[%s7048 + $0x5c] sm:$0x1]
        %v9095 = vld [vmem:[%s7048 + $0x60] sm:$0xf]
        %v9096 = vld [vmem:[%s7048 + $0x64] sm:$0xf]
        %v9097 = vld [vmem:[%s7048 + $0x68] sm:$0x1]
        %v9098 = vld [vmem:[%s7048 + $0x6c] sm:$0xf]
        %v9099 = vld [vmem:[%s7048 + $0x70] sm:$0xf]
        %v9100 = vld [vmem:[%s7048 + $0x74] sm:$0x1]
        %v9101 = vld [vmem:[%s7048 + $0x78] sm:$0xf]
        %v9102 = vld [vmem:[%s7048 + $0x7c] sm:$0xf]
        %v9103 = vld [vmem:[%s7048 + $0x80] sm:$0x1]
        %v9104 = vld [vmem:[%s7048 + $0x84] sm:$0xf]
        %v9105 = vld [vmem:[%s7048 + $0x88] sm:$0xf]
        %v9106 = vld [vmem:[%s7048 + $0x8c] sm:$0x1]
        %v9107 = vld [vmem:[%s7048 + $0x90] sm:$0xf]
        %v9108 = vld [vmem:[%s7048 + $0x94] sm:$0xf]
        %v9109 = vld [vmem:[%s7048 + $0x98] sm:$0x1]
        %v9110 = vld [vmem:[%s7048 + $0x9c] sm:$0xf]
        %v9111 = vld [vmem:[%s7048 + $0xa0] sm:$0xf]
        %v9112 = vld [vmem:[%s7048 + $0xa4] sm:$0x1]
        %v9113 = vld [vmem:[%s7048 + $0xa8] sm:$0xf]
        %v9114 = vld [vmem:[%s7048 + $0xac] sm:$0xf]
        %v9115 = vld [vmem:[%s7048 + $0xb0] sm:$0x1]
        %v9116 = vld [vmem:[%s7048 + $0xb4] sm:$0xf]
        %v9117 = vld [vmem:[%s7048 + $0xb8] sm:$0xf]
        %v9118 = vld [vmem:[%s7048 + $0xbc] sm:$0x1]
        %v9120 = vshrl.u32 %v9071, 16
        %v9122 = vrot.slane %v9120, 4
        %v9123 = vshll.u32 %v9071, 16
        %v9125 = vrot.slane %v9123, 5
        %v9126 = vor.u32 %v9122, %v9125
        %v9127 = vrot.slane %v9126, 4
        %v9129 = vshll.u32 %v9072, 16
        %v9131 = vrot.slane %v9129, 5
        %v9132 = vsel %vm3099, %v9127, %v9131
        %v9133 = vshrl.u32 %v9072, 16
        %v9135 = vrot.slane %v9133, 4
        %v9136 = vor.u32 %v9135, %v9131
        %v9137 = vrot.slane %v9136, 4
        %v9139 = vshll.u32 %v9073, 16
        %v9141 = vrot.slane %v9139, 5
        %v9142 = vsel %vm3099, %v9137, %v9141
        %v9144 = vshrl.u32 %v9074, 16
        %v9146 = vrot.slane %v9144, 4
        %v9147 = vshll.u32 %v9074, 16
        %v9149 = vrot.slane %v9147, 5
        %v9150 = vor.u32 %v9146, %v9149
        %v9151 = vrot.slane %v9150, 4
        %v9153 = vshll.u32 %v9075, 16
        %v9155 = vrot.slane %v9153, 5
        %v9156 = vsel %vm3099, %v9151, %v9155
        %v9157 = vshrl.u32 %v9075, 16
        %v9159 = vrot.slane %v9157, 4
        %v9160 = vor.u32 %v9159, %v9155
        %v9161 = vrot.slane %v9160, 4
        %v9163 = vshll.u32 %v9076, 16
        %v9165 = vrot.slane %v9163, 5
        %v9166 = vsel %vm3099, %v9161, %v9165
        %v9168 = vshrl.u32 %v9077, 16
        %v9170 = vrot.slane %v9168, 4
        %v9171 = vshll.u32 %v9077, 16
        %v9173 = vrot.slane %v9171, 5
        %v9174 = vor.u32 %v9170, %v9173
        %v9175 = vrot.slane %v9174, 4
        %v9177 = vshll.u32 %v9078, 16
        %v9179 = vrot.slane %v9177, 5
        %v9180 = vsel %vm3099, %v9175, %v9179
        %v9181 = vshrl.u32 %v9078, 16
        %v9183 = vrot.slane %v9181, 4
        %v9184 = vor.u32 %v9183, %v9179
        %v9185 = vrot.slane %v9184, 4
        %v9187 = vshll.u32 %v9079, 16
        %v9189 = vrot.slane %v9187, 5
        %v9190 = vsel %vm3099, %v9185, %v9189
        %v9192 = vshrl.u32 %v9080, 16
        %v9194 = vrot.slane %v9192, 4
        %v9195 = vshll.u32 %v9080, 16
        %v9197 = vrot.slane %v9195, 5
        %v9198 = vor.u32 %v9194, %v9197
        %v9199 = vrot.slane %v9198, 4
        %v9201 = vshll.u32 %v9081, 16
        %v9203 = vrot.slane %v9201, 5
        %v9204 = vsel %vm3099, %v9199, %v9203
        %v9205 = vshrl.u32 %v9081, 16
        %v9207 = vrot.slane %v9205, 4
        %v9208 = vor.u32 %v9207, %v9203
        %v9209 = vrot.slane %v9208, 4
        %v9211 = vshll.u32 %v9082, 16
        %v9213 = vrot.slane %v9211, 5
        %v9214 = vsel %vm3099, %v9209, %v9213
        %v9216 = vshrl.u32 %v9083, 16
        %v9218 = vrot.slane %v9216, 4
        %v9219 = vshll.u32 %v9083, 16
        %v9221 = vrot.slane %v9219, 5
        %v9222 = vor.u32 %v9218, %v9221
        %v9223 = vrot.slane %v9222, 4
        %v9225 = vshll.u32 %v9084, 16
        %v9227 = vrot.slane %v9225, 5
        %v9228 = vsel %vm3099, %v9223, %v9227
        %v9229 = vshrl.u32 %v9084, 16
        %v9231 = vrot.slane %v9229, 4
        %v9232 = vor.u32 %v9231, %v9227
        %v9233 = vrot.slane %v9232, 4
        %v9235 = vshll.u32 %v9085, 16
        %v9237 = vrot.slane %v9235, 5
        %v9238 = vsel %vm3099, %v9233, %v9237
        %v9240 = vshrl.u32 %v9086, 16
        %v9242 = vrot.slane %v9240, 4
        %v9243 = vshll.u32 %v9086, 16
        %v9245 = vrot.slane %v9243, 5
        %v9246 = vor.u32 %v9242, %v9245
        %v9247 = vrot.slane %v9246, 4
        %v9249 = vshll.u32 %v9087, 16
        %v9251 = vrot.slane %v9249, 5
        %v9252 = vsel %vm3099, %v9247, %v9251
        %v9253 = vshrl.u32 %v9087, 16
        %v9255 = vrot.slane %v9253, 4
        %v9256 = vor.u32 %v9255, %v9251
        %v9257 = vrot.slane %v9256, 4
        %v9259 = vshll.u32 %v9088, 16
        %v9261 = vrot.slane %v9259, 5
        %v9262 = vsel %vm3099, %v9257, %v9261
        %v9264 = vshrl.u32 %v9089, 16
        %v9266 = vrot.slane %v9264, 4
        %v9267 = vshll.u32 %v9089, 16
        %v9269 = vrot.slane %v9267, 5
        %v9270 = vor.u32 %v9266, %v9269
        %v9271 = vrot.slane %v9270, 4
        %v9273 = vshll.u32 %v9090, 16
        %v9275 = vrot.slane %v9273, 5
        %v9276 = vsel %vm3099, %v9271, %v9275
        %v9277 = vshrl.u32 %v9090, 16
        %v9279 = vrot.slane %v9277, 4
        %v9280 = vor.u32 %v9279, %v9275
        %v9281 = vrot.slane %v9280, 4
        %v9283 = vshll.u32 %v9091, 16
        %v9285 = vrot.slane %v9283, 5
        %v9286 = vsel %vm3099, %v9281, %v9285
        %v9288 = vshrl.u32 %v9092, 16
        %v9290 = vrot.slane %v9288, 4
        %v9291 = vshll.u32 %v9092, 16
        %v9293 = vrot.slane %v9291, 5
        %v9294 = vor.u32 %v9290, %v9293
        %v9295 = vrot.slane %v9294, 4
        %v9297 = vshll.u32 %v9093, 16
        %v9299 = vrot.slane %v9297, 5
        %v9300 = vsel %vm3099, %v9295, %v9299
        %v9301 = vshrl.u32 %v9093, 16
        %v9303 = vrot.slane %v9301, 4
        %v9304 = vor.u32 %v9303, %v9299
        %v9305 = vrot.slane %v9304, 4
        %v9307 = vshll.u32 %v9094, 16
        %v9309 = vrot.slane %v9307, 5
        %v9310 = vsel %vm3099, %v9305, %v9309
        %v9312 = vshrl.u32 %v9095, 16
        %v9314 = vrot.slane %v9312, 4
        %v9315 = vshll.u32 %v9095, 16
        %v9317 = vrot.slane %v9315, 5
        %v9318 = vor.u32 %v9314, %v9317
        %v9319 = vrot.slane %v9318, 4
        %v9321 = vshll.u32 %v9096, 16
        %v9323 = vrot.slane %v9321, 5
        %v9324 = vsel %vm3099, %v9319, %v9323
        %v9325 = vshrl.u32 %v9096, 16
        %v9327 = vrot.slane %v9325, 4
        %v9328 = vor.u32 %v9327, %v9323
        %v9329 = vrot.slane %v9328, 4
        %v9331 = vshll.u32 %v9097, 16
        %v9333 = vrot.slane %v9331, 5
        %v9334 = vsel %vm3099, %v9329, %v9333
        %v9336 = vshrl.u32 %v9098, 16
        %v9338 = vrot.slane %v9336, 4
        %v9339 = vshll.u32 %v9098, 16
        %v9341 = vrot.slane %v9339, 5
        %v9342 = vor.u32 %v9338, %v9341
        %v9343 = vrot.slane %v9342, 4
        %v9345 = vshll.u32 %v9099, 16
        %v9347 = vrot.slane %v9345, 5
        %v9348 = vsel %vm3099, %v9343, %v9347
        %v9349 = vshrl.u32 %v9099, 16
        %v9351 = vrot.slane %v9349, 4
        %v9352 = vor.u32 %v9351, %v9347
        %v9353 = vrot.slane %v9352, 4
        %v9355 = vshll.u32 %v9100, 16
        %v9357 = vrot.slane %v9355, 5
        %v9358 = vsel %vm3099, %v9353, %v9357
        %v9360 = vshrl.u32 %v9101, 16
        %v9362 = vrot.slane %v9360, 4
        %v9363 = vshll.u32 %v9101, 16
        %v9365 = vrot.slane %v9363, 5
        %v9366 = vor.u32 %v9362, %v9365
        %v9367 = vrot.slane %v9366, 4
        %v9369 = vshll.u32 %v9102, 16
        %v9371 = vrot.slane %v9369, 5
        %v9372 = vsel %vm3099, %v9367, %v9371
        %v9373 = vshrl.u32 %v9102, 16
        %v9375 = vrot.slane %v9373, 4
        %v9376 = vor.u32 %v9375, %v9371
        %v9377 = vrot.slane %v9376, 4
        %v9379 = vshll.u32 %v9103, 16
        %v9381 = vrot.slane %v9379, 5
        %v9382 = vsel %vm3099, %v9377, %v9381
        %v9384 = vshrl.u32 %v9104, 16
        %v9386 = vrot.slane %v9384, 4
        %v9387 = vshll.u32 %v9104, 16
        %v9389 = vrot.slane %v9387, 5
        %v9390 = vor.u32 %v9386, %v9389
        %v9391 = vrot.slane %v9390, 4
        %v9393 = vshll.u32 %v9105, 16
        %v9395 = vrot.slane %v9393, 5
        %v9396 = vsel %vm3099, %v9391, %v9395
        %v9397 = vshrl.u32 %v9105, 16
        %v9399 = vrot.slane %v9397, 4
        %v9400 = vor.u32 %v9399, %v9395
        %v9401 = vrot.slane %v9400, 4
        %v9403 = vshll.u32 %v9106, 16
        %v9405 = vrot.slane %v9403, 5
        %v9406 = vsel %vm3099, %v9401, %v9405
        %v9408 = vshrl.u32 %v9107, 16
        %v9410 = vrot.slane %v9408, 4
        %v9411 = vshll.u32 %v9107, 16
        %v9413 = vrot.slane %v9411, 5
        %v9414 = vor.u32 %v9410, %v9413
        %v9415 = vrot.slane %v9414, 4
        %v9417 = vshll.u32 %v9108, 16
        %v9419 = vrot.slane %v9417, 5
        %v9420 = vsel %vm3099, %v9415, %v9419
        %v9421 = vshrl.u32 %v9108, 16
        %v9423 = vrot.slane %v9421, 4
        %v9424 = vor.u32 %v9423, %v9419
        %v9425 = vrot.slane %v9424, 4
        %v9427 = vshll.u32 %v9109, 16
        %v9429 = vrot.slane %v9427, 5
        %v9430 = vsel %vm3099, %v9425, %v9429
        %v9432 = vshrl.u32 %v9110, 16
        %v9434 = vrot.slane %v9432, 4
        %v9435 = vshll.u32 %v9110, 16
        %v9437 = vrot.slane %v9435, 5
        %v9438 = vor.u32 %v9434, %v9437
        %v9439 = vrot.slane %v9438, 4
        %v9441 = vshll.u32 %v9111, 16
        %v9443 = vrot.slane %v9441, 5
        %v9444 = vsel %vm3099, %v9439, %v9443
        %v9445 = vshrl.u32 %v9111, 16
        %v9447 = vrot.slane %v9445, 4
        %v9448 = vor.u32 %v9447, %v9443
        %v9449 = vrot.slane %v9448, 4
        %v9451 = vshll.u32 %v9112, 16
        %v9453 = vrot.slane %v9451, 5
        %v9454 = vsel %vm3099, %v9449, %v9453
        %v9456 = vshrl.u32 %v9113, 16
        %v9458 = vrot.slane %v9456, 4
        %v9459 = vshll.u32 %v9113, 16
        %v9461 = vrot.slane %v9459, 5
        %v9462 = vor.u32 %v9458, %v9461
        %v9463 = vrot.slane %v9462, 4
        %v9465 = vshll.u32 %v9114, 16
        %v9467 = vrot.slane %v9465, 5
        %v9468 = vsel %vm3099, %v9463, %v9467
        %v9469 = vshrl.u32 %v9114, 16
        %v9471 = vrot.slane %v9469, 4
        %v9472 = vor.u32 %v9471, %v9467
        %v9473 = vrot.slane %v9472, 4
        %v9475 = vshll.u32 %v9115, 16
        %v9477 = vrot.slane %v9475, 5
        %v9478 = vsel %vm3099, %v9473, %v9477
        %v9480 = vshrl.u32 %v9116, 16
        %v9482 = vrot.slane %v9480, 4
        %v9483 = vshll.u32 %v9116, 16
        %v9485 = vrot.slane %v9483, 5
        %v9486 = vor.u32 %v9482, %v9485
        %v9487 = vrot.slane %v9486, 4
        %v9489 = vshll.u32 %v9117, 16
        %v9491 = vrot.slane %v9489, 5
        %v9492 = vsel %vm3099, %v9487, %v9491
        %v9493 = vshrl.u32 %v9117, 16
        %v9495 = vrot.slane %v9493, 4
        %v9496 = vor.u32 %v9495, %v9491
        %v9497 = vrot.slane %v9496, 4
        %v9499 = vshll.u32 %v9118, 16
        %v9501 = vrot.slane %v9499, 5
        %v9502 = vsel %vm3099, %v9497, %v9501
        %v9503 = vld [vmem:[#allocation5 + $0x100] sm:$0xf]
        %v9504 = vld [vmem:[#allocation5 + $0x104] sm:$0xf]
        %v9505 = vld [vmem:[#allocation5 + $0x108] sm:$0xf]
        %v9506 = vld [vmem:[#allocation5 + $0x10c] sm:$0xf]
        %v9507 = vld [vmem:[#allocation5 + $0x110] sm:$0xf]
        %v9508 = vld [vmem:[#allocation5 + $0x114] sm:$0xf]
        %v9509 = vld [vmem:[#allocation5 + $0x118] sm:$0xf]
        %v9510 = vld [vmem:[#allocation5 + $0x11c] sm:$0xf]
        %v9511 = vld [vmem:[#allocation5 + $0x120] sm:$0xf]
        %v9512 = vld [vmem:[#allocation5 + $0x124] sm:$0xf]
        %v9513 = vld [vmem:[#allocation5 + $0x128] sm:$0xf]
        %v9514 = vld [vmem:[#allocation5 + $0x12c] sm:$0xf]
        %v9515 = vld [vmem:[#allocation5 + $0x130] sm:$0xf]
        %v9516 = vld [vmem:[#allocation5 + $0x134] sm:$0xf]
        %v9517 = vld [vmem:[#allocation5 + $0x138] sm:$0xf]
        %v9518 = vld [vmem:[#allocation5 + $0x13c] sm:$0xf]
        %v9519 = vunpack.c.l.b16 %v9132
        %v9520 = vunpack.c.l.b16 %v9142
        %v9521 = vunpack.c.l.b16 %v9156
        %v9522 = vunpack.c.l.b16 %v9166
        %v9523 = vunpack.c.l.b16 %v9180
        %v9524 = vunpack.c.l.b16 %v9190
        %v9525 = vunpack.c.l.b16 %v9204
        %v9526 = vunpack.c.l.b16 %v9214
        %v9527 = vunpack.c.l.b16 %v9228
        %v9528 = vunpack.c.l.b16 %v9238
        %v9529 = vunpack.c.l.b16 %v9252
        %v9530 = vunpack.c.l.b16 %v9262
        %v9531 = vunpack.c.l.b16 %v9276
        %v9532 = vunpack.c.l.b16 %v9286
        %v9533 = vunpack.c.l.b16 %v9300
        %v9534 = vunpack.c.l.b16 %v9310
        %v9535 = vunpack.c.l.b16 %v9324
        %v9536 = vunpack.c.l.b16 %v9334
        %v9537 = vunpack.c.l.b16 %v9348
        %v9538 = vunpack.c.l.b16 %v9358
        %v9539 = vunpack.c.l.b16 %v9372
        %v9540 = vunpack.c.l.b16 %v9382
        %v9541 = vunpack.c.l.b16 %v9396
        %v9542 = vunpack.c.l.b16 %v9406
        %v9543 = vunpack.c.l.b16 %v9420
        %v9544 = vunpack.c.l.b16 %v9430
        %v9545 = vunpack.c.l.b16 %v9444
        %v9546 = vunpack.c.l.b16 %v9454
        %v9547 = vunpack.c.l.b16 %v9468
        %v9548 = vunpack.c.l.b16 %v9478
        %v9549 = vunpack.c.l.b16 %v9492
        %v9550 = vunpack.c.l.b16 %v9502
        %v9551 = vpack.c.b16 %v9520, %v9519
        %v9552 = vpack.c.b16 %v9522, %v9521
        %v9553 = vpack.c.b16 %v9524, %v9523
        %v9554 = vpack.c.b16 %v9526, %v9525
        %v9555 = vpack.c.b16 %v9528, %v9527
        %v9556 = vpack.c.b16 %v9530, %v9529
        %v9557 = vpack.c.b16 %v9532, %v9531
        %v9558 = vpack.c.b16 %v9534, %v9533
        %v9559 = vpack.c.b16 %v9536, %v9535
        %v9560 = vpack.c.b16 %v9538, %v9537
        %v9561 = vpack.c.b16 %v9540, %v9539
        %v9562 = vpack.c.b16 %v9542, %v9541
        %v9563 = vpack.c.b16 %v9544, %v9543
        %v9564 = vpack.c.b16 %v9546, %v9545
        %v9565 = vpack.c.b16 %v9548, %v9547
        %v9566 = vpack.c.b16 %v9550, %v9549
        %v9599 = vunpack.c.l.b16 %v9503
        %v9600 = vunpack.c.l.b16 %v9504
        %v9601 = vunpack.c.l.b16 %v9505
        %v9602 = vunpack.c.l.b16 %v9506
        %v9603 = vunpack.c.l.b16 %v9507
        %v9604 = vunpack.c.l.b16 %v9508
        %v9605 = vunpack.c.l.b16 %v9509
        %v9606 = vunpack.c.l.b16 %v9510
        %v9607 = vunpack.c.l.b16 %v9511
        %v9608 = vunpack.c.l.b16 %v9512
        %v9609 = vunpack.c.l.b16 %v9513
        %v9610 = vunpack.c.l.b16 %v9514
        %v9611 = vunpack.c.l.b16 %v9515
        %v9612 = vunpack.c.l.b16 %v9516
        %v9613 = vunpack.c.l.b16 %v9517
        %v9614 = vunpack.c.l.b16 %v9518
        %v9615 = vpack.c.b16 %v9600, %v9599
        %v9616 = vpack.c.b16 %v9602, %v9601
        %v9617 = vpack.c.b16 %v9604, %v9603
        %v9618 = vpack.c.b16 %v9606, %v9605
        %v9619 = vpack.c.b16 %v9608, %v9607
        %v9620 = vpack.c.b16 %v9610, %v9609
        %v9621 = vpack.c.b16 %v9612, %v9611
        %v9622 = vpack.c.b16 %v9614, %v9613
        %9631 = vmatprep.subr.bf16.mxu0 0
        %9632 = vmatpush1.bf16.msra.mxu0 %v9622
        %9633 = vmatprep.subr.bf16.mxu0 0
        %9634 = vmatpush1.bf16.msra.mxu0 %v9621
        %9635 = vmatprep.subr.bf16.mxu0 0
        %9636 = vmatpush1.bf16.msra.mxu0 %v9620
        %9637 = vmatprep.subr.bf16.mxu0 0
        %9638 = vmatpush1.bf16.msra.mxu0 %v9619
        %9639 = vmatprep.subr.bf16.mxu0 0
        %9640 = vmatpush1.bf16.msra.mxu0 %v9618
        %9641 = vmatprep.subr.bf16.mxu0 0
        %9642 = vmatpush1.bf16.msra.mxu0 %v9617
        %9643 = vmatprep.subr.bf16.mxu0 0
        %9644 = vmatpush1.bf16.msra.mxu0 %v9616
        %9645 = vmatprep.subr.bf16.mxu0 0
        %9646 = vmatpush1.bf16.msra.mxu0 %v9615
        %9647 = vmatprep.subr.bf16.mxu0 0
        %9648 = vmatpush2.bf16.msra.mxu0 0
        %9649 = vmatprep.subr.bf16.mxu0 0
        %9650 = vmatpush2.bf16.msra.mxu0 0
        %9651 = vmatprep.subr.bf16.mxu0 0
        %9652 = vmatpush2.bf16.msra.mxu0 0
        %9653 = vmatprep.subr.bf16.mxu0 0
        %9654 = vmatpush2.bf16.msra.mxu0 0
        %9655 = vmatprep.subr.bf16.mxu0 0
        %9656 = vmatpush2.bf16.msra.mxu0 0
        %9657 = vmatprep.subr.bf16.mxu0 0
        %9658 = vmatpush2.bf16.msra.mxu0 0
        %9659 = vmatprep.subr.bf16.mxu0 0
        %9660 = vmatpush2.bf16.msra.mxu0 0
        %9661 = vmatprep.subr.bf16.mxu0 0
        %9662 = vmatpush2.bf16.msra.mxu0 0
        %9663 = vmatprep.mubr.bf16.mxu0 0
        %9664 = vmatmul.mubr.bf16.gmra.mxu0 %v9551
        %v9665 = vpop.f32.mrf.mxu0
        %v9666 = vadd.f32 0.0, %v9665
        %v9667 = vpop.f32.mrf.mxu0
        %v9668 = vpop.f32.mrf.mxu0
        %v9669 = vadd.f32 0.0, %v9668
        %v9670 = vpop.f32.mrf.mxu0
        %9671 = vmatprep.mubr.bf16.mxu0 0
        %9672 = vmatmul.mubr.bf16.gmra.mxu0 %v9552
        %v9673 = vpop.f32.mrf.mxu0
        %v9674 = vadd.f32 0.0, %v9673
        %v9675 = vpop.f32.mrf.mxu0
        %v9676 = vpop.f32.mrf.mxu0
        %v9677 = vadd.f32 0.0, %v9676
        %v9678 = vpop.f32.mrf.mxu0
        %9679 = vmatprep.mubr.bf16.mxu0 0
        %9680 = vmatmul.mubr.bf16.gmra.mxu0 %v9553
        %v9681 = vpop.f32.mrf.mxu0
        %v9682 = vadd.f32 0.0, %v9681
        %v9683 = vpop.f32.mrf.mxu0
        %v9684 = vpop.f32.mrf.mxu0
        %v9685 = vadd.f32 0.0, %v9684
        %v9686 = vpop.f32.mrf.mxu0
        %9687 = vmatprep.mubr.bf16.mxu0 0
        %9688 = vmatmul.mubr.bf16.gmra.mxu0 %v9554
        %v9689 = vpop.f32.mrf.mxu0
        %v9690 = vadd.f32 0.0, %v9689
        %v9691 = vpop.f32.mrf.mxu0
        %v9692 = vpop.f32.mrf.mxu0
        %v9693 = vadd.f32 0.0, %v9692
        %v9694 = vpop.f32.mrf.mxu0
        %9695 = vmatprep.mubr.bf16.mxu0 0
        %9696 = vmatmul.mubr.bf16.gmra.mxu0 %v9555
        %v9697 = vpop.f32.mrf.mxu0
        %v9698 = vadd.f32 0.0, %v9697
        %v9699 = vpop.f32.mrf.mxu0
        %v9700 = vpop.f32.mrf.mxu0
        %v9701 = vadd.f32 0.0, %v9700
        %v9702 = vpop.f32.mrf.mxu0
        %9703 = vmatprep.mubr.bf16.mxu0 0
        %9704 = vmatmul.mubr.bf16.gmra.mxu0 %v9556
        %v9705 = vpop.f32.mrf.mxu0
        %v9706 = vadd.f32 0.0, %v9705
        %v9707 = vpop.f32.mrf.mxu0
        %v9708 = vpop.f32.mrf.mxu0
        %v9709 = vadd.f32 0.0, %v9708
        %v9710 = vpop.f32.mrf.mxu0
        %9711 = vmatprep.mubr.bf16.mxu0 0
        %9712 = vmatmul.mubr.bf16.gmra.mxu0 %v9557
        %v9713 = vpop.f32.mrf.mxu0
        %v9714 = vadd.f32 0.0, %v9713
        %v9715 = vpop.f32.mrf.mxu0
        %v9716 = vpop.f32.mrf.mxu0
        %v9717 = vadd.f32 0.0, %v9716
        %v9718 = vpop.f32.mrf.mxu0
        %9719 = vmatprep.mubr.bf16.mxu0 0
        %9720 = vmatmul.mubr.bf16.gmra.mxu0 %v9558
        %v9721 = vpop.f32.mrf.mxu0
        %v9722 = vadd.f32 0.0, %v9721
        %v9723 = vpop.f32.mrf.mxu0
        %v9724 = vpop.f32.mrf.mxu0
        %v9725 = vadd.f32 0.0, %v9724
        %v9726 = vpop.f32.mrf.mxu0
        %9727 = vmatprep.mubr.bf16.mxu0 0
        %9728 = vmatmul.mubr.bf16.gmra.mxu0 %v9559
        %v9729 = vpop.f32.mrf.mxu0
        %v9730 = vadd.f32 0.0, %v9729
        %v9731 = vpop.f32.mrf.mxu0
        %v9732 = vpop.f32.mrf.mxu0
        %v9733 = vadd.f32 0.0, %v9732
        %v9734 = vpop.f32.mrf.mxu0
        %9735 = vmatprep.mubr.bf16.mxu0 0
        %9736 = vmatmul.mubr.bf16.gmra.mxu0 %v9560
        %v9737 = vpop.f32.mrf.mxu0
        %v9738 = vadd.f32 0.0, %v9737
        %v9739 = vpop.f32.mrf.mxu0
        %v9740 = vpop.f32.mrf.mxu0
        %v9741 = vadd.f32 0.0, %v9740
        %v9742 = vpop.f32.mrf.mxu0
        %9743 = vmatprep.mubr.bf16.mxu0 0
        %9744 = vmatmul.mubr.bf16.gmra.mxu0 %v9561
        %v9745 = vpop.f32.mrf.mxu0
        %v9746 = vadd.f32 0.0, %v9745
        %v9747 = vpop.f32.mrf.mxu0
        %v9748 = vpop.f32.mrf.mxu0
        %v9749 = vadd.f32 0.0, %v9748
        %v9750 = vpop.f32.mrf.mxu0
        %9751 = vmatprep.mubr.bf16.mxu0 0
        %9752 = vmatmul.mubr.bf16.gmra.mxu0 %v9562
        %v9753 = vpop.f32.mrf.mxu0
        %v9754 = vadd.f32 0.0, %v9753
        %v9755 = vpop.f32.mrf.mxu0
        %v9756 = vpop.f32.mrf.mxu0
        %v9757 = vadd.f32 0.0, %v9756
        %v9758 = vpop.f32.mrf.mxu0
        %9759 = vmatprep.mubr.bf16.mxu0 0
        %9760 = vmatmul.mubr.bf16.gmra.mxu0 %v9563
        %v9761 = vpop.f32.mrf.mxu0
        %v9762 = vadd.f32 0.0, %v9761
        %v9763 = vpop.f32.mrf.mxu0
        %v9764 = vpop.f32.mrf.mxu0
        %v9765 = vadd.f32 0.0, %v9764
        %v9766 = vpop.f32.mrf.mxu0
        %9767 = vmatprep.mubr.bf16.mxu0 0
        %9768 = vmatmul.mubr.bf16.gmra.mxu0 %v9564
        %v9769 = vpop.f32.mrf.mxu0
        %v9770 = vadd.f32 0.0, %v9769
        %v9771 = vpop.f32.mrf.mxu0
        %v9772 = vpop.f32.mrf.mxu0
        %v9773 = vadd.f32 0.0, %v9772
        %v9774 = vpop.f32.mrf.mxu0
        %9775 = vmatprep.mubr.bf16.mxu0 0
        %9776 = vmatmul.mubr.bf16.gmra.mxu0 %v9565
        %v9777 = vpop.f32.mrf.mxu0
        %v9778 = vadd.f32 0.0, %v9777
        %v9779 = vpop.f32.mrf.mxu0
        %v9780 = vpop.f32.mrf.mxu0
        %v9781 = vadd.f32 0.0, %v9780
        %v9782 = vpop.f32.mrf.mxu0
        %9783 = vmatprep.mubr.bf16.mxu0 0
        %9784 = vmatmul.mubr.bf16.gmra.mxu0 %v9566
        %v9785 = vpop.f32.mrf.mxu0
        %v9786 = vadd.f32 0.0, %v9785
        %v9787 = vpop.f32.mrf.mxu0
        %v9788 = vpop.f32.mrf.mxu0
        %v9789 = vadd.f32 0.0, %v9788
        %v9790 = vpop.f32.mrf.mxu0
        %9791 = vdwg.mxu0
        %v9792 = vadd.f32 %v9039, %v9666
        %v9793 = vadd.f32 %v9040, %v9669
        %v9794 = vadd.f32 %v9041, %v9674
        %v9795 = vadd.f32 %v9042, %v9677
        %v9796 = vadd.f32 %v9043, %v9682
        %v9797 = vadd.f32 %v9044, %v9685
        %v9798 = vadd.f32 %v9045, %v9690
        %v9799 = vadd.f32 %v9046, %v9693
        %v9800 = vadd.f32 %v9047, %v9698
        %v9801 = vadd.f32 %v9048, %v9701
        %v9802 = vadd.f32 %v9049, %v9706
        %v9803 = vadd.f32 %v9050, %v9709
        %v9804 = vadd.f32 %v9051, %v9714
        %v9805 = vadd.f32 %v9052, %v9717
        %v9806 = vadd.f32 %v9053, %v9722
        %v9807 = vadd.f32 %v9054, %v9725
        %v9808 = vadd.f32 %v9055, %v9730
        %v9809 = vadd.f32 %v9056, %v9733
        %v9810 = vadd.f32 %v9057, %v9738
        %v9811 = vadd.f32 %v9058, %v9741
        %v9812 = vadd.f32 %v9059, %v9746
        %v9813 = vadd.f32 %v9060, %v9749
        %v9814 = vadd.f32 %v9061, %v9754
        %v9815 = vadd.f32 %v9062, %v9757
        %v9816 = vadd.f32 %v9063, %v9762
        %v9817 = vadd.f32 %v9064, %v9765
        %v9818 = vadd.f32 %v9065, %v9770
        %v9819 = vadd.f32 %v9066, %v9773
        %v9820 = vadd.f32 %v9067, %v9778
        %v9821 = vadd.f32 %v9068, %v9781
        %v9822 = vadd.f32 %v9069, %v9786
        %v9823 = vadd.f32 %v9070, %v9789
        %v9824 = vld [vmem:[%s7048] sm:$0xe]
        %v9825 = vld [vmem:[%s7048 + $0xc] sm:$0xe]
        %v9826 = vld [vmem:[%s7048 + $0x18] sm:$0xe]
        %v9827 = vld [vmem:[%s7048 + $0x24] sm:$0xe]
        %v9828 = vld [vmem:[%s7048 + $0x30] sm:$0xe]
        %v9829 = vld [vmem:[%s7048 + $0x3c] sm:$0xe]
        %v9830 = vld [vmem:[%s7048 + $0x48] sm:$0xe]
        %v9831 = vld [vmem:[%s7048 + $0x54] sm:$0xe]
        %v9832 = vld [vmem:[%s7048 + $0x60] sm:$0xe]
        %v9833 = vld [vmem:[%s7048 + $0x6c] sm:$0xe]
        %v9834 = vld [vmem:[%s7048 + $0x78] sm:$0xe]
        %v9835 = vld [vmem:[%s7048 + $0x84] sm:$0xe]
        %v9836 = vld [vmem:[%s7048 + $0x90] sm:$0xe]
        %v9837 = vld [vmem:[%s7048 + $0x9c] sm:$0xe]
        %v9838 = vld [vmem:[%s7048 + $0xa8] sm:$0xe]
        %v9839 = vld [vmem:[%s7048 + $0xb4] sm:$0xe]
        %v9888 = vrot.slane %v9824, 5
        %v9889 = vrot.slane %v9888, 4
        %v9890 = vrot.slane %v9072, 5
        %v9891 = vsel %vm3711, %v9889, %v9890
        %v9892 = vrot.slane %v9890, 4
        %v9893 = vrot.slane %v9073, 5
        %v9894 = vsel %vm3711, %v9892, %v9893
        %v9895 = vrot.slane %v9825, 5
        %v9896 = vrot.slane %v9895, 4
        %v9897 = vrot.slane %v9075, 5
        %v9898 = vsel %vm3711, %v9896, %v9897
        %v9899 = vrot.slane %v9897, 4
        %v9900 = vrot.slane %v9076, 5
        %v9901 = vsel %vm3711, %v9899, %v9900
        %v9902 = vrot.slane %v9826, 5
        %v9903 = vrot.slane %v9902, 4
        %v9904 = vrot.slane %v9078, 5
        %v9905 = vsel %vm3711, %v9903, %v9904
        %v9906 = vrot.slane %v9904, 4
        %v9907 = vrot.slane %v9079, 5
        %v9908 = vsel %vm3711, %v9906, %v9907
        %v9909 = vrot.slane %v9827, 5
        %v9910 = vrot.slane %v9909, 4
        %v9911 = vrot.slane %v9081, 5
        %v9912 = vsel %vm3711, %v9910, %v9911
        %v9913 = vrot.slane %v9911, 4
        %v9914 = vrot.slane %v9082, 5
        %v9915 = vsel %vm3711, %v9913, %v9914
        %v9916 = vrot.slane %v9828, 5
        %v9917 = vrot.slane %v9916, 4
        %v9918 = vrot.slane %v9084, 5
        %v9919 = vsel %vm3711, %v9917, %v9918
        %v9920 = vrot.slane %v9918, 4
        %v9921 = vrot.slane %v9085, 5
        %v9922 = vsel %vm3711, %v9920, %v9921
        %v9923 = vrot.slane %v9829, 5
        %v9924 = vrot.slane %v9923, 4
        %v9925 = vrot.slane %v9087, 5
        %v9926 = vsel %vm3711, %v9924, %v9925
        %v9927 = vrot.slane %v9925, 4
        %v9928 = vrot.slane %v9088, 5
        %v9929 = vsel %vm3711, %v9927, %v9928
        %v9930 = vrot.slane %v9830, 5
        %v9931 = vrot.slane %v9930, 4
        %v9932 = vrot.slane %v9090, 5
        %v9933 = vsel %vm3711, %v9931, %v9932
        %v9934 = vrot.slane %v9932, 4
        %v9935 = vrot.slane %v9091, 5
        %v9936 = vsel %vm3711, %v9934, %v9935
        %v9937 = vrot.slane %v9831, 5
        %v9938 = vrot.slane %v9937, 4
        %v9939 = vrot.slane %v9093, 5
        %v9940 = vsel %vm3711, %v9938, %v9939
        %v9941 = vrot.slane %v9939, 4
        %v9942 = vrot.slane %v9094, 5
        %v9943 = vsel %vm3711, %v9941, %v9942
        %v9944 = vrot.slane %v9832, 5
        %v9945 = vrot.slane %v9944, 4
        %v9946 = vrot.slane %v9096, 5
        %v9947 = vsel %vm3711, %v9945, %v9946
        %v9948 = vrot.slane %v9946, 4
        %v9949 = vrot.slane %v9097, 5
        %v9950 = vsel %vm3711, %v9948, %v9949
        %v9951 = vrot.slane %v9833, 5
        %v9952 = vrot.slane %v9951, 4
        %v9953 = vrot.slane %v9099, 5
        %v9954 = vsel %vm3711, %v9952, %v9953
        %v9955 = vrot.slane %v9953, 4
        %v9956 = vrot.slane %v9100, 5
        %v9957 = vsel %vm3711, %v9955, %v9956
        %v9958 = vrot.slane %v9834, 5
        %v9959 = vrot.slane %v9958, 4
        %v9960 = vrot.slane %v9102, 5
        %v9961 = vsel %vm3711, %v9959, %v9960
        %v9962 = vrot.slane %v9960, 4
        %v9963 = vrot.slane %v9103, 5
        %v9964 = vsel %vm3711, %v9962, %v9963
        %v9965 = vrot.slane %v9835, 5
        %v9966 = vrot.slane %v9965, 4
        %v9967 = vrot.slane %v9105, 5
        %v9968 = vsel %vm3711, %v9966, %v9967
        %v9969 = vrot.slane %v9967, 4
        %v9970 = vrot.slane %v9106, 5
        %v9971 = vsel %vm3711, %v9969, %v9970
        %v9972 = vrot.slane %v9836, 5
        %v9973 = vrot.slane %v9972, 4
        %v9974 = vrot.slane %v9108, 5
        %v9975 = vsel %vm3711, %v9973, %v9974
        %v9976 = vrot.slane %v9974, 4
        %v9977 = vrot.slane %v9109, 5
        %v9978 = vsel %vm3711, %v9976, %v9977
        %v9979 = vrot.slane %v9837, 5
        %v9980 = vrot.slane %v9979, 4
        %v9981 = vrot.slane %v9111, 5
        %v9982 = vsel %vm3711, %v9980, %v9981
        %v9983 = vrot.slane %v9981, 4
        %v9984 = vrot.slane %v9112, 5
        %v9985 = vsel %vm3711, %v9983, %v9984
        %v9986 = vrot.slane %v9838, 5
        %v9987 = vrot.slane %v9986, 4
        %v9988 = vrot.slane %v9114, 5
        %v9989 = vsel %vm3711, %v9987, %v9988
        %v9990 = vrot.slane %v9988, 4
        %v9991 = vrot.slane %v9115, 5
        %v9992 = vsel %vm3711, %v9990, %v9991
        %v9993 = vrot.slane %v9839, 5
        %v9994 = vrot.slane %v9993, 4
        %v9995 = vrot.slane %v9117, 5
        %v9996 = vsel %vm3711, %v9994, %v9995
        %v9997 = vrot.slane %v9995, 4
        %v9998 = vrot.slane %v9118, 5
        %v9999 = vsel %vm3711, %v9997, %v9998
        %v10000 = vld [vmem:[#allocation5 + $0x140] sm:$0xf]
        %v10001 = vld [vmem:[#allocation5 + $0x144] sm:$0xf]
        %v10002 = vld [vmem:[#allocation5 + $0x148] sm:$0xf]
        %v10003 = vld [vmem:[#allocation5 + $0x14c] sm:$0xf]
        %v10004 = vld [vmem:[#allocation5 + $0x150] sm:$0xf]
        %v10005 = vld [vmem:[#allocation5 + $0x154] sm:$0xf]
        %v10006 = vld [vmem:[#allocation5 + $0x158] sm:$0xf]
        %v10007 = vld [vmem:[#allocation5 + $0x15c] sm:$0xf]
        %v10008 = vld [vmem:[#allocation5 + $0x160] sm:$0xf]
        %v10009 = vld [vmem:[#allocation5 + $0x164] sm:$0xf]
        %v10010 = vld [vmem:[#allocation5 + $0x168] sm:$0xf]
        %v10011 = vld [vmem:[#allocation5 + $0x16c] sm:$0xf]
        %v10012 = vld [vmem:[#allocation5 + $0x170] sm:$0xf]
        %v10013 = vld [vmem:[#allocation5 + $0x174] sm:$0xf]
        %v10014 = vld [vmem:[#allocation5 + $0x178] sm:$0xf]
        %v10015 = vld [vmem:[#allocation5 + $0x17c] sm:$0xf]
        %v10016 = vunpack.c.l.b16 %v9891
        %v10017 = vunpack.c.l.b16 %v9894
        %v10018 = vunpack.c.l.b16 %v9898
        %v10019 = vunpack.c.l.b16 %v9901
        %v10020 = vunpack.c.l.b16 %v9905
        %v10021 = vunpack.c.l.b16 %v9908
        %v10022 = vunpack.c.l.b16 %v9912
        %v10023 = vunpack.c.l.b16 %v9915
        %v10024 = vunpack.c.l.b16 %v9919
        %v10025 = vunpack.c.l.b16 %v9922
        %v10026 = vunpack.c.l.b16 %v9926
        %v10027 = vunpack.c.l.b16 %v9929
        %v10028 = vunpack.c.l.b16 %v9933
        %v10029 = vunpack.c.l.b16 %v9936
        %v10030 = vunpack.c.l.b16 %v9940
        %v10031 = vunpack.c.l.b16 %v9943
        %v10032 = vunpack.c.l.b16 %v9947
        %v10033 = vunpack.c.l.b16 %v9950
        %v10034 = vunpack.c.l.b16 %v9954
        %v10035 = vunpack.c.l.b16 %v9957
        %v10036 = vunpack.c.l.b16 %v9961
        %v10037 = vunpack.c.l.b16 %v9964
        %v10038 = vunpack.c.l.b16 %v9968
        %v10039 = vunpack.c.l.b16 %v9971
        %v10040 = vunpack.c.l.b16 %v9975
        %v10041 = vunpack.c.l.b16 %v9978
        %v10042 = vunpack.c.l.b16 %v9982
        %v10043 = vunpack.c.l.b16 %v9985
        %v10044 = vunpack.c.l.b16 %v9989
        %v10045 = vunpack.c.l.b16 %v9992
        %v10046 = vunpack.c.l.b16 %v9996
        %v10047 = vunpack.c.l.b16 %v9999
        %v10048 = vpack.c.b16 %v10017, %v10016
        %v10049 = vpack.c.b16 %v10019, %v10018
        %v10050 = vpack.c.b16 %v10021, %v10020
        %v10051 = vpack.c.b16 %v10023, %v10022
        %v10052 = vpack.c.b16 %v10025, %v10024
        %v10053 = vpack.c.b16 %v10027, %v10026
        %v10054 = vpack.c.b16 %v10029, %v10028
        %v10055 = vpack.c.b16 %v10031, %v10030
        %v10056 = vpack.c.b16 %v10033, %v10032
        %v10057 = vpack.c.b16 %v10035, %v10034
        %v10058 = vpack.c.b16 %v10037, %v10036
        %v10059 = vpack.c.b16 %v10039, %v10038
        %v10060 = vpack.c.b16 %v10041, %v10040
        %v10061 = vpack.c.b16 %v10043, %v10042
        %v10062 = vpack.c.b16 %v10045, %v10044
        %v10063 = vpack.c.b16 %v10047, %v10046
        %v10096 = vunpack.c.l.b16 %v10000
        %v10097 = vunpack.c.l.b16 %v10001
        %v10098 = vunpack.c.l.b16 %v10002
        %v10099 = vunpack.c.l.b16 %v10003
        %v10100 = vunpack.c.l.b16 %v10004
        %v10101 = vunpack.c.l.b16 %v10005
        %v10102 = vunpack.c.l.b16 %v10006
        %v10103 = vunpack.c.l.b16 %v10007
        %v10104 = vunpack.c.l.b16 %v10008
        %v10105 = vunpack.c.l.b16 %v10009
        %v10106 = vunpack.c.l.b16 %v10010
        %v10107 = vunpack.c.l.b16 %v10011
        %v10108 = vunpack.c.l.b16 %v10012
        %v10109 = vunpack.c.l.b16 %v10013
        %v10110 = vunpack.c.l.b16 %v10014
        %v10111 = vunpack.c.l.b16 %v10015
        %v10112 = vpack.c.b16 %v10097, %v10096
        %v10113 = vpack.c.b16 %v10099, %v10098
        %v10114 = vpack.c.b16 %v10101, %v10100
        %v10115 = vpack.c.b16 %v10103, %v10102
        %v10116 = vpack.c.b16 %v10105, %v10104
        %v10117 = vpack.c.b16 %v10107, %v10106
        %v10118 = vpack.c.b16 %v10109, %v10108
        %v10119 = vpack.c.b16 %v10111, %v10110
        %10128 = vmatprep.subr.bf16.mxu0 0
        %10129 = vmatpush1.bf16.msra.mxu0 %v10119
        %10130 = vmatprep.subr.bf16.mxu0 0
        %10131 = vmatpush1.bf16.msra.mxu0 %v10118
        %10132 = vmatprep.subr.bf16.mxu0 0
        %10133 = vmatpush1.bf16.msra.mxu0 %v10117
        %10134 = vmatprep.subr.bf16.mxu0 0
        %10135 = vmatpush1.bf16.msra.mxu0 %v10116
        %10136 = vmatprep.subr.bf16.mxu0 0
        %10137 = vmatpush1.bf16.msra.mxu0 %v10115
        %10138 = vmatprep.subr.bf16.mxu0 0
        %10139 = vmatpush1.bf16.msra.mxu0 %v10114
        %10140 = vmatprep.subr.bf16.mxu0 0
        %10141 = vmatpush1.bf16.msra.mxu0 %v10113
        %10142 = vmatprep.subr.bf16.mxu0 0
        %10143 = vmatpush1.bf16.msra.mxu0 %v10112
        %10144 = vmatprep.subr.bf16.mxu0 0
        %10145 = vmatpush2.bf16.msra.mxu0 0
        %10146 = vmatprep.subr.bf16.mxu0 0
        %10147 = vmatpush2.bf16.msra.mxu0 0
        %10148 = vmatprep.subr.bf16.mxu0 0
        %10149 = vmatpush2.bf16.msra.mxu0 0
        %10150 = vmatprep.subr.bf16.mxu0 0
        %10151 = vmatpush2.bf16.msra.mxu0 0
        %10152 = vmatprep.subr.bf16.mxu0 0
        %10153 = vmatpush2.bf16.msra.mxu0 0
        %10154 = vmatprep.subr.bf16.mxu0 0
        %10155 = vmatpush2.bf16.msra.mxu0 0
        %10156 = vmatprep.subr.bf16.mxu0 0
        %10157 = vmatpush2.bf16.msra.mxu0 0
        %10158 = vmatprep.subr.bf16.mxu0 0
        %10159 = vmatpush2.bf16.msra.mxu0 0
        %10160 = vmatprep.mubr.bf16.mxu0 0
        %10161 = vmatmul.mubr.bf16.gmra.mxu0 %v10048
        %v10162 = vpop.f32.mrf.mxu0
        %v10163 = vadd.f32 0.0, %v10162
        %v10164 = vpop.f32.mrf.mxu0
        %v10165 = vpop.f32.mrf.mxu0
        %v10166 = vadd.f32 0.0, %v10165
        %v10167 = vpop.f32.mrf.mxu0
        %10168 = vmatprep.mubr.bf16.mxu0 0
        %10169 = vmatmul.mubr.bf16.gmra.mxu0 %v10049
        %v10170 = vpop.f32.mrf.mxu0
        %v10171 = vadd.f32 0.0, %v10170
        %v10172 = vpop.f32.mrf.mxu0
        %v10173 = vpop.f32.mrf.mxu0
        %v10174 = vadd.f32 0.0, %v10173
        %v10175 = vpop.f32.mrf.mxu0
        %10176 = vmatprep.mubr.bf16.mxu0 0
        %10177 = vmatmul.mubr.bf16.gmra.mxu0 %v10050
        %v10178 = vpop.f32.mrf.mxu0
        %v10179 = vadd.f32 0.0, %v10178
        %v10180 = vpop.f32.mrf.mxu0
        %v10181 = vpop.f32.mrf.mxu0
        %v10182 = vadd.f32 0.0, %v10181
        %v10183 = vpop.f32.mrf.mxu0
        %10184 = vmatprep.mubr.bf16.mxu0 0
        %10185 = vmatmul.mubr.bf16.gmra.mxu0 %v10051
        %v10186 = vpop.f32.mrf.mxu0
        %v10187 = vadd.f32 0.0, %v10186
        %v10188 = vpop.f32.mrf.mxu0
        %v10189 = vpop.f32.mrf.mxu0
        %v10190 = vadd.f32 0.0, %v10189
        %v10191 = vpop.f32.mrf.mxu0
        %10192 = vmatprep.mubr.bf16.mxu0 0
        %10193 = vmatmul.mubr.bf16.gmra.mxu0 %v10052
        %v10194 = vpop.f32.mrf.mxu0
        %v10195 = vadd.f32 0.0, %v10194
        %v10196 = vpop.f32.mrf.mxu0
        %v10197 = vpop.f32.mrf.mxu0
        %v10198 = vadd.f32 0.0, %v10197
        %v10199 = vpop.f32.mrf.mxu0
        %10200 = vmatprep.mubr.bf16.mxu0 0
        %10201 = vmatmul.mubr.bf16.gmra.mxu0 %v10053
        %v10202 = vpop.f32.mrf.mxu0
        %v10203 = vadd.f32 0.0, %v10202
        %v10204 = vpop.f32.mrf.mxu0
        %v10205 = vpop.f32.mrf.mxu0
        %v10206 = vadd.f32 0.0, %v10205
        %v10207 = vpop.f32.mrf.mxu0
        %10208 = vmatprep.mubr.bf16.mxu0 0
        %10209 = vmatmul.mubr.bf16.gmra.mxu0 %v10054
        %v10210 = vpop.f32.mrf.mxu0
        %v10211 = vadd.f32 0.0, %v10210
        %v10212 = vpop.f32.mrf.mxu0
        %v10213 = vpop.f32.mrf.mxu0
        %v10214 = vadd.f32 0.0, %v10213
        %v10215 = vpop.f32.mrf.mxu0
        %10216 = vmatprep.mubr.bf16.mxu0 0
        %10217 = vmatmul.mubr.bf16.gmra.mxu0 %v10055
        %v10218 = vpop.f32.mrf.mxu0
        %v10219 = vadd.f32 0.0, %v10218
        %v10220 = vpop.f32.mrf.mxu0
        %v10221 = vpop.f32.mrf.mxu0
        %v10222 = vadd.f32 0.0, %v10221
        %v10223 = vpop.f32.mrf.mxu0
        %10224 = vmatprep.mubr.bf16.mxu0 0
        %10225 = vmatmul.mubr.bf16.gmra.mxu0 %v10056
        %v10226 = vpop.f32.mrf.mxu0
        %v10227 = vadd.f32 0.0, %v10226
        %v10228 = vpop.f32.mrf.mxu0
        %v10229 = vpop.f32.mrf.mxu0
        %v10230 = vadd.f32 0.0, %v10229
        %v10231 = vpop.f32.mrf.mxu0
        %10232 = vmatprep.mubr.bf16.mxu0 0
        %10233 = vmatmul.mubr.bf16.gmra.mxu0 %v10057
        %v10234 = vpop.f32.mrf.mxu0
        %v10235 = vadd.f32 0.0, %v10234
        %v10236 = vpop.f32.mrf.mxu0
        %v10237 = vpop.f32.mrf.mxu0
        %v10238 = vadd.f32 0.0, %v10237
        %v10239 = vpop.f32.mrf.mxu0
        %10240 = vmatprep.mubr.bf16.mxu0 0
        %10241 = vmatmul.mubr.bf16.gmra.mxu0 %v10058
        %v10242 = vpop.f32.mrf.mxu0
        %v10243 = vadd.f32 0.0, %v10242
        %v10244 = vpop.f32.mrf.mxu0
        %v10245 = vpop.f32.mrf.mxu0
        %v10246 = vadd.f32 0.0, %v10245
        %v10247 = vpop.f32.mrf.mxu0
        %10248 = vmatprep.mubr.bf16.mxu0 0
        %10249 = vmatmul.mubr.bf16.gmra.mxu0 %v10059
        %v10250 = vpop.f32.mrf.mxu0
        %v10251 = vadd.f32 0.0, %v10250
        %v10252 = vpop.f32.mrf.mxu0
        %v10253 = vpop.f32.mrf.mxu0
        %v10254 = vadd.f32 0.0, %v10253
        %v10255 = vpop.f32.mrf.mxu0
        %10256 = vmatprep.mubr.bf16.mxu0 0
        %10257 = vmatmul.mubr.bf16.gmra.mxu0 %v10060
        %v10258 = vpop.f32.mrf.mxu0
        %v10259 = vadd.f32 0.0, %v10258
        %v10260 = vpop.f32.mrf.mxu0
        %v10261 = vpop.f32.mrf.mxu0
        %v10262 = vadd.f32 0.0, %v10261
        %v10263 = vpop.f32.mrf.mxu0
        %10264 = vmatprep.mubr.bf16.mxu0 0
        %10265 = vmatmul.mubr.bf16.gmra.mxu0 %v10061
        %v10266 = vpop.f32.mrf.mxu0
        %v10267 = vadd.f32 0.0, %v10266
        %v10268 = vpop.f32.mrf.mxu0
        %v10269 = vpop.f32.mrf.mxu0
        %v10270 = vadd.f32 0.0, %v10269
        %v10271 = vpop.f32.mrf.mxu0
        %10272 = vmatprep.mubr.bf16.mxu0 0
        %10273 = vmatmul.mubr.bf16.gmra.mxu0 %v10062
        %v10274 = vpop.f32.mrf.mxu0
        %v10275 = vadd.f32 0.0, %v10274
        %v10276 = vpop.f32.mrf.mxu0
        %v10277 = vpop.f32.mrf.mxu0
        %v10278 = vadd.f32 0.0, %v10277
        %v10279 = vpop.f32.mrf.mxu0
        %10280 = vmatprep.mubr.bf16.mxu0 0
        %10281 = vmatmul.mubr.bf16.gmra.mxu0 %v10063
        %v10282 = vpop.f32.mrf.mxu0
        %v10283 = vadd.f32 0.0, %v10282
        %v10284 = vpop.f32.mrf.mxu0
        %v10285 = vpop.f32.mrf.mxu0
        %v10286 = vadd.f32 0.0, %v10285
        %v10287 = vpop.f32.mrf.mxu0
        %10288 = vdwg.mxu0
        %v10289 = vadd.f32 %v9792, %v10163
        %v10290 = vadd.f32 %v9793, %v10166
        %v10291 = vadd.f32 %v9794, %v10171
        %v10292 = vadd.f32 %v9795, %v10174
        %v10293 = vadd.f32 %v9796, %v10179
        %v10294 = vadd.f32 %v9797, %v10182
        %v10295 = vadd.f32 %v9798, %v10187
        %v10296 = vadd.f32 %v9799, %v10190
        %v10297 = vadd.f32 %v9800, %v10195
        %v10298 = vadd.f32 %v9801, %v10198
        %v10299 = vadd.f32 %v9802, %v10203
        %v10300 = vadd.f32 %v9803, %v10206
        %v10301 = vadd.f32 %v9804, %v10211
        %v10302 = vadd.f32 %v9805, %v10214
        %v10303 = vadd.f32 %v9806, %v10219
        %v10304 = vadd.f32 %v9807, %v10222
        %v10305 = vadd.f32 %v9808, %v10227
        %v10306 = vadd.f32 %v9809, %v10230
        %v10307 = vadd.f32 %v9810, %v10235
        %v10308 = vadd.f32 %v9811, %v10238
        %v10309 = vadd.f32 %v9812, %v10243
        %v10310 = vadd.f32 %v9813, %v10246
        %v10311 = vadd.f32 %v9814, %v10251
        %v10312 = vadd.f32 %v9815, %v10254
        %v10313 = vadd.f32 %v9816, %v10259
        %v10314 = vadd.f32 %v9817, %v10262
        %v10315 = vadd.f32 %v9818, %v10267
        %v10316 = vadd.f32 %v9819, %v10270
        %v10317 = vadd.f32 %v9820, %v10275
        %v10318 = vadd.f32 %v9821, %v10278
        %v10319 = vadd.f32 %v9822, %v10283
        %v10320 = vadd.f32 %v9823, %v10286
        %s10321 = scalar_lea.vmem [#allocation3], 24
        %v10322 = vld [vmem:[%s10321] sm:$0xf]
        %v10323 = vld [vmem:[%s10321 + $0x4] sm:$0xf]
        %v10324 = vld [vmem:[%s10321 + $0xc] sm:$0xf]
        %v10325 = vld [vmem:[%s10321 + $0x10] sm:$0xf]
        %v10326 = vld [vmem:[%s10321 + $0x18] sm:$0xf]
        %v10327 = vld [vmem:[%s10321 + $0x1c] sm:$0xf]
        %v10328 = vld [vmem:[%s10321 + $0x24] sm:$0xf]
        %v10329 = vld [vmem:[%s10321 + $0x28] sm:$0xf]
        %v10330 = vld [vmem:[%s10321 + $0x30] sm:$0xf]
        %v10331 = vld [vmem:[%s10321 + $0x34] sm:$0xf]
        %v10332 = vld [vmem:[%s10321 + $0x3c] sm:$0xf]
        %v10333 = vld [vmem:[%s10321 + $0x40] sm:$0xf]
        %v10334 = vld [vmem:[%s10321 + $0x48] sm:$0xf]
        %v10335 = vld [vmem:[%s10321 + $0x4c] sm:$0xf]
        %v10336 = vld [vmem:[%s10321 + $0x54] sm:$0xf]
        %v10337 = vld [vmem:[%s10321 + $0x58] sm:$0xf]
        %v10338 = vld [vmem:[%s10321 + $0x60] sm:$0xf]
        %v10339 = vld [vmem:[%s10321 + $0x64] sm:$0xf]
        %v10340 = vld [vmem:[%s10321 + $0x6c] sm:$0xf]
        %v10341 = vld [vmem:[%s10321 + $0x70] sm:$0xf]
        %v10342 = vld [vmem:[%s10321 + $0x78] sm:$0xf]
        %v10343 = vld [vmem:[%s10321 + $0x7c] sm:$0xf]
        %v10344 = vld [vmem:[%s10321 + $0x84] sm:$0xf]
        %v10345 = vld [vmem:[%s10321 + $0x88] sm:$0xf]
        %v10346 = vld [vmem:[%s10321 + $0x90] sm:$0xf]
        %v10347 = vld [vmem:[%s10321 + $0x94] sm:$0xf]
        %v10348 = vld [vmem:[%s10321 + $0x9c] sm:$0xf]
        %v10349 = vld [vmem:[%s10321 + $0xa0] sm:$0xf]
        %v10350 = vld [vmem:[%s10321 + $0xa8] sm:$0xf]
        %v10351 = vld [vmem:[%s10321 + $0xac] sm:$0xf]
        %v10352 = vld [vmem:[%s10321 + $0xb4] sm:$0xf]
        %v10353 = vld [vmem:[%s10321 + $0xb8] sm:$0xf]
        %v10354 = vld [vmem:[#allocation5 + $0x180] sm:$0xf]
        %v10355 = vld [vmem:[#allocation5 + $0x184] sm:$0xf]
        %v10356 = vld [vmem:[#allocation5 + $0x188] sm:$0xf]
        %v10357 = vld [vmem:[#allocation5 + $0x18c] sm:$0xf]
        %v10358 = vld [vmem:[#allocation5 + $0x190] sm:$0xf]
        %v10359 = vld [vmem:[#allocation5 + $0x194] sm:$0xf]
        %v10360 = vld [vmem:[#allocation5 + $0x198] sm:$0xf]
        %v10361 = vld [vmem:[#allocation5 + $0x19c] sm:$0xf]
        %v10362 = vld [vmem:[#allocation5 + $0x1a0] sm:$0xf]
        %v10363 = vld [vmem:[#allocation5 + $0x1a4] sm:$0xf]
        %v10364 = vld [vmem:[#allocation5 + $0x1a8] sm:$0xf]
        %v10365 = vld [vmem:[#allocation5 + $0x1ac] sm:$0xf]
        %v10366 = vld [vmem:[#allocation5 + $0x1b0] sm:$0xf]
        %v10367 = vld [vmem:[#allocation5 + $0x1b4] sm:$0xf]
        %v10368 = vld [vmem:[#allocation5 + $0x1b8] sm:$0xf]
        %v10369 = vld [vmem:[#allocation5 + $0x1bc] sm:$0xf]
        %v10402 = vunpack.c.l.b16 %v10322
        %v10403 = vunpack.c.l.b16 %v10323
        %v10404 = vunpack.c.l.b16 %v10324
        %v10405 = vunpack.c.l.b16 %v10325
        %v10406 = vunpack.c.l.b16 %v10326
        %v10407 = vunpack.c.l.b16 %v10327
        %v10408 = vunpack.c.l.b16 %v10328
        %v10409 = vunpack.c.l.b16 %v10329
        %v10410 = vunpack.c.l.b16 %v10330
        %v10411 = vunpack.c.l.b16 %v10331
        %v10412 = vunpack.c.l.b16 %v10332
        %v10413 = vunpack.c.l.b16 %v10333
        %v10414 = vunpack.c.l.b16 %v10334
        %v10415 = vunpack.c.l.b16 %v10335
        %v10416 = vunpack.c.l.b16 %v10336
        %v10417 = vunpack.c.l.b16 %v10337
        %v10418 = vunpack.c.l.b16 %v10338
        %v10419 = vunpack.c.l.b16 %v10339
        %v10420 = vunpack.c.l.b16 %v10340
        %v10421 = vunpack.c.l.b16 %v10341
        %v10422 = vunpack.c.l.b16 %v10342
        %v10423 = vunpack.c.l.b16 %v10343
        %v10424 = vunpack.c.l.b16 %v10344
        %v10425 = vunpack.c.l.b16 %v10345
        %v10426 = vunpack.c.l.b16 %v10346
        %v10427 = vunpack.c.l.b16 %v10347
        %v10428 = vunpack.c.l.b16 %v10348
        %v10429 = vunpack.c.l.b16 %v10349
        %v10430 = vunpack.c.l.b16 %v10350
        %v10431 = vunpack.c.l.b16 %v10351
        %v10432 = vunpack.c.l.b16 %v10352
        %v10433 = vunpack.c.l.b16 %v10353
        %v10434 = vpack.c.b16 %v10403, %v10402
        %v10435 = vpack.c.b16 %v10405, %v10404
        %v10436 = vpack.c.b16 %v10407, %v10406
        %v10437 = vpack.c.b16 %v10409, %v10408
        %v10438 = vpack.c.b16 %v10411, %v10410
        %v10439 = vpack.c.b16 %v10413, %v10412
        %v10440 = vpack.c.b16 %v10415, %v10414
        %v10441 = vpack.c.b16 %v10417, %v10416
        %v10442 = vpack.c.b16 %v10419, %v10418
        %v10443 = vpack.c.b16 %v10421, %v10420
        %v10444 = vpack.c.b16 %v10423, %v10422
        %v10445 = vpack.c.b16 %v10425, %v10424
        %v10446 = vpack.c.b16 %v10427, %v10426
        %v10447 = vpack.c.b16 %v10429, %v10428
        %v10448 = vpack.c.b16 %v10431, %v10430
        %v10449 = vpack.c.b16 %v10433, %v10432
        %v10482 = vunpack.c.l.b16 %v10354
        %v10483 = vunpack.c.l.b16 %v10355
        %v10484 = vunpack.c.l.b16 %v10356
        %v10485 = vunpack.c.l.b16 %v10357
        %v10486 = vunpack.c.l.b16 %v10358
        %v10487 = vunpack.c.l.b16 %v10359
        %v10488 = vunpack.c.l.b16 %v10360
        %v10489 = vunpack.c.l.b16 %v10361
        %v10490 = vunpack.c.l.b16 %v10362
        %v10491 = vunpack.c.l.b16 %v10363
        %v10492 = vunpack.c.l.b16 %v10364
        %v10493 = vunpack.c.l.b16 %v10365
        %v10494 = vunpack.c.l.b16 %v10366
        %v10495 = vunpack.c.l.b16 %v10367
        %v10496 = vunpack.c.l.b16 %v10368
        %v10497 = vunpack.c.l.b16 %v10369
        %v10498 = vpack.c.b16 %v10483, %v10482
        %v10499 = vpack.c.b16 %v10485, %v10484
        %v10500 = vpack.c.b16 %v10487, %v10486
        %v10501 = vpack.c.b16 %v10489, %v10488
        %v10502 = vpack.c.b16 %v10491, %v10490
        %v10503 = vpack.c.b16 %v10493, %v10492
        %v10504 = vpack.c.b16 %v10495, %v10494
        %v10505 = vpack.c.b16 %v10497, %v10496
        %10514 = vmatprep.subr.bf16.mxu0 0
        %10515 = vmatpush1.bf16.msra.mxu0 %v10505
        %10516 = vmatprep.subr.bf16.mxu0 0
        %10517 = vmatpush1.bf16.msra.mxu0 %v10504
        %10518 = vmatprep.subr.bf16.mxu0 0
        %10519 = vmatpush1.bf16.msra.mxu0 %v10503
        %10520 = vmatprep.subr.bf16.mxu0 0
        %10521 = vmatpush1.bf16.msra.mxu0 %v10502
        %10522 = vmatprep.subr.bf16.mxu0 0
        %10523 = vmatpush1.bf16.msra.mxu0 %v10501
        %10524 = vmatprep.subr.bf16.mxu0 0
        %10525 = vmatpush1.bf16.msra.mxu0 %v10500
        %10526 = vmatprep.subr.bf16.mxu0 0
        %10527 = vmatpush1.bf16.msra.mxu0 %v10499
        %10528 = vmatprep.subr.bf16.mxu0 0
        %10529 = vmatpush1.bf16.msra.mxu0 %v10498
        %10530 = vmatprep.subr.bf16.mxu0 0
        %10531 = vmatpush2.bf16.msra.mxu0 0
        %10532 = vmatprep.subr.bf16.mxu0 0
        %10533 = vmatpush2.bf16.msra.mxu0 0
        %10534 = vmatprep.subr.bf16.mxu0 0
        %10535 = vmatpush2.bf16.msra.mxu0 0
        %10536 = vmatprep.subr.bf16.mxu0 0
        %10537 = vmatpush2.bf16.msra.mxu0 0
        %10538 = vmatprep.subr.bf16.mxu0 0
        %10539 = vmatpush2.bf16.msra.mxu0 0
        %10540 = vmatprep.subr.bf16.mxu0 0
        %10541 = vmatpush2.bf16.msra.mxu0 0
        %10542 = vmatprep.subr.bf16.mxu0 0
        %10543 = vmatpush2.bf16.msra.mxu0 0
        %10544 = vmatprep.subr.bf16.mxu0 0
        %10545 = vmatpush2.bf16.msra.mxu0 0
        %10546 = vmatprep.mubr.bf16.mxu0 0
        %10547 = vmatmul.mubr.bf16.gmra.mxu0 %v10434
        %v10548 = vpop.f32.mrf.mxu0
        %v10549 = vadd.f32 0.0, %v10548
        %v10550 = vpop.f32.mrf.mxu0
        %v10551 = vpop.f32.mrf.mxu0
        %v10552 = vadd.f32 0.0, %v10551
        %v10553 = vpop.f32.mrf.mxu0
        %10554 = vmatprep.mubr.bf16.mxu0 0
        %10555 = vmatmul.mubr.bf16.gmra.mxu0 %v10435
        %v10556 = vpop.f32.mrf.mxu0
        %v10557 = vadd.f32 0.0, %v10556
        %v10558 = vpop.f32.mrf.mxu0
        %v10559 = vpop.f32.mrf.mxu0
        %v10560 = vadd.f32 0.0, %v10559
        %v10561 = vpop.f32.mrf.mxu0
        %10562 = vmatprep.mubr.bf16.mxu0 0
        %10563 = vmatmul.mubr.bf16.gmra.mxu0 %v10436
        %v10564 = vpop.f32.mrf.mxu0
        %v10565 = vadd.f32 0.0, %v10564
        %v10566 = vpop.f32.mrf.mxu0
        %v10567 = vpop.f32.mrf.mxu0
        %v10568 = vadd.f32 0.0, %v10567
        %v10569 = vpop.f32.mrf.mxu0
        %10570 = vmatprep.mubr.bf16.mxu0 0
        %10571 = vmatmul.mubr.bf16.gmra.mxu0 %v10437
        %v10572 = vpop.f32.mrf.mxu0
        %v10573 = vadd.f32 0.0, %v10572
        %v10574 = vpop.f32.mrf.mxu0
        %v10575 = vpop.f32.mrf.mxu0
        %v10576 = vadd.f32 0.0, %v10575
        %v10577 = vpop.f32.mrf.mxu0
        %10578 = vmatprep.mubr.bf16.mxu0 0
        %10579 = vmatmul.mubr.bf16.gmra.mxu0 %v10438
        %v10580 = vpop.f32.mrf.mxu0
        %v10581 = vadd.f32 0.0, %v10580
        %v10582 = vpop.f32.mrf.mxu0
        %v10583 = vpop.f32.mrf.mxu0
        %v10584 = vadd.f32 0.0, %v10583
        %v10585 = vpop.f32.mrf.mxu0
        %10586 = vmatprep.mubr.bf16.mxu0 0
        %10587 = vmatmul.mubr.bf16.gmra.mxu0 %v10439
        %v10588 = vpop.f32.mrf.mxu0
        %v10589 = vadd.f32 0.0, %v10588
        %v10590 = vpop.f32.mrf.mxu0
        %v10591 = vpop.f32.mrf.mxu0
        %v10592 = vadd.f32 0.0, %v10591
        %v10593 = vpop.f32.mrf.mxu0
        %10594 = vmatprep.mubr.bf16.mxu0 0
        %10595 = vmatmul.mubr.bf16.gmra.mxu0 %v10440
        %v10596 = vpop.f32.mrf.mxu0
        %v10597 = vadd.f32 0.0, %v10596
        %v10598 = vpop.f32.mrf.mxu0
        %v10599 = vpop.f32.mrf.mxu0
        %v10600 = vadd.f32 0.0, %v10599
        %v10601 = vpop.f32.mrf.mxu0
        %10602 = vmatprep.mubr.bf16.mxu0 0
        %10603 = vmatmul.mubr.bf16.gmra.mxu0 %v10441
        %v10604 = vpop.f32.mrf.mxu0
        %v10605 = vadd.f32 0.0, %v10604
        %v10606 = vpop.f32.mrf.mxu0
        %v10607 = vpop.f32.mrf.mxu0
        %v10608 = vadd.f32 0.0, %v10607
        %v10609 = vpop.f32.mrf.mxu0
        %10610 = vmatprep.mubr.bf16.mxu0 0
        %10611 = vmatmul.mubr.bf16.gmra.mxu0 %v10442
        %v10612 = vpop.f32.mrf.mxu0
        %v10613 = vadd.f32 0.0, %v10612
        %v10614 = vpop.f32.mrf.mxu0
        %v10615 = vpop.f32.mrf.mxu0
        %v10616 = vadd.f32 0.0, %v10615
        %v10617 = vpop.f32.mrf.mxu0
        %10618 = vmatprep.mubr.bf16.mxu0 0
        %10619 = vmatmul.mubr.bf16.gmra.mxu0 %v10443
        %v10620 = vpop.f32.mrf.mxu0
        %v10621 = vadd.f32 0.0, %v10620
        %v10622 = vpop.f32.mrf.mxu0
        %v10623 = vpop.f32.mrf.mxu0
        %v10624 = vadd.f32 0.0, %v10623
        %v10625 = vpop.f32.mrf.mxu0
        %10626 = vmatprep.mubr.bf16.mxu0 0
        %10627 = vmatmul.mubr.bf16.gmra.mxu0 %v10444
        %v10628 = vpop.f32.mrf.mxu0
        %v10629 = vadd.f32 0.0, %v10628
        %v10630 = vpop.f32.mrf.mxu0
        %v10631 = vpop.f32.mrf.mxu0
        %v10632 = vadd.f32 0.0, %v10631
        %v10633 = vpop.f32.mrf.mxu0
        %10634 = vmatprep.mubr.bf16.mxu0 0
        %10635 = vmatmul.mubr.bf16.gmra.mxu0 %v10445
        %v10636 = vpop.f32.mrf.mxu0
        %v10637 = vadd.f32 0.0, %v10636
        %v10638 = vpop.f32.mrf.mxu0
        %v10639 = vpop.f32.mrf.mxu0
        %v10640 = vadd.f32 0.0, %v10639
        %v10641 = vpop.f32.mrf.mxu0
        %10642 = vmatprep.mubr.bf16.mxu0 0
        %10643 = vmatmul.mubr.bf16.gmra.mxu0 %v10446
        %v10644 = vpop.f32.mrf.mxu0
        %v10645 = vadd.f32 0.0, %v10644
        %v10646 = vpop.f32.mrf.mxu0
        %v10647 = vpop.f32.mrf.mxu0
        %v10648 = vadd.f32 0.0, %v10647
        %v10649 = vpop.f32.mrf.mxu0
        %10650 = vmatprep.mubr.bf16.mxu0 0
        %10651 = vmatmul.mubr.bf16.gmra.mxu0 %v10447
        %v10652 = vpop.f32.mrf.mxu0
        %v10653 = vadd.f32 0.0, %v10652
        %v10654 = vpop.f32.mrf.mxu0
        %v10655 = vpop.f32.mrf.mxu0
        %v10656 = vadd.f32 0.0, %v10655
        %v10657 = vpop.f32.mrf.mxu0
        %10658 = vmatprep.mubr.bf16.mxu0 0
        %10659 = vmatmul.mubr.bf16.gmra.mxu0 %v10448
        %v10660 = vpop.f32.mrf.mxu0
        %v10661 = vadd.f32 0.0, %v10660
        %v10662 = vpop.f32.mrf.mxu0
        %v10663 = vpop.f32.mrf.mxu0
        %v10664 = vadd.f32 0.0, %v10663
        %v10665 = vpop.f32.mrf.mxu0
        %10666 = vmatprep.mubr.bf16.mxu0 0
        %10667 = vmatmul.mubr.bf16.gmra.mxu0 %v10449
        %v10668 = vpop.f32.mrf.mxu0
        %v10669 = vadd.f32 0.0, %v10668
        %v10670 = vpop.f32.mrf.mxu0
        %v10671 = vpop.f32.mrf.mxu0
        %v10672 = vadd.f32 0.0, %v10671
        %v10673 = vpop.f32.mrf.mxu0
        %10674 = vdwg.mxu0
        %v10675 = vadd.f32 %v10289, %v10549
        %v10676 = vadd.f32 %v10290, %v10552
        %v10677 = vadd.f32 %v10291, %v10557
        %v10678 = vadd.f32 %v10292, %v10560
        %v10679 = vadd.f32 %v10293, %v10565
        %v10680 = vadd.f32 %v10294, %v10568
        %v10681 = vadd.f32 %v10295, %v10573
        %v10682 = vadd.f32 %v10296, %v10576
        %v10683 = vadd.f32 %v10297, %v10581
        %v10684 = vadd.f32 %v10298, %v10584
        %v10685 = vadd.f32 %v10299, %v10589
        %v10686 = vadd.f32 %v10300, %v10592
        %v10687 = vadd.f32 %v10301, %v10597
        %v10688 = vadd.f32 %v10302, %v10600
        %v10689 = vadd.f32 %v10303, %v10605
        %v10690 = vadd.f32 %v10304, %v10608
        %v10691 = vadd.f32 %v10305, %v10613
        %v10692 = vadd.f32 %v10306, %v10616
        %v10693 = vadd.f32 %v10307, %v10621
        %v10694 = vadd.f32 %v10308, %v10624
        %v10695 = vadd.f32 %v10309, %v10629
        %v10696 = vadd.f32 %v10310, %v10632
        %v10697 = vadd.f32 %v10311, %v10637
        %v10698 = vadd.f32 %v10312, %v10640
        %v10699 = vadd.f32 %v10313, %v10645
        %v10700 = vadd.f32 %v10314, %v10648
        %v10701 = vadd.f32 %v10315, %v10653
        %v10702 = vadd.f32 %v10316, %v10656
        %v10703 = vadd.f32 %v10317, %v10661
        %v10704 = vadd.f32 %v10318, %v10664
        %v10705 = vadd.f32 %v10319, %v10669
        %v10706 = vadd.f32 %v10320, %v10672
        %v10707 = vld [vmem:[%s10321] sm:$0xf]
        %v10708 = vld [vmem:[%s10321 + $0x4] sm:$0xf]
        %v10709 = vld [vmem:[%s10321 + $0x8] sm:$0x1]
        %v10710 = vld [vmem:[%s10321 + $0xc] sm:$0xf]
        %v10711 = vld [vmem:[%s10321 + $0x10] sm:$0xf]
        %v10712 = vld [vmem:[%s10321 + $0x14] sm:$0x1]
        %v10713 = vld [vmem:[%s10321 + $0x18] sm:$0xf]
        %v10714 = vld [vmem:[%s10321 + $0x1c] sm:$0xf]
        %v10715 = vld [vmem:[%s10321 + $0x20] sm:$0x1]
        %v10716 = vld [vmem:[%s10321 + $0x24] sm:$0xf]
        %v10717 = vld [vmem:[%s10321 + $0x28] sm:$0xf]
        %v10718 = vld [vmem:[%s10321 + $0x2c] sm:$0x1]
        %v10719 = vld [vmem:[%s10321 + $0x30] sm:$0xf]
        %v10720 = vld [vmem:[%s10321 + $0x34] sm:$0xf]
        %v10721 = vld [vmem:[%s10321 + $0x38] sm:$0x1]
        %v10722 = vld [vmem:[%s10321 + $0x3c] sm:$0xf]
        %v10723 = vld [vmem:[%s10321 + $0x40] sm:$0xf]
        %v10724 = vld [vmem:[%s10321 + $0x44] sm:$0x1]
        %v10725 = vld [vmem:[%s10321 + $0x48] sm:$0xf]
        %v10726 = vld [vmem:[%s10321 + $0x4c] sm:$0xf]
        %v10727 = vld [vmem:[%s10321 + $0x50] sm:$0x1]
        %v10728 = vld [vmem:[%s10321 + $0x54] sm:$0xf]
        %v10729 = vld [vmem:[%s10321 + $0x58] sm:$0xf]
        %v10730 = vld [vmem:[%s10321 + $0x5c] sm:$0x1]
        %v10731 = vld [vmem:[%s10321 + $0x60] sm:$0xf]
        %v10732 = vld [vmem:[%s10321 + $0x64] sm:$0xf]
        %v10733 = vld [vmem:[%s10321 + $0x68] sm:$0x1]
        %v10734 = vld [vmem:[%s10321 + $0x6c] sm:$0xf]
        %v10735 = vld [vmem:[%s10321 + $0x70] sm:$0xf]
        %v10736 = vld [vmem:[%s10321 + $0x74] sm:$0x1]
        %v10737 = vld [vmem:[%s10321 + $0x78] sm:$0xf]
        %v10738 = vld [vmem:[%s10321 + $0x7c] sm:$0xf]
        %v10739 = vld [vmem:[%s10321 + $0x80] sm:$0x1]
        %v10740 = vld [vmem:[%s10321 + $0x84] sm:$0xf]
        %v10741 = vld [vmem:[%s10321 + $0x88] sm:$0xf]
        %v10742 = vld [vmem:[%s10321 + $0x8c] sm:$0x1]
        %v10743 = vld [vmem:[%s10321 + $0x90] sm:$0xf]
        %v10744 = vld [vmem:[%s10321 + $0x94] sm:$0xf]
        %v10745 = vld [vmem:[%s10321 + $0x98] sm:$0x1]
        %v10746 = vld [vmem:[%s10321 + $0x9c] sm:$0xf]
        %v10747 = vld [vmem:[%s10321 + $0xa0] sm:$0xf]
        %v10748 = vld [vmem:[%s10321 + $0xa4] sm:$0x1]
        %v10749 = vld [vmem:[%s10321 + $0xa8] sm:$0xf]
        %v10750 = vld [vmem:[%s10321 + $0xac] sm:$0xf]
        %v10751 = vld [vmem:[%s10321 + $0xb0] sm:$0x1]
        %v10752 = vld [vmem:[%s10321 + $0xb4] sm:$0xf]
        %v10753 = vld [vmem:[%s10321 + $0xb8] sm:$0xf]
        %v10754 = vld [vmem:[%s10321 + $0xbc] sm:$0x1]
        %v10756 = vshrl.u32 %v10707, 16
        %v10758 = vrot.slane %v10756, 4
        %v10759 = vshll.u32 %v10707, 16
        %v10761 = vrot.slane %v10759, 5
        %v10762 = vor.u32 %v10758, %v10761
        %v10763 = vrot.slane %v10762, 4
        %v10765 = vshll.u32 %v10708, 16
        %v10767 = vrot.slane %v10765, 5
        %v10768 = vsel %vm3099, %v10763, %v10767
        %v10769 = vshrl.u32 %v10708, 16
        %v10771 = vrot.slane %v10769, 4
        %v10772 = vor.u32 %v10771, %v10767
        %v10773 = vrot.slane %v10772, 4
        %v10775 = vshll.u32 %v10709, 16
        %v10777 = vrot.slane %v10775, 5
        %v10778 = vsel %vm3099, %v10773, %v10777
        %v10780 = vshrl.u32 %v10710, 16
        %v10782 = vrot.slane %v10780, 4
        %v10783 = vshll.u32 %v10710, 16
        %v10785 = vrot.slane %v10783, 5
        %v10786 = vor.u32 %v10782, %v10785
        %v10787 = vrot.slane %v10786, 4
        %v10789 = vshll.u32 %v10711, 16
        %v10791 = vrot.slane %v10789, 5
        %v10792 = vsel %vm3099, %v10787, %v10791
        %v10793 = vshrl.u32 %v10711, 16
        %v10795 = vrot.slane %v10793, 4
        %v10796 = vor.u32 %v10795, %v10791
        %v10797 = vrot.slane %v10796, 4
        %v10799 = vshll.u32 %v10712, 16
        %v10801 = vrot.slane %v10799, 5
        %v10802 = vsel %vm3099, %v10797, %v10801
        %v10804 = vshrl.u32 %v10713, 16
        %v10806 = vrot.slane %v10804, 4
        %v10807 = vshll.u32 %v10713, 16
        %v10809 = vrot.slane %v10807, 5
        %v10810 = vor.u32 %v10806, %v10809
        %v10811 = vrot.slane %v10810, 4
        %v10813 = vshll.u32 %v10714, 16
        %v10815 = vrot.slane %v10813, 5
        %v10816 = vsel %vm3099, %v10811, %v10815
        %v10817 = vshrl.u32 %v10714, 16
        %v10819 = vrot.slane %v10817, 4
        %v10820 = vor.u32 %v10819, %v10815
        %v10821 = vrot.slane %v10820, 4
        %v10823 = vshll.u32 %v10715, 16
        %v10825 = vrot.slane %v10823, 5
        %v10826 = vsel %vm3099, %v10821, %v10825
        %v10828 = vshrl.u32 %v10716, 16
        %v10830 = vrot.slane %v10828, 4
        %v10831 = vshll.u32 %v10716, 16
        %v10833 = vrot.slane %v10831, 5
        %v10834 = vor.u32 %v10830, %v10833
        %v10835 = vrot.slane %v10834, 4
        %v10837 = vshll.u32 %v10717, 16
        %v10839 = vrot.slane %v10837, 5
        %v10840 = vsel %vm3099, %v10835, %v10839
        %v10841 = vshrl.u32 %v10717, 16
        %v10843 = vrot.slane %v10841, 4
        %v10844 = vor.u32 %v10843, %v10839
        %v10845 = vrot.slane %v10844, 4
        %v10847 = vshll.u32 %v10718, 16
        %v10849 = vrot.slane %v10847, 5
        %v10850 = vsel %vm3099, %v10845, %v10849
        %v10852 = vshrl.u32 %v10719, 16
        %v10854 = vrot.slane %v10852, 4
        %v10855 = vshll.u32 %v10719, 16
        %v10857 = vrot.slane %v10855, 5
        %v10858 = vor.u32 %v10854, %v10857
        %v10859 = vrot.slane %v10858, 4
        %v10861 = vshll.u32 %v10720, 16
        %v10863 = vrot.slane %v10861, 5
        %v10864 = vsel %vm3099, %v10859, %v10863
        %v10865 = vshrl.u32 %v10720, 16
        %v10867 = vrot.slane %v10865, 4
        %v10868 = vor.u32 %v10867, %v10863
        %v10869 = vrot.slane %v10868, 4
        %v10871 = vshll.u32 %v10721, 16
        %v10873 = vrot.slane %v10871, 5
        %v10874 = vsel %vm3099, %v10869, %v10873
        %v10876 = vshrl.u32 %v10722, 16
        %v10878 = vrot.slane %v10876, 4
        %v10879 = vshll.u32 %v10722, 16
        %v10881 = vrot.slane %v10879, 5
        %v10882 = vor.u32 %v10878, %v10881
        %v10883 = vrot.slane %v10882, 4
        %v10885 = vshll.u32 %v10723, 16
        %v10887 = vrot.slane %v10885, 5
        %v10888 = vsel %vm3099, %v10883, %v10887
        %v10889 = vshrl.u32 %v10723, 16
        %v10891 = vrot.slane %v10889, 4
        %v10892 = vor.u32 %v10891, %v10887
        %v10893 = vrot.slane %v10892, 4
        %v10895 = vshll.u32 %v10724, 16
        %v10897 = vrot.slane %v10895, 5
        %v10898 = vsel %vm3099, %v10893, %v10897
        %v10900 = vshrl.u32 %v10725, 16
        %v10902 = vrot.slane %v10900, 4
        %v10903 = vshll.u32 %v10725, 16
        %v10905 = vrot.slane %v10903, 5
        %v10906 = vor.u32 %v10902, %v10905
        %v10907 = vrot.slane %v10906, 4
        %v10909 = vshll.u32 %v10726, 16
        %v10911 = vrot.slane %v10909, 5
        %v10912 = vsel %vm3099, %v10907, %v10911
        %v10913 = vshrl.u32 %v10726, 16
        %v10915 = vrot.slane %v10913, 4
        %v10916 = vor.u32 %v10915, %v10911
        %v10917 = vrot.slane %v10916, 4
        %v10919 = vshll.u32 %v10727, 16
        %v10921 = vrot.slane %v10919, 5
        %v10922 = vsel %vm3099, %v10917, %v10921
        %v10924 = vshrl.u32 %v10728, 16
        %v10926 = vrot.slane %v10924, 4
        %v10927 = vshll.u32 %v10728, 16
        %v10929 = vrot.slane %v10927, 5
        %v10930 = vor.u32 %v10926, %v10929
        %v10931 = vrot.slane %v10930, 4
        %v10933 = vshll.u32 %v10729, 16
        %v10935 = vrot.slane %v10933, 5
        %v10936 = vsel %vm3099, %v10931, %v10935
        %v10937 = vshrl.u32 %v10729, 16
        %v10939 = vrot.slane %v10937, 4
        %v10940 = vor.u32 %v10939, %v10935
        %v10941 = vrot.slane %v10940, 4
        %v10943 = vshll.u32 %v10730, 16
        %v10945 = vrot.slane %v10943, 5
        %v10946 = vsel %vm3099, %v10941, %v10945
        %v10948 = vshrl.u32 %v10731, 16
        %v10950 = vrot.slane %v10948, 4
        %v10951 = vshll.u32 %v10731, 16
        %v10953 = vrot.slane %v10951, 5
        %v10954 = vor.u32 %v10950, %v10953
        %v10955 = vrot.slane %v10954, 4
        %v10957 = vshll.u32 %v10732, 16
        %v10959 = vrot.slane %v10957, 5
        %v10960 = vsel %vm3099, %v10955, %v10959
        %v10961 = vshrl.u32 %v10732, 16
        %v10963 = vrot.slane %v10961, 4
        %v10964 = vor.u32 %v10963, %v10959
        %v10965 = vrot.slane %v10964, 4
        %v10967 = vshll.u32 %v10733, 16
        %v10969 = vrot.slane %v10967, 5
        %v10970 = vsel %vm3099, %v10965, %v10969
        %v10972 = vshrl.u32 %v10734, 16
        %v10974 = vrot.slane %v10972, 4
        %v10975 = vshll.u32 %v10734, 16
        %v10977 = vrot.slane %v10975, 5
        %v10978 = vor.u32 %v10974, %v10977
        %v10979 = vrot.slane %v10978, 4
        %v10981 = vshll.u32 %v10735, 16
        %v10983 = vrot.slane %v10981, 5
        %v10984 = vsel %vm3099, %v10979, %v10983
        %v10985 = vshrl.u32 %v10735, 16
        %v10987 = vrot.slane %v10985, 4
        %v10988 = vor.u32 %v10987, %v10983
        %v10989 = vrot.slane %v10988, 4
        %v10991 = vshll.u32 %v10736, 16
        %v10993 = vrot.slane %v10991, 5
        %v10994 = vsel %vm3099, %v10989, %v10993
        %v10996 = vshrl.u32 %v10737, 16
        %v10998 = vrot.slane %v10996, 4
        %v10999 = vshll.u32 %v10737, 16
        %v11001 = vrot.slane %v10999, 5
        %v11002 = vor.u32 %v10998, %v11001
        %v11003 = vrot.slane %v11002, 4
        %v11005 = vshll.u32 %v10738, 16
        %v11007 = vrot.slane %v11005, 5
        %v11008 = vsel %vm3099, %v11003, %v11007
        %v11009 = vshrl.u32 %v10738, 16
        %v11011 = vrot.slane %v11009, 4
        %v11012 = vor.u32 %v11011, %v11007
        %v11013 = vrot.slane %v11012, 4
        %v11015 = vshll.u32 %v10739, 16
        %v11017 = vrot.slane %v11015, 5
        %v11018 = vsel %vm3099, %v11013, %v11017
        %v11020 = vshrl.u32 %v10740, 16
        %v11022 = vrot.slane %v11020, 4
        %v11023 = vshll.u32 %v10740, 16
        %v11025 = vrot.slane %v11023, 5
        %v11026 = vor.u32 %v11022, %v11025
        %v11027 = vrot.slane %v11026, 4
        %v11029 = vshll.u32 %v10741, 16
        %v11031 = vrot.slane %v11029, 5
        %v11032 = vsel %vm3099, %v11027, %v11031
        %v11033 = vshrl.u32 %v10741, 16
        %v11035 = vrot.slane %v11033, 4
        %v11036 = vor.u32 %v11035, %v11031
        %v11037 = vrot.slane %v11036, 4
        %v11039 = vshll.u32 %v10742, 16
        %v11041 = vrot.slane %v11039, 5
        %v11042 = vsel %vm3099, %v11037, %v11041
        %v11044 = vshrl.u32 %v10743, 16
        %v11046 = vrot.slane %v11044, 4
        %v11047 = vshll.u32 %v10743, 16
        %v11049 = vrot.slane %v11047, 5
        %v11050 = vor.u32 %v11046, %v11049
        %v11051 = vrot.slane %v11050, 4
        %v11053 = vshll.u32 %v10744, 16
        %v11055 = vrot.slane %v11053, 5
        %v11056 = vsel %vm3099, %v11051, %v11055
        %v11057 = vshrl.u32 %v10744, 16
        %v11059 = vrot.slane %v11057, 4
        %v11060 = vor.u32 %v11059, %v11055
        %v11061 = vrot.slane %v11060, 4
        %v11063 = vshll.u32 %v10745, 16
        %v11065 = vrot.slane %v11063, 5
        %v11066 = vsel %vm3099, %v11061, %v11065
        %v11068 = vshrl.u32 %v10746, 16
        %v11070 = vrot.slane %v11068, 4
        %v11071 = vshll.u32 %v10746, 16
        %v11073 = vrot.slane %v11071, 5
        %v11074 = vor.u32 %v11070, %v11073
        %v11075 = vrot.slane %v11074, 4
        %v11077 = vshll.u32 %v10747, 16
        %v11079 = vrot.slane %v11077, 5
        %v11080 = vsel %vm3099, %v11075, %v11079
        %v11081 = vshrl.u32 %v10747, 16
        %v11083 = vrot.slane %v11081, 4
        %v11084 = vor.u32 %v11083, %v11079
        %v11085 = vrot.slane %v11084, 4
        %v11087 = vshll.u32 %v10748, 16
        %v11089 = vrot.slane %v11087, 5
        %v11090 = vsel %vm3099, %v11085, %v11089
        %v11092 = vshrl.u32 %v10749, 16
        %v11094 = vrot.slane %v11092, 4
        %v11095 = vshll.u32 %v10749, 16
        %v11097 = vrot.slane %v11095, 5
        %v11098 = vor.u32 %v11094, %v11097
        %v11099 = vrot.slane %v11098, 4
        %v11101 = vshll.u32 %v10750, 16
        %v11103 = vrot.slane %v11101, 5
        %v11104 = vsel %vm3099, %v11099, %v11103
        %v11105 = vshrl.u32 %v10750, 16
        %v11107 = vrot.slane %v11105, 4
        %v11108 = vor.u32 %v11107, %v11103
        %v11109 = vrot.slane %v11108, 4
        %v11111 = vshll.u32 %v10751, 16
        %v11113 = vrot.slane %v11111, 5
        %v11114 = vsel %vm3099, %v11109, %v11113
        %v11116 = vshrl.u32 %v10752, 16
        %v11118 = vrot.slane %v11116, 4
        %v11119 = vshll.u32 %v10752, 16
        %v11121 = vrot.slane %v11119, 5
        %v11122 = vor.u32 %v11118, %v11121
        %v11123 = vrot.slane %v11122, 4
        %v11125 = vshll.u32 %v10753, 16
        %v11127 = vrot.slane %v11125, 5
        %v11128 = vsel %vm3099, %v11123, %v11127
        %v11129 = vshrl.u32 %v10753, 16
        %v11131 = vrot.slane %v11129, 4
        %v11132 = vor.u32 %v11131, %v11127
        %v11133 = vrot.slane %v11132, 4
        %v11135 = vshll.u32 %v10754, 16
        %v11137 = vrot.slane %v11135, 5
        %v11138 = vsel %vm3099, %v11133, %v11137
        %v11139 = vld [vmem:[#allocation5 + $0x1c0] sm:$0xf]
        %v11140 = vld [vmem:[#allocation5 + $0x1c4] sm:$0xf]
        %v11141 = vld [vmem:[#allocation5 + $0x1c8] sm:$0xf]
        %v11142 = vld [vmem:[#allocation5 + $0x1cc] sm:$0xf]
        %v11143 = vld [vmem:[#allocation5 + $0x1d0] sm:$0xf]
        %v11144 = vld [vmem:[#allocation5 + $0x1d4] sm:$0xf]
        %v11145 = vld [vmem:[#allocation5 + $0x1d8] sm:$0xf]
        %v11146 = vld [vmem:[#allocation5 + $0x1dc] sm:$0xf]
        %v11147 = vld [vmem:[#allocation5 + $0x1e0] sm:$0xf]
        %v11148 = vld [vmem:[#allocation5 + $0x1e4] sm:$0xf]
        %v11149 = vld [vmem:[#allocation5 + $0x1e8] sm:$0xf]
        %v11150 = vld [vmem:[#allocation5 + $0x1ec] sm:$0xf]
        %v11151 = vld [vmem:[#allocation5 + $0x1f0] sm:$0xf]
        %v11152 = vld [vmem:[#allocation5 + $0x1f4] sm:$0xf]
        %v11153 = vld [vmem:[#allocation5 + $0x1f8] sm:$0xf]
        %v11154 = vld [vmem:[#allocation5 + $0x1fc] sm:$0xf]
        %v11155 = vunpack.c.l.b16 %v10768
        %v11156 = vunpack.c.l.b16 %v10778
        %v11157 = vunpack.c.l.b16 %v10792
        %v11158 = vunpack.c.l.b16 %v10802
        %v11159 = vunpack.c.l.b16 %v10816
        %v11160 = vunpack.c.l.b16 %v10826
        %v11161 = vunpack.c.l.b16 %v10840
        %v11162 = vunpack.c.l.b16 %v10850
        %v11163 = vunpack.c.l.b16 %v10864
        %v11164 = vunpack.c.l.b16 %v10874
        %v11165 = vunpack.c.l.b16 %v10888
        %v11166 = vunpack.c.l.b16 %v10898
        %v11167 = vunpack.c.l.b16 %v10912
        %v11168 = vunpack.c.l.b16 %v10922
        %v11169 = vunpack.c.l.b16 %v10936
        %v11170 = vunpack.c.l.b16 %v10946
        %v11171 = vunpack.c.l.b16 %v10960
        %v11172 = vunpack.c.l.b16 %v10970
        %v11173 = vunpack.c.l.b16 %v10984
        %v11174 = vunpack.c.l.b16 %v10994
        %v11175 = vunpack.c.l.b16 %v11008
        %v11176 = vunpack.c.l.b16 %v11018
        %v11177 = vunpack.c.l.b16 %v11032
        %v11178 = vunpack.c.l.b16 %v11042
        %v11179 = vunpack.c.l.b16 %v11056
        %v11180 = vunpack.c.l.b16 %v11066
        %v11181 = vunpack.c.l.b16 %v11080
        %v11182 = vunpack.c.l.b16 %v11090
        %v11183 = vunpack.c.l.b16 %v11104
        %v11184 = vunpack.c.l.b16 %v11114
        %v11185 = vunpack.c.l.b16 %v11128
        %v11186 = vunpack.c.l.b16 %v11138
        %v11187 = vpack.c.b16 %v11156, %v11155
        %v11188 = vpack.c.b16 %v11158, %v11157
        %v11189 = vpack.c.b16 %v11160, %v11159
        %v11190 = vpack.c.b16 %v11162, %v11161
        %v11191 = vpack.c.b16 %v11164, %v11163
        %v11192 = vpack.c.b16 %v11166, %v11165
        %v11193 = vpack.c.b16 %v11168, %v11167
        %v11194 = vpack.c.b16 %v11170, %v11169
        %v11195 = vpack.c.b16 %v11172, %v11171
        %v11196 = vpack.c.b16 %v11174, %v11173
        %v11197 = vpack.c.b16 %v11176, %v11175
        %v11198 = vpack.c.b16 %v11178, %v11177
        %v11199 = vpack.c.b16 %v11180, %v11179
        %v11200 = vpack.c.b16 %v11182, %v11181
        %v11201 = vpack.c.b16 %v11184, %v11183
        %v11202 = vpack.c.b16 %v11186, %v11185
        %v11235 = vunpack.c.l.b16 %v11139
        %v11236 = vunpack.c.l.b16 %v11140
        %v11237 = vunpack.c.l.b16 %v11141
        %v11238 = vunpack.c.l.b16 %v11142
        %v11239 = vunpack.c.l.b16 %v11143
        %v11240 = vunpack.c.l.b16 %v11144
        %v11241 = vunpack.c.l.b16 %v11145
        %v11242 = vunpack.c.l.b16 %v11146
        %v11243 = vunpack.c.l.b16 %v11147
        %v11244 = vunpack.c.l.b16 %v11148
        %v11245 = vunpack.c.l.b16 %v11149
        %v11246 = vunpack.c.l.b16 %v11150
        %v11247 = vunpack.c.l.b16 %v11151
        %v11248 = vunpack.c.l.b16 %v11152
        %v11249 = vunpack.c.l.b16 %v11153
        %v11250 = vunpack.c.l.b16 %v11154
        %v11251 = vpack.c.b16 %v11236, %v11235
        %v11252 = vpack.c.b16 %v11238, %v11237
        %v11253 = vpack.c.b16 %v11240, %v11239
        %v11254 = vpack.c.b16 %v11242, %v11241
        %v11255 = vpack.c.b16 %v11244, %v11243
        %v11256 = vpack.c.b16 %v11246, %v11245
        %v11257 = vpack.c.b16 %v11248, %v11247
        %v11258 = vpack.c.b16 %v11250, %v11249
        %11267 = vmatprep.subr.bf16.mxu0 0
        %11268 = vmatpush1.bf16.msra.mxu0 %v11258
        %11269 = vmatprep.subr.bf16.mxu0 0
        %11270 = vmatpush1.bf16.msra.mxu0 %v11257
        %11271 = vmatprep.subr.bf16.mxu0 0
        %11272 = vmatpush1.bf16.msra.mxu0 %v11256
        %11273 = vmatprep.subr.bf16.mxu0 0
        %11274 = vmatpush1.bf16.msra.mxu0 %v11255
        %11275 = vmatprep.subr.bf16.mxu0 0
        %11276 = vmatpush1.bf16.msra.mxu0 %v11254
        %11277 = vmatprep.subr.bf16.mxu0 0
        %11278 = vmatpush1.bf16.msra.mxu0 %v11253
        %11279 = vmatprep.subr.bf16.mxu0 0
        %11280 = vmatpush1.bf16.msra.mxu0 %v11252
        %11281 = vmatprep.subr.bf16.mxu0 0
        %11282 = vmatpush1.bf16.msra.mxu0 %v11251
        %11283 = vmatprep.subr.bf16.mxu0 0
        %11284 = vmatpush2.bf16.msra.mxu0 0
        %11285 = vmatprep.subr.bf16.mxu0 0
        %11286 = vmatpush2.bf16.msra.mxu0 0
        %11287 = vmatprep.subr.bf16.mxu0 0
        %11288 = vmatpush2.bf16.msra.mxu0 0
        %11289 = vmatprep.subr.bf16.mxu0 0
        %11290 = vmatpush2.bf16.msra.mxu0 0
        %11291 = vmatprep.subr.bf16.mxu0 0
        %11292 = vmatpush2.bf16.msra.mxu0 0
        %11293 = vmatprep.subr.bf16.mxu0 0
        %11294 = vmatpush2.bf16.msra.mxu0 0
        %11295 = vmatprep.subr.bf16.mxu0 0
        %11296 = vmatpush2.bf16.msra.mxu0 0
        %11297 = vmatprep.subr.bf16.mxu0 0
        %11298 = vmatpush2.bf16.msra.mxu0 0
        %11299 = vmatprep.mubr.bf16.mxu0 0
        %11300 = vmatmul.mubr.bf16.gmra.mxu0 %v11187
        %v11301 = vpop.f32.mrf.mxu0
        %v11302 = vadd.f32 0.0, %v11301
        %v11303 = vpop.f32.mrf.mxu0
        %v11304 = vpop.f32.mrf.mxu0
        %v11305 = vadd.f32 0.0, %v11304
        %v11306 = vpop.f32.mrf.mxu0
        %11307 = vmatprep.mubr.bf16.mxu0 0
        %11308 = vmatmul.mubr.bf16.gmra.mxu0 %v11188
        %v11309 = vpop.f32.mrf.mxu0
        %v11310 = vadd.f32 0.0, %v11309
        %v11311 = vpop.f32.mrf.mxu0
        %v11312 = vpop.f32.mrf.mxu0
        %v11313 = vadd.f32 0.0, %v11312
        %v11314 = vpop.f32.mrf.mxu0
        %11315 = vmatprep.mubr.bf16.mxu0 0
        %11316 = vmatmul.mubr.bf16.gmra.mxu0 %v11189
        %v11317 = vpop.f32.mrf.mxu0
        %v11318 = vadd.f32 0.0, %v11317
        %v11319 = vpop.f32.mrf.mxu0
        %v11320 = vpop.f32.mrf.mxu0
        %v11321 = vadd.f32 0.0, %v11320
        %v11322 = vpop.f32.mrf.mxu0
        %11323 = vmatprep.mubr.bf16.mxu0 0
        %11324 = vmatmul.mubr.bf16.gmra.mxu0 %v11190
        %v11325 = vpop.f32.mrf.mxu0
        %v11326 = vadd.f32 0.0, %v11325
        %v11327 = vpop.f32.mrf.mxu0
        %v11328 = vpop.f32.mrf.mxu0
        %v11329 = vadd.f32 0.0, %v11328
        %v11330 = vpop.f32.mrf.mxu0
        %11331 = vmatprep.mubr.bf16.mxu0 0
        %11332 = vmatmul.mubr.bf16.gmra.mxu0 %v11191
        %v11333 = vpop.f32.mrf.mxu0
        %v11334 = vadd.f32 0.0, %v11333
        %v11335 = vpop.f32.mrf.mxu0
        %v11336 = vpop.f32.mrf.mxu0
        %v11337 = vadd.f32 0.0, %v11336
        %v11338 = vpop.f32.mrf.mxu0
        %11339 = vmatprep.mubr.bf16.mxu0 0
        %11340 = vmatmul.mubr.bf16.gmra.mxu0 %v11192
        %v11341 = vpop.f32.mrf.mxu0
        %v11342 = vadd.f32 0.0, %v11341
        %v11343 = vpop.f32.mrf.mxu0
        %v11344 = vpop.f32.mrf.mxu0
        %v11345 = vadd.f32 0.0, %v11344
        %v11346 = vpop.f32.mrf.mxu0
        %11347 = vmatprep.mubr.bf16.mxu0 0
        %11348 = vmatmul.mubr.bf16.gmra.mxu0 %v11193
        %v11349 = vpop.f32.mrf.mxu0
        %v11350 = vadd.f32 0.0, %v11349
        %v11351 = vpop.f32.mrf.mxu0
        %v11352 = vpop.f32.mrf.mxu0
        %v11353 = vadd.f32 0.0, %v11352
        %v11354 = vpop.f32.mrf.mxu0
        %11355 = vmatprep.mubr.bf16.mxu0 0
        %11356 = vmatmul.mubr.bf16.gmra.mxu0 %v11194
        %v11357 = vpop.f32.mrf.mxu0
        %v11358 = vadd.f32 0.0, %v11357
        %v11359 = vpop.f32.mrf.mxu0
        %v11360 = vpop.f32.mrf.mxu0
        %v11361 = vadd.f32 0.0, %v11360
        %v11362 = vpop.f32.mrf.mxu0
        %11363 = vmatprep.mubr.bf16.mxu0 0
        %11364 = vmatmul.mubr.bf16.gmra.mxu0 %v11195
        %v11365 = vpop.f32.mrf.mxu0
        %v11366 = vadd.f32 0.0, %v11365
        %v11367 = vpop.f32.mrf.mxu0
        %v11368 = vpop.f32.mrf.mxu0
        %v11369 = vadd.f32 0.0, %v11368
        %v11370 = vpop.f32.mrf.mxu0
        %11371 = vmatprep.mubr.bf16.mxu0 0
        %11372 = vmatmul.mubr.bf16.gmra.mxu0 %v11196
        %v11373 = vpop.f32.mrf.mxu0
        %v11374 = vadd.f32 0.0, %v11373
        %v11375 = vpop.f32.mrf.mxu0
        %v11376 = vpop.f32.mrf.mxu0
        %v11377 = vadd.f32 0.0, %v11376
        %v11378 = vpop.f32.mrf.mxu0
        %11379 = vmatprep.mubr.bf16.mxu0 0
        %11380 = vmatmul.mubr.bf16.gmra.mxu0 %v11197
        %v11381 = vpop.f32.mrf.mxu0
        %v11382 = vadd.f32 0.0, %v11381
        %v11383 = vpop.f32.mrf.mxu0
        %v11384 = vpop.f32.mrf.mxu0
        %v11385 = vadd.f32 0.0, %v11384
        %v11386 = vpop.f32.mrf.mxu0
        %11387 = vmatprep.mubr.bf16.mxu0 0
        %11388 = vmatmul.mubr.bf16.gmra.mxu0 %v11198
        %v11389 = vpop.f32.mrf.mxu0
        %v11390 = vadd.f32 0.0, %v11389
        %v11391 = vpop.f32.mrf.mxu0
        %v11392 = vpop.f32.mrf.mxu0
        %v11393 = vadd.f32 0.0, %v11392
        %v11394 = vpop.f32.mrf.mxu0
        %11395 = vmatprep.mubr.bf16.mxu0 0
        %11396 = vmatmul.mubr.bf16.gmra.mxu0 %v11199
        %v11397 = vpop.f32.mrf.mxu0
        %v11398 = vadd.f32 0.0, %v11397
        %v11399 = vpop.f32.mrf.mxu0
        %v11400 = vpop.f32.mrf.mxu0
        %v11401 = vadd.f32 0.0, %v11400
        %v11402 = vpop.f32.mrf.mxu0
        %11403 = vmatprep.mubr.bf16.mxu0 0
        %11404 = vmatmul.mubr.bf16.gmra.mxu0 %v11200
        %v11405 = vpop.f32.mrf.mxu0
        %v11406 = vadd.f32 0.0, %v11405
        %v11407 = vpop.f32.mrf.mxu0
        %v11408 = vpop.f32.mrf.mxu0
        %v11409 = vadd.f32 0.0, %v11408
        %v11410 = vpop.f32.mrf.mxu0
        %11411 = vmatprep.mubr.bf16.mxu0 0
        %11412 = vmatmul.mubr.bf16.gmra.mxu0 %v11201
        %v11413 = vpop.f32.mrf.mxu0
        %v11414 = vadd.f32 0.0, %v11413
        %v11415 = vpop.f32.mrf.mxu0
        %v11416 = vpop.f32.mrf.mxu0
        %v11417 = vadd.f32 0.0, %v11416
        %v11418 = vpop.f32.mrf.mxu0
        %11419 = vmatprep.mubr.bf16.mxu0 0
        %11420 = vmatmul.mubr.bf16.gmra.mxu0 %v11202
        %v11421 = vpop.f32.mrf.mxu0
        %v11422 = vadd.f32 0.0, %v11421
        %v11423 = vpop.f32.mrf.mxu0
        %v11424 = vpop.f32.mrf.mxu0
        %v11425 = vadd.f32 0.0, %v11424
        %v11426 = vpop.f32.mrf.mxu0
        %11427 = vdwg.mxu0
        %v11428 = vadd.f32 %v10675, %v11302
        %v11429 = vadd.f32 %v10676, %v11305
        %v11430 = vadd.f32 %v10677, %v11310
        %v11431 = vadd.f32 %v10678, %v11313
        %v11432 = vadd.f32 %v10679, %v11318
        %v11433 = vadd.f32 %v10680, %v11321
        %v11434 = vadd.f32 %v10681, %v11326
        %v11435 = vadd.f32 %v10682, %v11329
        %v11436 = vadd.f32 %v10683, %v11334
        %v11437 = vadd.f32 %v10684, %v11337
        %v11438 = vadd.f32 %v10685, %v11342
        %v11439 = vadd.f32 %v10686, %v11345
        %v11440 = vadd.f32 %v10687, %v11350
        %v11441 = vadd.f32 %v10688, %v11353
        %v11442 = vadd.f32 %v10689, %v11358
        %v11443 = vadd.f32 %v10690, %v11361
        %v11444 = vadd.f32 %v10691, %v11366
        %v11445 = vadd.f32 %v10692, %v11369
        %v11446 = vadd.f32 %v10693, %v11374
        %v11447 = vadd.f32 %v10694, %v11377
        %v11448 = vadd.f32 %v10695, %v11382
        %v11449 = vadd.f32 %v10696, %v11385
        %v11450 = vadd.f32 %v10697, %v11390
        %v11451 = vadd.f32 %v10698, %v11393
        %v11452 = vadd.f32 %v10699, %v11398
        %v11453 = vadd.f32 %v10700, %v11401
        %v11454 = vadd.f32 %v10701, %v11406
        %v11455 = vadd.f32 %v10702, %v11409
        %v11456 = vadd.f32 %v10703, %v11414
        %v11457 = vadd.f32 %v10704, %v11417
        %v11458 = vadd.f32 %v10705, %v11422
        %v11459 = vadd.f32 %v10706, %v11425
        %v11460 = vld [vmem:[%s10321] sm:$0xe]
        %v11461 = vld [vmem:[%s10321 + $0xc] sm:$0xe]
        %v11462 = vld [vmem:[%s10321 + $0x18] sm:$0xe]
        %v11463 = vld [vmem:[%s10321 + $0x24] sm:$0xe]
        %v11464 = vld [vmem:[%s10321 + $0x30] sm:$0xe]
        %v11465 = vld [vmem:[%s10321 + $0x3c] sm:$0xe]
        %v11466 = vld [vmem:[%s10321 + $0x48] sm:$0xe]
        %v11467 = vld [vmem:[%s10321 + $0x54] sm:$0xe]
        %v11468 = vld [vmem:[%s10321 + $0x60] sm:$0xe]
        %v11469 = vld [vmem:[%s10321 + $0x6c] sm:$0xe]
        %v11470 = vld [vmem:[%s10321 + $0x78] sm:$0xe]
        %v11471 = vld [vmem:[%s10321 + $0x84] sm:$0xe]
        %v11472 = vld [vmem:[%s10321 + $0x90] sm:$0xe]
        %v11473 = vld [vmem:[%s10321 + $0x9c] sm:$0xe]
        %v11474 = vld [vmem:[%s10321 + $0xa8] sm:$0xe]
        %v11475 = vld [vmem:[%s10321 + $0xb4] sm:$0xe]
        %v11524 = vrot.slane %v11460, 5
        %v11525 = vrot.slane %v11524, 4
        %v11526 = vrot.slane %v10708, 5
        %v11527 = vsel %vm3711, %v11525, %v11526
        %v11528 = vrot.slane %v11526, 4
        %v11529 = vrot.slane %v10709, 5
        %v11530 = vsel %vm3711, %v11528, %v11529
        %v11531 = vrot.slane %v11461, 5
        %v11532 = vrot.slane %v11531, 4
        %v11533 = vrot.slane %v10711, 5
        %v11534 = vsel %vm3711, %v11532, %v11533
        %v11535 = vrot.slane %v11533, 4
        %v11536 = vrot.slane %v10712, 5
        %v11537 = vsel %vm3711, %v11535, %v11536
        %v11538 = vrot.slane %v11462, 5
        %v11539 = vrot.slane %v11538, 4
        %v11540 = vrot.slane %v10714, 5
        %v11541 = vsel %vm3711, %v11539, %v11540
        %v11542 = vrot.slane %v11540, 4
        %v11543 = vrot.slane %v10715, 5
        %v11544 = vsel %vm3711, %v11542, %v11543
        %v11545 = vrot.slane %v11463, 5
        %v11546 = vrot.slane %v11545, 4
        %v11547 = vrot.slane %v10717, 5
        %v11548 = vsel %vm3711, %v11546, %v11547
        %v11549 = vrot.slane %v11547, 4
        %v11550 = vrot.slane %v10718, 5
        %v11551 = vsel %vm3711, %v11549, %v11550
        %v11552 = vrot.slane %v11464, 5
        %v11553 = vrot.slane %v11552, 4
        %v11554 = vrot.slane %v10720, 5
        %v11555 = vsel %vm3711, %v11553, %v11554
        %v11556 = vrot.slane %v11554, 4
        %v11557 = vrot.slane %v10721, 5
        %v11558 = vsel %vm3711, %v11556, %v11557
        %v11559 = vrot.slane %v11465, 5
        %v11560 = vrot.slane %v11559, 4
        %v11561 = vrot.slane %v10723, 5
        %v11562 = vsel %vm3711, %v11560, %v11561
        %v11563 = vrot.slane %v11561, 4
        %v11564 = vrot.slane %v10724, 5
        %v11565 = vsel %vm3711, %v11563, %v11564
        %v11566 = vrot.slane %v11466, 5
        %v11567 = vrot.slane %v11566, 4
        %v11568 = vrot.slane %v10726, 5
        %v11569 = vsel %vm3711, %v11567, %v11568
        %v11570 = vrot.slane %v11568, 4
        %v11571 = vrot.slane %v10727, 5
        %v11572 = vsel %vm3711, %v11570, %v11571
        %v11573 = vrot.slane %v11467, 5
        %v11574 = vrot.slane %v11573, 4
        %v11575 = vrot.slane %v10729, 5
        %v11576 = vsel %vm3711, %v11574, %v11575
        %v11577 = vrot.slane %v11575, 4
        %v11578 = vrot.slane %v10730, 5
        %v11579 = vsel %vm3711, %v11577, %v11578
        %v11580 = vrot.slane %v11468, 5
        %v11581 = vrot.slane %v11580, 4
        %v11582 = vrot.slane %v10732, 5
        %v11583 = vsel %vm3711, %v11581, %v11582
        %v11584 = vrot.slane %v11582, 4
        %v11585 = vrot.slane %v10733, 5
        %v11586 = vsel %vm3711, %v11584, %v11585
        %v11587 = vrot.slane %v11469, 5
        %v11588 = vrot.slane %v11587, 4
        %v11589 = vrot.slane %v10735, 5
        %v11590 = vsel %vm3711, %v11588, %v11589
        %v11591 = vrot.slane %v11589, 4
        %v11592 = vrot.slane %v10736, 5
        %v11593 = vsel %vm3711, %v11591, %v11592
        %v11594 = vrot.slane %v11470, 5
        %v11595 = vrot.slane %v11594, 4
        %v11596 = vrot.slane %v10738, 5
        %v11597 = vsel %vm3711, %v11595, %v11596
        %v11598 = vrot.slane %v11596, 4
        %v11599 = vrot.slane %v10739, 5
        %v11600 = vsel %vm3711, %v11598, %v11599
        %v11601 = vrot.slane %v11471, 5
        %v11602 = vrot.slane %v11601, 4
        %v11603 = vrot.slane %v10741, 5
        %v11604 = vsel %vm3711, %v11602, %v11603
        %v11605 = vrot.slane %v11603, 4
        %v11606 = vrot.slane %v10742, 5
        %v11607 = vsel %vm3711, %v11605, %v11606
        %v11608 = vrot.slane %v11472, 5
        %v11609 = vrot.slane %v11608, 4
        %v11610 = vrot.slane %v10744, 5
        %v11611 = vsel %vm3711, %v11609, %v11610
        %v11612 = vrot.slane %v11610, 4
        %v11613 = vrot.slane %v10745, 5
        %v11614 = vsel %vm3711, %v11612, %v11613
        %v11615 = vrot.slane %v11473, 5
        %v11616 = vrot.slane %v11615, 4
        %v11617 = vrot.slane %v10747, 5
        %v11618 = vsel %vm3711, %v11616, %v11617
        %v11619 = vrot.slane %v11617, 4
        %v11620 = vrot.slane %v10748, 5
        %v11621 = vsel %vm3711, %v11619, %v11620
        %v11622 = vrot.slane %v11474, 5
        %v11623 = vrot.slane %v11622, 4
        %v11624 = vrot.slane %v10750, 5
        %v11625 = vsel %vm3711, %v11623, %v11624
        %v11626 = vrot.slane %v11624, 4
        %v11627 = vrot.slane %v10751, 5
        %v11628 = vsel %vm3711, %v11626, %v11627
        %v11629 = vrot.slane %v11475, 5
        %v11630 = vrot.slane %v11629, 4
        %v11631 = vrot.slane %v10753, 5
        %v11632 = vsel %vm3711, %v11630, %v11631
        %v11633 = vrot.slane %v11631, 4
        %v11634 = vrot.slane %v10754, 5
        %v11635 = vsel %vm3711, %v11633, %v11634
        %v11636 = vld [vmem:[#allocation5 + $0x200] sm:$0xf]
        %v11637 = vld [vmem:[#allocation5 + $0x204] sm:$0xf]
        %v11638 = vld [vmem:[#allocation5 + $0x208] sm:$0xf]
        %v11639 = vld [vmem:[#allocation5 + $0x20c] sm:$0xf]
        %v11640 = vld [vmem:[#allocation5 + $0x210] sm:$0xf]
        %v11641 = vld [vmem:[#allocation5 + $0x214] sm:$0xf]
        %v11642 = vld [vmem:[#allocation5 + $0x218] sm:$0xf]
        %v11643 = vld [vmem:[#allocation5 + $0x21c] sm:$0xf]
        %v11644 = vld [vmem:[#allocation5 + $0x220] sm:$0xf]
        %v11645 = vld [vmem:[#allocation5 + $0x224] sm:$0xf]
        %v11646 = vld [vmem:[#allocation5 + $0x228] sm:$0xf]
        %v11647 = vld [vmem:[#allocation5 + $0x22c] sm:$0xf]
        %v11648 = vld [vmem:[#allocation5 + $0x230] sm:$0xf]
        %v11649 = vld [vmem:[#allocation5 + $0x234] sm:$0xf]
        %v11650 = vld [vmem:[#allocation5 + $0x238] sm:$0xf]
        %v11651 = vld [vmem:[#allocation5 + $0x23c] sm:$0xf]
        %v11652 = vunpack.c.l.b16 %v11527
        %v11653 = vunpack.c.l.b16 %v11530
        %v11654 = vunpack.c.l.b16 %v11534
        %v11655 = vunpack.c.l.b16 %v11537
        %v11656 = vunpack.c.l.b16 %v11541
        %v11657 = vunpack.c.l.b16 %v11544
        %v11658 = vunpack.c.l.b16 %v11548
        %v11659 = vunpack.c.l.b16 %v11551
        %v11660 = vunpack.c.l.b16 %v11555
        %v11661 = vunpack.c.l.b16 %v11558
        %v11662 = vunpack.c.l.b16 %v11562
        %v11663 = vunpack.c.l.b16 %v11565
        %v11664 = vunpack.c.l.b16 %v11569
        %v11665 = vunpack.c.l.b16 %v11572
        %v11666 = vunpack.c.l.b16 %v11576
        %v11667 = vunpack.c.l.b16 %v11579
        %v11668 = vunpack.c.l.b16 %v11583
        %v11669 = vunpack.c.l.b16 %v11586
        %v11670 = vunpack.c.l.b16 %v11590
        %v11671 = vunpack.c.l.b16 %v11593
        %v11672 = vunpack.c.l.b16 %v11597
        %v11673 = vunpack.c.l.b16 %v11600
        %v11674 = vunpack.c.l.b16 %v11604
        %v11675 = vunpack.c.l.b16 %v11607
        %v11676 = vunpack.c.l.b16 %v11611
        %v11677 = vunpack.c.l.b16 %v11614
        %v11678 = vunpack.c.l.b16 %v11618
        %v11679 = vunpack.c.l.b16 %v11621
        %v11680 = vunpack.c.l.b16 %v11625
        %v11681 = vunpack.c.l.b16 %v11628
        %v11682 = vunpack.c.l.b16 %v11632
        %v11683 = vunpack.c.l.b16 %v11635
        %v11684 = vpack.c.b16 %v11653, %v11652
        %v11685 = vpack.c.b16 %v11655, %v11654
        %v11686 = vpack.c.b16 %v11657, %v11656
        %v11687 = vpack.c.b16 %v11659, %v11658
        %v11688 = vpack.c.b16 %v11661, %v11660
        %v11689 = vpack.c.b16 %v11663, %v11662
        %v11690 = vpack.c.b16 %v11665, %v11664
        %v11691 = vpack.c.b16 %v11667, %v11666
        %v11692 = vpack.c.b16 %v11669, %v11668
        %v11693 = vpack.c.b16 %v11671, %v11670
        %v11694 = vpack.c.b16 %v11673, %v11672
        %v11695 = vpack.c.b16 %v11675, %v11674
        %v11696 = vpack.c.b16 %v11677, %v11676
        %v11697 = vpack.c.b16 %v11679, %v11678
        %v11698 = vpack.c.b16 %v11681, %v11680
        %v11699 = vpack.c.b16 %v11683, %v11682
        %v11732 = vunpack.c.l.b16 %v11636
        %v11733 = vunpack.c.l.b16 %v11637
        %v11734 = vunpack.c.l.b16 %v11638
        %v11735 = vunpack.c.l.b16 %v11639
        %v11736 = vunpack.c.l.b16 %v11640
        %v11737 = vunpack.c.l.b16 %v11641
        %v11738 = vunpack.c.l.b16 %v11642
        %v11739 = vunpack.c.l.b16 %v11643
        %v11740 = vunpack.c.l.b16 %v11644
        %v11741 = vunpack.c.l.b16 %v11645
        %v11742 = vunpack.c.l.b16 %v11646
        %v11743 = vunpack.c.l.b16 %v11647
        %v11744 = vunpack.c.l.b16 %v11648
        %v11745 = vunpack.c.l.b16 %v11649
        %v11746 = vunpack.c.l.b16 %v11650
        %v11747 = vunpack.c.l.b16 %v11651
        %v11748 = vpack.c.b16 %v11733, %v11732
        %v11749 = vpack.c.b16 %v11735, %v11734
        %v11750 = vpack.c.b16 %v11737, %v11736
        %v11751 = vpack.c.b16 %v11739, %v11738
        %v11752 = vpack.c.b16 %v11741, %v11740
        %v11753 = vpack.c.b16 %v11743, %v11742
        %v11754 = vpack.c.b16 %v11745, %v11744
        %v11755 = vpack.c.b16 %v11747, %v11746
        %11764 = vmatprep.subr.bf16.mxu0 0
        %11765 = vmatpush1.bf16.msra.mxu0 %v11755
        %11766 = vmatprep.subr.bf16.mxu0 0
        %11767 = vmatpush1.bf16.msra.mxu0 %v11754
        %11768 = vmatprep.subr.bf16.mxu0 0
        %11769 = vmatpush1.bf16.msra.mxu0 %v11753
        %11770 = vmatprep.subr.bf16.mxu0 0
        %11771 = vmatpush1.bf16.msra.mxu0 %v11752
        %11772 = vmatprep.subr.bf16.mxu0 0
        %11773 = vmatpush1.bf16.msra.mxu0 %v11751
        %11774 = vmatprep.subr.bf16.mxu0 0
        %11775 = vmatpush1.bf16.msra.mxu0 %v11750
        %11776 = vmatprep.subr.bf16.mxu0 0
        %11777 = vmatpush1.bf16.msra.mxu0 %v11749
        %11778 = vmatprep.subr.bf16.mxu0 0
        %11779 = vmatpush1.bf16.msra.mxu0 %v11748
        %11780 = vmatprep.subr.bf16.mxu0 0
        %11781 = vmatpush2.bf16.msra.mxu0 0
        %11782 = vmatprep.subr.bf16.mxu0 0
        %11783 = vmatpush2.bf16.msra.mxu0 0
        %11784 = vmatprep.subr.bf16.mxu0 0
        %11785 = vmatpush2.bf16.msra.mxu0 0
        %11786 = vmatprep.subr.bf16.mxu0 0
        %11787 = vmatpush2.bf16.msra.mxu0 0
        %11788 = vmatprep.subr.bf16.mxu0 0
        %11789 = vmatpush2.bf16.msra.mxu0 0
        %11790 = vmatprep.subr.bf16.mxu0 0
        %11791 = vmatpush2.bf16.msra.mxu0 0
        %11792 = vmatprep.subr.bf16.mxu0 0
        %11793 = vmatpush2.bf16.msra.mxu0 0
        %11794 = vmatprep.subr.bf16.mxu0 0
        %11795 = vmatpush2.bf16.msra.mxu0 0
        %11796 = vmatprep.mubr.bf16.mxu0 0
        %11797 = vmatmul.mubr.bf16.gmra.mxu0 %v11684
        %v11798 = vpop.f32.mrf.mxu0
        %v11799 = vadd.f32 0.0, %v11798
        %v11800 = vpop.f32.mrf.mxu0
        %v11801 = vpop.f32.mrf.mxu0
        %v11802 = vadd.f32 0.0, %v11801
        %v11803 = vpop.f32.mrf.mxu0
        %11804 = vmatprep.mubr.bf16.mxu0 0
        %11805 = vmatmul.mubr.bf16.gmra.mxu0 %v11685
        %v11806 = vpop.f32.mrf.mxu0
        %v11807 = vadd.f32 0.0, %v11806
        %v11808 = vpop.f32.mrf.mxu0
        %v11809 = vpop.f32.mrf.mxu0
        %v11810 = vadd.f32 0.0, %v11809
        %v11811 = vpop.f32.mrf.mxu0
        %11812 = vmatprep.mubr.bf16.mxu0 0
        %11813 = vmatmul.mubr.bf16.gmra.mxu0 %v11686
        %v11814 = vpop.f32.mrf.mxu0
        %v11815 = vadd.f32 0.0, %v11814
        %v11816 = vpop.f32.mrf.mxu0
        %v11817 = vpop.f32.mrf.mxu0
        %v11818 = vadd.f32 0.0, %v11817
        %v11819 = vpop.f32.mrf.mxu0
        %11820 = vmatprep.mubr.bf16.mxu0 0
        %11821 = vmatmul.mubr.bf16.gmra.mxu0 %v11687
        %v11822 = vpop.f32.mrf.mxu0
        %v11823 = vadd.f32 0.0, %v11822
        %v11824 = vpop.f32.mrf.mxu0
        %v11825 = vpop.f32.mrf.mxu0
        %v11826 = vadd.f32 0.0, %v11825
        %v11827 = vpop.f32.mrf.mxu0
        %11828 = vmatprep.mubr.bf16.mxu0 0
        %11829 = vmatmul.mubr.bf16.gmra.mxu0 %v11688
        %v11830 = vpop.f32.mrf.mxu0
        %v11831 = vadd.f32 0.0, %v11830
        %v11832 = vpop.f32.mrf.mxu0
        %v11833 = vpop.f32.mrf.mxu0
        %v11834 = vadd.f32 0.0, %v11833
        %v11835 = vpop.f32.mrf.mxu0
        %11836 = vmatprep.mubr.bf16.mxu0 0
        %11837 = vmatmul.mubr.bf16.gmra.mxu0 %v11689
        %v11838 = vpop.f32.mrf.mxu0
        %v11839 = vadd.f32 0.0, %v11838
        %v11840 = vpop.f32.mrf.mxu0
        %v11841 = vpop.f32.mrf.mxu0
        %v11842 = vadd.f32 0.0, %v11841
        %v11843 = vpop.f32.mrf.mxu0
        %11844 = vmatprep.mubr.bf16.mxu0 0
        %11845 = vmatmul.mubr.bf16.gmra.mxu0 %v11690
        %v11846 = vpop.f32.mrf.mxu0
        %v11847 = vadd.f32 0.0, %v11846
        %v11848 = vpop.f32.mrf.mxu0
        %v11849 = vpop.f32.mrf.mxu0
        %v11850 = vadd.f32 0.0, %v11849
        %v11851 = vpop.f32.mrf.mxu0
        %11852 = vmatprep.mubr.bf16.mxu0 0
        %11853 = vmatmul.mubr.bf16.gmra.mxu0 %v11691
        %v11854 = vpop.f32.mrf.mxu0
        %v11855 = vadd.f32 0.0, %v11854
        %v11856 = vpop.f32.mrf.mxu0
        %v11857 = vpop.f32.mrf.mxu0
        %v11858 = vadd.f32 0.0, %v11857
        %v11859 = vpop.f32.mrf.mxu0
        %11860 = vmatprep.mubr.bf16.mxu0 0
        %11861 = vmatmul.mubr.bf16.gmra.mxu0 %v11692
        %v11862 = vpop.f32.mrf.mxu0
        %v11863 = vadd.f32 0.0, %v11862
        %v11864 = vpop.f32.mrf.mxu0
        %v11865 = vpop.f32.mrf.mxu0
        %v11866 = vadd.f32 0.0, %v11865
        %v11867 = vpop.f32.mrf.mxu0
        %11868 = vmatprep.mubr.bf16.mxu0 0
        %11869 = vmatmul.mubr.bf16.gmra.mxu0 %v11693
        %v11870 = vpop.f32.mrf.mxu0
        %v11871 = vadd.f32 0.0, %v11870
        %v11872 = vpop.f32.mrf.mxu0
        %v11873 = vpop.f32.mrf.mxu0
        %v11874 = vadd.f32 0.0, %v11873
        %v11875 = vpop.f32.mrf.mxu0
        %11876 = vmatprep.mubr.bf16.mxu0 0
        %11877 = vmatmul.mubr.bf16.gmra.mxu0 %v11694
        %v11878 = vpop.f32.mrf.mxu0
        %v11879 = vadd.f32 0.0, %v11878
        %v11880 = vpop.f32.mrf.mxu0
        %v11881 = vpop.f32.mrf.mxu0
        %v11882 = vadd.f32 0.0, %v11881
        %v11883 = vpop.f32.mrf.mxu0
        %11884 = vmatprep.mubr.bf16.mxu0 0
        %11885 = vmatmul.mubr.bf16.gmra.mxu0 %v11695
        %v11886 = vpop.f32.mrf.mxu0
        %v11887 = vadd.f32 0.0, %v11886
        %v11888 = vpop.f32.mrf.mxu0
        %v11889 = vpop.f32.mrf.mxu0
        %v11890 = vadd.f32 0.0, %v11889
        %v11891 = vpop.f32.mrf.mxu0
        %11892 = vmatprep.mubr.bf16.mxu0 0
        %11893 = vmatmul.mubr.bf16.gmra.mxu0 %v11696
        %v11894 = vpop.f32.mrf.mxu0
        %v11895 = vadd.f32 0.0, %v11894
        %v11896 = vpop.f32.mrf.mxu0
        %v11897 = vpop.f32.mrf.mxu0
        %v11898 = vadd.f32 0.0, %v11897
        %v11899 = vpop.f32.mrf.mxu0
        %11900 = vmatprep.mubr.bf16.mxu0 0
        %11901 = vmatmul.mubr.bf16.gmra.mxu0 %v11697
        %v11902 = vpop.f32.mrf.mxu0
        %v11903 = vadd.f32 0.0, %v11902
        %v11904 = vpop.f32.mrf.mxu0
        %v11905 = vpop.f32.mrf.mxu0
        %v11906 = vadd.f32 0.0, %v11905
        %v11907 = vpop.f32.mrf.mxu0
        %11908 = vmatprep.mubr.bf16.mxu0 0
        %11909 = vmatmul.mubr.bf16.gmra.mxu0 %v11698
        %v11910 = vpop.f32.mrf.mxu0
        %v11911 = vadd.f32 0.0, %v11910
        %v11912 = vpop.f32.mrf.mxu0
        %v11913 = vpop.f32.mrf.mxu0
        %v11914 = vadd.f32 0.0, %v11913
        %v11915 = vpop.f32.mrf.mxu0
        %11916 = vmatprep.mubr.bf16.mxu0 0
        %11917 = vmatmul.mubr.bf16.gmra.mxu0 %v11699
        %v11918 = vpop.f32.mrf.mxu0
        %v11919 = vadd.f32 0.0, %v11918
        %v11920 = vpop.f32.mrf.mxu0
        %v11921 = vpop.f32.mrf.mxu0
        %v11922 = vadd.f32 0.0, %v11921
        %v11923 = vpop.f32.mrf.mxu0
        %11924 = vdwg.mxu0
        %v11925 = vadd.f32 %v11428, %v11799
        %v11926 = vadd.f32 %v11429, %v11802
        %v11927 = vadd.f32 %v11430, %v11807
        %v11928 = vadd.f32 %v11431, %v11810
        %v11929 = vadd.f32 %v11432, %v11815
        %v11930 = vadd.f32 %v11433, %v11818
        %v11931 = vadd.f32 %v11434, %v11823
        %v11932 = vadd.f32 %v11435, %v11826
        %v11933 = vadd.f32 %v11436, %v11831
        %v11934 = vadd.f32 %v11437, %v11834
        %v11935 = vadd.f32 %v11438, %v11839
        %v11936 = vadd.f32 %v11439, %v11842
        %v11937 = vadd.f32 %v11440, %v11847
        %v11938 = vadd.f32 %v11441, %v11850
        %v11939 = vadd.f32 %v11442, %v11855
        %v11940 = vadd.f32 %v11443, %v11858
        %v11941 = vadd.f32 %v11444, %v11863
        %v11942 = vadd.f32 %v11445, %v11866
        %v11943 = vadd.f32 %v11446, %v11871
        %v11944 = vadd.f32 %v11447, %v11874
        %v11945 = vadd.f32 %v11448, %v11879
        %v11946 = vadd.f32 %v11449, %v11882
        %v11947 = vadd.f32 %v11450, %v11887
        %v11948 = vadd.f32 %v11451, %v11890
        %v11949 = vadd.f32 %v11452, %v11895
        %v11950 = vadd.f32 %v11453, %v11898
        %v11951 = vadd.f32 %v11454, %v11903
        %v11952 = vadd.f32 %v11455, %v11906
        %v11953 = vadd.f32 %v11456, %v11911
        %v11954 = vadd.f32 %v11457, %v11914
        %v11955 = vadd.f32 %v11458, %v11919
        %v11956 = vadd.f32 %v11459, %v11922
        %v11957 = vld [vmem:[%s8] sm:$0x1]
        %v11959 = vlaneseq
        %v11960 = vshrl.u32 %v11959, 7
        %v11961 = vsub.s32 0, %v11960
        %v11962 = vrot.slane %v11957, %v11961
        %v11964 = vmul.f32 %v11925, %v11962
        %v11965 = vmul.f32 %v11926, %v11962
        %v11966 = vmul.f32 %v11927, %v11962
        %v11967 = vmul.f32 %v11928, %v11962
        %v11968 = vmul.f32 %v11929, %v11962
        %v11969 = vmul.f32 %v11930, %v11962
        %v11970 = vmul.f32 %v11931, %v11962
        %v11971 = vmul.f32 %v11932, %v11962
        %v11972 = vmul.f32 %v11933, %v11962
        %v11973 = vmul.f32 %v11934, %v11962
        %v11974 = vmul.f32 %v11935, %v11962
        %v11975 = vmul.f32 %v11936, %v11962
        %v11976 = vmul.f32 %v11937, %v11962
        %v11977 = vmul.f32 %v11938, %v11962
        %v11978 = vmul.f32 %v11939, %v11962
        %v11979 = vmul.f32 %v11940, %v11962
        %v11980 = vmul.f32 %v11941, %v11962
        %v11981 = vmul.f32 %v11942, %v11962
        %v11982 = vmul.f32 %v11943, %v11962
        %v11983 = vmul.f32 %v11944, %v11962
        %v11984 = vmul.f32 %v11945, %v11962
        %v11985 = vmul.f32 %v11946, %v11962
        %v11986 = vmul.f32 %v11947, %v11962
        %v11987 = vmul.f32 %v11948, %v11962
        %v11988 = vmul.f32 %v11949, %v11962
        %v11989 = vmul.f32 %v11950, %v11962
        %v11990 = vmul.f32 %v11951, %v11962
        %v11991 = vmul.f32 %v11952, %v11962
        %v11992 = vmul.f32 %v11953, %v11962
        %v11993 = vmul.f32 %v11954, %v11962
        %v11994 = vmul.f32 %v11955, %v11962
        %v11995 = vmul.f32 %v11956, %v11962
        %v11996 = vld [vmem:[%s9] sm:$0x1]
        %v11998 = vlaneseq
        %v11999 = vshrl.u32 %v11998, 7
        %v12000 = vsub.s32 0, %v11999
        %v12001 = vrot.slane %v11996, %v12000
        %v12003 = vadd.f32 %v11964, %v12001
        %v12004 = vadd.f32 %v11965, %v12001
        %v12005 = vadd.f32 %v11966, %v12001
        %v12006 = vadd.f32 %v11967, %v12001
        %v12007 = vadd.f32 %v11968, %v12001
        %v12008 = vadd.f32 %v11969, %v12001
        %v12009 = vadd.f32 %v11970, %v12001
        %v12010 = vadd.f32 %v11971, %v12001
        %v12011 = vadd.f32 %v11972, %v12001
        %v12012 = vadd.f32 %v11973, %v12001
        %v12013 = vadd.f32 %v11974, %v12001
        %v12014 = vadd.f32 %v11975, %v12001
        %v12015 = vadd.f32 %v11976, %v12001
        %v12016 = vadd.f32 %v11977, %v12001
        %v12017 = vadd.f32 %v11978, %v12001
        %v12018 = vadd.f32 %v11979, %v12001
        %v12019 = vadd.f32 %v11980, %v12001
        %v12020 = vadd.f32 %v11981, %v12001
        %v12021 = vadd.f32 %v11982, %v12001
        %v12022 = vadd.f32 %v11983, %v12001
        %v12023 = vadd.f32 %v11984, %v12001
        %v12024 = vadd.f32 %v11985, %v12001
        %v12025 = vadd.f32 %v11986, %v12001
        %v12026 = vadd.f32 %v11987, %v12001
        %v12027 = vadd.f32 %v11988, %v12001
        %v12028 = vadd.f32 %v11989, %v12001
        %v12029 = vadd.f32 %v11990, %v12001
        %v12030 = vadd.f32 %v11991, %v12001
        %v12031 = vadd.f32 %v11992, %v12001
        %v12032 = vadd.f32 %v11993, %v12001
        %v12033 = vadd.f32 %v11994, %v12001
        %v12034 = vadd.f32 %v11995, %v12001
        %v12035 = vmax.f32 %v12003, 0.0
        %v12036 = vmax.f32 %v12004, 0.0
        %v12037 = vmax.f32 %v12005, 0.0
        %v12038 = vmax.f32 %v12006, 0.0
        %v12039 = vmax.f32 %v12007, 0.0
        %v12040 = vmax.f32 %v12008, 0.0
        %v12041 = vmax.f32 %v12009, 0.0
        %v12042 = vmax.f32 %v12010, 0.0
        %v12043 = vmax.f32 %v12011, 0.0
        %v12044 = vmax.f32 %v12012, 0.0
        %v12045 = vmax.f32 %v12013, 0.0
        %v12046 = vmax.f32 %v12014, 0.0
        %v12047 = vmax.f32 %v12015, 0.0
        %v12048 = vmax.f32 %v12016, 0.0
        %v12049 = vmax.f32 %v12017, 0.0
        %v12050 = vmax.f32 %v12018, 0.0
        %v12051 = vmax.f32 %v12019, 0.0
        %v12052 = vmax.f32 %v12020, 0.0
        %v12053 = vmax.f32 %v12021, 0.0
        %v12054 = vmax.f32 %v12022, 0.0
        %v12055 = vmax.f32 %v12023, 0.0
        %v12056 = vmax.f32 %v12024, 0.0
        %v12057 = vmax.f32 %v12025, 0.0
        %v12058 = vmax.f32 %v12026, 0.0
        %v12059 = vmax.f32 %v12027, 0.0
        %v12060 = vmax.f32 %v12028, 0.0
        %v12061 = vmax.f32 %v12029, 0.0
        %v12062 = vmax.f32 %v12030, 0.0
        %v12063 = vmax.f32 %v12031, 0.0
        %v12064 = vmax.f32 %v12032, 0.0
        %v12065 = vmax.f32 %v12033, 0.0
        %v12066 = vmax.f32 %v12034, 0.0
        %12067 = vst [vmem:[%s382] sm:$0xff] %v12035
        %12068 = vst [vmem:[%s382 + $0x8] sm:$0xff] %v12036
        %12069 = vst [vmem:[%s382 + $0x10] sm:$0xff] %v12037
        %12070 = vst [vmem:[%s382 + $0x18] sm:$0xff] %v12038
        %12071 = vst [vmem:[%s382 + $0x20] sm:$0xff] %v12039
        %12072 = vst [vmem:[%s382 + $0x28] sm:$0xff] %v12040
        %12073 = vst [vmem:[%s382 + $0x30] sm:$0xff] %v12041
        %12074 = vst [vmem:[%s382 + $0x38] sm:$0xff] %v12042
        %12075 = vst [vmem:[%s382 + $0x40] sm:$0xff] %v12043
        %12076 = vst [vmem:[%s382 + $0x48] sm:$0xff] %v12044
        %12077 = vst [vmem:[%s382 + $0x50] sm:$0xff] %v12045
        %12078 = vst [vmem:[%s382 + $0x58] sm:$0xff] %v12046
        %12079 = vst [vmem:[%s382 + $0x60] sm:$0xff] %v12047
        %12080 = vst [vmem:[%s382 + $0x68] sm:$0xff] %v12048
        %12081 = vst [vmem:[%s382 + $0x70] sm:$0xff] %v12049
        %12082 = vst [vmem:[%s382 + $0x78] sm:$0xff] %v12050
        %12083 = vst [vmem:[%s382 + $0x80] sm:$0xff] %v12051
        %12084 = vst [vmem:[%s382 + $0x88] sm:$0xff] %v12052
        %12085 = vst [vmem:[%s382 + $0x90] sm:$0xff] %v12053
        %12086 = vst [vmem:[%s382 + $0x98] sm:$0xff] %v12054
        %12087 = vst [vmem:[%s382 + $0xa0] sm:$0xff] %v12055
        %12088 = vst [vmem:[%s382 + $0xa8] sm:$0xff] %v12056
        %12089 = vst [vmem:[%s382 + $0xb0] sm:$0xff] %v12057
        %12090 = vst [vmem:[%s382 + $0xb8] sm:$0xff] %v12058
        %12091 = vst [vmem:[%s382 + $0xc0] sm:$0xff] %v12059
        %12092 = vst [vmem:[%s382 + $0xc8] sm:$0xff] %v12060
        %12093 = vst [vmem:[%s382 + $0xd0] sm:$0xff] %v12061
        %12094 = vst [vmem:[%s382 + $0xd8] sm:$0xff] %v12062
        %12095 = vst [vmem:[%s382 + $0xe0] sm:$0xff] %v12063
        %12096 = vst [vmem:[%s382 + $0xe8] sm:$0xff] %v12064
        %12097 = vst [vmem:[%s382 + $0xf0] sm:$0xff] %v12065
        %12098 = vst [vmem:[%s382 + $0xf8] sm:$0xff] %v12066
        %s12099 = sand.u32 %s253, 1
        %s12100 = scalar_lea.sflag [#allocation7], %s12099
        %s12101 = sand.u32 %s253, 1
        %s12102 = smul.addr %s12101, 256
        %s12103 = scalar_lea.vmem [#allocation8], %s12102
        // Predicated region
        $region65: #{tpu_custom_call.1} parent=59 // pred_check
          %p12104 = pneg %p263
        $region66: #{tpu_custom_call.1} parent=59 // pred_check_branch
          %12106 = sbr.rel (%p12104) target = $region68
        $region67: #{tpu_custom_call.1} parent=59 // pred_region
          %s12108 = ssub.s32 4096, 4096
          %12109 = vsyncadd %s12100, %s12108
          %s12110 = smul.addr %s25, 32
          %s12111 = smul.addr %s12110, 128
          %s12112 = scalar_lea.hbm %s10, %s12111
          %s12113 = sshll.u32 %s12103, 4
          %s12114 = int_to_ptr.vmem [resolvable:$true] %s12113
          %12119 = dma.vmem_to_hbm [thread:$0]  %s12114, 4096, %s12112, %s12100, 128, 128, 8
        $region68: #{tpu_custom_call.1} parent=59 // pred_fallthru
          _
      $region60: #{tpu_custom_call.1} parent=5 // pred_fallthru
        _
      %p12120 = scmp.le.s32.totalorder 2, %s20
      // Predicated region
      $region69: #{tpu_custom_call.1} parent=5 // pred_check
        %p12121 = pneg %p12120
      $region70: #{tpu_custom_call.1} parent=5 // pred_check_branch
        %12123 = sbr.rel (%p12121) target = $region72
      $region71: #{tpu_custom_call.1} parent=5 // pred_region
        %s12124 = ssub.s32 %s20, 2
        // Predicated region
        $region73: #{tpu_custom_call.1} parent=71 // pred_check
          %p12125 = pneg %p269
        $region74: #{tpu_custom_call.1} parent=71 // pred_check_branch
          %12127 = sbr.rel (%p12125) target = $region76
        $region75: #{tpu_custom_call.1} parent=71 // pred_region
          %s12128 = sand.u32 %s254, 1
          %s12129 = scalar_lea.sflag [#allocation7], %s12128
          %s12130 = sand.u32 %s254, 1
          %s12131 = smul.addr %s12130, 256
          %s12132 = scalar_lea.vmem [#allocation8], %s12131
          %12133 = dma.done %s12129, 4096
        $region76: #{tpu_custom_call.1} parent=71 // pred_fallthru
          _
      $region72: #{tpu_custom_call.1} parent=5 // pred_fallthru
        _
    $region6: #{tpu_custom_call.1} parent=1 // loop_footer
      %s24 = sadd.s32 1, %s20
    $region7: #{tpu_custom_call.1} parent=1 // loop_footer_branch
      %19 = sbr.rel target = $region3
    $region8: #{tpu_custom_call.1} parent=1 // loop_exit
      _
    %12134 = vsyncpa [#allocation6], 1
    %s12135 = scalar_lea.sflag [#allocation6], 1
    %12136 = vsyncpa %s12135, 1
    %12137 = vsyncpa [#allocation7], 1
    %s12138 = scalar_lea.sflag [#allocation7], 1
    %12139 = vsyncpa %s12138, 1

</llo_original>
